<compile_context>
chip_gen: v6e
topology: v6e:2x2x1
jax: 0.10.0
libtpu: 0.0.40
codegen_flags: <defaults>
</compile_context>

<pallas_src>
import jax
import jax.numpy as jnp
from jax import lax
from jax.experimental import pallas as pl
from jax.experimental.pallas import tpu as pltpu

# ----------------------------- small config ---------------------------------
BATCH = 2
WAV_LEN = 3200
CONV_CH = 32                     # 512 in the real model
CONV_LAYERS = [(10, 5), (3, 2), (3, 2), (3, 2), (3, 2), (2, 2), (2, 2)]
HIDDEN = 32                      # 768 in the real model
N_HEADS = 4                      # 12 in the real model
HEAD_DIM = HIDDEN // N_HEADS
FFN = 64                         # 3072 in the real model
N_LAYERS = 2                     # 12 in the real model
POS_K = 7                        # 128 in the real model (odd here -> no trim)
POS_G = 4                        # 16 in the real model
NUM_BUCKETS = 16                 # 320 in the real model
MAX_DISTANCE = 32                # 800 in the real model
LN_EPS = 1e-5


def _conv_out_len(length, k, s):
    return (length - k) // s + 1


def _seq_lens():
    lens = [WAV_LEN]
    for (k, s) in CONV_LAYERS:
        lens.append(_conv_out_len(lens[-1], k, s))
    return lens


SEQ_LENS = _seq_lens()           # [3200, 639, 319, 159, 79, 39, 19, 9]
T0 = SEQ_LENS[1]                 # 639
FRAMES = SEQ_LENS[-1]            # 9

# Offsets into the packed per-encoder-layer parameter vector (one DMA stream
# instead of ~8 tiny ones): [qkv_b, o_b, ln1_g, ln1_b, ff1_b, ff2_b, ln2_g, ln2_b]
_QKV_B = 0
_O_B = _QKV_B + 3 * HIDDEN
_LN1_G = _O_B + HIDDEN
_LN1_B = _LN1_G + HIDDEN
_FF1_B = _LN1_B + HIDDEN
_FF2_B = _FF1_B + FFN
_LN2_G = _FF2_B + HIDDEN
_LN2_B = _LN2_G + HIDDEN
_LVEC = _LN2_B + HIDDEN          # 352


# ------------------------------ math helpers ---------------------------------
def _gelu(x):
    # tanh-approx GELU (PyTorch uses exact erf GELU; numerically very close).
    return 0.5 * x * (1.0 + jnp.tanh(0.7978845608028654 * (x + 0.044715 * x * x * x)))


def _ln(x, g, b, eps=LN_EPS):
    """LayerNorm over the last dim, f32 statistics. g, b: (1, C)."""
    mu = jnp.mean(x, axis=-1, keepdims=True)
    var = jnp.mean((x - mu) ** 2, axis=-1, keepdims=True)
    return (x - mu) * lax.rsqrt(var + eps) * g + b


# -------------------------- relative position bias ---------------------------
def _relative_position_bucket(rel, num_buckets=NUM_BUCKETS, max_distance=MAX_DISTANCE):
    num_buckets = num_buckets // 2
    ret = jnp.where(rel > 0, num_buckets, 0)
    n = jnp.abs(rel)
    max_exact = num_buckets // 2
    is_small = n < max_exact
    n_clip = jnp.maximum(n, 1).astype(jnp.float32)
    val_if_large = max_exact + (
        jnp.log(n_clip / max_exact) / jnp.log(max_distance / max_exact)
        * (num_buckets - max_exact)).astype(jnp.int32)
    val_if_large = jnp.minimum(val_if_large, num_buckets - 1)
    return ret + jnp.where(is_small, n, val_if_large)


def compute_position_bias(rel_emb, seq_len):
    """Shared (heads, T, T) relative-position bias (NOT tiled per batch); the
    bucket-embedding gather stays in the XLA wrapper (data-dependent gather)."""
    pos = jnp.arange(seq_len)
    rel = pos[None, :] - pos[:, None]          # (T, T)  k - q
    buckets = _relative_position_bucket(rel)   # (T, T)
    bias = rel_emb[buckets]                    # (T, T, NH)
    return jnp.transpose(bias, (2, 0, 1))      # (NH, T, T)


# --------------------------- the single fused kernel -------------------------
def _wavlm_kernel(patch_ref, w0_ref, wk3_ref, wk2_ref, vec_ref, fpw_ref,
                  posw_ref, bias_ref, qkvw_ref, ow_ref, f1w_ref, f2w_ref,
                  lvec_ref, o_ref, buf_a, buf_b):
    f32, bf16 = jnp.float32, jnp.bfloat16

    # ---- conv layer 0: one im2col MXU matmul (patches built in the wrapper)
    #      + GroupNorm(num_groups == num_channels) over time + GELU.
    x = jnp.dot(patch_ref[...], w0_ref[...], preferred_element_type=f32)   # (T0, C)
    mu = jnp.mean(x, axis=0, keepdims=True)
    var = jnp.mean((x - mu) ** 2, axis=0, keepdims=True)
    x = (x - mu) * lax.rsqrt(var + LN_EPS) * vec_ref[0:1, :] + vec_ref[1:2, :]
    x = _gelu(x)

    # ---- conv layers 1..6 fused: activations ping-pong between two VMEM
    #      scratch buffers, per-tap strided reads feed small MXU matmuls.
    buf_a[...] = x
    bufs = (buf_a, buf_b)
    src = 0
    n_conv = len(CONV_LAYERS)
    for li in range(1, n_conv):
        k, stride = CONV_LAYERS[li]
        t_out = SEQ_LENS[li + 1]
        acc = jnp.zeros((t_out, CONV_CH), f32)
        for kk in range(k):
            xs = bufs[src][pl.ds(kk, t_out, stride=stride), :].astype(bf16)
            if k == 3:
                w_tap = wk3_ref[(li - 1) * 3 + kk]
            else:
                w_tap = wk2_ref[(li - 5) * 2 + kk]
            acc = acc + jnp.dot(xs, w_tap, preferred_element_type=f32)
        x = _gelu(acc)
        if li < n_conv - 1:                      # last layer's output stays a value
            bufs[1 - src][0:t_out, :] = x
            src = 1 - src

    # x: (FRAMES, CONV_CH) f32
    # ---- feature projection: LayerNorm + Linear (fused)
    xn = _ln(x, vec_ref[2:3, :], vec_ref[3:4, :])
    x = jnp.dot(xn.astype(bf16), fpw_ref[...],
                preferred_element_type=f32) + vec_ref[4:5, :]

    # ---- positional grouped conv (block-diagonal weights, "same" padding)
    #      + bias + GELU + residual + encoder LayerNorm.
    T, H = FRAMES, HIDDEN
    pad = POS_K // 2
    zpad = jnp.zeros((pad, H), f32)
    xp = jnp.concatenate([zpad, x, zpad], axis=0).astype(bf16)     # (T + 2*pad, H)
    pc = jnp.zeros((T, H), f32)
    for k in range(POS_K):
        pc = pc + jnp.dot(xp[k:k + T, :], posw_ref[k], preferred_element_type=f32)
    pc = _gelu(pc + vec_ref[5:6, :])
    x = _ln(x + pc, vec_ref[6:7, :], vec_ref[7:8, :])

    # ---- transformer encoder layers (post-norm), shared rel-position bias.
    # TODO(synk): at real WavLM seq lengths this full (T, T) score path needs a
    # flash-style KV-tiled rewrite sized against v7x's 64 MiB VMEM.
    scale = HEAD_DIM ** -0.5
    lv = lvec_ref
    for l in range(N_LAYERS):
        qkv = jnp.dot(x.astype(bf16), qkvw_ref[l],
                      preferred_element_type=f32) + lv[l:l + 1, _QKV_B:_QKV_B + 3 * H]
        heads = []
        for h in range(N_HEADS):
            q_h = (qkv[:, h * HEAD_DIM:(h + 1) * HEAD_DIM] * scale).astype(bf16)
            k_h = qkv[:, H + h * HEAD_DIM:H + (h + 1) * HEAD_DIM].astype(bf16)
            v_h = qkv[:, 2 * H + h * HEAD_DIM:2 * H + (h + 1) * HEAD_DIM].astype(bf16)
            s = lax.dot_general(q_h, k_h, (((1,), (1,)), ((), ())),
                                preferred_element_type=f32)
            s = s + bias_ref[h]
            s = s - jnp.max(s, axis=-1, keepdims=True)
            p = jnp.exp(s)
            p = p / jnp.sum(p, axis=-1, keepdims=True)    # exact softmax denom
            heads.append(jnp.dot(p.astype(bf16), v_h, preferred_element_type=f32))
        ctx = jnp.concatenate(heads, axis=-1)                       # (T, H)
        attn = jnp.dot(ctx.astype(bf16), ow_ref[l],
                       preferred_element_type=f32) + lv[l:l + 1, _O_B:_O_B + H]
        x1 = _ln(x + attn, lv[l:l + 1, _LN1_G:_LN1_G + H], lv[l:l + 1, _LN1_B:_LN1_B + H])
        hmid = _gelu(jnp.dot(x1.astype(bf16), f1w_ref[l], preferred_element_type=f32)
                     + lv[l:l + 1, _FF1_B:_FF1_B + FFN])
        h2 = jnp.dot(hmid.astype(bf16), f2w_ref[l],
                     preferred_element_type=f32) + lv[l:l + 1, _FF2_B:_FF2_B + H]
        x = _ln(x1 + h2, lv[l:l + 1, _LN2_G:_LN2_G + H], lv[l:l + 1, _LN2_B:_LN2_B + H])

    o_ref[...] = x


# ------------------------------- forward pass --------------------------------
def wavlm_forward(params, waveform):
    """waveform:(B, L) f32 -> encoder features (B, FRAMES, HIDDEN).
    Equivalent to `model(x)[0]` of the PyTorch module (dropout = eval no-op)."""
    B, L = waveform.shape
    k0, s0 = CONV_LAYERS[0]
    assert k0 == 2 * s0 and L % s0 == 0          # layer-0 im2col via reshape+concat

    # Layer-0 im2col in the wrapper: (B, L) -> (B, T0, k0) bf16 patches
    # (~13 KB/batch), turning the Cin==1 conv into one lane-dense MXU matmul.
    wr = waveform.reshape(B, L // s0, s0)
    patches = jnp.concatenate([wr[:, :T0, :], wr[:, 1:T0 + 1, :]], axis=-1)
    patches = patches.astype(jnp.bfloat16)

    # TODO(synk): WavLM's *gated* relative position bias (query-conditioned
    # gate) is approximated by the plain bucketed relative-position bias.
    pos_bias = compute_position_bias(params["rel_emb"], FRAMES)     # (NH, T, T)

    def rep(a):
        nd = a.ndim
        return pl.BlockSpec(a.shape, lambda b, nd=nd: (0,) * nd)

    rep_args = (params["w0"], params["wk3"], params["wk2"], params["vec8"],
                params["fp_w"], params["pos_w"], pos_bias, params["qkv_w"],
                params["o_w"], params["ff1_w"], params["ff2_w"], params["lvec"])

    return pl.pallas_call(
        _wavlm_kernel,
        grid=(B,),
        in_specs=[pl.BlockSpec((None, T0, k0), lambda b: (b, 0, 0))]
                 + [rep(a) for a in rep_args],
        out_specs=pl.BlockSpec((None, FRAMES, HIDDEN), lambda b: (b, 0, 0)),
        out_shape=jax.ShapeDtypeStruct((B, FRAMES, HIDDEN), jnp.float32),
        scratch_shapes=[pltpu.VMEM((SEQ_LENS[1], CONV_CH), jnp.float32),
                        pltpu.VMEM((SEQ_LENS[2], CONV_CH), jnp.float32)],
        compiler_params=pltpu.CompilerParams(
            dimension_semantics=("parallel",),    # one batch element per TC (v7x)
            vmem_limit_bytes=32 * 1024 * 1024),
    )(patches, *rep_args)


# ------------------------------- parameters ----------------------------------
def init_params(key):
    keys = iter(jax.random.split(key, 32))

    def rnd(shape, scale=0.02):
        return (scale * jax.random.normal(next(keys), shape)).astype(jnp.float32)

    bf16 = jnp.bfloat16
    ones, zeros = jnp.ones, jnp.zeros
    p = {}
    # Conv feature extractor (bias=False in WavLM).  Layer 0 is (K, Cout) since
    # Cin == 1; layers 1-4 (k=3) and 5-6 (k=2) are stored tap-flattened so the
    # kernel indexes one (Cin, Cout) tap with a single static index.
    p["w0"] = rnd((CONV_LAYERS[0][0], CONV_CH), scale=0.1).astype(bf16)
    p["wk3"] = rnd((4 * 3, CONV_CH, CONV_CH), scale=0.1).astype(bf16)
    p["wk2"] = rnd((2 * 2, CONV_CH, CONV_CH), scale=0.1).astype(bf16)
    # Packed small vectors (single DMA): rows = [gn_g, gn_b, fp_ln_g, fp_ln_b,
    # fp_b, pos_conv_b, enc_ln_g, enc_ln_b].
    # TODO(synk): at real scale CONV_CH(512) != HIDDEN(768) so this pack needs
    # per-row padding; trivially true here since both are 32.
    p["vec8"] = jnp.stack([ones((CONV_CH,)), zeros((CONV_CH,)),
                           ones((CONV_CH,)), zeros((CONV_CH,)),
                           zeros((HIDDEN,)), zeros((HIDDEN,)),
                           ones((HIDDEN,)), zeros((HIDDEN,))]).astype(jnp.float32)
    p["fp_w"] = rnd((CONV_CH, HIDDEN)).astype(bf16)
    # Positional grouped conv expanded to block-diagonal (K, H, H): at H=32 /
    # G=4 each per-group matmul would pad a full MXU tile anyway, so block-diag
    # costs nothing and gives K single (T,32)x(32,32) matmuls.
    # TODO(synk): weight-norm reparametrization of pos_conv omitted (pure
    # reparam of the same dense weight; synthetic weights used directly).
    # TODO(synk): real model kernel=128 (even) needs a trailing-timestep trim.
    wg = rnd((POS_K, POS_G, HIDDEN // POS_G, HIDDEN // POS_G), scale=0.1)
    p["pos_w"] = jnp.stack(
        [jax.scipy.linalg.block_diag(*[wg[k, g] for g in range(POS_G)])
         for k in range(POS_K)]).astype(bf16)
    p["rel_emb"] = rnd((NUM_BUCKETS, N_HEADS), scale=0.1)
    # Transformer layers: stacked matrices + one packed per-layer 1-D vector.
    p["qkv_w"] = rnd((N_LAYERS, HIDDEN, 3 * HIDDEN)).astype(bf16)
    p["o_w"] = rnd((N_LAYERS, HIDDEN, HIDDEN)).astype(bf16)
    p["ff1_w"] = rnd((N_LAYERS, HIDDEN, FFN)).astype(bf16)
    p["ff2_w"] = rnd((N_LAYERS, FFN, HIDDEN)).astype(bf16)
    lvec = jnp.concatenate([zeros((3 * HIDDEN,)), zeros((HIDDEN,)),
                            ones((HIDDEN,)), zeros((HIDDEN,)),
                            zeros((FFN,)), zeros((HIDDEN,)),
                            ones((HIDDEN,)), zeros((HIDDEN,))])
    assert lvec.shape[0] == _LVEC
    p["lvec"] = jnp.tile(lvec[None, :], (N_LAYERS, 1)).astype(jnp.float32)
    return p


# ------------------------------------ main -----------------------------------
if __name__ == "__main__":
    key = jax.random.PRNGKey(0)
    pkey, xkey = jax.random.split(key)
    params = init_params(pkey)
    waveform = jax.random.normal(xkey, (BATCH, WAV_LEN), dtype=jnp.float32)

    out = jax.jit(wavlm_forward)(params, waveform)
    out = jax.block_until_ready(out)

    assert out.shape == (BATCH, FRAMES, HIDDEN), out.shape
    assert bool(jnp.all(jnp.isfinite(out)))
    print("KERNEL_OK")
</pallas_src>

<mosaic_0001>
module attributes {stable_mosaic.version = 11 : i64} {
  func.func @_wavlm_kernel(%arg0: i32, %arg1: memref<1x639x10xbf16, #tpu.memory_space<vmem>>, %arg2: memref<10x32xbf16, #tpu.memory_space<vmem>>, %arg3: memref<12x32x32xbf16, #tpu.memory_space<vmem>>, %arg4: memref<4x32x32xbf16, #tpu.memory_space<vmem>>, %arg5: memref<8x32xf32, #tpu.memory_space<vmem>>, %arg6: memref<32x32xbf16, #tpu.memory_space<vmem>>, %arg7: memref<7x32x32xbf16, #tpu.memory_space<vmem>>, %arg8: memref<4x9x9xf32, #tpu.memory_space<vmem>>, %arg9: memref<2x32x96xbf16, #tpu.memory_space<vmem>>, %arg10: memref<2x32x32xbf16, #tpu.memory_space<vmem>>, %arg11: memref<2x32x64xbf16, #tpu.memory_space<vmem>>, %arg12: memref<2x64x32xbf16, #tpu.memory_space<vmem>>, %arg13: memref<2x352xf32, #tpu.memory_space<vmem>>, %arg14: memref<1x9x32xf32, #tpu.memory_space<vmem>>, %arg15: memref<639x32xf32, #tpu.memory_space<vmem>>, %arg16: memref<319x32xf32, #tpu.memory_space<vmem>>) attributes {dimension_semantics = [#tpu.dimension_semantics<parallel>], iteration_bounds = array<i64: 2>, scalar_prefetch = 0 : i64, scratch_operands = 2 : i64, tpu.core_type = #tpu.core_type<tc>, window_params = [{transform_indices = @transform_0, window_bounds = array<i64: 1, 639, 10>}, {pipeline_mode = #tpu.pipeline_mode<synchronous>, transform_indices = @transform_1, window_bounds = array<i64: 10, 32>}, {pipeline_mode = #tpu.pipeline_mode<synchronous>, transform_indices = @transform_2, window_bounds = array<i64: 12, 32, 32>}, {pipeline_mode = #tpu.pipeline_mode<synchronous>, transform_indices = @transform_3, window_bounds = array<i64: 4, 32, 32>}, {pipeline_mode = #tpu.pipeline_mode<synchronous>, transform_indices = @transform_4, window_bounds = array<i64: 8, 32>}, {pipeline_mode = #tpu.pipeline_mode<synchronous>, transform_indices = @transform_5, window_bounds = array<i64: 32, 32>}, {pipeline_mode = #tpu.pipeline_mode<synchronous>, transform_indices = @transform_6, window_bounds = array<i64: 7, 32, 32>}, {pipeline_mode = #tpu.pipeline_mode<synchronous>, transform_indices = @transform_7, window_bounds = array<i64: 4, 9, 9>}, {pipeline_mode = #tpu.pipeline_mode<synchronous>, transform_indices = @transform_8, window_bounds = array<i64: 2, 32, 96>}, {pipeline_mode = #tpu.pipeline_mode<synchronous>, transform_indices = @transform_9, window_bounds = array<i64: 2, 32, 32>}, {pipeline_mode = #tpu.pipeline_mode<synchronous>, transform_indices = @transform_10, window_bounds = array<i64: 2, 32, 64>}, {pipeline_mode = #tpu.pipeline_mode<synchronous>, transform_indices = @transform_11, window_bounds = array<i64: 2, 64, 32>}, {pipeline_mode = #tpu.pipeline_mode<synchronous>, transform_indices = @transform_12, window_bounds = array<i64: 2, 352>}, {transform_indices = @transform_13, window_bounds = array<i64: 1, 9, 32>}]} {
    %c0 = arith.constant 0 : index
    %c0_0 = arith.constant 0 : index
    %c0_1 = arith.constant 0 : index
    %0 = vector.load %arg1[%c0, %c0_0, %c0_1] : memref<1x639x10xbf16, #tpu.memory_space<vmem>>, vector<1x639x10xbf16>
    %1 = vector.shape_cast %0 : vector<1x639x10xbf16> to vector<639x10xbf16>
    %c0_2 = arith.constant 0 : index
    %c0_3 = arith.constant 0 : index
    %2 = vector.load %arg2[%c0_2, %c0_3] : memref<10x32xbf16, #tpu.memory_space<vmem>>, vector<10x32xbf16>
    %cst = arith.constant dense<0.000000e+00> : vector<639x32xf32>
    %3 = tpu.matmul %1, %2, %cst {dimension_numbers = #tpu.dot_dimension_numbers<[1], [0], [0], [1], [0, 0, 1, 1], [], []>} : vector<639x10xbf16>, vector<10x32xbf16>, vector<639x32xf32> -> vector<639x32xf32>
    %cst_4 = arith.constant dense<0.000000e+00> : vector<32xf32>
    %4 = vector.multi_reduction <add>, %3, %cst_4 [0] : vector<639x32xf32> to vector<32xf32>
    %5 = vector.shape_cast %4 : vector<32xf32> to vector<1x32xf32>
    %cst_5 = arith.constant 6.390000e+02 : f32
    %6 = vector.broadcast %cst_5 : f32 to vector<1x32xf32>
    %7 = arith.divf %5, %6 : vector<1x32xf32>
    %8 = vector.broadcast %7 : vector<1x32xf32> to vector<639x32xf32>
    %9 = arith.subf %3, %8 : vector<639x32xf32>
    %10 = arith.mulf %9, %9 : vector<639x32xf32>
    %cst_6 = arith.constant dense<0.000000e+00> : vector<32xf32>
    %11 = vector.multi_reduction <add>, %10, %cst_6 [0] : vector<639x32xf32> to vector<32xf32>
    %12 = vector.shape_cast %11 : vector<32xf32> to vector<1x32xf32>
    %cst_7 = arith.constant 6.390000e+02 : f32
    %13 = vector.broadcast %cst_7 : f32 to vector<1x32xf32>
    %14 = arith.divf %12, %13 : vector<1x32xf32>
    %15 = vector.broadcast %7 : vector<1x32xf32> to vector<639x32xf32>
    %16 = arith.subf %3, %15 : vector<639x32xf32>
    %cst_8 = arith.constant 9.99999974E-6 : f32
    %17 = vector.broadcast %cst_8 : f32 to vector<1x32xf32>
    %18 = arith.addf %14, %17 : vector<1x32xf32>
    %19 = math.rsqrt %18 : vector<1x32xf32>
    %20 = vector.broadcast %19 : vector<1x32xf32> to vector<639x32xf32>
    %21 = arith.mulf %16, %20 : vector<639x32xf32>
    %c0_9 = arith.constant 0 : index
    %c0_10 = arith.constant 0 : index
    %22 = vector.load %arg5[%c0_9, %c0_10] : memref<8x32xf32, #tpu.memory_space<vmem>>, vector<1x32xf32>
    %23 = vector.broadcast %22 : vector<1x32xf32> to vector<639x32xf32>
    %24 = arith.mulf %21, %23 : vector<639x32xf32>
    %c1 = arith.constant 1 : index
    %c0_11 = arith.constant 0 : index
    %25 = vector.load %arg5[%c1, %c0_11] : memref<8x32xf32, #tpu.memory_space<vmem>>, vector<1x32xf32>
    %26 = vector.broadcast %25 : vector<1x32xf32> to vector<639x32xf32>
    %27 = arith.addf %24, %26 : vector<639x32xf32>
    %cst_12 = arith.constant 5.000000e-01 : f32
    %28 = vector.broadcast %cst_12 : f32 to vector<639x32xf32>
    %29 = arith.mulf %28, %27 : vector<639x32xf32>
    %cst_13 = arith.constant 4.471500e-02 : f32
    %30 = vector.broadcast %cst_13 : f32 to vector<639x32xf32>
    %31 = arith.mulf %30, %27 : vector<639x32xf32>
    %32 = arith.mulf %31, %27 : vector<639x32xf32>
    %33 = arith.mulf %32, %27 : vector<639x32xf32>
    %34 = arith.addf %27, %33 : vector<639x32xf32>
    %cst_14 = arith.constant 0.797884583 : f32
    %35 = vector.broadcast %cst_14 : f32 to vector<639x32xf32>
    %36 = arith.mulf %35, %34 : vector<639x32xf32>
    %37 = math.tanh %36 : vector<639x32xf32>
    %cst_15 = arith.constant 1.000000e+00 : f32
    %38 = vector.broadcast %cst_15 : f32 to vector<639x32xf32>
    %39 = arith.addf %38, %37 : vector<639x32xf32>
    %40 = arith.mulf %29, %39 : vector<639x32xf32>
    %c0_16 = arith.constant 0 : index
    %c0_17 = arith.constant 0 : index
    %41 = vector.load %arg15[%c0_16, %c0_17] : memref<639x32xf32, #tpu.memory_space<vmem>>, vector<639x32xf32>
    tpu.vector_store %arg15[%c0_16, %c0_17], %40 {strides = array<i32>} : memref<639x32xf32, #tpu.memory_space<vmem>>, vector<639x32xf32>,
    %cst_18 = arith.constant 0.000000e+00 : f32
    %42 = vector.broadcast %cst_18 : f32 to vector<319x32xf32>
    %c0_19 = arith.constant 0 : index
    %c0_20 = arith.constant 0 : index
    %43 = tpu.strided_load %arg15[%c0_19, %c0_20] {strides = array<i32: 2, 1>} : memref<639x32xf32, #tpu.memory_space<vmem>>, vector<319x32xf32>
    %44 = arith.truncf %43 : vector<319x32xf32> to vector<319x32xbf16>
    %c0_21 = arith.constant 0 : index
    %c0_22 = arith.constant 0 : index
    %c0_23 = arith.constant 0 : index
    %45 = vector.load %arg3[%c0_21, %c0_22, %c0_23] : memref<12x32x32xbf16, #tpu.memory_space<vmem>>, vector<1x32x32xbf16>
    %46 = vector.shape_cast %45 : vector<1x32x32xbf16> to vector<32x32xbf16>
    %cst_24 = arith.constant dense<0.000000e+00> : vector<319x32xf32>
    %47 = tpu.matmul %44, %46, %cst_24 {dimension_numbers = #tpu.dot_dimension_numbers<[1], [0], [0], [1], [0, 0, 1, 1], [], []>} : vector<319x32xbf16>, vector<32x32xbf16>, vector<319x32xf32> -> vector<319x32xf32>
    %48 = arith.addf %42, %47 : vector<319x32xf32>
    %c1_25 = arith.constant 1 : index
    %c0_26 = arith.constant 0 : index
    %49 = tpu.strided_load %arg15[%c1_25, %c0_26] {strides = array<i32: 2, 1>} : memref<639x32xf32, #tpu.memory_space<vmem>>, vector<319x32xf32>
    %50 = arith.truncf %49 : vector<319x32xf32> to vector<319x32xbf16>
    %c1_27 = arith.constant 1 : index
    %c0_28 = arith.constant 0 : index
    %c0_29 = arith.constant 0 : index
    %51 = vector.load %arg3[%c1_27, %c0_28, %c0_29] : memref<12x32x32xbf16, #tpu.memory_space<vmem>>, vector<1x32x32xbf16>
    %52 = vector.shape_cast %51 : vector<1x32x32xbf16> to vector<32x32xbf16>
    %cst_30 = arith.constant dense<0.000000e+00> : vector<319x32xf32>
    %53 = tpu.matmul %50, %52, %cst_30 {dimension_numbers = #tpu.dot_dimension_numbers<[1], [0], [0], [1], [0, 0, 1, 1], [], []>} : vector<319x32xbf16>, vector<32x32xbf16>, vector<319x32xf32> -> vector<319x32xf32>
    %54 = arith.addf %48, %53 : vector<319x32xf32>
    %c2 = arith.constant 2 : index
    %c0_31 = arith.constant 0 : index
    %55 = tpu.strided_load %arg15[%c2, %c0_31] {strides = array<i32: 2, 1>} : memref<639x32xf32, #tpu.memory_space<vmem>>, vector<319x32xf32>
    %56 = arith.truncf %55 : vector<319x32xf32> to vector<319x32xbf16>
    %c2_32 = arith.constant 2 : index
    %c0_33 = arith.constant 0 : index
    %c0_34 = arith.constant 0 : index
    %57 = vector.load %arg3[%c2_32, %c0_33, %c0_34] : memref<12x32x32xbf16, #tpu.memory_space<vmem>>, vector<1x32x32xbf16>
    %58 = vector.shape_cast %57 : vector<1x32x32xbf16> to vector<32x32xbf16>
    %cst_35 = arith.constant dense<0.000000e+00> : vector<319x32xf32>
    %59 = tpu.matmul %56, %58, %cst_35 {dimension_numbers = #tpu.dot_dimension_numbers<[1], [0], [0], [1], [0, 0, 1, 1], [], []>} : vector<319x32xbf16>, vector<32x32xbf16>, vector<319x32xf32> -> vector<319x32xf32>
    %60 = arith.addf %54, %59 : vector<319x32xf32>
    %cst_36 = arith.constant 5.000000e-01 : f32
    %61 = vector.broadcast %cst_36 : f32 to vector<319x32xf32>
    %62 = arith.mulf %61, %60 : vector<319x32xf32>
    %cst_37 = arith.constant 4.471500e-02 : f32
    %63 = vector.broadcast %cst_37 : f32 to vector<319x32xf32>
    %64 = arith.mulf %63, %60 : vector<319x32xf32>
    %65 = arith.mulf %64, %60 : vector<319x32xf32>
    %66 = arith.mulf %65, %60 : vector<319x32xf32>
    %67 = arith.addf %60, %66 : vector<319x32xf32>
    %cst_38 = arith.constant 0.797884583 : f32
    %68 = vector.broadcast %cst_38 : f32 to vector<319x32xf32>
    %69 = arith.mulf %68, %67 : vector<319x32xf32>
    %70 = math.tanh %69 : vector<319x32xf32>
    %cst_39 = arith.constant 1.000000e+00 : f32
    %71 = vector.broadcast %cst_39 : f32 to vector<319x32xf32>
    %72 = arith.addf %71, %70 : vector<319x32xf32>
    %73 = arith.mulf %62, %72 : vector<319x32xf32>
    %c0_40 = arith.constant 0 : index
    %c0_41 = arith.constant 0 : index
    %74 = vector.load %arg16[%c0_40, %c0_41] : memref<319x32xf32, #tpu.memory_space<vmem>>, vector<319x32xf32>
    tpu.vector_store %arg16[%c0_40, %c0_41], %73 {strides = array<i32>} : memref<319x32xf32, #tpu.memory_space<vmem>>, vector<319x32xf32>,
    %cst_42 = arith.constant 0.000000e+00 : f32
    %75 = vector.broadcast %cst_42 : f32 to vector<159x32xf32>
    %c0_43 = arith.constant 0 : index
    %c0_44 = arith.constant 0 : index
    %76 = tpu.strided_load %arg16[%c0_43, %c0_44] {strides = array<i32: 2, 1>} : memref<319x32xf32, #tpu.memory_space<vmem>>, vector<159x32xf32>
    %77 = arith.truncf %76 : vector<159x32xf32> to vector<159x32xbf16>
    %c3 = arith.constant 3 : index
    %c0_45 = arith.constant 0 : index
    %c0_46 = arith.constant 0 : index
    %78 = vector.load %arg3[%c3, %c0_45, %c0_46] : memref<12x32x32xbf16, #tpu.memory_space<vmem>>, vector<1x32x32xbf16>
    %79 = vector.shape_cast %78 : vector<1x32x32xbf16> to vector<32x32xbf16>
    %cst_47 = arith.constant dense<0.000000e+00> : vector<159x32xf32>
    %80 = tpu.matmul %77, %79, %cst_47 {dimension_numbers = #tpu.dot_dimension_numbers<[1], [0], [0], [1], [0, 0, 1, 1], [], []>} : vector<159x32xbf16>, vector<32x32xbf16>, vector<159x32xf32> -> vector<159x32xf32>
    %81 = arith.addf %75, %80 : vector<159x32xf32>
    %c1_48 = arith.constant 1 : index
    %c0_49 = arith.constant 0 : index
    %82 = tpu.strided_load %arg16[%c1_48, %c0_49] {strides = array<i32: 2, 1>} : memref<319x32xf32, #tpu.memory_space<vmem>>, vector<159x32xf32>
    %83 = arith.truncf %82 : vector<159x32xf32> to vector<159x32xbf16>
    %c4 = arith.constant 4 : index
    %c0_50 = arith.constant 0 : index
    %c0_51 = arith.constant 0 : index
    %84 = vector.load %arg3[%c4, %c0_50, %c0_51] : memref<12x32x32xbf16, #tpu.memory_space<vmem>>, vector<1x32x32xbf16>
    %85 = vector.shape_cast %84 : vector<1x32x32xbf16> to vector<32x32xbf16>
    %cst_52 = arith.constant dense<0.000000e+00> : vector<159x32xf32>
    %86 = tpu.matmul %83, %85, %cst_52 {dimension_numbers = #tpu.dot_dimension_numbers<[1], [0], [0], [1], [0, 0, 1, 1], [], []>} : vector<159x32xbf16>, vector<32x32xbf16>, vector<159x32xf32> -> vector<159x32xf32>
    %87 = arith.addf %81, %86 : vector<159x32xf32>
    %c2_53 = arith.constant 2 : index
    %c0_54 = arith.constant 0 : index
    %88 = tpu.strided_load %arg16[%c2_53, %c0_54] {strides = array<i32: 2, 1>} : memref<319x32xf32, #tpu.memory_space<vmem>>, vector<159x32xf32>
    %89 = arith.truncf %88 : vector<159x32xf32> to vector<159x32xbf16>
    %c5 = arith.constant 5 : index
    %c0_55 = arith.constant 0 : index
    %c0_56 = arith.constant 0 : index
    %90 = vector.load %arg3[%c5, %c0_55, %c0_56] : memref<12x32x32xbf16, #tpu.memory_space<vmem>>, vector<1x32x32xbf16>
    %91 = vector.shape_cast %90 : vector<1x32x32xbf16> to vector<32x32xbf16>
    %cst_57 = arith.constant dense<0.000000e+00> : vector<159x32xf32>
    %92 = tpu.matmul %89, %91, %cst_57 {dimension_numbers = #tpu.dot_dimension_numbers<[1], [0], [0], [1], [0, 0, 1, 1], [], []>} : vector<159x32xbf16>, vector<32x32xbf16>, vector<159x32xf32> -> vector<159x32xf32>
    %93 = arith.addf %87, %92 : vector<159x32xf32>
    %cst_58 = arith.constant 5.000000e-01 : f32
    %94 = vector.broadcast %cst_58 : f32 to vector<159x32xf32>
    %95 = arith.mulf %94, %93 : vector<159x32xf32>
    %cst_59 = arith.constant 4.471500e-02 : f32
    %96 = vector.broadcast %cst_59 : f32 to vector<159x32xf32>
    %97 = arith.mulf %96, %93 : vector<159x32xf32>
    %98 = arith.mulf %97, %93 : vector<159x32xf32>
    %99 = arith.mulf %98, %93 : vector<159x32xf32>
    %100 = arith.addf %93, %99 : vector<159x32xf32>
    %cst_60 = arith.constant 0.797884583 : f32
    %101 = vector.broadcast %cst_60 : f32 to vector<159x32xf32>
    %102 = arith.mulf %101, %100 : vector<159x32xf32>
    %103 = math.tanh %102 : vector<159x32xf32>
    %cst_61 = arith.constant 1.000000e+00 : f32
    %104 = vector.broadcast %cst_61 : f32 to vector<159x32xf32>
    %105 = arith.addf %104, %103 : vector<159x32xf32>
    %106 = arith.mulf %95, %105 : vector<159x32xf32>
    %c0_62 = arith.constant 0 : index
    %c0_63 = arith.constant 0 : index
    %107 = vector.load %arg15[%c0_62, %c0_63] : memref<639x32xf32, #tpu.memory_space<vmem>>, vector<159x32xf32>
    tpu.vector_store %arg15[%c0_62, %c0_63], %106 {strides = array<i32>} : memref<639x32xf32, #tpu.memory_space<vmem>>, vector<159x32xf32>,
    %cst_64 = arith.constant 0.000000e+00 : f32
    %108 = vector.broadcast %cst_64 : f32 to vector<79x32xf32>
    %c0_65 = arith.constant 0 : index
    %c0_66 = arith.constant 0 : index
    %109 = tpu.strided_load %arg15[%c0_65, %c0_66] {strides = array<i32: 2, 1>} : memref<639x32xf32, #tpu.memory_space<vmem>>, vector<79x32xf32>
    %110 = arith.truncf %109 : vector<79x32xf32> to vector<79x32xbf16>
    %c6 = arith.constant 6 : index
    %c0_67 = arith.constant 0 : index
    %c0_68 = arith.constant 0 : index
    %111 = vector.load %arg3[%c6, %c0_67, %c0_68] : memref<12x32x32xbf16, #tpu.memory_space<vmem>>, vector<1x32x32xbf16>
    %112 = vector.shape_cast %111 : vector<1x32x32xbf16> to vector<32x32xbf16>
    %cst_69 = arith.constant dense<0.000000e+00> : vector<79x32xf32>
    %113 = tpu.matmul %110, %112, %cst_69 {dimension_numbers = #tpu.dot_dimension_numbers<[1], [0], [0], [1], [0, 0, 1, 1], [], []>} : vector<79x32xbf16>, vector<32x32xbf16>, vector<79x32xf32> -> vector<79x32xf32>
    %114 = arith.addf %108, %113 : vector<79x32xf32>
    %c1_70 = arith.constant 1 : index
    %c0_71 = arith.constant 0 : index
    %115 = tpu.strided_load %arg15[%c1_70, %c0_71] {strides = array<i32: 2, 1>} : memref<639x32xf32, #tpu.memory_space<vmem>>, vector<79x32xf32>
    %116 = arith.truncf %115 : vector<79x32xf32> to vector<79x32xbf16>
    %c7 = arith.constant 7 : index
    %c0_72 = arith.constant 0 : index
    %c0_73 = arith.constant 0 : index
    %117 = vector.load %arg3[%c7, %c0_72, %c0_73] : memref<12x32x32xbf16, #tpu.memory_space<vmem>>, vector<1x32x32xbf16>
    %118 = vector.shape_cast %117 : vector<1x32x32xbf16> to vector<32x32xbf16>
    %cst_74 = arith.constant dense<0.000000e+00> : vector<79x32xf32>
    %119 = tpu.matmul %116, %118, %cst_74 {dimension_numbers = #tpu.dot_dimension_numbers<[1], [0], [0], [1], [0, 0, 1, 1], [], []>} : vector<79x32xbf16>, vector<32x32xbf16>, vector<79x32xf32> -> vector<79x32xf32>
    %120 = arith.addf %114, %119 : vector<79x32xf32>
    %c2_75 = arith.constant 2 : index
    %c0_76 = arith.constant 0 : index
    %121 = tpu.strided_load %arg15[%c2_75, %c0_76] {strides = array<i32: 2, 1>} : memref<639x32xf32, #tpu.memory_space<vmem>>, vector<79x32xf32>
    %122 = arith.truncf %121 : vector<79x32xf32> to vector<79x32xbf16>
    %c8 = arith.constant 8 : index
    %c0_77 = arith.constant 0 : index
    %c0_78 = arith.constant 0 : index
    %123 = vector.load %arg3[%c8, %c0_77, %c0_78] : memref<12x32x32xbf16, #tpu.memory_space<vmem>>, vector<1x32x32xbf16>
    %124 = vector.shape_cast %123 : vector<1x32x32xbf16> to vector<32x32xbf16>
    %cst_79 = arith.constant dense<0.000000e+00> : vector<79x32xf32>
    %125 = tpu.matmul %122, %124, %cst_79 {dimension_numbers = #tpu.dot_dimension_numbers<[1], [0], [0], [1], [0, 0, 1, 1], [], []>} : vector<79x32xbf16>, vector<32x32xbf16>, vector<79x32xf32> -> vector<79x32xf32>
    %126 = arith.addf %120, %125 : vector<79x32xf32>
    %cst_80 = arith.constant 5.000000e-01 : f32
    %127 = vector.broadcast %cst_80 : f32 to vector<79x32xf32>
    %128 = arith.mulf %127, %126 : vector<79x32xf32>
    %cst_81 = arith.constant 4.471500e-02 : f32
    %129 = vector.broadcast %cst_81 : f32 to vector<79x32xf32>
    %130 = arith.mulf %129, %126 : vector<79x32xf32>
    %131 = arith.mulf %130, %126 : vector<79x32xf32>
    %132 = arith.mulf %131, %126 : vector<79x32xf32>
    %133 = arith.addf %126, %132 : vector<79x32xf32>
    %cst_82 = arith.constant 0.797884583 : f32
    %134 = vector.broadcast %cst_82 : f32 to vector<79x32xf32>
    %135 = arith.mulf %134, %133 : vector<79x32xf32>
    %136 = math.tanh %135 : vector<79x32xf32>
    %cst_83 = arith.constant 1.000000e+00 : f32
    %137 = vector.broadcast %cst_83 : f32 to vector<79x32xf32>
    %138 = arith.addf %137, %136 : vector<79x32xf32>
    %139 = arith.mulf %128, %138 : vector<79x32xf32>
    %c0_84 = arith.constant 0 : index
    %c0_85 = arith.constant 0 : index
    %140 = vector.load %arg16[%c0_84, %c0_85] : memref<319x32xf32, #tpu.memory_space<vmem>>, vector<79x32xf32>
    tpu.vector_store %arg16[%c0_84, %c0_85], %139 {strides = array<i32>} : memref<319x32xf32, #tpu.memory_space<vmem>>, vector<79x32xf32>,
    %cst_86 = arith.constant 0.000000e+00 : f32
    %141 = vector.broadcast %cst_86 : f32 to vector<39x32xf32>
    %c0_87 = arith.constant 0 : index
    %c0_88 = arith.constant 0 : index
    %142 = tpu.strided_load %arg16[%c0_87, %c0_88] {strides = array<i32: 2, 1>} : memref<319x32xf32, #tpu.memory_space<vmem>>, vector<39x32xf32>
    %143 = arith.truncf %142 : vector<39x32xf32> to vector<39x32xbf16>
    %c9 = arith.constant 9 : index
    %c0_89 = arith.constant 0 : index
    %c0_90 = arith.constant 0 : index
    %144 = vector.load %arg3[%c9, %c0_89, %c0_90] : memref<12x32x32xbf16, #tpu.memory_space<vmem>>, vector<1x32x32xbf16>
    %145 = vector.shape_cast %144 : vector<1x32x32xbf16> to vector<32x32xbf16>
    %cst_91 = arith.constant dense<0.000000e+00> : vector<39x32xf32>
    %146 = tpu.matmul %143, %145, %cst_91 {dimension_numbers = #tpu.dot_dimension_numbers<[1], [0], [0], [1], [0, 0, 1, 1], [], []>} : vector<39x32xbf16>, vector<32x32xbf16>, vector<39x32xf32> -> vector<39x32xf32>
    %147 = arith.addf %141, %146 : vector<39x32xf32>
    %c1_92 = arith.constant 1 : index
    %c0_93 = arith.constant 0 : index
    %148 = tpu.strided_load %arg16[%c1_92, %c0_93] {strides = array<i32: 2, 1>} : memref<319x32xf32, #tpu.memory_space<vmem>>, vector<39x32xf32>
    %149 = arith.truncf %148 : vector<39x32xf32> to vector<39x32xbf16>
    %c10 = arith.constant 10 : index
    %c0_94 = arith.constant 0 : index
    %c0_95 = arith.constant 0 : index
    %150 = vector.load %arg3[%c10, %c0_94, %c0_95] : memref<12x32x32xbf16, #tpu.memory_space<vmem>>, vector<1x32x32xbf16>
    %151 = vector.shape_cast %150 : vector<1x32x32xbf16> to vector<32x32xbf16>
    %cst_96 = arith.constant dense<0.000000e+00> : vector<39x32xf32>
    %152 = tpu.matmul %149, %151, %cst_96 {dimension_numbers = #tpu.dot_dimension_numbers<[1], [0], [0], [1], [0, 0, 1, 1], [], []>} : vector<39x32xbf16>, vector<32x32xbf16>, vector<39x32xf32> -> vector<39x32xf32>
    %153 = arith.addf %147, %152 : vector<39x32xf32>
    %c2_97 = arith.constant 2 : index
    %c0_98 = arith.constant 0 : index
    %154 = tpu.strided_load %arg16[%c2_97, %c0_98] {strides = array<i32: 2, 1>} : memref<319x32xf32, #tpu.memory_space<vmem>>, vector<39x32xf32>
    %155 = arith.truncf %154 : vector<39x32xf32> to vector<39x32xbf16>
    %c11 = arith.constant 11 : index
    %c0_99 = arith.constant 0 : index
    %c0_100 = arith.constant 0 : index
    %156 = vector.load %arg3[%c11, %c0_99, %c0_100] : memref<12x32x32xbf16, #tpu.memory_space<vmem>>, vector<1x32x32xbf16>
    %157 = vector.shape_cast %156 : vector<1x32x32xbf16> to vector<32x32xbf16>
    %cst_101 = arith.constant dense<0.000000e+00> : vector<39x32xf32>
    %158 = tpu.matmul %155, %157, %cst_101 {dimension_numbers = #tpu.dot_dimension_numbers<[1], [0], [0], [1], [0, 0, 1, 1], [], []>} : vector<39x32xbf16>, vector<32x32xbf16>, vector<39x32xf32> -> vector<39x32xf32>
    %159 = arith.addf %153, %158 : vector<39x32xf32>
    %cst_102 = arith.constant 5.000000e-01 : f32
    %160 = vector.broadcast %cst_102 : f32 to vector<39x32xf32>
    %161 = arith.mulf %160, %159 : vector<39x32xf32>
    %cst_103 = arith.constant 4.471500e-02 : f32
    %162 = vector.broadcast %cst_103 : f32 to vector<39x32xf32>
    %163 = arith.mulf %162, %159 : vector<39x32xf32>
    %164 = arith.mulf %163, %159 : vector<39x32xf32>
    %165 = arith.mulf %164, %159 : vector<39x32xf32>
    %166 = arith.addf %159, %165 : vector<39x32xf32>
    %cst_104 = arith.constant 0.797884583 : f32
    %167 = vector.broadcast %cst_104 : f32 to vector<39x32xf32>
    %168 = arith.mulf %167, %166 : vector<39x32xf32>
    %169 = math.tanh %168 : vector<39x32xf32>
    %cst_105 = arith.constant 1.000000e+00 : f32
    %170 = vector.broadcast %cst_105 : f32 to vector<39x32xf32>
    %171 = arith.addf %170, %169 : vector<39x32xf32>
    %172 = arith.mulf %161, %171 : vector<39x32xf32>
    %c0_106 = arith.constant 0 : index
    %c0_107 = arith.constant 0 : index
    %173 = vector.load %arg15[%c0_106, %c0_107] : memref<639x32xf32, #tpu.memory_space<vmem>>, vector<39x32xf32>
    tpu.vector_store %arg15[%c0_106, %c0_107], %172 {strides = array<i32>} : memref<639x32xf32, #tpu.memory_space<vmem>>, vector<39x32xf32>,
    %cst_108 = arith.constant 0.000000e+00 : f32
    %174 = vector.broadcast %cst_108 : f32 to vector<19x32xf32>
    %c0_109 = arith.constant 0 : index
    %c0_110 = arith.constant 0 : index
    %175 = tpu.strided_load %arg15[%c0_109, %c0_110] {strides = array<i32: 2, 1>} : memref<639x32xf32, #tpu.memory_space<vmem>>, vector<19x32xf32>
    %176 = arith.truncf %175 : vector<19x32xf32> to vector<19x32xbf16>
    %c0_111 = arith.constant 0 : index
    %c0_112 = arith.constant 0 : index
    %c0_113 = arith.constant 0 : index
    %177 = vector.load %arg4[%c0_111, %c0_112, %c0_113] : memref<4x32x32xbf16, #tpu.memory_space<vmem>>, vector<1x32x32xbf16>
    %178 = vector.shape_cast %177 : vector<1x32x32xbf16> to vector<32x32xbf16>
    %cst_114 = arith.constant dense<0.000000e+00> : vector<19x32xf32>
    %179 = tpu.matmul %176, %178, %cst_114 {dimension_numbers = #tpu.dot_dimension_numbers<[1], [0], [0], [1], [0, 0, 1, 1], [], []>} : vector<19x32xbf16>, vector<32x32xbf16>, vector<19x32xf32> -> vector<19x32xf32>
    %180 = arith.addf %174, %179 : vector<19x32xf32>
    %c1_115 = arith.constant 1 : index
    %c0_116 = arith.constant 0 : index
    %181 = tpu.strided_load %arg15[%c1_115, %c0_116] {strides = array<i32: 2, 1>} : memref<639x32xf32, #tpu.memory_space<vmem>>, vector<19x32xf32>
    %182 = arith.truncf %181 : vector<19x32xf32> to vector<19x32xbf16>
    %c1_117 = arith.constant 1 : index
    %c0_118 = arith.constant 0 : index
    %c0_119 = arith.constant 0 : index
    %183 = vector.load %arg4[%c1_117, %c0_118, %c0_119] : memref<4x32x32xbf16, #tpu.memory_space<vmem>>, vector<1x32x32xbf16>
    %184 = vector.shape_cast %183 : vector<1x32x32xbf16> to vector<32x32xbf16>
    %cst_120 = arith.constant dense<0.000000e+00> : vector<19x32xf32>
    %185 = tpu.matmul %182, %184, %cst_120 {dimension_numbers = #tpu.dot_dimension_numbers<[1], [0], [0], [1], [0, 0, 1, 1], [], []>} : vector<19x32xbf16>, vector<32x32xbf16>, vector<19x32xf32> -> vector<19x32xf32>
    %186 = arith.addf %180, %185 : vector<19x32xf32>
    %cst_121 = arith.constant 5.000000e-01 : f32
    %187 = vector.broadcast %cst_121 : f32 to vector<19x32xf32>
    %188 = arith.mulf %187, %186 : vector<19x32xf32>
    %cst_122 = arith.constant 4.471500e-02 : f32
    %189 = vector.broadcast %cst_122 : f32 to vector<19x32xf32>
    %190 = arith.mulf %189, %186 : vector<19x32xf32>
    %191 = arith.mulf %190, %186 : vector<19x32xf32>
    %192 = arith.mulf %191, %186 : vector<19x32xf32>
    %193 = arith.addf %186, %192 : vector<19x32xf32>
    %cst_123 = arith.constant 0.797884583 : f32
    %194 = vector.broadcast %cst_123 : f32 to vector<19x32xf32>
    %195 = arith.mulf %194, %193 : vector<19x32xf32>
    %196 = math.tanh %195 : vector<19x32xf32>
    %cst_124 = arith.constant 1.000000e+00 : f32
    %197 = vector.broadcast %cst_124 : f32 to vector<19x32xf32>
    %198 = arith.addf %197, %196 : vector<19x32xf32>
    %199 = arith.mulf %188, %198 : vector<19x32xf32>
    %c0_125 = arith.constant 0 : index
    %c0_126 = arith.constant 0 : index
    %200 = vector.load %arg16[%c0_125, %c0_126] : memref<319x32xf32, #tpu.memory_space<vmem>>, vector<19x32xf32>
    tpu.vector_store %arg16[%c0_125, %c0_126], %199 {strides = array<i32>} : memref<319x32xf32, #tpu.memory_space<vmem>>, vector<19x32xf32>,
    %cst_127 = arith.constant 0.000000e+00 : f32
    %201 = vector.broadcast %cst_127 : f32 to vector<9x32xf32>
    %c0_128 = arith.constant 0 : index
    %c0_129 = arith.constant 0 : index
    %202 = tpu.strided_load %arg16[%c0_128, %c0_129] {strides = array<i32: 2, 1>} : memref<319x32xf32, #tpu.memory_space<vmem>>, vector<9x32xf32>
    %203 = arith.truncf %202 : vector<9x32xf32> to vector<9x32xbf16>
    %c2_130 = arith.constant 2 : index
    %c0_131 = arith.constant 0 : index
    %c0_132 = arith.constant 0 : index
    %204 = vector.load %arg4[%c2_130, %c0_131, %c0_132] : memref<4x32x32xbf16, #tpu.memory_space<vmem>>, vector<1x32x32xbf16>
    %205 = vector.shape_cast %204 : vector<1x32x32xbf16> to vector<32x32xbf16>
    %cst_133 = arith.constant dense<0.000000e+00> : vector<9x32xf32>
    %206 = tpu.matmul %203, %205, %cst_133 {dimension_numbers = #tpu.dot_dimension_numbers<[1], [0], [0], [1], [0, 0, 1, 1], [], []>} : vector<9x32xbf16>, vector<32x32xbf16>, vector<9x32xf32> -> vector<9x32xf32>
    %207 = arith.addf %201, %206 : vector<9x32xf32>
    %c1_134 = arith.constant 1 : index
    %c0_135 = arith.constant 0 : index
    %208 = tpu.strided_load %arg16[%c1_134, %c0_135] {strides = array<i32: 2, 1>} : memref<319x32xf32, #tpu.memory_space<vmem>>, vector<9x32xf32>
    %209 = arith.truncf %208 : vector<9x32xf32> to vector<9x32xbf16>
    %c3_136 = arith.constant 3 : index
    %c0_137 = arith.constant 0 : index
    %c0_138 = arith.constant 0 : index
    %210 = vector.load %arg4[%c3_136, %c0_137, %c0_138] : memref<4x32x32xbf16, #tpu.memory_space<vmem>>, vector<1x32x32xbf16>
    %211 = vector.shape_cast %210 : vector<1x32x32xbf16> to vector<32x32xbf16>
    %cst_139 = arith.constant dense<0.000000e+00> : vector<9x32xf32>
    %212 = tpu.matmul %209, %211, %cst_139 {dimension_numbers = #tpu.dot_dimension_numbers<[1], [0], [0], [1], [0, 0, 1, 1], [], []>} : vector<9x32xbf16>, vector<32x32xbf16>, vector<9x32xf32> -> vector<9x32xf32>
    %213 = arith.addf %207, %212 : vector<9x32xf32>
    %cst_140 = arith.constant 5.000000e-01 : f32
    %214 = vector.broadcast %cst_140 : f32 to vector<9x32xf32>
    %215 = arith.mulf %214, %213 : vector<9x32xf32>
    %cst_141 = arith.constant 4.471500e-02 : f32
    %216 = vector.broadcast %cst_141 : f32 to vector<9x32xf32>
    %217 = arith.mulf %216, %213 : vector<9x32xf32>
    %218 = arith.mulf %217, %213 : vector<9x32xf32>
    %219 = arith.mulf %218, %213 : vector<9x32xf32>
    %220 = arith.addf %213, %219 : vector<9x32xf32>
    %cst_142 = arith.constant 0.797884583 : f32
    %221 = vector.broadcast %cst_142 : f32 to vector<9x32xf32>
    %222 = arith.mulf %221, %220 : vector<9x32xf32>
    %223 = math.tanh %222 : vector<9x32xf32>
    %cst_143 = arith.constant 1.000000e+00 : f32
    %224 = vector.broadcast %cst_143 : f32 to vector<9x32xf32>
    %225 = arith.addf %224, %223 : vector<9x32xf32>
    %226 = arith.mulf %215, %225 : vector<9x32xf32>
    %c2_144 = arith.constant 2 : index
    %c0_145 = arith.constant 0 : index
    %227 = vector.load %arg5[%c2_144, %c0_145] : memref<8x32xf32, #tpu.memory_space<vmem>>, vector<1x32xf32>
    %c3_146 = arith.constant 3 : index
    %c0_147 = arith.constant 0 : index
    %228 = vector.load %arg5[%c3_146, %c0_147] : memref<8x32xf32, #tpu.memory_space<vmem>>, vector<1x32xf32>
    %cst_148 = arith.constant dense<0.000000e+00> : vector<9xf32>
    %229 = vector.multi_reduction <add>, %226, %cst_148 [1] : vector<9x32xf32> to vector<9xf32>
    %230 = vector.shape_cast %229 : vector<9xf32> to vector<9x1xf32>
    %cst_149 = arith.constant 3.200000e+01 : f32
    %231 = vector.broadcast %cst_149 : f32 to vector<9x1xf32>
    %232 = arith.divf %230, %231 : vector<9x1xf32>
    %233 = vector.broadcast %232 : vector<9x1xf32> to vector<9x32xf32>
    %234 = arith.subf %226, %233 : vector<9x32xf32>
    %235 = arith.mulf %234, %234 : vector<9x32xf32>
    %cst_150 = arith.constant dense<0.000000e+00> : vector<9xf32>
    %236 = vector.multi_reduction <add>, %235, %cst_150 [1] : vector<9x32xf32> to vector<9xf32>
    %237 = vector.shape_cast %236 : vector<9xf32> to vector<9x1xf32>
    %cst_151 = arith.constant 3.200000e+01 : f32
    %238 = vector.broadcast %cst_151 : f32 to vector<9x1xf32>
    %239 = arith.divf %237, %238 : vector<9x1xf32>
    %240 = vector.broadcast %232 : vector<9x1xf32> to vector<9x32xf32>
    %241 = arith.subf %226, %240 : vector<9x32xf32>
    %cst_152 = arith.constant 9.99999974E-6 : f32
    %242 = vector.broadcast %cst_152 : f32 to vector<9x1xf32>
    %243 = arith.addf %239, %242 : vector<9x1xf32>
    %244 = math.rsqrt %243 : vector<9x1xf32>
    %245 = vector.broadcast %244 : vector<9x1xf32> to vector<9x32xf32>
    %246 = arith.mulf %241, %245 : vector<9x32xf32>
    %247 = vector.broadcast %227 : vector<1x32xf32> to vector<9x32xf32>
    %248 = arith.mulf %246, %247 : vector<9x32xf32>
    %249 = vector.broadcast %228 : vector<1x32xf32> to vector<9x32xf32>
    %250 = arith.addf %248, %249 : vector<9x32xf32>
    %251 = arith.truncf %250 : vector<9x32xf32> to vector<9x32xbf16>
    %c0_153 = arith.constant 0 : index
    %c0_154 = arith.constant 0 : index
    %252 = vector.load %arg6[%c0_153, %c0_154] : memref<32x32xbf16, #tpu.memory_space<vmem>>, vector<32x32xbf16>
    %cst_155 = arith.constant dense<0.000000e+00> : vector<9x32xf32>
    %253 = tpu.matmul %251, %252, %cst_155 {dimension_numbers = #tpu.dot_dimension_numbers<[1], [0], [0], [1], [0, 0, 1, 1], [], []>} : vector<9x32xbf16>, vector<32x32xbf16>, vector<9x32xf32> -> vector<9x32xf32>
    %c4_156 = arith.constant 4 : index
    %c0_157 = arith.constant 0 : index
    %254 = vector.load %arg5[%c4_156, %c0_157] : memref<8x32xf32, #tpu.memory_space<vmem>>, vector<1x32xf32>
    %255 = vector.broadcast %254 : vector<1x32xf32> to vector<9x32xf32>
    %256 = arith.addf %253, %255 : vector<9x32xf32>
    %cst_158 = arith.constant 0.000000e+00 : f32
    %257 = vector.broadcast %cst_158 : f32 to vector<3x32xf32>
    %258 = tpu.concatenate %257, %256, %257 in 0 : vector<3x32xf32>, vector<9x32xf32>, vector<3x32xf32> -> vector<15x32xf32>
    %259 = arith.truncf %258 : vector<15x32xf32> to vector<15x32xbf16>
    %cst_159 = arith.constant 0.000000e+00 : f32
    %260 = vector.broadcast %cst_159 : f32 to vector<9x32xf32>
    %261 = vector.extract_strided_slice %259 {offsets = [0, 0], sizes = [9, 32], strides = [1, 1]} : vector<15x32xbf16> to vector<9x32xbf16>
    %c0_160 = arith.constant 0 : index
    %c0_161 = arith.constant 0 : index
    %c0_162 = arith.constant 0 : index
    %262 = vector.load %arg7[%c0_160, %c0_161, %c0_162] : memref<7x32x32xbf16, #tpu.memory_space<vmem>>, vector<1x32x32xbf16>
    %263 = vector.shape_cast %262 : vector<1x32x32xbf16> to vector<32x32xbf16>
    %cst_163 = arith.constant dense<0.000000e+00> : vector<9x32xf32>
    %264 = tpu.matmul %261, %263, %cst_163 {dimension_numbers = #tpu.dot_dimension_numbers<[1], [0], [0], [1], [0, 0, 1, 1], [], []>} : vector<9x32xbf16>, vector<32x32xbf16>, vector<9x32xf32> -> vector<9x32xf32>
    %265 = arith.addf %260, %264 : vector<9x32xf32>
    %266 = vector.extract_strided_slice %259 {offsets = [1, 0], sizes = [9, 32], strides = [1, 1]} : vector<15x32xbf16> to vector<9x32xbf16>
    %c1_164 = arith.constant 1 : index
    %c0_165 = arith.constant 0 : index
    %c0_166 = arith.constant 0 : index
    %267 = vector.load %arg7[%c1_164, %c0_165, %c0_166] : memref<7x32x32xbf16, #tpu.memory_space<vmem>>, vector<1x32x32xbf16>
    %268 = vector.shape_cast %267 : vector<1x32x32xbf16> to vector<32x32xbf16>
    %cst_167 = arith.constant dense<0.000000e+00> : vector<9x32xf32>
    %269 = tpu.matmul %266, %268, %cst_167 {dimension_numbers = #tpu.dot_dimension_numbers<[1], [0], [0], [1], [0, 0, 1, 1], [], []>} : vector<9x32xbf16>, vector<32x32xbf16>, vector<9x32xf32> -> vector<9x32xf32>
    %270 = arith.addf %265, %269 : vector<9x32xf32>
    %271 = vector.extract_strided_slice %259 {offsets = [2, 0], sizes = [9, 32], strides = [1, 1]} : vector<15x32xbf16> to vector<9x32xbf16>
    %c2_168 = arith.constant 2 : index
    %c0_169 = arith.constant 0 : index
    %c0_170 = arith.constant 0 : index
    %272 = vector.load %arg7[%c2_168, %c0_169, %c0_170] : memref<7x32x32xbf16, #tpu.memory_space<vmem>>, vector<1x32x32xbf16>
    %273 = vector.shape_cast %272 : vector<1x32x32xbf16> to vector<32x32xbf16>
    %cst_171 = arith.constant dense<0.000000e+00> : vector<9x32xf32>
    %274 = tpu.matmul %271, %273, %cst_171 {dimension_numbers = #tpu.dot_dimension_numbers<[1], [0], [0], [1], [0, 0, 1, 1], [], []>} : vector<9x32xbf16>, vector<32x32xbf16>, vector<9x32xf32> -> vector<9x32xf32>
    %275 = arith.addf %270, %274 : vector<9x32xf32>
    %276 = vector.extract_strided_slice %259 {offsets = [3, 0], sizes = [9, 32], strides = [1, 1]} : vector<15x32xbf16> to vector<9x32xbf16>
    %c3_172 = arith.constant 3 : index
    %c0_173 = arith.constant 0 : index
    %c0_174 = arith.constant 0 : index
    %277 = vector.load %arg7[%c3_172, %c0_173, %c0_174] : memref<7x32x32xbf16, #tpu.memory_space<vmem>>, vector<1x32x32xbf16>
    %278 = vector.shape_cast %277 : vector<1x32x32xbf16> to vector<32x32xbf16>
    %cst_175 = arith.constant dense<0.000000e+00> : vector<9x32xf32>
    %279 = tpu.matmul %276, %278, %cst_175 {dimension_numbers = #tpu.dot_dimension_numbers<[1], [0], [0], [1], [0, 0, 1, 1], [], []>} : vector<9x32xbf16>, vector<32x32xbf16>, vector<9x32xf32> -> vector<9x32xf32>
    %280 = arith.addf %275, %279 : vector<9x32xf32>
    %281 = vector.extract_strided_slice %259 {offsets = [4, 0], sizes = [9, 32], strides = [1, 1]} : vector<15x32xbf16> to vector<9x32xbf16>
    %c4_176 = arith.constant 4 : index
    %c0_177 = arith.constant 0 : index
    %c0_178 = arith.constant 0 : index
    %282 = vector.load %arg7[%c4_176, %c0_177, %c0_178] : memref<7x32x32xbf16, #tpu.memory_space<vmem>>, vector<1x32x32xbf16>
    %283 = vector.shape_cast %282 : vector<1x32x32xbf16> to vector<32x32xbf16>
    %cst_179 = arith.constant dense<0.000000e+00> : vector<9x32xf32>
    %284 = tpu.matmul %281, %283, %cst_179 {dimension_numbers = #tpu.dot_dimension_numbers<[1], [0], [0], [1], [0, 0, 1, 1], [], []>} : vector<9x32xbf16>, vector<32x32xbf16>, vector<9x32xf32> -> vector<9x32xf32>
    %285 = arith.addf %280, %284 : vector<9x32xf32>
    %286 = vector.extract_strided_slice %259 {offsets = [5, 0], sizes = [9, 32], strides = [1, 1]} : vector<15x32xbf16> to vector<9x32xbf16>
    %c5_180 = arith.constant 5 : index
    %c0_181 = arith.constant 0 : index
    %c0_182 = arith.constant 0 : index
    %287 = vector.load %arg7[%c5_180, %c0_181, %c0_182] : memref<7x32x32xbf16, #tpu.memory_space<vmem>>, vector<1x32x32xbf16>
    %288 = vector.shape_cast %287 : vector<1x32x32xbf16> to vector<32x32xbf16>
    %cst_183 = arith.constant dense<0.000000e+00> : vector<9x32xf32>
    %289 = tpu.matmul %286, %288, %cst_183 {dimension_numbers = #tpu.dot_dimension_numbers<[1], [0], [0], [1], [0, 0, 1, 1], [], []>} : vector<9x32xbf16>, vector<32x32xbf16>, vector<9x32xf32> -> vector<9x32xf32>
    %290 = arith.addf %285, %289 : vector<9x32xf32>
    %291 = vector.extract_strided_slice %259 {offsets = [6, 0], sizes = [9, 32], strides = [1, 1]} : vector<15x32xbf16> to vector<9x32xbf16>
    %c6_184 = arith.constant 6 : index
    %c0_185 = arith.constant 0 : index
    %c0_186 = arith.constant 0 : index
    %292 = vector.load %arg7[%c6_184, %c0_185, %c0_186] : memref<7x32x32xbf16, #tpu.memory_space<vmem>>, vector<1x32x32xbf16>
    %293 = vector.shape_cast %292 : vector<1x32x32xbf16> to vector<32x32xbf16>
    %cst_187 = arith.constant dense<0.000000e+00> : vector<9x32xf32>
    %294 = tpu.matmul %291, %293, %cst_187 {dimension_numbers = #tpu.dot_dimension_numbers<[1], [0], [0], [1], [0, 0, 1, 1], [], []>} : vector<9x32xbf16>, vector<32x32xbf16>, vector<9x32xf32> -> vector<9x32xf32>
    %295 = arith.addf %290, %294 : vector<9x32xf32>
    %c5_188 = arith.constant 5 : index
    %c0_189 = arith.constant 0 : index
    %296 = vector.load %arg5[%c5_188, %c0_189] : memref<8x32xf32, #tpu.memory_space<vmem>>, vector<1x32xf32>
    %297 = vector.broadcast %296 : vector<1x32xf32> to vector<9x32xf32>
    %298 = arith.addf %295, %297 : vector<9x32xf32>
    %cst_190 = arith.constant 5.000000e-01 : f32
    %299 = vector.broadcast %cst_190 : f32 to vector<9x32xf32>
    %300 = arith.mulf %299, %298 : vector<9x32xf32>
    %cst_191 = arith.constant 4.471500e-02 : f32
    %301 = vector.broadcast %cst_191 : f32 to vector<9x32xf32>
    %302 = arith.mulf %301, %298 : vector<9x32xf32>
    %303 = arith.mulf %302, %298 : vector<9x32xf32>
    %304 = arith.mulf %303, %298 : vector<9x32xf32>
    %305 = arith.addf %298, %304 : vector<9x32xf32>
    %cst_192 = arith.constant 0.797884583 : f32
    %306 = vector.broadcast %cst_192 : f32 to vector<9x32xf32>
    %307 = arith.mulf %306, %305 : vector<9x32xf32>
    %308 = math.tanh %307 : vector<9x32xf32>
    %cst_193 = arith.constant 1.000000e+00 : f32
    %309 = vector.broadcast %cst_193 : f32 to vector<9x32xf32>
    %310 = arith.addf %309, %308 : vector<9x32xf32>
    %311 = arith.mulf %300, %310 : vector<9x32xf32>
    %312 = arith.addf %256, %311 : vector<9x32xf32>
    %c6_194 = arith.constant 6 : index
    %c0_195 = arith.constant 0 : index
    %313 = vector.load %arg5[%c6_194, %c0_195] : memref<8x32xf32, #tpu.memory_space<vmem>>, vector<1x32xf32>
    %c7_196 = arith.constant 7 : index
    %c0_197 = arith.constant 0 : index
    %314 = vector.load %arg5[%c7_196, %c0_197] : memref<8x32xf32, #tpu.memory_space<vmem>>, vector<1x32xf32>
    %cst_198 = arith.constant dense<0.000000e+00> : vector<9xf32>
    %315 = vector.multi_reduction <add>, %312, %cst_198 [1] : vector<9x32xf32> to vector<9xf32>
    %316 = vector.shape_cast %315 : vector<9xf32> to vector<9x1xf32>
    %cst_199 = arith.constant 3.200000e+01 : f32
    %317 = vector.broadcast %cst_199 : f32 to vector<9x1xf32>
    %318 = arith.divf %316, %317 : vector<9x1xf32>
    %319 = vector.broadcast %318 : vector<9x1xf32> to vector<9x32xf32>
    %320 = arith.subf %312, %319 : vector<9x32xf32>
    %321 = arith.mulf %320, %320 : vector<9x32xf32>
    %cst_200 = arith.constant dense<0.000000e+00> : vector<9xf32>
    %322 = vector.multi_reduction <add>, %321, %cst_200 [1] : vector<9x32xf32> to vector<9xf32>
    %323 = vector.shape_cast %322 : vector<9xf32> to vector<9x1xf32>
    %cst_201 = arith.constant 3.200000e+01 : f32
    %324 = vector.broadcast %cst_201 : f32 to vector<9x1xf32>
    %325 = arith.divf %323, %324 : vector<9x1xf32>
    %326 = vector.broadcast %318 : vector<9x1xf32> to vector<9x32xf32>
    %327 = arith.subf %312, %326 : vector<9x32xf32>
    %cst_202 = arith.constant 9.99999974E-6 : f32
    %328 = vector.broadcast %cst_202 : f32 to vector<9x1xf32>
    %329 = arith.addf %325, %328 : vector<9x1xf32>
    %330 = math.rsqrt %329 : vector<9x1xf32>
    %331 = vector.broadcast %330 : vector<9x1xf32> to vector<9x32xf32>
    %332 = arith.mulf %327, %331 : vector<9x32xf32>
    %333 = vector.broadcast %313 : vector<1x32xf32> to vector<9x32xf32>
    %334 = arith.mulf %332, %333 : vector<9x32xf32>
    %335 = vector.broadcast %314 : vector<1x32xf32> to vector<9x32xf32>
    %336 = arith.addf %334, %335 : vector<9x32xf32>
    %337 = arith.truncf %336 : vector<9x32xf32> to vector<9x32xbf16>
    %c0_203 = arith.constant 0 : index
    %c0_204 = arith.constant 0 : index
    %c0_205 = arith.constant 0 : index
    %338 = vector.load %arg9[%c0_203, %c0_204, %c0_205] : memref<2x32x96xbf16, #tpu.memory_space<vmem>>, vector<1x32x96xbf16>
    %339 = vector.shape_cast %338 : vector<1x32x96xbf16> to vector<32x96xbf16>
    %cst_206 = arith.constant dense<0.000000e+00> : vector<9x96xf32>
    %340 = tpu.matmul %337, %339, %cst_206 {dimension_numbers = #tpu.dot_dimension_numbers<[1], [0], [0], [1], [0, 0, 1, 1], [], []>} : vector<9x32xbf16>, vector<32x96xbf16>, vector<9x96xf32> -> vector<9x96xf32>
    %c0_207 = arith.constant 0 : index
    %c0_208 = arith.constant 0 : index
    %341 = vector.load %arg13[%c0_207, %c0_208] : memref<2x352xf32, #tpu.memory_space<vmem>>, vector<1x96xf32>
    %342 = vector.broadcast %341 : vector<1x96xf32> to vector<9x96xf32>
    %343 = arith.addf %340, %342 : vector<9x96xf32>
    %344 = vector.extract_strided_slice %343 {offsets = [0, 0], sizes = [9, 8], strides = [1, 1]} : vector<9x96xf32> to vector<9x8xf32>
    %cst_209 = arith.constant 0.353553385 : f32
    %345 = vector.broadcast %cst_209 : f32 to vector<9x8xf32>
    %346 = arith.mulf %344, %345 : vector<9x8xf32>
    %347 = arith.truncf %346 : vector<9x8xf32> to vector<9x8xbf16>
    %348 = vector.extract_strided_slice %343 {offsets = [0, 32], sizes = [9, 8], strides = [1, 1]} : vector<9x96xf32> to vector<9x8xf32>
    %349 = arith.truncf %348 : vector<9x8xf32> to vector<9x8xbf16>
    %350 = vector.extract_strided_slice %343 {offsets = [0, 64], sizes = [9, 8], strides = [1, 1]} : vector<9x96xf32> to vector<9x8xf32>
    %351 = arith.truncf %350 : vector<9x8xf32> to vector<9x8xbf16>
    %cst_210 = arith.constant dense<0.000000e+00> : vector<9x9xf32>
    %352 = tpu.matmul %347, %349, %cst_210 {dimension_numbers = #tpu.dot_dimension_numbers<[1], [1], [0], [0], [0, 0, 1, 0], [], []>} : vector<9x8xbf16>, vector<9x8xbf16>, vector<9x9xf32> -> vector<9x9xf32>
    %c0_211 = arith.constant 0 : index
    %c0_212 = arith.constant 0 : index
    %c0_213 = arith.constant 0 : index
    %353 = vector.load %arg8[%c0_211, %c0_212, %c0_213] : memref<4x9x9xf32, #tpu.memory_space<vmem>>, vector<1x9x9xf32>
    %354 = vector.shape_cast %353 : vector<1x9x9xf32> to vector<9x9xf32>
    %355 = arith.addf %352, %354 : vector<9x9xf32>
    %cst_214 = arith.constant dense<0xFF800000> : vector<9xf32>
    %356 = vector.multi_reduction <maximumf>, %355, %cst_214 [1] : vector<9x9xf32> to vector<9xf32>
    %357 = vector.shape_cast %356 : vector<9xf32> to vector<9x1xf32>
    %358 = vector.broadcast %357 : vector<9x1xf32> to vector<9x9xf32>
    %359 = arith.subf %355, %358 : vector<9x9xf32>
    %360 = math.exp %359 : vector<9x9xf32>
    %cst_215 = arith.constant dense<0.000000e+00> : vector<9xf32>
    %361 = vector.multi_reduction <add>, %360, %cst_215 [1] : vector<9x9xf32> to vector<9xf32>
    %362 = vector.shape_cast %361 : vector<9xf32> to vector<9x1xf32>
    %363 = vector.broadcast %362 : vector<9x1xf32> to vector<9x9xf32>
    %364 = arith.divf %360, %363 : vector<9x9xf32>
    %365 = arith.truncf %364 : vector<9x9xf32> to vector<9x9xbf16>
    %cst_216 = arith.constant dense<0.000000e+00> : vector<9x8xf32>
    %366 = tpu.matmul %365, %351, %cst_216 {dimension_numbers = #tpu.dot_dimension_numbers<[1], [0], [0], [1], [0, 0, 1, 1], [], []>} : vector<9x9xbf16>, vector<9x8xbf16>, vector<9x8xf32> -> vector<9x8xf32>
    %367 = vector.extract_strided_slice %343 {offsets = [0, 8], sizes = [9, 8], strides = [1, 1]} : vector<9x96xf32> to vector<9x8xf32>
    %cst_217 = arith.constant 0.353553385 : f32
    %368 = vector.broadcast %cst_217 : f32 to vector<9x8xf32>
    %369 = arith.mulf %367, %368 : vector<9x8xf32>
    %370 = arith.truncf %369 : vector<9x8xf32> to vector<9x8xbf16>
    %371 = vector.extract_strided_slice %343 {offsets = [0, 40], sizes = [9, 8], strides = [1, 1]} : vector<9x96xf32> to vector<9x8xf32>
    %372 = arith.truncf %371 : vector<9x8xf32> to vector<9x8xbf16>
    %373 = vector.extract_strided_slice %343 {offsets = [0, 72], sizes = [9, 8], strides = [1, 1]} : vector<9x96xf32> to vector<9x8xf32>
    %374 = arith.truncf %373 : vector<9x8xf32> to vector<9x8xbf16>
    %cst_218 = arith.constant dense<0.000000e+00> : vector<9x9xf32>
    %375 = tpu.matmul %370, %372, %cst_218 {dimension_numbers = #tpu.dot_dimension_numbers<[1], [1], [0], [0], [0, 0, 1, 0], [], []>} : vector<9x8xbf16>, vector<9x8xbf16>, vector<9x9xf32> -> vector<9x9xf32>
    %c1_219 = arith.constant 1 : index
    %c0_220 = arith.constant 0 : index
    %c0_221 = arith.constant 0 : index
    %376 = vector.load %arg8[%c1_219, %c0_220, %c0_221] : memref<4x9x9xf32, #tpu.memory_space<vmem>>, vector<1x9x9xf32>
    %377 = vector.shape_cast %376 : vector<1x9x9xf32> to vector<9x9xf32>
    %378 = arith.addf %375, %377 : vector<9x9xf32>
    %cst_222 = arith.constant dense<0xFF800000> : vector<9xf32>
    %379 = vector.multi_reduction <maximumf>, %378, %cst_222 [1] : vector<9x9xf32> to vector<9xf32>
    %380 = vector.shape_cast %379 : vector<9xf32> to vector<9x1xf32>
    %381 = vector.broadcast %380 : vector<9x1xf32> to vector<9x9xf32>
    %382 = arith.subf %378, %381 : vector<9x9xf32>
    %383 = math.exp %382 : vector<9x9xf32>
    %cst_223 = arith.constant dense<0.000000e+00> : vector<9xf32>
    %384 = vector.multi_reduction <add>, %383, %cst_223 [1] : vector<9x9xf32> to vector<9xf32>
    %385 = vector.shape_cast %384 : vector<9xf32> to vector<9x1xf32>
    %386 = vector.broadcast %385 : vector<9x1xf32> to vector<9x9xf32>
    %387 = arith.divf %383, %386 : vector<9x9xf32>
    %388 = arith.truncf %387 : vector<9x9xf32> to vector<9x9xbf16>
    %cst_224 = arith.constant dense<0.000000e+00> : vector<9x8xf32>
    %389 = tpu.matmul %388, %374, %cst_224 {dimension_numbers = #tpu.dot_dimension_numbers<[1], [0], [0], [1], [0, 0, 1, 1], [], []>} : vector<9x9xbf16>, vector<9x8xbf16>, vector<9x8xf32> -> vector<9x8xf32>
    %390 = vector.extract_strided_slice %343 {offsets = [0, 16], sizes = [9, 8], strides = [1, 1]} : vector<9x96xf32> to vector<9x8xf32>
    %cst_225 = arith.constant 0.353553385 : f32
    %391 = vector.broadcast %cst_225 : f32 to vector<9x8xf32>
    %392 = arith.mulf %390, %391 : vector<9x8xf32>
    %393 = arith.truncf %392 : vector<9x8xf32> to vector<9x8xbf16>
    %394 = vector.extract_strided_slice %343 {offsets = [0, 48], sizes = [9, 8], strides = [1, 1]} : vector<9x96xf32> to vector<9x8xf32>
    %395 = arith.truncf %394 : vector<9x8xf32> to vector<9x8xbf16>
    %396 = vector.extract_strided_slice %343 {offsets = [0, 80], sizes = [9, 8], strides = [1, 1]} : vector<9x96xf32> to vector<9x8xf32>
    %397 = arith.truncf %396 : vector<9x8xf32> to vector<9x8xbf16>
    %cst_226 = arith.constant dense<0.000000e+00> : vector<9x9xf32>
    %398 = tpu.matmul %393, %395, %cst_226 {dimension_numbers = #tpu.dot_dimension_numbers<[1], [1], [0], [0], [0, 0, 1, 0], [], []>} : vector<9x8xbf16>, vector<9x8xbf16>, vector<9x9xf32> -> vector<9x9xf32>
    %c2_227 = arith.constant 2 : index
    %c0_228 = arith.constant 0 : index
    %c0_229 = arith.constant 0 : index
    %399 = vector.load %arg8[%c2_227, %c0_228, %c0_229] : memref<4x9x9xf32, #tpu.memory_space<vmem>>, vector<1x9x9xf32>
    %400 = vector.shape_cast %399 : vector<1x9x9xf32> to vector<9x9xf32>
    %401 = arith.addf %398, %400 : vector<9x9xf32>
    %cst_230 = arith.constant dense<0xFF800000> : vector<9xf32>
    %402 = vector.multi_reduction <maximumf>, %401, %cst_230 [1] : vector<9x9xf32> to vector<9xf32>
    %403 = vector.shape_cast %402 : vector<9xf32> to vector<9x1xf32>
    %404 = vector.broadcast %403 : vector<9x1xf32> to vector<9x9xf32>
    %405 = arith.subf %401, %404 : vector<9x9xf32>
    %406 = math.exp %405 : vector<9x9xf32>
    %cst_231 = arith.constant dense<0.000000e+00> : vector<9xf32>
    %407 = vector.multi_reduction <add>, %406, %cst_231 [1] : vector<9x9xf32> to vector<9xf32>
    %408 = vector.shape_cast %407 : vector<9xf32> to vector<9x1xf32>
    %409 = vector.broadcast %408 : vector<9x1xf32> to vector<9x9xf32>
    %410 = arith.divf %406, %409 : vector<9x9xf32>
    %411 = arith.truncf %410 : vector<9x9xf32> to vector<9x9xbf16>
    %cst_232 = arith.constant dense<0.000000e+00> : vector<9x8xf32>
    %412 = tpu.matmul %411, %397, %cst_232 {dimension_numbers = #tpu.dot_dimension_numbers<[1], [0], [0], [1], [0, 0, 1, 1], [], []>} : vector<9x9xbf16>, vector<9x8xbf16>, vector<9x8xf32> -> vector<9x8xf32>
    %413 = vector.extract_strided_slice %343 {offsets = [0, 24], sizes = [9, 8], strides = [1, 1]} : vector<9x96xf32> to vector<9x8xf32>
    %cst_233 = arith.constant 0.353553385 : f32
    %414 = vector.broadcast %cst_233 : f32 to vector<9x8xf32>
    %415 = arith.mulf %413, %414 : vector<9x8xf32>
    %416 = arith.truncf %415 : vector<9x8xf32> to vector<9x8xbf16>
    %417 = vector.extract_strided_slice %343 {offsets = [0, 56], sizes = [9, 8], strides = [1, 1]} : vector<9x96xf32> to vector<9x8xf32>
    %418 = arith.truncf %417 : vector<9x8xf32> to vector<9x8xbf16>
    %419 = vector.extract_strided_slice %343 {offsets = [0, 88], sizes = [9, 8], strides = [1, 1]} : vector<9x96xf32> to vector<9x8xf32>
    %420 = arith.truncf %419 : vector<9x8xf32> to vector<9x8xbf16>
    %cst_234 = arith.constant dense<0.000000e+00> : vector<9x9xf32>
    %421 = tpu.matmul %416, %418, %cst_234 {dimension_numbers = #tpu.dot_dimension_numbers<[1], [1], [0], [0], [0, 0, 1, 0], [], []>} : vector<9x8xbf16>, vector<9x8xbf16>, vector<9x9xf32> -> vector<9x9xf32>
    %c3_235 = arith.constant 3 : index
    %c0_236 = arith.constant 0 : index
    %c0_237 = arith.constant 0 : index
    %422 = vector.load %arg8[%c3_235, %c0_236, %c0_237] : memref<4x9x9xf32, #tpu.memory_space<vmem>>, vector<1x9x9xf32>
    %423 = vector.shape_cast %422 : vector<1x9x9xf32> to vector<9x9xf32>
    %424 = arith.addf %421, %423 : vector<9x9xf32>
    %cst_238 = arith.constant dense<0xFF800000> : vector<9xf32>
    %425 = vector.multi_reduction <maximumf>, %424, %cst_238 [1] : vector<9x9xf32> to vector<9xf32>
    %426 = vector.shape_cast %425 : vector<9xf32> to vector<9x1xf32>
    %427 = vector.broadcast %426 : vector<9x1xf32> to vector<9x9xf32>
    %428 = arith.subf %424, %427 : vector<9x9xf32>
    %429 = math.exp %428 : vector<9x9xf32>
    %cst_239 = arith.constant dense<0.000000e+00> : vector<9xf32>
    %430 = vector.multi_reduction <add>, %429, %cst_239 [1] : vector<9x9xf32> to vector<9xf32>
    %431 = vector.shape_cast %430 : vector<9xf32> to vector<9x1xf32>
    %432 = vector.broadcast %431 : vector<9x1xf32> to vector<9x9xf32>
    %433 = arith.divf %429, %432 : vector<9x9xf32>
    %434 = arith.truncf %433 : vector<9x9xf32> to vector<9x9xbf16>
    %cst_240 = arith.constant dense<0.000000e+00> : vector<9x8xf32>
    %435 = tpu.matmul %434, %420, %cst_240 {dimension_numbers = #tpu.dot_dimension_numbers<[1], [0], [0], [1], [0, 0, 1, 1], [], []>} : vector<9x9xbf16>, vector<9x8xbf16>, vector<9x8xf32> -> vector<9x8xf32>
    %436 = tpu.concatenate %366, %389, %412, %435 in 1 : vector<9x8xf32>, vector<9x8xf32>, vector<9x8xf32>, vector<9x8xf32> -> vector<9x32xf32>
    %437 = arith.truncf %436 : vector<9x32xf32> to vector<9x32xbf16>
    %c0_241 = arith.constant 0 : index
    %c0_242 = arith.constant 0 : index
    %c0_243 = arith.constant 0 : index
    %438 = vector.load %arg10[%c0_241, %c0_242, %c0_243] : memref<2x32x32xbf16, #tpu.memory_space<vmem>>, vector<1x32x32xbf16>
    %439 = vector.shape_cast %438 : vector<1x32x32xbf16> to vector<32x32xbf16>
    %cst_244 = arith.constant dense<0.000000e+00> : vector<9x32xf32>
    %440 = tpu.matmul %437, %439, %cst_244 {dimension_numbers = #tpu.dot_dimension_numbers<[1], [0], [0], [1], [0, 0, 1, 1], [], []>} : vector<9x32xbf16>, vector<32x32xbf16>, vector<9x32xf32> -> vector<9x32xf32>
    %c0_245 = arith.constant 0 : index
    %c96 = arith.constant 96 : index
    %441 = vector.load %arg13[%c0_245, %c96] : memref<2x352xf32, #tpu.memory_space<vmem>>, vector<1x32xf32>
    %442 = vector.broadcast %441 : vector<1x32xf32> to vector<9x32xf32>
    %443 = arith.addf %440, %442 : vector<9x32xf32>
    %444 = arith.addf %336, %443 : vector<9x32xf32>
    %c0_246 = arith.constant 0 : index
    %c128 = arith.constant 128 : index
    %445 = vector.load %arg13[%c0_246, %c128] : memref<2x352xf32, #tpu.memory_space<vmem>>, vector<1x32xf32>
    %c0_247 = arith.constant 0 : index
    %c160 = arith.constant 160 : index
    %446 = vector.load %arg13[%c0_247, %c160] : memref<2x352xf32, #tpu.memory_space<vmem>>, vector<1x32xf32>
    %cst_248 = arith.constant dense<0.000000e+00> : vector<9xf32>
    %447 = vector.multi_reduction <add>, %444, %cst_248 [1] : vector<9x32xf32> to vector<9xf32>
    %448 = vector.shape_cast %447 : vector<9xf32> to vector<9x1xf32>
    %cst_249 = arith.constant 3.200000e+01 : f32
    %449 = vector.broadcast %cst_249 : f32 to vector<9x1xf32>
    %450 = arith.divf %448, %449 : vector<9x1xf32>
    %451 = vector.broadcast %450 : vector<9x1xf32> to vector<9x32xf32>
    %452 = arith.subf %444, %451 : vector<9x32xf32>
    %453 = arith.mulf %452, %452 : vector<9x32xf32>
    %cst_250 = arith.constant dense<0.000000e+00> : vector<9xf32>
    %454 = vector.multi_reduction <add>, %453, %cst_250 [1] : vector<9x32xf32> to vector<9xf32>
    %455 = vector.shape_cast %454 : vector<9xf32> to vector<9x1xf32>
    %cst_251 = arith.constant 3.200000e+01 : f32
    %456 = vector.broadcast %cst_251 : f32 to vector<9x1xf32>
    %457 = arith.divf %455, %456 : vector<9x1xf32>
    %458 = vector.broadcast %450 : vector<9x1xf32> to vector<9x32xf32>
    %459 = arith.subf %444, %458 : vector<9x32xf32>
    %cst_252 = arith.constant 9.99999974E-6 : f32
    %460 = vector.broadcast %cst_252 : f32 to vector<9x1xf32>
    %461 = arith.addf %457, %460 : vector<9x1xf32>
    %462 = math.rsqrt %461 : vector<9x1xf32>
    %463 = vector.broadcast %462 : vector<9x1xf32> to vector<9x32xf32>
    %464 = arith.mulf %459, %463 : vector<9x32xf32>
    %465 = vector.broadcast %445 : vector<1x32xf32> to vector<9x32xf32>
    %466 = arith.mulf %464, %465 : vector<9x32xf32>
    %467 = vector.broadcast %446 : vector<1x32xf32> to vector<9x32xf32>
    %468 = arith.addf %466, %467 : vector<9x32xf32>
    %469 = arith.truncf %468 : vector<9x32xf32> to vector<9x32xbf16>
    %c0_253 = arith.constant 0 : index
    %c0_254 = arith.constant 0 : index
    %c0_255 = arith.constant 0 : index
    %470 = vector.load %arg11[%c0_253, %c0_254, %c0_255] : memref<2x32x64xbf16, #tpu.memory_space<vmem>>, vector<1x32x64xbf16>
    %471 = vector.shape_cast %470 : vector<1x32x64xbf16> to vector<32x64xbf16>
    %cst_256 = arith.constant dense<0.000000e+00> : vector<9x64xf32>
    %472 = tpu.matmul %469, %471, %cst_256 {dimension_numbers = #tpu.dot_dimension_numbers<[1], [0], [0], [1], [0, 0, 1, 1], [], []>} : vector<9x32xbf16>, vector<32x64xbf16>, vector<9x64xf32> -> vector<9x64xf32>
    %c0_257 = arith.constant 0 : index
    %c192 = arith.constant 192 : index
    %473 = vector.load %arg13[%c0_257, %c192] : memref<2x352xf32, #tpu.memory_space<vmem>>, vector<1x64xf32>
    %474 = vector.broadcast %473 : vector<1x64xf32> to vector<9x64xf32>
    %475 = arith.addf %472, %474 : vector<9x64xf32>
    %cst_258 = arith.constant 5.000000e-01 : f32
    %476 = vector.broadcast %cst_258 : f32 to vector<9x64xf32>
    %477 = arith.mulf %476, %475 : vector<9x64xf32>
    %cst_259 = arith.constant 4.471500e-02 : f32
    %478 = vector.broadcast %cst_259 : f32 to vector<9x64xf32>
    %479 = arith.mulf %478, %475 : vector<9x64xf32>
    %480 = arith.mulf %479, %475 : vector<9x64xf32>
    %481 = arith.mulf %480, %475 : vector<9x64xf32>
    %482 = arith.addf %475, %481 : vector<9x64xf32>
    %cst_260 = arith.constant 0.797884583 : f32
    %483 = vector.broadcast %cst_260 : f32 to vector<9x64xf32>
    %484 = arith.mulf %483, %482 : vector<9x64xf32>
    %485 = math.tanh %484 : vector<9x64xf32>
    %cst_261 = arith.constant 1.000000e+00 : f32
    %486 = vector.broadcast %cst_261 : f32 to vector<9x64xf32>
    %487 = arith.addf %486, %485 : vector<9x64xf32>
    %488 = arith.mulf %477, %487 : vector<9x64xf32>
    %489 = arith.truncf %488 : vector<9x64xf32> to vector<9x64xbf16>
    %c0_262 = arith.constant 0 : index
    %c0_263 = arith.constant 0 : index
    %c0_264 = arith.constant 0 : index
    %490 = vector.load %arg12[%c0_262, %c0_263, %c0_264] : memref<2x64x32xbf16, #tpu.memory_space<vmem>>, vector<1x64x32xbf16>
    %491 = vector.shape_cast %490 : vector<1x64x32xbf16> to vector<64x32xbf16>
    %cst_265 = arith.constant dense<0.000000e+00> : vector<9x32xf32>
    %492 = tpu.matmul %489, %491, %cst_265 {dimension_numbers = #tpu.dot_dimension_numbers<[1], [0], [0], [1], [0, 0, 1, 1], [], []>} : vector<9x64xbf16>, vector<64x32xbf16>, vector<9x32xf32> -> vector<9x32xf32>
    %c0_266 = arith.constant 0 : index
    %c256 = arith.constant 256 : index
    %493 = vector.load %arg13[%c0_266, %c256] : memref<2x352xf32, #tpu.memory_space<vmem>>, vector<1x32xf32>
    %494 = vector.broadcast %493 : vector<1x32xf32> to vector<9x32xf32>
    %495 = arith.addf %492, %494 : vector<9x32xf32>
    %496 = arith.addf %468, %495 : vector<9x32xf32>
    %c0_267 = arith.constant 0 : index
    %c288 = arith.constant 288 : index
    %497 = vector.load %arg13[%c0_267, %c288] : memref<2x352xf32, #tpu.memory_space<vmem>>, vector<1x32xf32>
    %c0_268 = arith.constant 0 : index
    %c320 = arith.constant 320 : index
    %498 = vector.load %arg13[%c0_268, %c320] : memref<2x352xf32, #tpu.memory_space<vmem>>, vector<1x32xf32>
    %cst_269 = arith.constant dense<0.000000e+00> : vector<9xf32>
    %499 = vector.multi_reduction <add>, %496, %cst_269 [1] : vector<9x32xf32> to vector<9xf32>
    %500 = vector.shape_cast %499 : vector<9xf32> to vector<9x1xf32>
    %cst_270 = arith.constant 3.200000e+01 : f32
    %501 = vector.broadcast %cst_270 : f32 to vector<9x1xf32>
    %502 = arith.divf %500, %501 : vector<9x1xf32>
    %503 = vector.broadcast %502 : vector<9x1xf32> to vector<9x32xf32>
    %504 = arith.subf %496, %503 : vector<9x32xf32>
    %505 = arith.mulf %504, %504 : vector<9x32xf32>
    %cst_271 = arith.constant dense<0.000000e+00> : vector<9xf32>
    %506 = vector.multi_reduction <add>, %505, %cst_271 [1] : vector<9x32xf32> to vector<9xf32>
    %507 = vector.shape_cast %506 : vector<9xf32> to vector<9x1xf32>
    %cst_272 = arith.constant 3.200000e+01 : f32
    %508 = vector.broadcast %cst_272 : f32 to vector<9x1xf32>
    %509 = arith.divf %507, %508 : vector<9x1xf32>
    %510 = vector.broadcast %502 : vector<9x1xf32> to vector<9x32xf32>
    %511 = arith.subf %496, %510 : vector<9x32xf32>
    %cst_273 = arith.constant 9.99999974E-6 : f32
    %512 = vector.broadcast %cst_273 : f32 to vector<9x1xf32>
    %513 = arith.addf %509, %512 : vector<9x1xf32>
    %514 = math.rsqrt %513 : vector<9x1xf32>
    %515 = vector.broadcast %514 : vector<9x1xf32> to vector<9x32xf32>
    %516 = arith.mulf %511, %515 : vector<9x32xf32>
    %517 = vector.broadcast %497 : vector<1x32xf32> to vector<9x32xf32>
    %518 = arith.mulf %516, %517 : vector<9x32xf32>
    %519 = vector.broadcast %498 : vector<1x32xf32> to vector<9x32xf32>
    %520 = arith.addf %518, %519 : vector<9x32xf32>
    %521 = arith.truncf %520 : vector<9x32xf32> to vector<9x32xbf16>
    %c1_274 = arith.constant 1 : index
    %c0_275 = arith.constant 0 : index
    %c0_276 = arith.constant 0 : index
    %522 = vector.load %arg9[%c1_274, %c0_275, %c0_276] : memref<2x32x96xbf16, #tpu.memory_space<vmem>>, vector<1x32x96xbf16>
    %523 = vector.shape_cast %522 : vector<1x32x96xbf16> to vector<32x96xbf16>
    %cst_277 = arith.constant dense<0.000000e+00> : vector<9x96xf32>
    %524 = tpu.matmul %521, %523, %cst_277 {dimension_numbers = #tpu.dot_dimension_numbers<[1], [0], [0], [1], [0, 0, 1, 1], [], []>} : vector<9x32xbf16>, vector<32x96xbf16>, vector<9x96xf32> -> vector<9x96xf32>
    %c1_278 = arith.constant 1 : index
    %c0_279 = arith.constant 0 : index
    %525 = vector.load %arg13[%c1_278, %c0_279] : memref<2x352xf32, #tpu.memory_space<vmem>>, vector<1x96xf32>
    %526 = vector.broadcast %525 : vector<1x96xf32> to vector<9x96xf32>
    %527 = arith.addf %524, %526 : vector<9x96xf32>
    %528 = vector.extract_strided_slice %527 {offsets = [0, 0], sizes = [9, 8], strides = [1, 1]} : vector<9x96xf32> to vector<9x8xf32>
    %cst_280 = arith.constant 0.353553385 : f32
    %529 = vector.broadcast %cst_280 : f32 to vector<9x8xf32>
    %530 = arith.mulf %528, %529 : vector<9x8xf32>
    %531 = arith.truncf %530 : vector<9x8xf32> to vector<9x8xbf16>
    %532 = vector.extract_strided_slice %527 {offsets = [0, 32], sizes = [9, 8], strides = [1, 1]} : vector<9x96xf32> to vector<9x8xf32>
    %533 = arith.truncf %532 : vector<9x8xf32> to vector<9x8xbf16>
    %534 = vector.extract_strided_slice %527 {offsets = [0, 64], sizes = [9, 8], strides = [1, 1]} : vector<9x96xf32> to vector<9x8xf32>
    %535 = arith.truncf %534 : vector<9x8xf32> to vector<9x8xbf16>
    %cst_281 = arith.constant dense<0.000000e+00> : vector<9x9xf32>
    %536 = tpu.matmul %531, %533, %cst_281 {dimension_numbers = #tpu.dot_dimension_numbers<[1], [1], [0], [0], [0, 0, 1, 0], [], []>} : vector<9x8xbf16>, vector<9x8xbf16>, vector<9x9xf32> -> vector<9x9xf32>
    %c0_282 = arith.constant 0 : index
    %c0_283 = arith.constant 0 : index
    %c0_284 = arith.constant 0 : index
    %537 = vector.load %arg8[%c0_282, %c0_283, %c0_284] : memref<4x9x9xf32, #tpu.memory_space<vmem>>, vector<1x9x9xf32>
    %538 = vector.shape_cast %537 : vector<1x9x9xf32> to vector<9x9xf32>
    %539 = arith.addf %536, %538 : vector<9x9xf32>
    %cst_285 = arith.constant dense<0xFF800000> : vector<9xf32>
    %540 = vector.multi_reduction <maximumf>, %539, %cst_285 [1] : vector<9x9xf32> to vector<9xf32>
    %541 = vector.shape_cast %540 : vector<9xf32> to vector<9x1xf32>
    %542 = vector.broadcast %541 : vector<9x1xf32> to vector<9x9xf32>
    %543 = arith.subf %539, %542 : vector<9x9xf32>
    %544 = math.exp %543 : vector<9x9xf32>
    %cst_286 = arith.constant dense<0.000000e+00> : vector<9xf32>
    %545 = vector.multi_reduction <add>, %544, %cst_286 [1] : vector<9x9xf32> to vector<9xf32>
    %546 = vector.shape_cast %545 : vector<9xf32> to vector<9x1xf32>
    %547 = vector.broadcast %546 : vector<9x1xf32> to vector<9x9xf32>
    %548 = arith.divf %544, %547 : vector<9x9xf32>
    %549 = arith.truncf %548 : vector<9x9xf32> to vector<9x9xbf16>
    %cst_287 = arith.constant dense<0.000000e+00> : vector<9x8xf32>
    %550 = tpu.matmul %549, %535, %cst_287 {dimension_numbers = #tpu.dot_dimension_numbers<[1], [0], [0], [1], [0, 0, 1, 1], [], []>} : vector<9x9xbf16>, vector<9x8xbf16>, vector<9x8xf32> -> vector<9x8xf32>
    %551 = vector.extract_strided_slice %527 {offsets = [0, 8], sizes = [9, 8], strides = [1, 1]} : vector<9x96xf32> to vector<9x8xf32>
    %cst_288 = arith.constant 0.353553385 : f32
    %552 = vector.broadcast %cst_288 : f32 to vector<9x8xf32>
    %553 = arith.mulf %551, %552 : vector<9x8xf32>
    %554 = arith.truncf %553 : vector<9x8xf32> to vector<9x8xbf16>
    %555 = vector.extract_strided_slice %527 {offsets = [0, 40], sizes = [9, 8], strides = [1, 1]} : vector<9x96xf32> to vector<9x8xf32>
    %556 = arith.truncf %555 : vector<9x8xf32> to vector<9x8xbf16>
    %557 = vector.extract_strided_slice %527 {offsets = [0, 72], sizes = [9, 8], strides = [1, 1]} : vector<9x96xf32> to vector<9x8xf32>
    %558 = arith.truncf %557 : vector<9x8xf32> to vector<9x8xbf16>
    %cst_289 = arith.constant dense<0.000000e+00> : vector<9x9xf32>
    %559 = tpu.matmul %554, %556, %cst_289 {dimension_numbers = #tpu.dot_dimension_numbers<[1], [1], [0], [0], [0, 0, 1, 0], [], []>} : vector<9x8xbf16>, vector<9x8xbf16>, vector<9x9xf32> -> vector<9x9xf32>
    %c1_290 = arith.constant 1 : index
    %c0_291 = arith.constant 0 : index
    %c0_292 = arith.constant 0 : index
    %560 = vector.load %arg8[%c1_290, %c0_291, %c0_292] : memref<4x9x9xf32, #tpu.memory_space<vmem>>, vector<1x9x9xf32>
    %561 = vector.shape_cast %560 : vector<1x9x9xf32> to vector<9x9xf32>
    %562 = arith.addf %559, %561 : vector<9x9xf32>
    %cst_293 = arith.constant dense<0xFF800000> : vector<9xf32>
    %563 = vector.multi_reduction <maximumf>, %562, %cst_293 [1] : vector<9x9xf32> to vector<9xf32>
    %564 = vector.shape_cast %563 : vector<9xf32> to vector<9x1xf32>
    %565 = vector.broadcast %564 : vector<9x1xf32> to vector<9x9xf32>
    %566 = arith.subf %562, %565 : vector<9x9xf32>
    %567 = math.exp %566 : vector<9x9xf32>
    %cst_294 = arith.constant dense<0.000000e+00> : vector<9xf32>
    %568 = vector.multi_reduction <add>, %567, %cst_294 [1] : vector<9x9xf32> to vector<9xf32>
    %569 = vector.shape_cast %568 : vector<9xf32> to vector<9x1xf32>
    %570 = vector.broadcast %569 : vector<9x1xf32> to vector<9x9xf32>
    %571 = arith.divf %567, %570 : vector<9x9xf32>
    %572 = arith.truncf %571 : vector<9x9xf32> to vector<9x9xbf16>
    %cst_295 = arith.constant dense<0.000000e+00> : vector<9x8xf32>
    %573 = tpu.matmul %572, %558, %cst_295 {dimension_numbers = #tpu.dot_dimension_numbers<[1], [0], [0], [1], [0, 0, 1, 1], [], []>} : vector<9x9xbf16>, vector<9x8xbf16>, vector<9x8xf32> -> vector<9x8xf32>
    %574 = vector.extract_strided_slice %527 {offsets = [0, 16], sizes = [9, 8], strides = [1, 1]} : vector<9x96xf32> to vector<9x8xf32>
    %cst_296 = arith.constant 0.353553385 : f32
    %575 = vector.broadcast %cst_296 : f32 to vector<9x8xf32>
    %576 = arith.mulf %574, %575 : vector<9x8xf32>
    %577 = arith.truncf %576 : vector<9x8xf32> to vector<9x8xbf16>
    %578 = vector.extract_strided_slice %527 {offsets = [0, 48], sizes = [9, 8], strides = [1, 1]} : vector<9x96xf32> to vector<9x8xf32>
    %579 = arith.truncf %578 : vector<9x8xf32> to vector<9x8xbf16>
    %580 = vector.extract_strided_slice %527 {offsets = [0, 80], sizes = [9, 8], strides = [1, 1]} : vector<9x96xf32> to vector<9x8xf32>
    %581 = arith.truncf %580 : vector<9x8xf32> to vector<9x8xbf16>
    %cst_297 = arith.constant dense<0.000000e+00> : vector<9x9xf32>
    %582 = tpu.matmul %577, %579, %cst_297 {dimension_numbers = #tpu.dot_dimension_numbers<[1], [1], [0], [0], [0, 0, 1, 0], [], []>} : vector<9x8xbf16>, vector<9x8xbf16>, vector<9x9xf32> -> vector<9x9xf32>
    %c2_298 = arith.constant 2 : index
    %c0_299 = arith.constant 0 : index
    %c0_300 = arith.constant 0 : index
    %583 = vector.load %arg8[%c2_298, %c0_299, %c0_300] : memref<4x9x9xf32, #tpu.memory_space<vmem>>, vector<1x9x9xf32>
    %584 = vector.shape_cast %583 : vector<1x9x9xf32> to vector<9x9xf32>
    %585 = arith.addf %582, %584 : vector<9x9xf32>
    %cst_301 = arith.constant dense<0xFF800000> : vector<9xf32>
    %586 = vector.multi_reduction <maximumf>, %585, %cst_301 [1] : vector<9x9xf32> to vector<9xf32>
    %587 = vector.shape_cast %586 : vector<9xf32> to vector<9x1xf32>
    %588 = vector.broadcast %587 : vector<9x1xf32> to vector<9x9xf32>
    %589 = arith.subf %585, %588 : vector<9x9xf32>
    %590 = math.exp %589 : vector<9x9xf32>
    %cst_302 = arith.constant dense<0.000000e+00> : vector<9xf32>
    %591 = vector.multi_reduction <add>, %590, %cst_302 [1] : vector<9x9xf32> to vector<9xf32>
    %592 = vector.shape_cast %591 : vector<9xf32> to vector<9x1xf32>
    %593 = vector.broadcast %592 : vector<9x1xf32> to vector<9x9xf32>
    %594 = arith.divf %590, %593 : vector<9x9xf32>
    %595 = arith.truncf %594 : vector<9x9xf32> to vector<9x9xbf16>
    %cst_303 = arith.constant dense<0.000000e+00> : vector<9x8xf32>
    %596 = tpu.matmul %595, %581, %cst_303 {dimension_numbers = #tpu.dot_dimension_numbers<[1], [0], [0], [1], [0, 0, 1, 1], [], []>} : vector<9x9xbf16>, vector<9x8xbf16>, vector<9x8xf32> -> vector<9x8xf32>
    %597 = vector.extract_strided_slice %527 {offsets = [0, 24], sizes = [9, 8], strides = [1, 1]} : vector<9x96xf32> to vector<9x8xf32>
    %cst_304 = arith.constant 0.353553385 : f32
    %598 = vector.broadcast %cst_304 : f32 to vector<9x8xf32>
    %599 = arith.mulf %597, %598 : vector<9x8xf32>
    %600 = arith.truncf %599 : vector<9x8xf32> to vector<9x8xbf16>
    %601 = vector.extract_strided_slice %527 {offsets = [0, 56], sizes = [9, 8], strides = [1, 1]} : vector<9x96xf32> to vector<9x8xf32>
    %602 = arith.truncf %601 : vector<9x8xf32> to vector<9x8xbf16>
    %603 = vector.extract_strided_slice %527 {offsets = [0, 88], sizes = [9, 8], strides = [1, 1]} : vector<9x96xf32> to vector<9x8xf32>
    %604 = arith.truncf %603 : vector<9x8xf32> to vector<9x8xbf16>
    %cst_305 = arith.constant dense<0.000000e+00> : vector<9x9xf32>
    %605 = tpu.matmul %600, %602, %cst_305 {dimension_numbers = #tpu.dot_dimension_numbers<[1], [1], [0], [0], [0, 0, 1, 0], [], []>} : vector<9x8xbf16>, vector<9x8xbf16>, vector<9x9xf32> -> vector<9x9xf32>
    %c3_306 = arith.constant 3 : index
    %c0_307 = arith.constant 0 : index
    %c0_308 = arith.constant 0 : index
    %606 = vector.load %arg8[%c3_306, %c0_307, %c0_308] : memref<4x9x9xf32, #tpu.memory_space<vmem>>, vector<1x9x9xf32>
    %607 = vector.shape_cast %606 : vector<1x9x9xf32> to vector<9x9xf32>
    %608 = arith.addf %605, %607 : vector<9x9xf32>
    %cst_309 = arith.constant dense<0xFF800000> : vector<9xf32>
    %609 = vector.multi_reduction <maximumf>, %608, %cst_309 [1] : vector<9x9xf32> to vector<9xf32>
    %610 = vector.shape_cast %609 : vector<9xf32> to vector<9x1xf32>
    %611 = vector.broadcast %610 : vector<9x1xf32> to vector<9x9xf32>
    %612 = arith.subf %608, %611 : vector<9x9xf32>
    %613 = math.exp %612 : vector<9x9xf32>
    %cst_310 = arith.constant dense<0.000000e+00> : vector<9xf32>
    %614 = vector.multi_reduction <add>, %613, %cst_310 [1] : vector<9x9xf32> to vector<9xf32>
    %615 = vector.shape_cast %614 : vector<9xf32> to vector<9x1xf32>
    %616 = vector.broadcast %615 : vector<9x1xf32> to vector<9x9xf32>
    %617 = arith.divf %613, %616 : vector<9x9xf32>
    %618 = arith.truncf %617 : vector<9x9xf32> to vector<9x9xbf16>
    %cst_311 = arith.constant dense<0.000000e+00> : vector<9x8xf32>
    %619 = tpu.matmul %618, %604, %cst_311 {dimension_numbers = #tpu.dot_dimension_numbers<[1], [0], [0], [1], [0, 0, 1, 1], [], []>} : vector<9x9xbf16>, vector<9x8xbf16>, vector<9x8xf32> -> vector<9x8xf32>
    %620 = tpu.concatenate %550, %573, %596, %619 in 1 : vector<9x8xf32>, vector<9x8xf32>, vector<9x8xf32>, vector<9x8xf32> -> vector<9x32xf32>
    %621 = arith.truncf %620 : vector<9x32xf32> to vector<9x32xbf16>
    %c1_312 = arith.constant 1 : index
    %c0_313 = arith.constant 0 : index
    %c0_314 = arith.constant 0 : index
    %622 = vector.load %arg10[%c1_312, %c0_313, %c0_314] : memref<2x32x32xbf16, #tpu.memory_space<vmem>>, vector<1x32x32xbf16>
    %623 = vector.shape_cast %622 : vector<1x32x32xbf16> to vector<32x32xbf16>
    %cst_315 = arith.constant dense<0.000000e+00> : vector<9x32xf32>
    %624 = tpu.matmul %621, %623, %cst_315 {dimension_numbers = #tpu.dot_dimension_numbers<[1], [0], [0], [1], [0, 0, 1, 1], [], []>} : vector<9x32xbf16>, vector<32x32xbf16>, vector<9x32xf32> -> vector<9x32xf32>
    %c1_316 = arith.constant 1 : index
    %c96_317 = arith.constant 96 : index
    %625 = vector.load %arg13[%c1_316, %c96_317] : memref<2x352xf32, #tpu.memory_space<vmem>>, vector<1x32xf32>
    %626 = vector.broadcast %625 : vector<1x32xf32> to vector<9x32xf32>
    %627 = arith.addf %624, %626 : vector<9x32xf32>
    %628 = arith.addf %520, %627 : vector<9x32xf32>
    %c1_318 = arith.constant 1 : index
    %c128_319 = arith.constant 128 : index
    %629 = vector.load %arg13[%c1_318, %c128_319] : memref<2x352xf32, #tpu.memory_space<vmem>>, vector<1x32xf32>
    %c1_320 = arith.constant 1 : index
    %c160_321 = arith.constant 160 : index
    %630 = vector.load %arg13[%c1_320, %c160_321] : memref<2x352xf32, #tpu.memory_space<vmem>>, vector<1x32xf32>
    %cst_322 = arith.constant dense<0.000000e+00> : vector<9xf32>
    %631 = vector.multi_reduction <add>, %628, %cst_322 [1] : vector<9x32xf32> to vector<9xf32>
    %632 = vector.shape_cast %631 : vector<9xf32> to vector<9x1xf32>
    %cst_323 = arith.constant 3.200000e+01 : f32
    %633 = vector.broadcast %cst_323 : f32 to vector<9x1xf32>
    %634 = arith.divf %632, %633 : vector<9x1xf32>
    %635 = vector.broadcast %634 : vector<9x1xf32> to vector<9x32xf32>
    %636 = arith.subf %628, %635 : vector<9x32xf32>
    %637 = arith.mulf %636, %636 : vector<9x32xf32>
    %cst_324 = arith.constant dense<0.000000e+00> : vector<9xf32>
    %638 = vector.multi_reduction <add>, %637, %cst_324 [1] : vector<9x32xf32> to vector<9xf32>
    %639 = vector.shape_cast %638 : vector<9xf32> to vector<9x1xf32>
    %cst_325 = arith.constant 3.200000e+01 : f32
    %640 = vector.broadcast %cst_325 : f32 to vector<9x1xf32>
    %641 = arith.divf %639, %640 : vector<9x1xf32>
    %642 = vector.broadcast %634 : vector<9x1xf32> to vector<9x32xf32>
    %643 = arith.subf %628, %642 : vector<9x32xf32>
    %cst_326 = arith.constant 9.99999974E-6 : f32
    %644 = vector.broadcast %cst_326 : f32 to vector<9x1xf32>
    %645 = arith.addf %641, %644 : vector<9x1xf32>
    %646 = math.rsqrt %645 : vector<9x1xf32>
    %647 = vector.broadcast %646 : vector<9x1xf32> to vector<9x32xf32>
    %648 = arith.mulf %643, %647 : vector<9x32xf32>
    %649 = vector.broadcast %629 : vector<1x32xf32> to vector<9x32xf32>
    %650 = arith.mulf %648, %649 : vector<9x32xf32>
    %651 = vector.broadcast %630 : vector<1x32xf32> to vector<9x32xf32>
    %652 = arith.addf %650, %651 : vector<9x32xf32>
    %653 = arith.truncf %652 : vector<9x32xf32> to vector<9x32xbf16>
    %c1_327 = arith.constant 1 : index
    %c0_328 = arith.constant 0 : index
    %c0_329 = arith.constant 0 : index
    %654 = vector.load %arg11[%c1_327, %c0_328, %c0_329] : memref<2x32x64xbf16, #tpu.memory_space<vmem>>, vector<1x32x64xbf16>
    %655 = vector.shape_cast %654 : vector<1x32x64xbf16> to vector<32x64xbf16>
    %cst_330 = arith.constant dense<0.000000e+00> : vector<9x64xf32>
    %656 = tpu.matmul %653, %655, %cst_330 {dimension_numbers = #tpu.dot_dimension_numbers<[1], [0], [0], [1], [0, 0, 1, 1], [], []>} : vector<9x32xbf16>, vector<32x64xbf16>, vector<9x64xf32> -> vector<9x64xf32>
    %c1_331 = arith.constant 1 : index
    %c192_332 = arith.constant 192 : index
    %657 = vector.load %arg13[%c1_331, %c192_332] : memref<2x352xf32, #tpu.memory_space<vmem>>, vector<1x64xf32>
    %658 = vector.broadcast %657 : vector<1x64xf32> to vector<9x64xf32>
    %659 = arith.addf %656, %658 : vector<9x64xf32>
    %cst_333 = arith.constant 5.000000e-01 : f32
    %660 = vector.broadcast %cst_333 : f32 to vector<9x64xf32>
    %661 = arith.mulf %660, %659 : vector<9x64xf32>
    %cst_334 = arith.constant 4.471500e-02 : f32
    %662 = vector.broadcast %cst_334 : f32 to vector<9x64xf32>
    %663 = arith.mulf %662, %659 : vector<9x64xf32>
    %664 = arith.mulf %663, %659 : vector<9x64xf32>
    %665 = arith.mulf %664, %659 : vector<9x64xf32>
    %666 = arith.addf %659, %665 : vector<9x64xf32>
    %cst_335 = arith.constant 0.797884583 : f32
    %667 = vector.broadcast %cst_335 : f32 to vector<9x64xf32>
    %668 = arith.mulf %667, %666 : vector<9x64xf32>
    %669 = math.tanh %668 : vector<9x64xf32>
    %cst_336 = arith.constant 1.000000e+00 : f32
    %670 = vector.broadcast %cst_336 : f32 to vector<9x64xf32>
    %671 = arith.addf %670, %669 : vector<9x64xf32>
    %672 = arith.mulf %661, %671 : vector<9x64xf32>
    %673 = arith.truncf %672 : vector<9x64xf32> to vector<9x64xbf16>
    %c1_337 = arith.constant 1 : index
    %c0_338 = arith.constant 0 : index
    %c0_339 = arith.constant 0 : index
    %674 = vector.load %arg12[%c1_337, %c0_338, %c0_339] : memref<2x64x32xbf16, #tpu.memory_space<vmem>>, vector<1x64x32xbf16>
    %675 = vector.shape_cast %674 : vector<1x64x32xbf16> to vector<64x32xbf16>
    %cst_340 = arith.constant dense<0.000000e+00> : vector<9x32xf32>
    %676 = tpu.matmul %673, %675, %cst_340 {dimension_numbers = #tpu.dot_dimension_numbers<[1], [0], [0], [1], [0, 0, 1, 1], [], []>} : vector<9x64xbf16>, vector<64x32xbf16>, vector<9x32xf32> -> vector<9x32xf32>
    %c1_341 = arith.constant 1 : index
    %c256_342 = arith.constant 256 : index
    %677 = vector.load %arg13[%c1_341, %c256_342] : memref<2x352xf32, #tpu.memory_space<vmem>>, vector<1x32xf32>
    %678 = vector.broadcast %677 : vector<1x32xf32> to vector<9x32xf32>
    %679 = arith.addf %676, %678 : vector<9x32xf32>
    %680 = arith.addf %652, %679 : vector<9x32xf32>
    %c1_343 = arith.constant 1 : index
    %c288_344 = arith.constant 288 : index
    %681 = vector.load %arg13[%c1_343, %c288_344] : memref<2x352xf32, #tpu.memory_space<vmem>>, vector<1x32xf32>
    %c1_345 = arith.constant 1 : index
    %c320_346 = arith.constant 320 : index
    %682 = vector.load %arg13[%c1_345, %c320_346] : memref<2x352xf32, #tpu.memory_space<vmem>>, vector<1x32xf32>
    %cst_347 = arith.constant dense<0.000000e+00> : vector<9xf32>
    %683 = vector.multi_reduction <add>, %680, %cst_347 [1] : vector<9x32xf32> to vector<9xf32>
    %684 = vector.shape_cast %683 : vector<9xf32> to vector<9x1xf32>
    %cst_348 = arith.constant 3.200000e+01 : f32
    %685 = vector.broadcast %cst_348 : f32 to vector<9x1xf32>
    %686 = arith.divf %684, %685 : vector<9x1xf32>
    %687 = vector.broadcast %686 : vector<9x1xf32> to vector<9x32xf32>
    %688 = arith.subf %680, %687 : vector<9x32xf32>
    %689 = arith.mulf %688, %688 : vector<9x32xf32>
    %cst_349 = arith.constant dense<0.000000e+00> : vector<9xf32>
    %690 = vector.multi_reduction <add>, %689, %cst_349 [1] : vector<9x32xf32> to vector<9xf32>
    %691 = vector.shape_cast %690 : vector<9xf32> to vector<9x1xf32>
    %cst_350 = arith.constant 3.200000e+01 : f32
    %692 = vector.broadcast %cst_350 : f32 to vector<9x1xf32>
    %693 = arith.divf %691, %692 : vector<9x1xf32>
    %694 = vector.broadcast %686 : vector<9x1xf32> to vector<9x32xf32>
    %695 = arith.subf %680, %694 : vector<9x32xf32>
    %cst_351 = arith.constant 9.99999974E-6 : f32
    %696 = vector.broadcast %cst_351 : f32 to vector<9x1xf32>
    %697 = arith.addf %693, %696 : vector<9x1xf32>
    %698 = math.rsqrt %697 : vector<9x1xf32>
    %699 = vector.broadcast %698 : vector<9x1xf32> to vector<9x32xf32>
    %700 = arith.mulf %695, %699 : vector<9x32xf32>
    %701 = vector.broadcast %681 : vector<1x32xf32> to vector<9x32xf32>
    %702 = arith.mulf %700, %701 : vector<9x32xf32>
    %703 = vector.broadcast %682 : vector<1x32xf32> to vector<9x32xf32>
    %704 = arith.addf %702, %703 : vector<9x32xf32>
    %c0_352 = arith.constant 0 : index
    %c0_353 = arith.constant 0 : index
    %c0_354 = arith.constant 0 : index
    %705 = vector.load %arg14[%c0_352, %c0_353, %c0_354] : memref<1x9x32xf32, #tpu.memory_space<vmem>>, vector<1x9x32xf32>
    %706 = vector.shape_cast %705 : vector<1x9x32xf32> to vector<9x32xf32>
    %707 = vector.shape_cast %704 : vector<9x32xf32> to vector<1x9x32xf32>
    tpu.vector_store %arg14[%c0_352, %c0_353, %c0_354], %707 {strides = array<i32>} : memref<1x9x32xf32, #tpu.memory_space<vmem>>, vector<1x9x32xf32>,
    return
  }
  func.func @transform_0(%arg0: i32) -> (i32, i32, i32) {
    %c0_i32 = arith.constant 0 : i32
    %c0_i32_0 = arith.constant 0 : i32
    %c0_i32_1 = arith.constant 0 : i32
    return %arg0, %c0_i32, %c0_i32_0 : i32, i32, i32
  }
  func.func @transform_1(%arg0: i32) -> (i32, i32) {
    %c0_i32 = arith.constant 0 : i32
    %c0_i32_0 = arith.constant 0 : i32
    %c0_i32_1 = arith.constant 0 : i32
    return %c0_i32, %c0_i32_0 : i32, i32
  }
  func.func @transform_2(%arg0: i32) -> (i32, i32, i32) {
    %c0_i32 = arith.constant 0 : i32
    %c0_i32_0 = arith.constant 0 : i32
    %c0_i32_1 = arith.constant 0 : i32
    %c0_i32_2 = arith.constant 0 : i32
    return %c0_i32, %c0_i32_0, %c0_i32_1 : i32, i32, i32
  }
  func.func @transform_3(%arg0: i32) -> (i32, i32, i32) {
    %c0_i32 = arith.constant 0 : i32
    %c0_i32_0 = arith.constant 0 : i32
    %c0_i32_1 = arith.constant 0 : i32
    %c0_i32_2 = arith.constant 0 : i32
    return %c0_i32, %c0_i32_0, %c0_i32_1 : i32, i32, i32
  }
  func.func @transform_4(%arg0: i32) -> (i32, i32) {
    %c0_i32 = arith.constant 0 : i32
    %c0_i32_0 = arith.constant 0 : i32
    %c0_i32_1 = arith.constant 0 : i32
    return %c0_i32, %c0_i32_0 : i32, i32
  }
  func.func @transform_5(%arg0: i32) -> (i32, i32) {
    %c0_i32 = arith.constant 0 : i32
    %c0_i32_0 = arith.constant 0 : i32
    %c0_i32_1 = arith.constant 0 : i32
    return %c0_i32, %c0_i32_0 : i32, i32
  }
  func.func @transform_6(%arg0: i32) -> (i32, i32, i32) {
    %c0_i32 = arith.constant 0 : i32
    %c0_i32_0 = arith.constant 0 : i32
    %c0_i32_1 = arith.constant 0 : i32
    %c0_i32_2 = arith.constant 0 : i32
    return %c0_i32, %c0_i32_0, %c0_i32_1 : i32, i32, i32
  }
  func.func @transform_7(%arg0: i32) -> (i32, i32, i32) {
    %c0_i32 = arith.constant 0 : i32
    %c0_i32_0 = arith.constant 0 : i32
    %c0_i32_1 = arith.constant 0 : i32
    %c0_i32_2 = arith.constant 0 : i32
    return %c0_i32, %c0_i32_0, %c0_i32_1 : i32, i32, i32
  }
  func.func @transform_8(%arg0: i32) -> (i32, i32, i32) {
    %c0_i32 = arith.constant 0 : i32
    %c0_i32_0 = arith.constant 0 : i32
    %c0_i32_1 = arith.constant 0 : i32
    %c0_i32_2 = arith.constant 0 : i32
    return %c0_i32, %c0_i32_0, %c0_i32_1 : i32, i32, i32
  }
  func.func @transform_9(%arg0: i32) -> (i32, i32, i32) {
    %c0_i32 = arith.constant 0 : i32
    %c0_i32_0 = arith.constant 0 : i32
    %c0_i32_1 = arith.constant 0 : i32
    %c0_i32_2 = arith.constant 0 : i32
    return %c0_i32, %c0_i32_0, %c0_i32_1 : i32, i32, i32
  }
  func.func @transform_10(%arg0: i32) -> (i32, i32, i32) {
    %c0_i32 = arith.constant 0 : i32
    %c0_i32_0 = arith.constant 0 : i32
    %c0_i32_1 = arith.constant 0 : i32
    %c0_i32_2 = arith.constant 0 : i32
    return %c0_i32, %c0_i32_0, %c0_i32_1 : i32, i32, i32
  }
  func.func @transform_11(%arg0: i32) -> (i32, i32, i32) {
    %c0_i32 = arith.constant 0 : i32
    %c0_i32_0 = arith.constant 0 : i32
    %c0_i32_1 = arith.constant 0 : i32
    %c0_i32_2 = arith.constant 0 : i32
    return %c0_i32, %c0_i32_0, %c0_i32_1 : i32, i32, i32
  }
  func.func @transform_12(%arg0: i32) -> (i32, i32) {
    %c0_i32 = arith.constant 0 : i32
    %c0_i32_0 = arith.constant 0 : i32
    %c0_i32_1 = arith.constant 0 : i32
    return %c0_i32, %c0_i32_0 : i32, i32
  }
  func.func @transform_13(%arg0: i32) -> (i32, i32, i32) {
    %c0_i32 = arith.constant 0 : i32
    %c0_i32_0 = arith.constant 0 : i32
    %c0_i32_1 = arith.constant 0 : i32
    return %arg0, %c0_i32, %c0_i32_0 : i32, i32, i32
  }
}

</mosaic_0001>

<llo_original>
// kernel: wavlm_forward.1
$region0: #{wavlm_forward.1}
  #allocation0 [shape = 'u32[]', space=smem, size = 0x4, offset = 0x4, fixed_abs, tag = 'smem constant byte address 0x4 - core index']
  #allocation1 [shape = 'u32[144,128]{1,0:T(1,128)}', space=vmem, size = 0x12000, scoped, tag = 'internal scratch']
  #allocation2 [shape = 'f32[639,32]{1,0:T(8,128)}', space=vmem, size = 0x50000, scoped, tag = 'scratch operand']
  #allocation3 [shape = 'f32[319,32]{1,0:T(8,128)}', space=vmem, size = 0x28000, scoped, tag = 'scratch operand']
  %s0 = inlined_call_operand.vmem [shape: bf16[2,639,10], index: 0, kind: input, shape index: {}]
  %s1 = inlined_call_operand.vmem [shape: bf16[10,32], index: 1, kind: input, shape index: {}]
  %s2 = inlined_call_operand.vmem [shape: bf16[12,32,32], index: 2, kind: input, shape index: {}]
  %s3 = inlined_call_operand.vmem [shape: bf16[4,32,32], index: 3, kind: input, shape index: {}]
  %s4 = inlined_call_operand.vmem [shape: f32[8,32], index: 4, kind: input, shape index: {}]
  %s5 = inlined_call_operand.vmem [shape: bf16[32,32], index: 5, kind: input, shape index: {}]
  %s6 = inlined_call_operand.vmem [shape: bf16[7,32,32], index: 6, kind: input, shape index: {}]
  %s7 = inlined_call_operand.vmem [shape: f32[4,9,9], index: 7, kind: input, shape index: {}]
  %s8 = inlined_call_operand.vmem [shape: bf16[2,32,96], index: 8, kind: input, shape index: {}]
  %s9 = inlined_call_operand.vmem [shape: bf16[2,32,32], index: 9, kind: input, shape index: {}]
  %s10 = inlined_call_operand.vmem [shape: bf16[2,32,64], index: 10, kind: input, shape index: {}]
  %s11 = inlined_call_operand.vmem [shape: bf16[2,64,32], index: 11, kind: input, shape index: {}]
  %s12 = inlined_call_operand.vmem [shape: f32[2,352], index: 12, kind: input, shape index: {}]
  %s13 = inlined_call_operand.vmem [shape: f32[2,9,32], index: 13, kind: output, shape index: {}]
  %s14 = sld [smem:[#allocation0]]
  $region85: #{wavlm_forward.1} parent=0
    _
  %s16 = ssub.s32 1, %s14
  %s17 = scalar_select 0, %s16, %s14
  loop: start=0, step=1, limit=4
  $region2: #{wavlm_forward.1} parent=0 // loop_pre_header
    _
  $region3: #{wavlm_forward.1} parent=0 // loop_header
    %s19 = sphi 0, %s23
    %p20 = scmp.ge.s32.totalorder %s19, 4
    %s29 = sphi 0, %s31
    %s32 = sphi 0, %s29
    %s33 = sphi 0, %s32
    %s49 = sphi 0, %s33
    %s53 = sphi 0, %s53
    %s55 = sphi 0, %s53
    %s56 = sphi 0, %s55
    %s70 = sphi 0, %s56
    %s74 = sphi 0, %s74
    %s76 = sphi 0, %s74
    %s77 = sphi 0, %s76
    %s91 = sphi 0, %s77
    %s95 = sphi 0, %s95
    %s97 = sphi 0, %s95
    %s98 = sphi 0, %s97
    %s112 = sphi 0, %s98
    %s116 = sphi 0, %s116
    %s118 = sphi 0, %s116
    %s119 = sphi 0, %s118
    %s133 = sphi 0, %s119
    %s137 = sphi 0, %s137
    %s139 = sphi 0, %s137
    %s140 = sphi 0, %s139
    %s154 = sphi 0, %s140
    %s158 = sphi 0, %s158
    %s160 = sphi 0, %s158
    %s161 = sphi 0, %s160
    %s175 = sphi 0, %s161
    %s179 = sphi 0, %s179
    %s181 = sphi 0, %s179
    %s182 = sphi 0, %s181
    %s196 = sphi 0, %s182
    %s200 = sphi 0, %s200
    %s202 = sphi 0, %s200
    %s203 = sphi 0, %s202
    %s217 = sphi 0, %s203
    %s221 = sphi 0, %s221
    %s223 = sphi 0, %s221
    %s224 = sphi 0, %s223
    %s238 = sphi 0, %s224
    %s242 = sphi 0, %s242
    %s244 = sphi 0, %s242
    %s245 = sphi 0, %s244
    %s259 = sphi 0, %s245
    %s263 = sphi 0, %s263
    %s265 = sphi 0, %s263
    %s266 = sphi 0, %s265
    %s280 = sphi 0, %s266
    %s284 = sphi 0, %s284
    %s286 = sphi 0, %s284
    %s287 = sphi 0, %s286
    %s301 = sphi 0, %s287
    %s307 = sphi 0, %s309
    %s310 = sphi 0, %s307
    %s311 = sphi 0, %s310
    %s327 = sphi 0, %s311
  $region4: #{wavlm_forward.1} parent=0 // loop_header_branch
    %22 = sbr.rel (%p20) target = $region8
  $region5: #{wavlm_forward.1} parent=0 // loop_body
    %s24 = ssub.s32 %s19, 1
    %s25 = ssub.s32 %s19, 2
    %s26 = sadd.s32 %s19, 1
    %s27 = ssub.s32 %s19, %s26
    %p28 = scmp.eq.s32.totalorder %s27, 0
    %s30 = sadd.s32 %s29, 1
    %s31 = scalar_select %p28, %s29, %s30
    %p34 = pneg %p28
    %p35 = scmp.eq.s32.totalorder %s19, 1
    %p36 = por %p34, %p35
    %p37 = scmp.ne.s32.totalorder %s29, %s32
    %p38 = scmp.eq.s32.totalorder %s19, 0
    %p39 = por %p37, %p38
    %p40 = scmp.ne.s32.totalorder %s29, %s32
    %p41 = scmp.eq.s32.totalorder %s24, 1
    %p42 = por %p40, %p41
    %p43 = scmp.ne.s32.totalorder %s32, %s33
    %p44 = scmp.eq.s32.totalorder %s24, 0
    %p45 = por %p43, %p44
    %p46 = scmp.ne.s32.totalorder %s32, %s33
    %p47 = scmp.eq.s32.totalorder %s25, 1
    %p48 = por %p46, %p47
    %p50 = scmp.ne.s32.totalorder %s33, %s49
    %p51 = scmp.eq.s32.totalorder %s25, 0
    %p52 = por %p50, %p51
    %s54 = sadd.s32 %s53, 1
    %p57 = scmp.eq.s32.totalorder %s19, 1
    %p58 = scmp.ne.s32.totalorder %s53, %s55
    %p59 = scmp.eq.s32.totalorder %s19, 0
    %p60 = por %p58, %p59
    %p61 = scmp.ne.s32.totalorder %s53, %s55
    %p62 = scmp.eq.s32.totalorder %s24, 1
    %p63 = por %p61, %p62
    %p64 = scmp.ne.s32.totalorder %s55, %s56
    %p65 = scmp.eq.s32.totalorder %s24, 0
    %p66 = por %p64, %p65
    %p67 = scmp.ne.s32.totalorder %s55, %s56
    %p68 = scmp.eq.s32.totalorder %s25, 1
    %p69 = por %p67, %p68
    %p71 = scmp.ne.s32.totalorder %s56, %s70
    %p72 = scmp.eq.s32.totalorder %s25, 0
    %p73 = por %p71, %p72
    %s75 = sadd.s32 %s74, 1
    %p78 = scmp.eq.s32.totalorder %s19, 1
    %p79 = scmp.ne.s32.totalorder %s74, %s76
    %p80 = scmp.eq.s32.totalorder %s19, 0
    %p81 = por %p79, %p80
    %p82 = scmp.ne.s32.totalorder %s74, %s76
    %p83 = scmp.eq.s32.totalorder %s24, 1
    %p84 = por %p82, %p83
    %p85 = scmp.ne.s32.totalorder %s76, %s77
    %p86 = scmp.eq.s32.totalorder %s24, 0
    %p87 = por %p85, %p86
    %p88 = scmp.ne.s32.totalorder %s76, %s77
    %p89 = scmp.eq.s32.totalorder %s25, 1
    %p90 = por %p88, %p89
    %p92 = scmp.ne.s32.totalorder %s77, %s91
    %p93 = scmp.eq.s32.totalorder %s25, 0
    %p94 = por %p92, %p93
    %s96 = sadd.s32 %s95, 1
    %p99 = scmp.eq.s32.totalorder %s19, 1
    %p100 = scmp.ne.s32.totalorder %s95, %s97
    %p101 = scmp.eq.s32.totalorder %s19, 0
    %p102 = por %p100, %p101
    %p103 = scmp.ne.s32.totalorder %s95, %s97
    %p104 = scmp.eq.s32.totalorder %s24, 1
    %p105 = por %p103, %p104
    %p106 = scmp.ne.s32.totalorder %s97, %s98
    %p107 = scmp.eq.s32.totalorder %s24, 0
    %p108 = por %p106, %p107
    %p109 = scmp.ne.s32.totalorder %s97, %s98
    %p110 = scmp.eq.s32.totalorder %s25, 1
    %p111 = por %p109, %p110
    %p113 = scmp.ne.s32.totalorder %s98, %s112
    %p114 = scmp.eq.s32.totalorder %s25, 0
    %p115 = por %p113, %p114
    %s117 = sadd.s32 %s116, 1
    %p120 = scmp.eq.s32.totalorder %s19, 1
    %p121 = scmp.ne.s32.totalorder %s116, %s118
    %p122 = scmp.eq.s32.totalorder %s19, 0
    %p123 = por %p121, %p122
    %p124 = scmp.ne.s32.totalorder %s116, %s118
    %p125 = scmp.eq.s32.totalorder %s24, 1
    %p126 = por %p124, %p125
    %p127 = scmp.ne.s32.totalorder %s118, %s119
    %p128 = scmp.eq.s32.totalorder %s24, 0
    %p129 = por %p127, %p128
    %p130 = scmp.ne.s32.totalorder %s118, %s119
    %p131 = scmp.eq.s32.totalorder %s25, 1
    %p132 = por %p130, %p131
    %p134 = scmp.ne.s32.totalorder %s119, %s133
    %p135 = scmp.eq.s32.totalorder %s25, 0
    %p136 = por %p134, %p135
    %s138 = sadd.s32 %s137, 1
    %p141 = scmp.eq.s32.totalorder %s19, 1
    %p142 = scmp.ne.s32.totalorder %s137, %s139
    %p143 = scmp.eq.s32.totalorder %s19, 0
    %p144 = por %p142, %p143
    %p145 = scmp.ne.s32.totalorder %s137, %s139
    %p146 = scmp.eq.s32.totalorder %s24, 1
    %p147 = por %p145, %p146
    %p148 = scmp.ne.s32.totalorder %s139, %s140
    %p149 = scmp.eq.s32.totalorder %s24, 0
    %p150 = por %p148, %p149
    %p151 = scmp.ne.s32.totalorder %s139, %s140
    %p152 = scmp.eq.s32.totalorder %s25, 1
    %p153 = por %p151, %p152
    %p155 = scmp.ne.s32.totalorder %s140, %s154
    %p156 = scmp.eq.s32.totalorder %s25, 0
    %p157 = por %p155, %p156
    %s159 = sadd.s32 %s158, 1
    %p162 = scmp.eq.s32.totalorder %s19, 1
    %p163 = scmp.ne.s32.totalorder %s158, %s160
    %p164 = scmp.eq.s32.totalorder %s19, 0
    %p165 = por %p163, %p164
    %p166 = scmp.ne.s32.totalorder %s158, %s160
    %p167 = scmp.eq.s32.totalorder %s24, 1
    %p168 = por %p166, %p167
    %p169 = scmp.ne.s32.totalorder %s160, %s161
    %p170 = scmp.eq.s32.totalorder %s24, 0
    %p171 = por %p169, %p170
    %p172 = scmp.ne.s32.totalorder %s160, %s161
    %p173 = scmp.eq.s32.totalorder %s25, 1
    %p174 = por %p172, %p173
    %p176 = scmp.ne.s32.totalorder %s161, %s175
    %p177 = scmp.eq.s32.totalorder %s25, 0
    %p178 = por %p176, %p177
    %s180 = sadd.s32 %s179, 1
    %p183 = scmp.eq.s32.totalorder %s19, 1
    %p184 = scmp.ne.s32.totalorder %s179, %s181
    %p185 = scmp.eq.s32.totalorder %s19, 0
    %p186 = por %p184, %p185
    %p187 = scmp.ne.s32.totalorder %s179, %s181
    %p188 = scmp.eq.s32.totalorder %s24, 1
    %p189 = por %p187, %p188
    %p190 = scmp.ne.s32.totalorder %s181, %s182
    %p191 = scmp.eq.s32.totalorder %s24, 0
    %p192 = por %p190, %p191
    %p193 = scmp.ne.s32.totalorder %s181, %s182
    %p194 = scmp.eq.s32.totalorder %s25, 1
    %p195 = por %p193, %p194
    %p197 = scmp.ne.s32.totalorder %s182, %s196
    %p198 = scmp.eq.s32.totalorder %s25, 0
    %p199 = por %p197, %p198
    %s201 = sadd.s32 %s200, 1
    %p204 = scmp.eq.s32.totalorder %s19, 1
    %p205 = scmp.ne.s32.totalorder %s200, %s202
    %p206 = scmp.eq.s32.totalorder %s19, 0
    %p207 = por %p205, %p206
    %p208 = scmp.ne.s32.totalorder %s200, %s202
    %p209 = scmp.eq.s32.totalorder %s24, 1
    %p210 = por %p208, %p209
    %p211 = scmp.ne.s32.totalorder %s202, %s203
    %p212 = scmp.eq.s32.totalorder %s24, 0
    %p213 = por %p211, %p212
    %p214 = scmp.ne.s32.totalorder %s202, %s203
    %p215 = scmp.eq.s32.totalorder %s25, 1
    %p216 = por %p214, %p215
    %p218 = scmp.ne.s32.totalorder %s203, %s217
    %p219 = scmp.eq.s32.totalorder %s25, 0
    %p220 = por %p218, %p219
    %s222 = sadd.s32 %s221, 1
    %p225 = scmp.eq.s32.totalorder %s19, 1
    %p226 = scmp.ne.s32.totalorder %s221, %s223
    %p227 = scmp.eq.s32.totalorder %s19, 0
    %p228 = por %p226, %p227
    %p229 = scmp.ne.s32.totalorder %s221, %s223
    %p230 = scmp.eq.s32.totalorder %s24, 1
    %p231 = por %p229, %p230
    %p232 = scmp.ne.s32.totalorder %s223, %s224
    %p233 = scmp.eq.s32.totalorder %s24, 0
    %p234 = por %p232, %p233
    %p235 = scmp.ne.s32.totalorder %s223, %s224
    %p236 = scmp.eq.s32.totalorder %s25, 1
    %p237 = por %p235, %p236
    %p239 = scmp.ne.s32.totalorder %s224, %s238
    %p240 = scmp.eq.s32.totalorder %s25, 0
    %p241 = por %p239, %p240
    %s243 = sadd.s32 %s242, 1
    %p246 = scmp.eq.s32.totalorder %s19, 1
    %p247 = scmp.ne.s32.totalorder %s242, %s244
    %p248 = scmp.eq.s32.totalorder %s19, 0
    %p249 = por %p247, %p248
    %p250 = scmp.ne.s32.totalorder %s242, %s244
    %p251 = scmp.eq.s32.totalorder %s24, 1
    %p252 = por %p250, %p251
    %p253 = scmp.ne.s32.totalorder %s244, %s245
    %p254 = scmp.eq.s32.totalorder %s24, 0
    %p255 = por %p253, %p254
    %p256 = scmp.ne.s32.totalorder %s244, %s245
    %p257 = scmp.eq.s32.totalorder %s25, 1
    %p258 = por %p256, %p257
    %p260 = scmp.ne.s32.totalorder %s245, %s259
    %p261 = scmp.eq.s32.totalorder %s25, 0
    %p262 = por %p260, %p261
    %s264 = sadd.s32 %s263, 1
    %p267 = scmp.eq.s32.totalorder %s19, 1
    %p268 = scmp.ne.s32.totalorder %s263, %s265
    %p269 = scmp.eq.s32.totalorder %s19, 0
    %p270 = por %p268, %p269
    %p271 = scmp.ne.s32.totalorder %s263, %s265
    %p272 = scmp.eq.s32.totalorder %s24, 1
    %p273 = por %p271, %p272
    %p274 = scmp.ne.s32.totalorder %s265, %s266
    %p275 = scmp.eq.s32.totalorder %s24, 0
    %p276 = por %p274, %p275
    %p277 = scmp.ne.s32.totalorder %s265, %s266
    %p278 = scmp.eq.s32.totalorder %s25, 1
    %p279 = por %p277, %p278
    %p281 = scmp.ne.s32.totalorder %s266, %s280
    %p282 = scmp.eq.s32.totalorder %s25, 0
    %p283 = por %p281, %p282
    %s285 = sadd.s32 %s284, 1
    %p288 = scmp.eq.s32.totalorder %s19, 1
    %p289 = scmp.ne.s32.totalorder %s284, %s286
    %p290 = scmp.eq.s32.totalorder %s19, 0
    %p291 = por %p289, %p290
    %p292 = scmp.ne.s32.totalorder %s284, %s286
    %p293 = scmp.eq.s32.totalorder %s24, 1
    %p294 = por %p292, %p293
    %p295 = scmp.ne.s32.totalorder %s286, %s287
    %p296 = scmp.eq.s32.totalorder %s24, 0
    %p297 = por %p295, %p296
    %p298 = scmp.ne.s32.totalorder %s286, %s287
    %p299 = scmp.eq.s32.totalorder %s25, 1
    %p300 = por %p298, %p299
    %p302 = scmp.ne.s32.totalorder %s287, %s301
    %p303 = scmp.eq.s32.totalorder %s25, 0
    %p304 = por %p302, %p303
    %s305 = ssub.s32 %s19, %s26
    %p306 = scmp.eq.s32.totalorder %s305, 0
    %s308 = sadd.s32 %s307, 1
    %s309 = scalar_select %p306, %s307, %s308
    %p312 = pneg %p306
    %p313 = scmp.eq.s32.totalorder %s19, 1
    %p314 = por %p312, %p313
    %p315 = scmp.ne.s32.totalorder %s307, %s310
    %p316 = scmp.eq.s32.totalorder %s19, 0
    %p317 = por %p315, %p316
    %p318 = scmp.ne.s32.totalorder %s307, %s310
    %p319 = scmp.eq.s32.totalorder %s24, 1
    %p320 = por %p318, %p319
    %p321 = scmp.ne.s32.totalorder %s310, %s311
    %p322 = scmp.eq.s32.totalorder %s24, 0
    %p323 = por %p321, %p322
    %p324 = scmp.ne.s32.totalorder %s310, %s311
    %p325 = scmp.eq.s32.totalorder %s25, 1
    %p326 = por %p324, %p325
    %p328 = scmp.ne.s32.totalorder %s311, %s327
    %p329 = scmp.eq.s32.totalorder %s25, 0
    %p330 = por %p328, %p329
    %p331 = scmp.le.s32.totalorder 1, %s19
    %p332 = scmp.lt.s32.totalorder %s19, 3
    %p333 = pnand %p331, %p332
    %p334 = pneg %p333
    // Predicated region
    $region9: #{wavlm_forward.1} parent=5 // pred_check
      _
    $region10: #{wavlm_forward.1} parent=5 // pred_check_branch
      %336 = sbr.rel (%p333) target = $region12
    $region11: #{wavlm_forward.1} parent=5 // pred_region
      %s337 = ssub.s32 %s19, 1
      // Predicated region
      $region13: #{wavlm_forward.1} parent=11 // pred_check
        %p338 = pneg %p66
      $region14: #{wavlm_forward.1} parent=11 // pred_check_branch
        %340 = sbr.rel (%p338) target = $region16
      $region15: #{wavlm_forward.1} parent=11 // pred_region
        _
      $region16: #{wavlm_forward.1} parent=11 // pred_fallthru
        _
      // Predicated region
      $region17: #{wavlm_forward.1} parent=11 // pred_check
        %p341 = pneg %p87
      $region18: #{wavlm_forward.1} parent=11 // pred_check_branch
        %343 = sbr.rel (%p341) target = $region20
      $region19: #{wavlm_forward.1} parent=11 // pred_region
        _
      $region20: #{wavlm_forward.1} parent=11 // pred_fallthru
        _
      // Predicated region
      $region21: #{wavlm_forward.1} parent=11 // pred_check
        %p344 = pneg %p108
      $region22: #{wavlm_forward.1} parent=11 // pred_check_branch
        %346 = sbr.rel (%p344) target = $region24
      $region23: #{wavlm_forward.1} parent=11 // pred_region
        _
      $region24: #{wavlm_forward.1} parent=11 // pred_fallthru
        _
      // Predicated region
      $region25: #{wavlm_forward.1} parent=11 // pred_check
        %p347 = pneg %p129
      $region26: #{wavlm_forward.1} parent=11 // pred_check_branch
        %349 = sbr.rel (%p347) target = $region28
      $region27: #{wavlm_forward.1} parent=11 // pred_region
        _
      $region28: #{wavlm_forward.1} parent=11 // pred_fallthru
        _
      // Predicated region
      $region29: #{wavlm_forward.1} parent=11 // pred_check
        %p350 = pneg %p150
      $region30: #{wavlm_forward.1} parent=11 // pred_check_branch
        %352 = sbr.rel (%p350) target = $region32
      $region31: #{wavlm_forward.1} parent=11 // pred_region
        _
      $region32: #{wavlm_forward.1} parent=11 // pred_fallthru
        _
      // Predicated region
      $region33: #{wavlm_forward.1} parent=11 // pred_check
        %p353 = pneg %p171
      $region34: #{wavlm_forward.1} parent=11 // pred_check_branch
        %355 = sbr.rel (%p353) target = $region36
      $region35: #{wavlm_forward.1} parent=11 // pred_region
        _
      $region36: #{wavlm_forward.1} parent=11 // pred_fallthru
        _
      // Predicated region
      $region37: #{wavlm_forward.1} parent=11 // pred_check
        %p356 = pneg %p192
      $region38: #{wavlm_forward.1} parent=11 // pred_check_branch
        %358 = sbr.rel (%p356) target = $region40
      $region39: #{wavlm_forward.1} parent=11 // pred_region
        _
      $region40: #{wavlm_forward.1} parent=11 // pred_fallthru
        _
      // Predicated region
      $region41: #{wavlm_forward.1} parent=11 // pred_check
        %p359 = pneg %p213
      $region42: #{wavlm_forward.1} parent=11 // pred_check_branch
        %361 = sbr.rel (%p359) target = $region44
      $region43: #{wavlm_forward.1} parent=11 // pred_region
        _
      $region44: #{wavlm_forward.1} parent=11 // pred_fallthru
        _
      // Predicated region
      $region45: #{wavlm_forward.1} parent=11 // pred_check
        %p362 = pneg %p234
      $region46: #{wavlm_forward.1} parent=11 // pred_check_branch
        %364 = sbr.rel (%p362) target = $region48
      $region47: #{wavlm_forward.1} parent=11 // pred_region
        _
      $region48: #{wavlm_forward.1} parent=11 // pred_fallthru
        _
      // Predicated region
      $region49: #{wavlm_forward.1} parent=11 // pred_check
        %p365 = pneg %p255
      $region50: #{wavlm_forward.1} parent=11 // pred_check_branch
        %367 = sbr.rel (%p365) target = $region52
      $region51: #{wavlm_forward.1} parent=11 // pred_region
        _
      $region52: #{wavlm_forward.1} parent=11 // pred_fallthru
        _
      // Predicated region
      $region53: #{wavlm_forward.1} parent=11 // pred_check
        %p368 = pneg %p276
      $region54: #{wavlm_forward.1} parent=11 // pred_check_branch
        %370 = sbr.rel (%p368) target = $region56
      $region55: #{wavlm_forward.1} parent=11 // pred_region
        _
      $region56: #{wavlm_forward.1} parent=11 // pred_fallthru
        _
      // Predicated region
      $region57: #{wavlm_forward.1} parent=11 // pred_check
        %p371 = pneg %p297
      $region58: #{wavlm_forward.1} parent=11 // pred_check_branch
        %373 = sbr.rel (%p371) target = $region60
      $region59: #{wavlm_forward.1} parent=11 // pred_region
        _
      $region60: #{wavlm_forward.1} parent=11 // pred_fallthru
        _
    $region12: #{wavlm_forward.1} parent=5 // pred_fallthru
      _
    %p374 = scmp.lt.s32.totalorder %s19, 2
    // Predicated region
    $region61: #{wavlm_forward.1} parent=5 // pred_check
      %p375 = pneg %p374
    $region62: #{wavlm_forward.1} parent=5 // pred_check_branch
      %377 = sbr.rel (%p375) target = $region64
    $region63: #{wavlm_forward.1} parent=5 // pred_region
      // Predicated region
      $region65: #{wavlm_forward.1} parent=63 // pred_check
        %p378 = pneg %p39
      $region66: #{wavlm_forward.1} parent=63 // pred_check_branch
        %380 = sbr.rel (%p378) target = $region68
      $region67: #{wavlm_forward.1} parent=63 // pred_region
        %p381 = scmp.lt.s32.totalorder %s19, 1
        %s382 = scalar_select %p381, %s19, 1
        %s383 = smul.addr %s382, 80
        %s384 = smul.addr %s383, 4
        %s385 = scalar_lea.vmem %s0, %s384
      $region68: #{wavlm_forward.1} parent=63 // pred_fallthru
        _
    $region64: #{wavlm_forward.1} parent=5 // pred_fallthru
      _
    %p386 = scmp.le.s32.totalorder 1, %s19
    %p387 = scmp.lt.s32.totalorder %s19, 3
    %p388 = pnand %p386, %p387
    %p389 = pneg %p388
    // Predicated region
    $region69: #{wavlm_forward.1} parent=5 // pred_check
      _
    $region70: #{wavlm_forward.1} parent=5 // pred_check_branch
      %391 = sbr.rel (%p388) target = $region72
    $region71: #{wavlm_forward.1} parent=5 // pred_region
      %s392 = ssub.s32 %s19, 1
      %p393 = scmp.lt.s32.totalorder %s24, 1
      %s394 = scalar_select %p393, %s24, 1
      %s395 = smul.addr %s394, 80
      %s396 = smul.addr %s395, 4
      %s397 = scalar_lea.vmem %s0, %s396
      %p398 = pneg %p45
      %p399 = pneg %p42
      %p400 = pneg %p66
      %p401 = pneg %p63
      %p402 = pneg %p87
      %p403 = pneg %p84
      %p404 = pneg %p108
      %p405 = pneg %p105
      %p406 = pneg %p129
      %p407 = pneg %p126
      %p408 = pneg %p150
      %p409 = pneg %p147
      %p410 = pneg %p171
      %p411 = pneg %p168
      %p412 = pneg %p192
      %p413 = pneg %p189
      %p414 = pneg %p213
      %p415 = pneg %p210
      %p416 = pneg %p234
      %p417 = pneg %p231
      %p418 = pneg %p255
      %p419 = pneg %p252
      %p420 = pneg %p276
      %p421 = pneg %p273
      %p422 = pneg %p297
      %p423 = pneg %p294
      %p424 = pneg %p323
      %p425 = pneg %p320
      %p426 = scmp.lt.s32.totalorder %s24, 1
      %s427 = scalar_select %p426, %s24, 1
      %s428 = smul.addr %s427, 2
      %s429 = smul.addr %s428, 8
      %s430 = scalar_lea.vmem %s13, %s429
      %p431 = scmp.lt.s32.totalorder %s24, 1
      %s432 = scalar_select %p431, %s24, 1
      %s433 = smul.addr %s432, 80
      %s434 = smul.addr %s433, 4
      %s435 = scalar_lea.vmem %s0, %s434
      %p436 = scmp.lt.s32.totalorder %s24, 1
      %s437 = scalar_select %p436, %s24, 1
      %s438 = smul.addr %s437, 2
      %s439 = smul.addr %s438, 8
      %s440 = scalar_lea.vmem %s13, %s439
      %v442 = vld [vmem:[%s435] sm:$0xf]
      %v443 = vld [vmem:[%s435 + $0x4] sm:$0xf]
      %v444 = vld [vmem:[%s435 + $0x8] sm:$0xf]
      %v445 = vld [vmem:[%s435 + $0xc] sm:$0xf]
      %v446 = vld [vmem:[%s435 + $0x10] sm:$0xf]
      %v447 = vld [vmem:[%s435 + $0x14] sm:$0xf]
      %v448 = vld [vmem:[%s435 + $0x18] sm:$0xf]
      %v449 = vld [vmem:[%s435 + $0x1c] sm:$0xf]
      %v450 = vld [vmem:[%s435 + $0x20] sm:$0xf]
      %v451 = vld [vmem:[%s435 + $0x24] sm:$0xf]
      %v452 = vld [vmem:[%s435 + $0x28] sm:$0xf]
      %v453 = vld [vmem:[%s435 + $0x2c] sm:$0xf]
      %v454 = vld [vmem:[%s435 + $0x30] sm:$0xf]
      %v455 = vld [vmem:[%s435 + $0x34] sm:$0xf]
      %v456 = vld [vmem:[%s435 + $0x38] sm:$0xf]
      %v457 = vld [vmem:[%s435 + $0x3c] sm:$0xf]
      %v458 = vld [vmem:[%s435 + $0x40] sm:$0xf]
      %v459 = vld [vmem:[%s435 + $0x44] sm:$0xf]
      %v460 = vld [vmem:[%s435 + $0x48] sm:$0xf]
      %v461 = vld [vmem:[%s435 + $0x4c] sm:$0xf]
      %v462 = vld [vmem:[%s435 + $0x50] sm:$0xf]
      %v463 = vld [vmem:[%s435 + $0x54] sm:$0xf]
      %v464 = vld [vmem:[%s435 + $0x58] sm:$0xf]
      %v465 = vld [vmem:[%s435 + $0x5c] sm:$0xf]
      %v466 = vld [vmem:[%s435 + $0x60] sm:$0xf]
      %v467 = vld [vmem:[%s435 + $0x64] sm:$0xf]
      %v468 = vld [vmem:[%s435 + $0x68] sm:$0xf]
      %v469 = vld [vmem:[%s435 + $0x6c] sm:$0xf]
      %v470 = vld [vmem:[%s435 + $0x70] sm:$0xf]
      %v471 = vld [vmem:[%s435 + $0x74] sm:$0xf]
      %v472 = vld [vmem:[%s435 + $0x78] sm:$0xf]
      %v473 = vld [vmem:[%s435 + $0x7c] sm:$0xf]
      %v474 = vld [vmem:[%s435 + $0x80] sm:$0xf]
      %v475 = vld [vmem:[%s435 + $0x84] sm:$0xf]
      %v476 = vld [vmem:[%s435 + $0x88] sm:$0xf]
      %v477 = vld [vmem:[%s435 + $0x8c] sm:$0xf]
      %v478 = vld [vmem:[%s435 + $0x90] sm:$0xf]
      %v479 = vld [vmem:[%s435 + $0x94] sm:$0xf]
      %v480 = vld [vmem:[%s435 + $0x98] sm:$0xf]
      %v481 = vld [vmem:[%s435 + $0x9c] sm:$0xf]
      %v482 = vld [vmem:[%s435 + $0xa0] sm:$0xf]
      %v483 = vld [vmem:[%s435 + $0xa4] sm:$0xf]
      %v484 = vld [vmem:[%s435 + $0xa8] sm:$0xf]
      %v485 = vld [vmem:[%s435 + $0xac] sm:$0xf]
      %v486 = vld [vmem:[%s435 + $0xb0] sm:$0xf]
      %v487 = vld [vmem:[%s435 + $0xb4] sm:$0xf]
      %v488 = vld [vmem:[%s435 + $0xb8] sm:$0xf]
      %v489 = vld [vmem:[%s435 + $0xbc] sm:$0xf]
      %v490 = vld [vmem:[%s435 + $0xc0] sm:$0xf]
      %v491 = vld [vmem:[%s435 + $0xc4] sm:$0xf]
      %v492 = vld [vmem:[%s435 + $0xc8] sm:$0xf]
      %v493 = vld [vmem:[%s435 + $0xcc] sm:$0xf]
      %v494 = vld [vmem:[%s435 + $0xd0] sm:$0xf]
      %v495 = vld [vmem:[%s435 + $0xd4] sm:$0xf]
      %v496 = vld [vmem:[%s435 + $0xd8] sm:$0xf]
      %v497 = vld [vmem:[%s435 + $0xdc] sm:$0xf]
      %v498 = vld [vmem:[%s435 + $0xe0] sm:$0xf]
      %v499 = vld [vmem:[%s435 + $0xe4] sm:$0xf]
      %v500 = vld [vmem:[%s435 + $0xe8] sm:$0xf]
      %v501 = vld [vmem:[%s435 + $0xec] sm:$0xf]
      %v502 = vld [vmem:[%s435 + $0xf0] sm:$0xf]
      %v503 = vld [vmem:[%s435 + $0xf4] sm:$0xf]
      %v504 = vld [vmem:[%s435 + $0xf8] sm:$0xf]
      %v505 = vld [vmem:[%s435 + $0xfc] sm:$0xf]
      %v506 = vld [vmem:[%s435 + $0x100] sm:$0xf]
      %v507 = vld [vmem:[%s435 + $0x104] sm:$0xf]
      %v508 = vld [vmem:[%s435 + $0x108] sm:$0xf]
      %v509 = vld [vmem:[%s435 + $0x10c] sm:$0xf]
      %v510 = vld [vmem:[%s435 + $0x110] sm:$0xf]
      %v511 = vld [vmem:[%s435 + $0x114] sm:$0xf]
      %v512 = vld [vmem:[%s435 + $0x118] sm:$0xf]
      %v513 = vld [vmem:[%s435 + $0x11c] sm:$0xf]
      %v514 = vld [vmem:[%s435 + $0x120] sm:$0xf]
      %v515 = vld [vmem:[%s435 + $0x124] sm:$0xf]
      %v516 = vld [vmem:[%s435 + $0x128] sm:$0xf]
      %v517 = vld [vmem:[%s435 + $0x12c] sm:$0xf]
      %v518 = vld [vmem:[%s435 + $0x130] sm:$0xf]
      %v519 = vld [vmem:[%s435 + $0x134] sm:$0xf]
      %v520 = vld [vmem:[%s435 + $0x138] sm:$0xf]
      %v521 = vld [vmem:[%s435 + $0x13c] sm:$0xf]
      %v522 = vld [vmem:[%s1] sm:$0xf]
      %v523 = vld [vmem:[%s1 + $0x4] sm:$0x1]
      %v604 = vunpack.c.l.b16 %v442
      %v605 = vunpack.c.l.b16 %v443
      %v606 = vunpack.c.l.b16 %v444
      %v607 = vunpack.c.l.b16 %v445
      %v608 = vunpack.c.l.b16 %v446
      %v609 = vunpack.c.l.b16 %v447
      %v610 = vunpack.c.l.b16 %v448
      %v611 = vunpack.c.l.b16 %v449
      %v612 = vunpack.c.l.b16 %v450
      %v613 = vunpack.c.l.b16 %v451
      %v614 = vunpack.c.l.b16 %v452
      %v615 = vunpack.c.l.b16 %v453
      %v616 = vunpack.c.l.b16 %v454
      %v617 = vunpack.c.l.b16 %v455
      %v618 = vunpack.c.l.b16 %v456
      %v619 = vunpack.c.l.b16 %v457
      %v620 = vunpack.c.l.b16 %v458
      %v621 = vunpack.c.l.b16 %v459
      %v622 = vunpack.c.l.b16 %v460
      %v623 = vunpack.c.l.b16 %v461
      %v624 = vunpack.c.l.b16 %v462
      %v625 = vunpack.c.l.b16 %v463
      %v626 = vunpack.c.l.b16 %v464
      %v627 = vunpack.c.l.b16 %v465
      %v628 = vunpack.c.l.b16 %v466
      %v629 = vunpack.c.l.b16 %v467
      %v630 = vunpack.c.l.b16 %v468
      %v631 = vunpack.c.l.b16 %v469
      %v632 = vunpack.c.l.b16 %v470
      %v633 = vunpack.c.l.b16 %v471
      %v634 = vunpack.c.l.b16 %v472
      %v635 = vunpack.c.l.b16 %v473
      %v636 = vunpack.c.l.b16 %v474
      %v637 = vunpack.c.l.b16 %v475
      %v638 = vunpack.c.l.b16 %v476
      %v639 = vunpack.c.l.b16 %v477
      %v640 = vunpack.c.l.b16 %v478
      %v641 = vunpack.c.l.b16 %v479
      %v642 = vunpack.c.l.b16 %v480
      %v643 = vunpack.c.l.b16 %v481
      %v644 = vunpack.c.l.b16 %v482
      %v645 = vunpack.c.l.b16 %v483
      %v646 = vunpack.c.l.b16 %v484
      %v647 = vunpack.c.l.b16 %v485
      %v648 = vunpack.c.l.b16 %v486
      %v649 = vunpack.c.l.b16 %v487
      %v650 = vunpack.c.l.b16 %v488
      %v651 = vunpack.c.l.b16 %v489
      %v652 = vunpack.c.l.b16 %v490
      %v653 = vunpack.c.l.b16 %v491
      %v654 = vunpack.c.l.b16 %v492
      %v655 = vunpack.c.l.b16 %v493
      %v656 = vunpack.c.l.b16 %v494
      %v657 = vunpack.c.l.b16 %v495
      %v658 = vunpack.c.l.b16 %v496
      %v659 = vunpack.c.l.b16 %v497
      %v660 = vunpack.c.l.b16 %v498
      %v661 = vunpack.c.l.b16 %v499
      %v662 = vunpack.c.l.b16 %v500
      %v663 = vunpack.c.l.b16 %v501
      %v664 = vunpack.c.l.b16 %v502
      %v665 = vunpack.c.l.b16 %v503
      %v666 = vunpack.c.l.b16 %v504
      %v667 = vunpack.c.l.b16 %v505
      %v668 = vunpack.c.l.b16 %v506
      %v669 = vunpack.c.l.b16 %v507
      %v670 = vunpack.c.l.b16 %v508
      %v671 = vunpack.c.l.b16 %v509
      %v672 = vunpack.c.l.b16 %v510
      %v673 = vunpack.c.l.b16 %v511
      %v674 = vunpack.c.l.b16 %v512
      %v675 = vunpack.c.l.b16 %v513
      %v676 = vunpack.c.l.b16 %v514
      %v677 = vunpack.c.l.b16 %v515
      %v678 = vunpack.c.l.b16 %v516
      %v679 = vunpack.c.l.b16 %v517
      %v680 = vunpack.c.l.b16 %v518
      %v681 = vunpack.c.l.b16 %v519
      %v682 = vunpack.c.l.b16 %v520
      %v683 = vunpack.c.l.b16 %v521
      %v684 = vpack.c.b16 %v605, %v604
      %v685 = vpack.c.b16 %v607, %v606
      %v686 = vpack.c.b16 %v609, %v608
      %v687 = vpack.c.b16 %v611, %v610
      %v688 = vpack.c.b16 %v613, %v612
      %v689 = vpack.c.b16 %v615, %v614
      %v690 = vpack.c.b16 %v617, %v616
      %v691 = vpack.c.b16 %v619, %v618
      %v692 = vpack.c.b16 %v621, %v620
      %v693 = vpack.c.b16 %v623, %v622
      %v694 = vpack.c.b16 %v625, %v624
      %v695 = vpack.c.b16 %v627, %v626
      %v696 = vpack.c.b16 %v629, %v628
      %v697 = vpack.c.b16 %v631, %v630
      %v698 = vpack.c.b16 %v633, %v632
      %v699 = vpack.c.b16 %v635, %v634
      %v700 = vpack.c.b16 %v637, %v636
      %v701 = vpack.c.b16 %v639, %v638
      %v702 = vpack.c.b16 %v641, %v640
      %v703 = vpack.c.b16 %v643, %v642
      %v704 = vpack.c.b16 %v645, %v644
      %v705 = vpack.c.b16 %v647, %v646
      %v706 = vpack.c.b16 %v649, %v648
      %v707 = vpack.c.b16 %v651, %v650
      %v708 = vpack.c.b16 %v653, %v652
      %v709 = vpack.c.b16 %v655, %v654
      %v710 = vpack.c.b16 %v657, %v656
      %v711 = vpack.c.b16 %v659, %v658
      %v712 = vpack.c.b16 %v661, %v660
      %v713 = vpack.c.b16 %v663, %v662
      %v714 = vpack.c.b16 %v665, %v664
      %v715 = vpack.c.b16 %v667, %v666
      %v716 = vpack.c.b16 %v669, %v668
      %v717 = vpack.c.b16 %v671, %v670
      %v718 = vpack.c.b16 %v673, %v672
      %v719 = vpack.c.b16 %v675, %v674
      %v720 = vpack.c.b16 %v677, %v676
      %v721 = vpack.c.b16 %v679, %v678
      %v722 = vpack.c.b16 %v681, %v680
      %v723 = vpack.c.b16 %v683, %v682
      %v726 = vunpack.c.l.b16 %v522
      %v727 = vunpack.c.l.b16 %v523
      %v728 = vpack.c.b16 %v727, %v726
      %vm729 = vcmask 80896
      %v731 = vsel %vm729, %v684, 0
      %v734 = vsel %vm729, %v685, 0
      %v737 = vsel %vm729, %v686, 0
      %v740 = vsel %vm729, %v687, 0
      %v743 = vsel %vm729, %v688, 0
      %v746 = vsel %vm729, %v689, 0
      %v749 = vsel %vm729, %v690, 0
      %v752 = vsel %vm729, %v691, 0
      %v755 = vsel %vm729, %v692, 0
      %v758 = vsel %vm729, %v693, 0
      %v761 = vsel %vm729, %v694, 0
      %v764 = vsel %vm729, %v695, 0
      %v767 = vsel %vm729, %v696, 0
      %v770 = vsel %vm729, %v697, 0
      %v773 = vsel %vm729, %v698, 0
      %v776 = vsel %vm729, %v699, 0
      %v779 = vsel %vm729, %v700, 0
      %v782 = vsel %vm729, %v701, 0
      %v785 = vsel %vm729, %v702, 0
      %v788 = vsel %vm729, %v703, 0
      %v791 = vsel %vm729, %v704, 0
      %v794 = vsel %vm729, %v705, 0
      %v797 = vsel %vm729, %v706, 0
      %v800 = vsel %vm729, %v707, 0
      %v803 = vsel %vm729, %v708, 0
      %v806 = vsel %vm729, %v709, 0
      %v809 = vsel %vm729, %v710, 0
      %v812 = vsel %vm729, %v711, 0
      %v815 = vsel %vm729, %v712, 0
      %v818 = vsel %vm729, %v713, 0
      %v821 = vsel %vm729, %v714, 0
      %v824 = vsel %vm729, %v715, 0
      %v827 = vsel %vm729, %v716, 0
      %v830 = vsel %vm729, %v717, 0
      %v833 = vsel %vm729, %v718, 0
      %v836 = vsel %vm729, %v719, 0
      %v839 = vsel %vm729, %v720, 0
      %v842 = vsel %vm729, %v721, 0
      %v845 = vsel %vm729, %v722, 0
      %v848 = vsel %vm729, %v723, 0
      %vm850 = vcmask 1044480
      %v852 = vsel %vm850, %v728, 0
      %854 = vmatprep.subr.bf16.mxu0 0
      %855 = vmatpush1.bf16.msra.mxu0 0
      %856 = vmatprep.subr.bf16.mxu0 0
      %857 = vmatpush1.bf16.msra.mxu0 0
      %858 = vmatprep.subr.bf16.mxu0 0
      %859 = vmatpush1.bf16.msra.mxu0 0
      %860 = vmatprep.subr.bf16.mxu0 0
      %861 = vmatpush1.bf16.msra.mxu0 0
      %862 = vmatprep.subr.bf16.mxu0 0
      %863 = vmatpush1.bf16.msra.mxu0 0
      %864 = vmatprep.subr.bf16.mxu0 0
      %865 = vmatpush1.bf16.msra.mxu0 0
      %866 = vmatprep.subr.bf16.mxu0 0
      %867 = vmatpush1.bf16.msra.mxu0 0
      %868 = vmatprep.subr.bf16.mxu0 0
      %869 = vmatpush1.bf16.msra.mxu0 %v852
      %870 = vmatprep.subr.bf16.mxu0 0
      %871 = vmatpush2.bf16.msra.mxu0 0
      %872 = vmatprep.subr.bf16.mxu0 0
      %873 = vmatpush2.bf16.msra.mxu0 0
      %874 = vmatprep.subr.bf16.mxu0 0
      %875 = vmatpush2.bf16.msra.mxu0 0
      %876 = vmatprep.subr.bf16.mxu0 0
      %877 = vmatpush2.bf16.msra.mxu0 0
      %878 = vmatprep.subr.bf16.mxu0 0
      %879 = vmatpush2.bf16.msra.mxu0 0
      %880 = vmatprep.subr.bf16.mxu0 0
      %881 = vmatpush2.bf16.msra.mxu0 0
      %882 = vmatprep.subr.bf16.mxu0 0
      %883 = vmatpush2.bf16.msra.mxu0 0
      %884 = vmatprep.subr.bf16.mxu0 0
      %885 = vmatpush2.bf16.msra.mxu0 0
      %886 = vmatprep.mubr.bf16.mxu0 0
      %887 = vmatmul.mubr.bf16.gmra.mxu0 %v731
      %v888 = vpop.f32.mrf.mxu0
      %v889 = vadd.f32 0.0, %v888
      %v890 = vpop.f32.mrf.mxu0
      %v891 = vpop.f32.mrf.mxu0
      %v892 = vadd.f32 0.0, %v891
      %v893 = vpop.f32.mrf.mxu0
      %894 = vmatprep.mubr.bf16.mxu0 0
      %895 = vmatmul.mubr.bf16.gmra.mxu0 %v734
      %v896 = vpop.f32.mrf.mxu0
      %v897 = vadd.f32 0.0, %v896
      %v898 = vpop.f32.mrf.mxu0
      %v899 = vpop.f32.mrf.mxu0
      %v900 = vadd.f32 0.0, %v899
      %v901 = vpop.f32.mrf.mxu0
      %902 = vmatprep.mubr.bf16.mxu0 0
      %903 = vmatmul.mubr.bf16.gmra.mxu0 %v737
      %v904 = vpop.f32.mrf.mxu0
      %v905 = vadd.f32 0.0, %v904
      %v906 = vpop.f32.mrf.mxu0
      %v907 = vpop.f32.mrf.mxu0
      %v908 = vadd.f32 0.0, %v907
      %v909 = vpop.f32.mrf.mxu0
      %910 = vmatprep.mubr.bf16.mxu0 0
      %911 = vmatmul.mubr.bf16.gmra.mxu0 %v740
      %v912 = vpop.f32.mrf.mxu0
      %v913 = vadd.f32 0.0, %v912
      %v914 = vpop.f32.mrf.mxu0
      %v915 = vpop.f32.mrf.mxu0
      %v916 = vadd.f32 0.0, %v915
      %v917 = vpop.f32.mrf.mxu0
      %918 = vmatprep.mubr.bf16.mxu0 0
      %919 = vmatmul.mubr.bf16.gmra.mxu0 %v743
      %v920 = vpop.f32.mrf.mxu0
      %v921 = vadd.f32 0.0, %v920
      %v922 = vpop.f32.mrf.mxu0
      %v923 = vpop.f32.mrf.mxu0
      %v924 = vadd.f32 0.0, %v923
      %v925 = vpop.f32.mrf.mxu0
      %926 = vmatprep.mubr.bf16.mxu0 0
      %927 = vmatmul.mubr.bf16.gmra.mxu0 %v746
      %v928 = vpop.f32.mrf.mxu0
      %v929 = vadd.f32 0.0, %v928
      %v930 = vpop.f32.mrf.mxu0
      %v931 = vpop.f32.mrf.mxu0
      %v932 = vadd.f32 0.0, %v931
      %v933 = vpop.f32.mrf.mxu0
      %934 = vmatprep.mubr.bf16.mxu0 0
      %935 = vmatmul.mubr.bf16.gmra.mxu0 %v749
      %v936 = vpop.f32.mrf.mxu0
      %v937 = vadd.f32 0.0, %v936
      %v938 = vpop.f32.mrf.mxu0
      %v939 = vpop.f32.mrf.mxu0
      %v940 = vadd.f32 0.0, %v939
      %v941 = vpop.f32.mrf.mxu0
      %942 = vmatprep.mubr.bf16.mxu0 0
      %943 = vmatmul.mubr.bf16.gmra.mxu0 %v752
      %v944 = vpop.f32.mrf.mxu0
      %v945 = vadd.f32 0.0, %v944
      %v946 = vpop.f32.mrf.mxu0
      %v947 = vpop.f32.mrf.mxu0
      %v948 = vadd.f32 0.0, %v947
      %v949 = vpop.f32.mrf.mxu0
      %950 = vmatprep.mubr.bf16.mxu0 0
      %951 = vmatmul.mubr.bf16.gmra.mxu0 %v755
      %v952 = vpop.f32.mrf.mxu0
      %v953 = vadd.f32 0.0, %v952
      %v954 = vpop.f32.mrf.mxu0
      %v955 = vpop.f32.mrf.mxu0
      %v956 = vadd.f32 0.0, %v955
      %v957 = vpop.f32.mrf.mxu0
      %958 = vmatprep.mubr.bf16.mxu0 0
      %959 = vmatmul.mubr.bf16.gmra.mxu0 %v758
      %v960 = vpop.f32.mrf.mxu0
      %v961 = vadd.f32 0.0, %v960
      %v962 = vpop.f32.mrf.mxu0
      %v963 = vpop.f32.mrf.mxu0
      %v964 = vadd.f32 0.0, %v963
      %v965 = vpop.f32.mrf.mxu0
      %966 = vmatprep.mubr.bf16.mxu0 0
      %967 = vmatmul.mubr.bf16.gmra.mxu0 %v761
      %v968 = vpop.f32.mrf.mxu0
      %v969 = vadd.f32 0.0, %v968
      %v970 = vpop.f32.mrf.mxu0
      %v971 = vpop.f32.mrf.mxu0
      %v972 = vadd.f32 0.0, %v971
      %v973 = vpop.f32.mrf.mxu0
      %974 = vmatprep.mubr.bf16.mxu0 0
      %975 = vmatmul.mubr.bf16.gmra.mxu0 %v764
      %v976 = vpop.f32.mrf.mxu0
      %v977 = vadd.f32 0.0, %v976
      %v978 = vpop.f32.mrf.mxu0
      %v979 = vpop.f32.mrf.mxu0
      %v980 = vadd.f32 0.0, %v979
      %v981 = vpop.f32.mrf.mxu0
      %982 = vmatprep.mubr.bf16.mxu0 0
      %983 = vmatmul.mubr.bf16.gmra.mxu0 %v767
      %v984 = vpop.f32.mrf.mxu0
      %v985 = vadd.f32 0.0, %v984
      %v986 = vpop.f32.mrf.mxu0
      %v987 = vpop.f32.mrf.mxu0
      %v988 = vadd.f32 0.0, %v987
      %v989 = vpop.f32.mrf.mxu0
      %990 = vmatprep.mubr.bf16.mxu0 0
      %991 = vmatmul.mubr.bf16.gmra.mxu0 %v770
      %v992 = vpop.f32.mrf.mxu0
      %v993 = vadd.f32 0.0, %v992
      %v994 = vpop.f32.mrf.mxu0
      %v995 = vpop.f32.mrf.mxu0
      %v996 = vadd.f32 0.0, %v995
      %v997 = vpop.f32.mrf.mxu0
      %998 = vmatprep.mubr.bf16.mxu0 0
      %999 = vmatmul.mubr.bf16.gmra.mxu0 %v773
      %v1000 = vpop.f32.mrf.mxu0
      %v1001 = vadd.f32 0.0, %v1000
      %v1002 = vpop.f32.mrf.mxu0
      %v1003 = vpop.f32.mrf.mxu0
      %v1004 = vadd.f32 0.0, %v1003
      %v1005 = vpop.f32.mrf.mxu0
      %1006 = vmatprep.mubr.bf16.mxu0 0
      %1007 = vmatmul.mubr.bf16.gmra.mxu0 %v776
      %v1008 = vpop.f32.mrf.mxu0
      %v1009 = vadd.f32 0.0, %v1008
      %v1010 = vpop.f32.mrf.mxu0
      %v1011 = vpop.f32.mrf.mxu0
      %v1012 = vadd.f32 0.0, %v1011
      %v1013 = vpop.f32.mrf.mxu0
      %1014 = vmatprep.mubr.bf16.mxu0 0
      %1015 = vmatmul.mubr.bf16.gmra.mxu0 %v779
      %v1016 = vpop.f32.mrf.mxu0
      %v1017 = vadd.f32 0.0, %v1016
      %v1018 = vpop.f32.mrf.mxu0
      %v1019 = vpop.f32.mrf.mxu0
      %v1020 = vadd.f32 0.0, %v1019
      %v1021 = vpop.f32.mrf.mxu0
      %1022 = vmatprep.mubr.bf16.mxu0 0
      %1023 = vmatmul.mubr.bf16.gmra.mxu0 %v782
      %v1024 = vpop.f32.mrf.mxu0
      %v1025 = vadd.f32 0.0, %v1024
      %v1026 = vpop.f32.mrf.mxu0
      %v1027 = vpop.f32.mrf.mxu0
      %v1028 = vadd.f32 0.0, %v1027
      %v1029 = vpop.f32.mrf.mxu0
      %1030 = vmatprep.mubr.bf16.mxu0 0
      %1031 = vmatmul.mubr.bf16.gmra.mxu0 %v785
      %v1032 = vpop.f32.mrf.mxu0
      %v1033 = vadd.f32 0.0, %v1032
      %v1034 = vpop.f32.mrf.mxu0
      %v1035 = vpop.f32.mrf.mxu0
      %v1036 = vadd.f32 0.0, %v1035
      %v1037 = vpop.f32.mrf.mxu0
      %1038 = vmatprep.mubr.bf16.mxu0 0
      %1039 = vmatmul.mubr.bf16.gmra.mxu0 %v788
      %v1040 = vpop.f32.mrf.mxu0
      %v1041 = vadd.f32 0.0, %v1040
      %v1042 = vpop.f32.mrf.mxu0
      %v1043 = vpop.f32.mrf.mxu0
      %v1044 = vadd.f32 0.0, %v1043
      %v1045 = vpop.f32.mrf.mxu0
      %1046 = vmatprep.mubr.bf16.mxu0 0
      %1047 = vmatmul.mubr.bf16.gmra.mxu0 %v791
      %v1048 = vpop.f32.mrf.mxu0
      %v1049 = vadd.f32 0.0, %v1048
      %v1050 = vpop.f32.mrf.mxu0
      %v1051 = vpop.f32.mrf.mxu0
      %v1052 = vadd.f32 0.0, %v1051
      %v1053 = vpop.f32.mrf.mxu0
      %1054 = vmatprep.mubr.bf16.mxu0 0
      %1055 = vmatmul.mubr.bf16.gmra.mxu0 %v794
      %v1056 = vpop.f32.mrf.mxu0
      %v1057 = vadd.f32 0.0, %v1056
      %v1058 = vpop.f32.mrf.mxu0
      %v1059 = vpop.f32.mrf.mxu0
      %v1060 = vadd.f32 0.0, %v1059
      %v1061 = vpop.f32.mrf.mxu0
      %1062 = vmatprep.mubr.bf16.mxu0 0
      %1063 = vmatmul.mubr.bf16.gmra.mxu0 %v797
      %v1064 = vpop.f32.mrf.mxu0
      %v1065 = vadd.f32 0.0, %v1064
      %v1066 = vpop.f32.mrf.mxu0
      %v1067 = vpop.f32.mrf.mxu0
      %v1068 = vadd.f32 0.0, %v1067
      %v1069 = vpop.f32.mrf.mxu0
      %1070 = vmatprep.mubr.bf16.mxu0 0
      %1071 = vmatmul.mubr.bf16.gmra.mxu0 %v800
      %v1072 = vpop.f32.mrf.mxu0
      %v1073 = vadd.f32 0.0, %v1072
      %v1074 = vpop.f32.mrf.mxu0
      %v1075 = vpop.f32.mrf.mxu0
      %v1076 = vadd.f32 0.0, %v1075
      %v1077 = vpop.f32.mrf.mxu0
      %1078 = vmatprep.mubr.bf16.mxu0 0
      %1079 = vmatmul.mubr.bf16.gmra.mxu0 %v803
      %v1080 = vpop.f32.mrf.mxu0
      %v1081 = vadd.f32 0.0, %v1080
      %v1082 = vpop.f32.mrf.mxu0
      %v1083 = vpop.f32.mrf.mxu0
      %v1084 = vadd.f32 0.0, %v1083
      %v1085 = vpop.f32.mrf.mxu0
      %1086 = vmatprep.mubr.bf16.mxu0 0
      %1087 = vmatmul.mubr.bf16.gmra.mxu0 %v806
      %v1088 = vpop.f32.mrf.mxu0
      %v1089 = vadd.f32 0.0, %v1088
      %v1090 = vpop.f32.mrf.mxu0
      %v1091 = vpop.f32.mrf.mxu0
      %v1092 = vadd.f32 0.0, %v1091
      %v1093 = vpop.f32.mrf.mxu0
      %1094 = vmatprep.mubr.bf16.mxu0 0
      %1095 = vmatmul.mubr.bf16.gmra.mxu0 %v809
      %v1096 = vpop.f32.mrf.mxu0
      %v1097 = vadd.f32 0.0, %v1096
      %v1098 = vpop.f32.mrf.mxu0
      %v1099 = vpop.f32.mrf.mxu0
      %v1100 = vadd.f32 0.0, %v1099
      %v1101 = vpop.f32.mrf.mxu0
      %1102 = vmatprep.mubr.bf16.mxu0 0
      %1103 = vmatmul.mubr.bf16.gmra.mxu0 %v812
      %v1104 = vpop.f32.mrf.mxu0
      %v1105 = vadd.f32 0.0, %v1104
      %v1106 = vpop.f32.mrf.mxu0
      %v1107 = vpop.f32.mrf.mxu0
      %v1108 = vadd.f32 0.0, %v1107
      %v1109 = vpop.f32.mrf.mxu0
      %1110 = vmatprep.mubr.bf16.mxu0 0
      %1111 = vmatmul.mubr.bf16.gmra.mxu0 %v815
      %v1112 = vpop.f32.mrf.mxu0
      %v1113 = vadd.f32 0.0, %v1112
      %v1114 = vpop.f32.mrf.mxu0
      %v1115 = vpop.f32.mrf.mxu0
      %v1116 = vadd.f32 0.0, %v1115
      %v1117 = vpop.f32.mrf.mxu0
      %1118 = vmatprep.mubr.bf16.mxu0 0
      %1119 = vmatmul.mubr.bf16.gmra.mxu0 %v818
      %v1120 = vpop.f32.mrf.mxu0
      %v1121 = vadd.f32 0.0, %v1120
      %v1122 = vpop.f32.mrf.mxu0
      %v1123 = vpop.f32.mrf.mxu0
      %v1124 = vadd.f32 0.0, %v1123
      %v1125 = vpop.f32.mrf.mxu0
      %1126 = vmatprep.mubr.bf16.mxu0 0
      %1127 = vmatmul.mubr.bf16.gmra.mxu0 %v821
      %v1128 = vpop.f32.mrf.mxu0
      %v1129 = vadd.f32 0.0, %v1128
      %v1130 = vpop.f32.mrf.mxu0
      %v1131 = vpop.f32.mrf.mxu0
      %v1132 = vadd.f32 0.0, %v1131
      %v1133 = vpop.f32.mrf.mxu0
      %1134 = vmatprep.mubr.bf16.mxu0 0
      %1135 = vmatmul.mubr.bf16.gmra.mxu0 %v824
      %v1136 = vpop.f32.mrf.mxu0
      %v1137 = vadd.f32 0.0, %v1136
      %v1138 = vpop.f32.mrf.mxu0
      %v1139 = vpop.f32.mrf.mxu0
      %v1140 = vadd.f32 0.0, %v1139
      %v1141 = vpop.f32.mrf.mxu0
      %1142 = vmatprep.mubr.bf16.mxu0 0
      %1143 = vmatmul.mubr.bf16.gmra.mxu0 %v827
      %v1144 = vpop.f32.mrf.mxu0
      %v1145 = vadd.f32 0.0, %v1144
      %v1146 = vpop.f32.mrf.mxu0
      %v1147 = vpop.f32.mrf.mxu0
      %v1148 = vadd.f32 0.0, %v1147
      %v1149 = vpop.f32.mrf.mxu0
      %1150 = vmatprep.mubr.bf16.mxu0 0
      %1151 = vmatmul.mubr.bf16.gmra.mxu0 %v830
      %v1152 = vpop.f32.mrf.mxu0
      %v1153 = vadd.f32 0.0, %v1152
      %v1154 = vpop.f32.mrf.mxu0
      %v1155 = vpop.f32.mrf.mxu0
      %v1156 = vadd.f32 0.0, %v1155
      %v1157 = vpop.f32.mrf.mxu0
      %1158 = vmatprep.mubr.bf16.mxu0 0
      %1159 = vmatmul.mubr.bf16.gmra.mxu0 %v833
      %v1160 = vpop.f32.mrf.mxu0
      %v1161 = vadd.f32 0.0, %v1160
      %v1162 = vpop.f32.mrf.mxu0
      %v1163 = vpop.f32.mrf.mxu0
      %v1164 = vadd.f32 0.0, %v1163
      %v1165 = vpop.f32.mrf.mxu0
      %1166 = vmatprep.mubr.bf16.mxu0 0
      %1167 = vmatmul.mubr.bf16.gmra.mxu0 %v836
      %v1168 = vpop.f32.mrf.mxu0
      %v1169 = vadd.f32 0.0, %v1168
      %v1170 = vpop.f32.mrf.mxu0
      %v1171 = vpop.f32.mrf.mxu0
      %v1172 = vadd.f32 0.0, %v1171
      %v1173 = vpop.f32.mrf.mxu0
      %1174 = vmatprep.mubr.bf16.mxu0 0
      %1175 = vmatmul.mubr.bf16.gmra.mxu0 %v839
      %v1176 = vpop.f32.mrf.mxu0
      %v1177 = vadd.f32 0.0, %v1176
      %v1178 = vpop.f32.mrf.mxu0
      %v1179 = vpop.f32.mrf.mxu0
      %v1180 = vadd.f32 0.0, %v1179
      %v1181 = vpop.f32.mrf.mxu0
      %1182 = vmatprep.mubr.bf16.mxu0 0
      %1183 = vmatmul.mubr.bf16.gmra.mxu0 %v842
      %v1184 = vpop.f32.mrf.mxu0
      %v1185 = vadd.f32 0.0, %v1184
      %v1186 = vpop.f32.mrf.mxu0
      %v1187 = vpop.f32.mrf.mxu0
      %v1188 = vadd.f32 0.0, %v1187
      %v1189 = vpop.f32.mrf.mxu0
      %1190 = vmatprep.mubr.bf16.mxu0 0
      %1191 = vmatmul.mubr.bf16.gmra.mxu0 %v845
      %v1192 = vpop.f32.mrf.mxu0
      %v1193 = vadd.f32 0.0, %v1192
      %v1194 = vpop.f32.mrf.mxu0
      %v1195 = vpop.f32.mrf.mxu0
      %v1196 = vadd.f32 0.0, %v1195
      %v1197 = vpop.f32.mrf.mxu0
      %1198 = vmatprep.mubr.bf16.mxu0 0
      %1199 = vmatmul.mubr.bf16.gmra.mxu0 %v848
      %v1200 = vpop.f32.mrf.mxu0
      %v1201 = vadd.f32 0.0, %v1200
      %v1202 = vpop.f32.mrf.mxu0
      %v1203 = vpop.f32.mrf.mxu0
      %v1204 = vadd.f32 0.0, %v1203
      %v1205 = vpop.f32.mrf.mxu0
      %1206 = vdwg.mxu0
      %vm1207 = vcmask 261120
      %v1208 = vsel %vm1207, %v889, 0.0
      %v1209 = vsel %vm1207, %v892, 0.0
      %v1210 = vadd.f32 %v1208, %v1209
      %v1211 = vsel %vm1207, %v897, 0.0
      %v1212 = vadd.f32 %v1210, %v1211
      %v1213 = vsel %vm1207, %v900, 0.0
      %v1214 = vadd.f32 %v1212, %v1213
      %v1215 = vsel %vm1207, %v905, 0.0
      %v1216 = vadd.f32 %v1214, %v1215
      %v1217 = vsel %vm1207, %v908, 0.0
      %v1218 = vadd.f32 %v1216, %v1217
      %v1219 = vsel %vm1207, %v913, 0.0
      %v1220 = vadd.f32 %v1218, %v1219
      %v1221 = vsel %vm1207, %v916, 0.0
      %v1222 = vadd.f32 %v1220, %v1221
      %v1223 = vsel %vm1207, %v921, 0.0
      %v1224 = vadd.f32 %v1222, %v1223
      %v1225 = vsel %vm1207, %v924, 0.0
      %v1226 = vadd.f32 %v1224, %v1225
      %v1227 = vsel %vm1207, %v929, 0.0
      %v1228 = vadd.f32 %v1226, %v1227
      %v1229 = vsel %vm1207, %v932, 0.0
      %v1230 = vadd.f32 %v1228, %v1229
      %v1231 = vsel %vm1207, %v937, 0.0
      %v1232 = vadd.f32 %v1230, %v1231
      %v1233 = vsel %vm1207, %v940, 0.0
      %v1234 = vadd.f32 %v1232, %v1233
      %v1235 = vsel %vm1207, %v945, 0.0
      %v1236 = vadd.f32 %v1234, %v1235
      %v1237 = vsel %vm1207, %v948, 0.0
      %v1238 = vadd.f32 %v1236, %v1237
      %v1239 = vsel %vm1207, %v953, 0.0
      %v1240 = vadd.f32 %v1238, %v1239
      %v1241 = vsel %vm1207, %v956, 0.0
      %v1242 = vadd.f32 %v1240, %v1241
      %v1243 = vsel %vm1207, %v961, 0.0
      %v1244 = vadd.f32 %v1242, %v1243
      %v1245 = vsel %vm1207, %v964, 0.0
      %v1246 = vadd.f32 %v1244, %v1245
      %v1247 = vsel %vm1207, %v969, 0.0
      %v1248 = vadd.f32 %v1246, %v1247
      %v1249 = vsel %vm1207, %v972, 0.0
      %v1250 = vadd.f32 %v1248, %v1249
      %v1251 = vsel %vm1207, %v977, 0.0
      %v1252 = vadd.f32 %v1250, %v1251
      %v1253 = vsel %vm1207, %v980, 0.0
      %v1254 = vadd.f32 %v1252, %v1253
      %v1255 = vsel %vm1207, %v985, 0.0
      %v1256 = vadd.f32 %v1254, %v1255
      %v1257 = vsel %vm1207, %v988, 0.0
      %v1258 = vadd.f32 %v1256, %v1257
      %v1259 = vsel %vm1207, %v993, 0.0
      %v1260 = vadd.f32 %v1258, %v1259
      %v1261 = vsel %vm1207, %v996, 0.0
      %v1262 = vadd.f32 %v1260, %v1261
      %v1263 = vsel %vm1207, %v1001, 0.0
      %v1264 = vadd.f32 %v1262, %v1263
      %v1265 = vsel %vm1207, %v1004, 0.0
      %v1266 = vadd.f32 %v1264, %v1265
      %v1267 = vsel %vm1207, %v1009, 0.0
      %v1268 = vadd.f32 %v1266, %v1267
      %v1269 = vsel %vm1207, %v1012, 0.0
      %v1270 = vadd.f32 %v1268, %v1269
      %v1271 = vsel %vm1207, %v1017, 0.0
      %v1272 = vadd.f32 %v1270, %v1271
      %v1273 = vsel %vm1207, %v1020, 0.0
      %v1274 = vadd.f32 %v1272, %v1273
      %v1275 = vsel %vm1207, %v1025, 0.0
      %v1276 = vadd.f32 %v1274, %v1275
      %v1277 = vsel %vm1207, %v1028, 0.0
      %v1278 = vadd.f32 %v1276, %v1277
      %v1279 = vsel %vm1207, %v1033, 0.0
      %v1280 = vadd.f32 %v1278, %v1279
      %v1281 = vsel %vm1207, %v1036, 0.0
      %v1282 = vadd.f32 %v1280, %v1281
      %v1283 = vsel %vm1207, %v1041, 0.0
      %v1284 = vadd.f32 %v1282, %v1283
      %v1285 = vsel %vm1207, %v1044, 0.0
      %v1286 = vadd.f32 %v1284, %v1285
      %v1287 = vsel %vm1207, %v1049, 0.0
      %v1288 = vadd.f32 %v1286, %v1287
      %v1289 = vsel %vm1207, %v1052, 0.0
      %v1290 = vadd.f32 %v1288, %v1289
      %v1291 = vsel %vm1207, %v1057, 0.0
      %v1292 = vadd.f32 %v1290, %v1291
      %v1293 = vsel %vm1207, %v1060, 0.0
      %v1294 = vadd.f32 %v1292, %v1293
      %v1295 = vsel %vm1207, %v1065, 0.0
      %v1296 = vadd.f32 %v1294, %v1295
      %v1297 = vsel %vm1207, %v1068, 0.0
      %v1298 = vadd.f32 %v1296, %v1297
      %v1299 = vsel %vm1207, %v1073, 0.0
      %v1300 = vadd.f32 %v1298, %v1299
      %v1301 = vsel %vm1207, %v1076, 0.0
      %v1302 = vadd.f32 %v1300, %v1301
      %v1303 = vsel %vm1207, %v1081, 0.0
      %v1304 = vadd.f32 %v1302, %v1303
      %v1305 = vsel %vm1207, %v1084, 0.0
      %v1306 = vadd.f32 %v1304, %v1305
      %v1307 = vsel %vm1207, %v1089, 0.0
      %v1308 = vadd.f32 %v1306, %v1307
      %v1309 = vsel %vm1207, %v1092, 0.0
      %v1310 = vadd.f32 %v1308, %v1309
      %v1311 = vsel %vm1207, %v1097, 0.0
      %v1312 = vadd.f32 %v1310, %v1311
      %v1313 = vsel %vm1207, %v1100, 0.0
      %v1314 = vadd.f32 %v1312, %v1313
      %v1315 = vsel %vm1207, %v1105, 0.0
      %v1316 = vadd.f32 %v1314, %v1315
      %v1317 = vsel %vm1207, %v1108, 0.0
      %v1318 = vadd.f32 %v1316, %v1317
      %v1319 = vsel %vm1207, %v1113, 0.0
      %v1320 = vadd.f32 %v1318, %v1319
      %v1321 = vsel %vm1207, %v1116, 0.0
      %v1322 = vadd.f32 %v1320, %v1321
      %v1323 = vsel %vm1207, %v1121, 0.0
      %v1324 = vadd.f32 %v1322, %v1323
      %v1325 = vsel %vm1207, %v1124, 0.0
      %v1326 = vadd.f32 %v1324, %v1325
      %v1327 = vsel %vm1207, %v1129, 0.0
      %v1328 = vadd.f32 %v1326, %v1327
      %v1329 = vsel %vm1207, %v1132, 0.0
      %v1330 = vadd.f32 %v1328, %v1329
      %v1331 = vsel %vm1207, %v1137, 0.0
      %v1332 = vadd.f32 %v1330, %v1331
      %v1333 = vsel %vm1207, %v1140, 0.0
      %v1334 = vadd.f32 %v1332, %v1333
      %v1335 = vsel %vm1207, %v1145, 0.0
      %v1336 = vadd.f32 %v1334, %v1335
      %v1337 = vsel %vm1207, %v1148, 0.0
      %v1338 = vadd.f32 %v1336, %v1337
      %v1339 = vsel %vm1207, %v1153, 0.0
      %v1340 = vadd.f32 %v1338, %v1339
      %v1341 = vsel %vm1207, %v1156, 0.0
      %v1342 = vadd.f32 %v1340, %v1341
      %v1343 = vsel %vm1207, %v1161, 0.0
      %v1344 = vadd.f32 %v1342, %v1343
      %v1345 = vsel %vm1207, %v1164, 0.0
      %v1346 = vadd.f32 %v1344, %v1345
      %v1347 = vsel %vm1207, %v1169, 0.0
      %v1348 = vadd.f32 %v1346, %v1347
      %v1349 = vsel %vm1207, %v1172, 0.0
      %v1350 = vadd.f32 %v1348, %v1349
      %v1351 = vsel %vm1207, %v1177, 0.0
      %v1352 = vadd.f32 %v1350, %v1351
      %v1353 = vsel %vm1207, %v1180, 0.0
      %v1354 = vadd.f32 %v1352, %v1353
      %v1355 = vsel %vm1207, %v1185, 0.0
      %v1356 = vadd.f32 %v1354, %v1355
      %v1357 = vsel %vm1207, %v1188, 0.0
      %v1358 = vadd.f32 %v1356, %v1357
      %v1359 = vsel %vm1207, %v1193, 0.0
      %v1360 = vadd.f32 %v1358, %v1359
      %v1361 = vsel %vm1207, %v1196, 0.0
      %v1362 = vadd.f32 %v1360, %v1361
      %v1363 = vsel %vm1207, %v1201, 0.0
      %v1364 = vadd.f32 %v1362, %v1363
      %vm1365 = vcmask 260096
      %v1366 = vsel %vm1365, %v1204, 0.0
      %v1367 = vadd.f32 %v1364, %v1366
      %v1368 = vrot.slane %v1367, 4
      %v1369 = vadd.f32 %v1367, %v1368
      %v1370 = vrot.slane %v1369, 2
      %v1371 = vadd.f32 %v1369, %v1370
      %v1372 = vrot.slane %v1371, 1
      %v1373 = vadd.f32 %v1371, %v1372
      %v1374 = vrcp.pop 639.0
      %v1375 = vmul.f32 %v1373, %v1374
      %v1376 = vsub.f32 %v889, %v1375
      %v1377 = vsub.f32 %v892, %v1375
      %v1378 = vsub.f32 %v897, %v1375
      %v1379 = vsub.f32 %v900, %v1375
      %v1380 = vsub.f32 %v905, %v1375
      %v1381 = vsub.f32 %v908, %v1375
      %v1382 = vsub.f32 %v913, %v1375
      %v1383 = vsub.f32 %v916, %v1375
      %v1384 = vsub.f32 %v921, %v1375
      %v1385 = vsub.f32 %v924, %v1375
      %v1386 = vsub.f32 %v929, %v1375
      %v1387 = vsub.f32 %v932, %v1375
      %v1388 = vsub.f32 %v937, %v1375
      %v1389 = vsub.f32 %v940, %v1375
      %v1390 = vsub.f32 %v945, %v1375
      %v1391 = vsub.f32 %v948, %v1375
      %v1392 = vsub.f32 %v953, %v1375
      %v1393 = vsub.f32 %v956, %v1375
      %v1394 = vsub.f32 %v961, %v1375
      %v1395 = vsub.f32 %v964, %v1375
      %v1396 = vsub.f32 %v969, %v1375
      %v1397 = vsub.f32 %v972, %v1375
      %v1398 = vsub.f32 %v977, %v1375
      %v1399 = vsub.f32 %v980, %v1375
      %v1400 = vsub.f32 %v985, %v1375
      %v1401 = vsub.f32 %v988, %v1375
      %v1402 = vsub.f32 %v993, %v1375
      %v1403 = vsub.f32 %v996, %v1375
      %v1404 = vsub.f32 %v1001, %v1375
      %v1405 = vsub.f32 %v1004, %v1375
      %v1406 = vsub.f32 %v1009, %v1375
      %v1407 = vsub.f32 %v1012, %v1375
      %v1408 = vsub.f32 %v1017, %v1375
      %v1409 = vsub.f32 %v1020, %v1375
      %v1410 = vsub.f32 %v1025, %v1375
      %v1411 = vsub.f32 %v1028, %v1375
      %v1412 = vsub.f32 %v1033, %v1375
      %v1413 = vsub.f32 %v1036, %v1375
      %v1414 = vsub.f32 %v1041, %v1375
      %v1415 = vsub.f32 %v1044, %v1375
      %v1416 = vsub.f32 %v1049, %v1375
      %v1417 = vsub.f32 %v1052, %v1375
      %v1418 = vsub.f32 %v1057, %v1375
      %v1419 = vsub.f32 %v1060, %v1375
      %v1420 = vsub.f32 %v1065, %v1375
      %v1421 = vsub.f32 %v1068, %v1375
      %v1422 = vsub.f32 %v1073, %v1375
      %v1423 = vsub.f32 %v1076, %v1375
      %v1424 = vsub.f32 %v1081, %v1375
      %v1425 = vsub.f32 %v1084, %v1375
      %v1426 = vsub.f32 %v1089, %v1375
      %v1427 = vsub.f32 %v1092, %v1375
      %v1428 = vsub.f32 %v1097, %v1375
      %v1429 = vsub.f32 %v1100, %v1375
      %v1430 = vsub.f32 %v1105, %v1375
      %v1431 = vsub.f32 %v1108, %v1375
      %v1432 = vsub.f32 %v1113, %v1375
      %v1433 = vsub.f32 %v1116, %v1375
      %v1434 = vsub.f32 %v1121, %v1375
      %v1435 = vsub.f32 %v1124, %v1375
      %v1436 = vsub.f32 %v1129, %v1375
      %v1437 = vsub.f32 %v1132, %v1375
      %v1438 = vsub.f32 %v1137, %v1375
      %v1439 = vsub.f32 %v1140, %v1375
      %v1440 = vsub.f32 %v1145, %v1375
      %v1441 = vsub.f32 %v1148, %v1375
      %v1442 = vsub.f32 %v1153, %v1375
      %v1443 = vsub.f32 %v1156, %v1375
      %v1444 = vsub.f32 %v1161, %v1375
      %v1445 = vsub.f32 %v1164, %v1375
      %v1446 = vsub.f32 %v1169, %v1375
      %v1447 = vsub.f32 %v1172, %v1375
      %v1448 = vsub.f32 %v1177, %v1375
      %v1449 = vsub.f32 %v1180, %v1375
      %v1450 = vsub.f32 %v1185, %v1375
      %v1451 = vsub.f32 %v1188, %v1375
      %v1452 = vsub.f32 %v1193, %v1375
      %v1453 = vsub.f32 %v1196, %v1375
      %v1454 = vsub.f32 %v1201, %v1375
      %v1455 = vsub.f32 %v1204, %v1375
      %v1456 = vmul.f32 %v1376, %v1376
      %v1457 = vmul.f32 %v1377, %v1377
      %v1458 = vmul.f32 %v1378, %v1378
      %v1459 = vmul.f32 %v1379, %v1379
      %v1460 = vmul.f32 %v1380, %v1380
      %v1461 = vmul.f32 %v1381, %v1381
      %v1462 = vmul.f32 %v1382, %v1382
      %v1463 = vmul.f32 %v1383, %v1383
      %v1464 = vmul.f32 %v1384, %v1384
      %v1465 = vmul.f32 %v1385, %v1385
      %v1466 = vmul.f32 %v1386, %v1386
      %v1467 = vmul.f32 %v1387, %v1387
      %v1468 = vmul.f32 %v1388, %v1388
      %v1469 = vmul.f32 %v1389, %v1389
      %v1470 = vmul.f32 %v1390, %v1390
      %v1471 = vmul.f32 %v1391, %v1391
      %v1472 = vmul.f32 %v1392, %v1392
      %v1473 = vmul.f32 %v1393, %v1393
      %v1474 = vmul.f32 %v1394, %v1394
      %v1475 = vmul.f32 %v1395, %v1395
      %v1476 = vmul.f32 %v1396, %v1396
      %v1477 = vmul.f32 %v1397, %v1397
      %v1478 = vmul.f32 %v1398, %v1398
      %v1479 = vmul.f32 %v1399, %v1399
      %v1480 = vmul.f32 %v1400, %v1400
      %v1481 = vmul.f32 %v1401, %v1401
      %v1482 = vmul.f32 %v1402, %v1402
      %v1483 = vmul.f32 %v1403, %v1403
      %v1484 = vmul.f32 %v1404, %v1404
      %v1485 = vmul.f32 %v1405, %v1405
      %v1486 = vmul.f32 %v1406, %v1406
      %v1487 = vmul.f32 %v1407, %v1407
      %v1488 = vmul.f32 %v1408, %v1408
      %v1489 = vmul.f32 %v1409, %v1409
      %v1490 = vmul.f32 %v1410, %v1410
      %v1491 = vmul.f32 %v1411, %v1411
      %v1492 = vmul.f32 %v1412, %v1412
      %v1493 = vmul.f32 %v1413, %v1413
      %v1494 = vmul.f32 %v1414, %v1414
      %v1495 = vmul.f32 %v1415, %v1415
      %v1496 = vmul.f32 %v1416, %v1416
      %v1497 = vmul.f32 %v1417, %v1417
      %v1498 = vmul.f32 %v1418, %v1418
      %v1499 = vmul.f32 %v1419, %v1419
      %v1500 = vmul.f32 %v1420, %v1420
      %v1501 = vmul.f32 %v1421, %v1421
      %v1502 = vmul.f32 %v1422, %v1422
      %v1503 = vmul.f32 %v1423, %v1423
      %v1504 = vmul.f32 %v1424, %v1424
      %v1505 = vmul.f32 %v1425, %v1425
      %v1506 = vmul.f32 %v1426, %v1426
      %v1507 = vmul.f32 %v1427, %v1427
      %v1508 = vmul.f32 %v1428, %v1428
      %v1509 = vmul.f32 %v1429, %v1429
      %v1510 = vmul.f32 %v1430, %v1430
      %v1511 = vmul.f32 %v1431, %v1431
      %v1512 = vmul.f32 %v1432, %v1432
      %v1513 = vmul.f32 %v1433, %v1433
      %v1514 = vmul.f32 %v1434, %v1434
      %v1515 = vmul.f32 %v1435, %v1435
      %v1516 = vmul.f32 %v1436, %v1436
      %v1517 = vmul.f32 %v1437, %v1437
      %v1518 = vmul.f32 %v1438, %v1438
      %v1519 = vmul.f32 %v1439, %v1439
      %v1520 = vmul.f32 %v1440, %v1440
      %v1521 = vmul.f32 %v1441, %v1441
      %v1522 = vmul.f32 %v1442, %v1442
      %v1523 = vmul.f32 %v1443, %v1443
      %v1524 = vmul.f32 %v1444, %v1444
      %v1525 = vmul.f32 %v1445, %v1445
      %v1526 = vmul.f32 %v1446, %v1446
      %v1527 = vmul.f32 %v1447, %v1447
      %v1528 = vmul.f32 %v1448, %v1448
      %v1529 = vmul.f32 %v1449, %v1449
      %v1530 = vmul.f32 %v1450, %v1450
      %v1531 = vmul.f32 %v1451, %v1451
      %v1532 = vmul.f32 %v1452, %v1452
      %v1533 = vmul.f32 %v1453, %v1453
      %v1534 = vmul.f32 %v1454, %v1454
      %v1535 = vmul.f32 %v1455, %v1455
      %v1536 = vsel %vm1207, %v1456, 0.0
      %v1537 = vsel %vm1207, %v1457, 0.0
      %v1538 = vadd.f32 %v1536, %v1537
      %v1539 = vsel %vm1207, %v1458, 0.0
      %v1540 = vadd.f32 %v1538, %v1539
      %v1541 = vsel %vm1207, %v1459, 0.0
      %v1542 = vadd.f32 %v1540, %v1541
      %v1543 = vsel %vm1207, %v1460, 0.0
      %v1544 = vadd.f32 %v1542, %v1543
      %v1545 = vsel %vm1207, %v1461, 0.0
      %v1546 = vadd.f32 %v1544, %v1545
      %v1547 = vsel %vm1207, %v1462, 0.0
      %v1548 = vadd.f32 %v1546, %v1547
      %v1549 = vsel %vm1207, %v1463, 0.0
      %v1550 = vadd.f32 %v1548, %v1549
      %v1551 = vsel %vm1207, %v1464, 0.0
      %v1552 = vadd.f32 %v1550, %v1551
      %v1553 = vsel %vm1207, %v1465, 0.0
      %v1554 = vadd.f32 %v1552, %v1553
      %v1555 = vsel %vm1207, %v1466, 0.0
      %v1556 = vadd.f32 %v1554, %v1555
      %v1557 = vsel %vm1207, %v1467, 0.0
      %v1558 = vadd.f32 %v1556, %v1557
      %v1559 = vsel %vm1207, %v1468, 0.0
      %v1560 = vadd.f32 %v1558, %v1559
      %v1561 = vsel %vm1207, %v1469, 0.0
      %v1562 = vadd.f32 %v1560, %v1561
      %v1563 = vsel %vm1207, %v1470, 0.0
      %v1564 = vadd.f32 %v1562, %v1563
      %v1565 = vsel %vm1207, %v1471, 0.0
      %v1566 = vadd.f32 %v1564, %v1565
      %v1567 = vsel %vm1207, %v1472, 0.0
      %v1568 = vadd.f32 %v1566, %v1567
      %v1569 = vsel %vm1207, %v1473, 0.0
      %v1570 = vadd.f32 %v1568, %v1569
      %v1571 = vsel %vm1207, %v1474, 0.0
      %v1572 = vadd.f32 %v1570, %v1571
      %v1573 = vsel %vm1207, %v1475, 0.0
      %v1574 = vadd.f32 %v1572, %v1573
      %v1575 = vsel %vm1207, %v1476, 0.0
      %v1576 = vadd.f32 %v1574, %v1575
      %v1577 = vsel %vm1207, %v1477, 0.0
      %v1578 = vadd.f32 %v1576, %v1577
      %v1579 = vsel %vm1207, %v1478, 0.0
      %v1580 = vadd.f32 %v1578, %v1579
      %v1581 = vsel %vm1207, %v1479, 0.0
      %v1582 = vadd.f32 %v1580, %v1581
      %v1583 = vsel %vm1207, %v1480, 0.0
      %v1584 = vadd.f32 %v1582, %v1583
      %v1585 = vsel %vm1207, %v1481, 0.0
      %v1586 = vadd.f32 %v1584, %v1585
      %v1587 = vsel %vm1207, %v1482, 0.0
      %v1588 = vadd.f32 %v1586, %v1587
      %v1589 = vsel %vm1207, %v1483, 0.0
      %v1590 = vadd.f32 %v1588, %v1589
      %v1591 = vsel %vm1207, %v1484, 0.0
      %v1592 = vadd.f32 %v1590, %v1591
      %v1593 = vsel %vm1207, %v1485, 0.0
      %v1594 = vadd.f32 %v1592, %v1593
      %v1595 = vsel %vm1207, %v1486, 0.0
      %v1596 = vadd.f32 %v1594, %v1595
      %v1597 = vsel %vm1207, %v1487, 0.0
      %v1598 = vadd.f32 %v1596, %v1597
      %v1599 = vsel %vm1207, %v1488, 0.0
      %v1600 = vadd.f32 %v1598, %v1599
      %v1601 = vsel %vm1207, %v1489, 0.0
      %v1602 = vadd.f32 %v1600, %v1601
      %v1603 = vsel %vm1207, %v1490, 0.0
      %v1604 = vadd.f32 %v1602, %v1603
      %v1605 = vsel %vm1207, %v1491, 0.0
      %v1606 = vadd.f32 %v1604, %v1605
      %v1607 = vsel %vm1207, %v1492, 0.0
      %v1608 = vadd.f32 %v1606, %v1607
      %v1609 = vsel %vm1207, %v1493, 0.0
      %v1610 = vadd.f32 %v1608, %v1609
      %v1611 = vsel %vm1207, %v1494, 0.0
      %v1612 = vadd.f32 %v1610, %v1611
      %v1613 = vsel %vm1207, %v1495, 0.0
      %v1614 = vadd.f32 %v1612, %v1613
      %v1615 = vsel %vm1207, %v1496, 0.0
      %v1616 = vadd.f32 %v1614, %v1615
      %v1617 = vsel %vm1207, %v1497, 0.0
      %v1618 = vadd.f32 %v1616, %v1617
      %v1619 = vsel %vm1207, %v1498, 0.0
      %v1620 = vadd.f32 %v1618, %v1619
      %v1621 = vsel %vm1207, %v1499, 0.0
      %v1622 = vadd.f32 %v1620, %v1621
      %v1623 = vsel %vm1207, %v1500, 0.0
      %v1624 = vadd.f32 %v1622, %v1623
      %v1625 = vsel %vm1207, %v1501, 0.0
      %v1626 = vadd.f32 %v1624, %v1625
      %v1627 = vsel %vm1207, %v1502, 0.0
      %v1628 = vadd.f32 %v1626, %v1627
      %v1629 = vsel %vm1207, %v1503, 0.0
      %v1630 = vadd.f32 %v1628, %v1629
      %v1631 = vsel %vm1207, %v1504, 0.0
      %v1632 = vadd.f32 %v1630, %v1631
      %v1633 = vsel %vm1207, %v1505, 0.0
      %v1634 = vadd.f32 %v1632, %v1633
      %v1635 = vsel %vm1207, %v1506, 0.0
      %v1636 = vadd.f32 %v1634, %v1635
      %v1637 = vsel %vm1207, %v1507, 0.0
      %v1638 = vadd.f32 %v1636, %v1637
      %v1639 = vsel %vm1207, %v1508, 0.0
      %v1640 = vadd.f32 %v1638, %v1639
      %v1641 = vsel %vm1207, %v1509, 0.0
      %v1642 = vadd.f32 %v1640, %v1641
      %v1643 = vsel %vm1207, %v1510, 0.0
      %v1644 = vadd.f32 %v1642, %v1643
      %v1645 = vsel %vm1207, %v1511, 0.0
      %v1646 = vadd.f32 %v1644, %v1645
      %v1647 = vsel %vm1207, %v1512, 0.0
      %v1648 = vadd.f32 %v1646, %v1647
      %v1649 = vsel %vm1207, %v1513, 0.0
      %v1650 = vadd.f32 %v1648, %v1649
      %v1651 = vsel %vm1207, %v1514, 0.0
      %v1652 = vadd.f32 %v1650, %v1651
      %v1653 = vsel %vm1207, %v1515, 0.0
      %v1654 = vadd.f32 %v1652, %v1653
      %v1655 = vsel %vm1207, %v1516, 0.0
      %v1656 = vadd.f32 %v1654, %v1655
      %v1657 = vsel %vm1207, %v1517, 0.0
      %v1658 = vadd.f32 %v1656, %v1657
      %v1659 = vsel %vm1207, %v1518, 0.0
      %v1660 = vadd.f32 %v1658, %v1659
      %v1661 = vsel %vm1207, %v1519, 0.0
      %v1662 = vadd.f32 %v1660, %v1661
      %v1663 = vsel %vm1207, %v1520, 0.0
      %v1664 = vadd.f32 %v1662, %v1663
      %v1665 = vsel %vm1207, %v1521, 0.0
      %v1666 = vadd.f32 %v1664, %v1665
      %v1667 = vsel %vm1207, %v1522, 0.0
      %v1668 = vadd.f32 %v1666, %v1667
      %v1669 = vsel %vm1207, %v1523, 0.0
      %v1670 = vadd.f32 %v1668, %v1669
      %v1671 = vsel %vm1207, %v1524, 0.0
      %v1672 = vadd.f32 %v1670, %v1671
      %v1673 = vsel %vm1207, %v1525, 0.0
      %v1674 = vadd.f32 %v1672, %v1673
      %v1675 = vsel %vm1207, %v1526, 0.0
      %v1676 = vadd.f32 %v1674, %v1675
      %v1677 = vsel %vm1207, %v1527, 0.0
      %v1678 = vadd.f32 %v1676, %v1677
      %v1679 = vsel %vm1207, %v1528, 0.0
      %v1680 = vadd.f32 %v1678, %v1679
      %v1681 = vsel %vm1207, %v1529, 0.0
      %v1682 = vadd.f32 %v1680, %v1681
      %v1683 = vsel %vm1207, %v1530, 0.0
      %v1684 = vadd.f32 %v1682, %v1683
      %v1685 = vsel %vm1207, %v1531, 0.0
      %v1686 = vadd.f32 %v1684, %v1685
      %v1687 = vsel %vm1207, %v1532, 0.0
      %v1688 = vadd.f32 %v1686, %v1687
      %v1689 = vsel %vm1207, %v1533, 0.0
      %v1690 = vadd.f32 %v1688, %v1689
      %v1691 = vsel %vm1207, %v1534, 0.0
      %v1692 = vadd.f32 %v1690, %v1691
      %v1693 = vsel %vm1365, %v1535, 0.0
      %v1694 = vadd.f32 %v1692, %v1693
      %v1695 = vrot.slane %v1694, 4
      %v1696 = vadd.f32 %v1694, %v1695
      %v1697 = vrot.slane %v1696, 2
      %v1698 = vadd.f32 %v1696, %v1697
      %v1699 = vrot.slane %v1698, 1
      %v1700 = vadd.f32 %v1698, %v1699
      %v1701 = vmul.f32 %v1700, %v1374
      %v1702 = vadd.f32 %v1701, 1e-05
      %v1703 = vrsqrt.pop %v1702
      %v1704 = vmul.f32 %v1376, %v1703
      %v1705 = vmul.f32 %v1377, %v1703
      %v1706 = vmul.f32 %v1378, %v1703
      %v1707 = vmul.f32 %v1379, %v1703
      %v1708 = vmul.f32 %v1380, %v1703
      %v1709 = vmul.f32 %v1381, %v1703
      %v1710 = vmul.f32 %v1382, %v1703
      %v1711 = vmul.f32 %v1383, %v1703
      %v1712 = vmul.f32 %v1384, %v1703
      %v1713 = vmul.f32 %v1385, %v1703
      %v1714 = vmul.f32 %v1386, %v1703
      %v1715 = vmul.f32 %v1387, %v1703
      %v1716 = vmul.f32 %v1388, %v1703
      %v1717 = vmul.f32 %v1389, %v1703
      %v1718 = vmul.f32 %v1390, %v1703
      %v1719 = vmul.f32 %v1391, %v1703
      %v1720 = vmul.f32 %v1392, %v1703
      %v1721 = vmul.f32 %v1393, %v1703
      %v1722 = vmul.f32 %v1394, %v1703
      %v1723 = vmul.f32 %v1395, %v1703
      %v1724 = vmul.f32 %v1396, %v1703
      %v1725 = vmul.f32 %v1397, %v1703
      %v1726 = vmul.f32 %v1398, %v1703
      %v1727 = vmul.f32 %v1399, %v1703
      %v1728 = vmul.f32 %v1400, %v1703
      %v1729 = vmul.f32 %v1401, %v1703
      %v1730 = vmul.f32 %v1402, %v1703
      %v1731 = vmul.f32 %v1403, %v1703
      %v1732 = vmul.f32 %v1404, %v1703
      %v1733 = vmul.f32 %v1405, %v1703
      %v1734 = vmul.f32 %v1406, %v1703
      %v1735 = vmul.f32 %v1407, %v1703
      %v1736 = vmul.f32 %v1408, %v1703
      %v1737 = vmul.f32 %v1409, %v1703
      %v1738 = vmul.f32 %v1410, %v1703
      %v1739 = vmul.f32 %v1411, %v1703
      %v1740 = vmul.f32 %v1412, %v1703
      %v1741 = vmul.f32 %v1413, %v1703
      %v1742 = vmul.f32 %v1414, %v1703
      %v1743 = vmul.f32 %v1415, %v1703
      %v1744 = vmul.f32 %v1416, %v1703
      %v1745 = vmul.f32 %v1417, %v1703
      %v1746 = vmul.f32 %v1418, %v1703
      %v1747 = vmul.f32 %v1419, %v1703
      %v1748 = vmul.f32 %v1420, %v1703
      %v1749 = vmul.f32 %v1421, %v1703
      %v1750 = vmul.f32 %v1422, %v1703
      %v1751 = vmul.f32 %v1423, %v1703
      %v1752 = vmul.f32 %v1424, %v1703
      %v1753 = vmul.f32 %v1425, %v1703
      %v1754 = vmul.f32 %v1426, %v1703
      %v1755 = vmul.f32 %v1427, %v1703
      %v1756 = vmul.f32 %v1428, %v1703
      %v1757 = vmul.f32 %v1429, %v1703
      %v1758 = vmul.f32 %v1430, %v1703
      %v1759 = vmul.f32 %v1431, %v1703
      %v1760 = vmul.f32 %v1432, %v1703
      %v1761 = vmul.f32 %v1433, %v1703
      %v1762 = vmul.f32 %v1434, %v1703
      %v1763 = vmul.f32 %v1435, %v1703
      %v1764 = vmul.f32 %v1436, %v1703
      %v1765 = vmul.f32 %v1437, %v1703
      %v1766 = vmul.f32 %v1438, %v1703
      %v1767 = vmul.f32 %v1439, %v1703
      %v1768 = vmul.f32 %v1440, %v1703
      %v1769 = vmul.f32 %v1441, %v1703
      %v1770 = vmul.f32 %v1442, %v1703
      %v1771 = vmul.f32 %v1443, %v1703
      %v1772 = vmul.f32 %v1444, %v1703
      %v1773 = vmul.f32 %v1445, %v1703
      %v1774 = vmul.f32 %v1446, %v1703
      %v1775 = vmul.f32 %v1447, %v1703
      %v1776 = vmul.f32 %v1448, %v1703
      %v1777 = vmul.f32 %v1449, %v1703
      %v1778 = vmul.f32 %v1450, %v1703
      %v1779 = vmul.f32 %v1451, %v1703
      %v1780 = vmul.f32 %v1452, %v1703
      %v1781 = vmul.f32 %v1453, %v1703
      %v1782 = vmul.f32 %v1454, %v1703
      %v1783 = vmul.f32 %v1455, %v1703
      %v1784 = vld [vmem:[%s4] sm:$0x1]
      %v1785 = vlaneseq
      %v1786 = vshrl.u32 %v1785, 7
      %v1787 = vsub.s32 0, %v1786
      %v1788 = vrot.slane %v1784, %v1787
      %v1789 = vmul.f32 %v1704, %v1788
      %v1790 = vmul.f32 %v1705, %v1788
      %v1791 = vmul.f32 %v1706, %v1788
      %v1792 = vmul.f32 %v1707, %v1788
      %v1793 = vmul.f32 %v1708, %v1788
      %v1794 = vmul.f32 %v1709, %v1788
      %v1795 = vmul.f32 %v1710, %v1788
      %v1796 = vmul.f32 %v1711, %v1788
      %v1797 = vmul.f32 %v1712, %v1788
      %v1798 = vmul.f32 %v1713, %v1788
      %v1799 = vmul.f32 %v1714, %v1788
      %v1800 = vmul.f32 %v1715, %v1788
      %v1801 = vmul.f32 %v1716, %v1788
      %v1802 = vmul.f32 %v1717, %v1788
      %v1803 = vmul.f32 %v1718, %v1788
      %v1804 = vmul.f32 %v1719, %v1788
      %v1805 = vmul.f32 %v1720, %v1788
      %v1806 = vmul.f32 %v1721, %v1788
      %v1807 = vmul.f32 %v1722, %v1788
      %v1808 = vmul.f32 %v1723, %v1788
      %v1809 = vmul.f32 %v1724, %v1788
      %v1810 = vmul.f32 %v1725, %v1788
      %v1811 = vmul.f32 %v1726, %v1788
      %v1812 = vmul.f32 %v1727, %v1788
      %v1813 = vmul.f32 %v1728, %v1788
      %v1814 = vmul.f32 %v1729, %v1788
      %v1815 = vmul.f32 %v1730, %v1788
      %v1816 = vmul.f32 %v1731, %v1788
      %v1817 = vmul.f32 %v1732, %v1788
      %v1818 = vmul.f32 %v1733, %v1788
      %v1819 = vmul.f32 %v1734, %v1788
      %v1820 = vmul.f32 %v1735, %v1788
      %v1821 = vmul.f32 %v1736, %v1788
      %v1822 = vmul.f32 %v1737, %v1788
      %v1823 = vmul.f32 %v1738, %v1788
      %v1824 = vmul.f32 %v1739, %v1788
      %v1825 = vmul.f32 %v1740, %v1788
      %v1826 = vmul.f32 %v1741, %v1788
      %v1827 = vmul.f32 %v1742, %v1788
      %v1828 = vmul.f32 %v1743, %v1788
      %v1829 = vmul.f32 %v1744, %v1788
      %v1830 = vmul.f32 %v1745, %v1788
      %v1831 = vmul.f32 %v1746, %v1788
      %v1832 = vmul.f32 %v1747, %v1788
      %v1833 = vmul.f32 %v1748, %v1788
      %v1834 = vmul.f32 %v1749, %v1788
      %v1835 = vmul.f32 %v1750, %v1788
      %v1836 = vmul.f32 %v1751, %v1788
      %v1837 = vmul.f32 %v1752, %v1788
      %v1838 = vmul.f32 %v1753, %v1788
      %v1839 = vmul.f32 %v1754, %v1788
      %v1840 = vmul.f32 %v1755, %v1788
      %v1841 = vmul.f32 %v1756, %v1788
      %v1842 = vmul.f32 %v1757, %v1788
      %v1843 = vmul.f32 %v1758, %v1788
      %v1844 = vmul.f32 %v1759, %v1788
      %v1845 = vmul.f32 %v1760, %v1788
      %v1846 = vmul.f32 %v1761, %v1788
      %v1847 = vmul.f32 %v1762, %v1788
      %v1848 = vmul.f32 %v1763, %v1788
      %v1849 = vmul.f32 %v1764, %v1788
      %v1850 = vmul.f32 %v1765, %v1788
      %v1851 = vmul.f32 %v1766, %v1788
      %v1852 = vmul.f32 %v1767, %v1788
      %v1853 = vmul.f32 %v1768, %v1788
      %v1854 = vmul.f32 %v1769, %v1788
      %v1855 = vmul.f32 %v1770, %v1788
      %v1856 = vmul.f32 %v1771, %v1788
      %v1857 = vmul.f32 %v1772, %v1788
      %v1858 = vmul.f32 %v1773, %v1788
      %v1859 = vmul.f32 %v1774, %v1788
      %v1860 = vmul.f32 %v1775, %v1788
      %v1861 = vmul.f32 %v1776, %v1788
      %v1862 = vmul.f32 %v1777, %v1788
      %v1863 = vmul.f32 %v1778, %v1788
      %v1864 = vmul.f32 %v1779, %v1788
      %v1865 = vmul.f32 %v1780, %v1788
      %v1866 = vmul.f32 %v1781, %v1788
      %v1867 = vmul.f32 %v1782, %v1788
      %v1868 = vmul.f32 %v1783, %v1788
      %v1869 = vld [vmem:[%s4 + $0x1] sm:$0x1]
      %v1870 = vlaneseq
      %v1871 = vshrl.u32 %v1870, 7
      %v1872 = vsub.s32 0, %v1871
      %v1873 = vrot.slane %v1869, %v1872
      %v1874 = vadd.f32 %v1789, %v1873
      %v1875 = vadd.f32 %v1790, %v1873
      %v1876 = vadd.f32 %v1791, %v1873
      %v1877 = vadd.f32 %v1792, %v1873
      %v1878 = vadd.f32 %v1793, %v1873
      %v1879 = vadd.f32 %v1794, %v1873
      %v1880 = vadd.f32 %v1795, %v1873
      %v1881 = vadd.f32 %v1796, %v1873
      %v1882 = vadd.f32 %v1797, %v1873
      %v1883 = vadd.f32 %v1798, %v1873
      %v1884 = vadd.f32 %v1799, %v1873
      %v1885 = vadd.f32 %v1800, %v1873
      %v1886 = vadd.f32 %v1801, %v1873
      %v1887 = vadd.f32 %v1802, %v1873
      %v1888 = vadd.f32 %v1803, %v1873
      %v1889 = vadd.f32 %v1804, %v1873
      %v1890 = vadd.f32 %v1805, %v1873
      %v1891 = vadd.f32 %v1806, %v1873
      %v1892 = vadd.f32 %v1807, %v1873
      %v1893 = vadd.f32 %v1808, %v1873
      %v1894 = vadd.f32 %v1809, %v1873
      %v1895 = vadd.f32 %v1810, %v1873
      %v1896 = vadd.f32 %v1811, %v1873
      %v1897 = vadd.f32 %v1812, %v1873
      %v1898 = vadd.f32 %v1813, %v1873
      %v1899 = vadd.f32 %v1814, %v1873
      %v1900 = vadd.f32 %v1815, %v1873
      %v1901 = vadd.f32 %v1816, %v1873
      %v1902 = vadd.f32 %v1817, %v1873
      %v1903 = vadd.f32 %v1818, %v1873
      %v1904 = vadd.f32 %v1819, %v1873
      %v1905 = vadd.f32 %v1820, %v1873
      %v1906 = vadd.f32 %v1821, %v1873
      %v1907 = vadd.f32 %v1822, %v1873
      %v1908 = vadd.f32 %v1823, %v1873
      %v1909 = vadd.f32 %v1824, %v1873
      %v1910 = vadd.f32 %v1825, %v1873
      %v1911 = vadd.f32 %v1826, %v1873
      %v1912 = vadd.f32 %v1827, %v1873
      %v1913 = vadd.f32 %v1828, %v1873
      %v1914 = vadd.f32 %v1829, %v1873
      %v1915 = vadd.f32 %v1830, %v1873
      %v1916 = vadd.f32 %v1831, %v1873
      %v1917 = vadd.f32 %v1832, %v1873
      %v1918 = vadd.f32 %v1833, %v1873
      %v1919 = vadd.f32 %v1834, %v1873
      %v1920 = vadd.f32 %v1835, %v1873
      %v1921 = vadd.f32 %v1836, %v1873
      %v1922 = vadd.f32 %v1837, %v1873
      %v1923 = vadd.f32 %v1838, %v1873
      %v1924 = vadd.f32 %v1839, %v1873
      %v1925 = vadd.f32 %v1840, %v1873
      %v1926 = vadd.f32 %v1841, %v1873
      %v1927 = vadd.f32 %v1842, %v1873
      %v1928 = vadd.f32 %v1843, %v1873
      %v1929 = vadd.f32 %v1844, %v1873
      %v1930 = vadd.f32 %v1845, %v1873
      %v1931 = vadd.f32 %v1846, %v1873
      %v1932 = vadd.f32 %v1847, %v1873
      %v1933 = vadd.f32 %v1848, %v1873
      %v1934 = vadd.f32 %v1849, %v1873
      %v1935 = vadd.f32 %v1850, %v1873
      %v1936 = vadd.f32 %v1851, %v1873
      %v1937 = vadd.f32 %v1852, %v1873
      %v1938 = vadd.f32 %v1853, %v1873
      %v1939 = vadd.f32 %v1854, %v1873
      %v1940 = vadd.f32 %v1855, %v1873
      %v1941 = vadd.f32 %v1856, %v1873
      %v1942 = vadd.f32 %v1857, %v1873
      %v1943 = vadd.f32 %v1858, %v1873
      %v1944 = vadd.f32 %v1859, %v1873
      %v1945 = vadd.f32 %v1860, %v1873
      %v1946 = vadd.f32 %v1861, %v1873
      %v1947 = vadd.f32 %v1862, %v1873
      %v1948 = vadd.f32 %v1863, %v1873
      %v1949 = vadd.f32 %v1864, %v1873
      %v1950 = vadd.f32 %v1865, %v1873
      %v1951 = vadd.f32 %v1866, %v1873
      %v1952 = vadd.f32 %v1867, %v1873
      %v1953 = vadd.f32 %v1868, %v1873
      %v1954 = vmul.f32 %v1874, 0.5
      %v1955 = vmul.f32 %v1875, 0.5
      %v1956 = vmul.f32 %v1876, 0.5
      %v1957 = vmul.f32 %v1877, 0.5
      %v1958 = vmul.f32 %v1878, 0.5
      %v1959 = vmul.f32 %v1879, 0.5
      %v1960 = vmul.f32 %v1880, 0.5
      %v1961 = vmul.f32 %v1881, 0.5
      %v1962 = vmul.f32 %v1882, 0.5
      %v1963 = vmul.f32 %v1883, 0.5
      %v1964 = vmul.f32 %v1884, 0.5
      %v1965 = vmul.f32 %v1885, 0.5
      %v1966 = vmul.f32 %v1886, 0.5
      %v1967 = vmul.f32 %v1887, 0.5
      %v1968 = vmul.f32 %v1888, 0.5
      %v1969 = vmul.f32 %v1889, 0.5
      %v1970 = vmul.f32 %v1890, 0.5
      %v1971 = vmul.f32 %v1891, 0.5
      %v1972 = vmul.f32 %v1892, 0.5
      %v1973 = vmul.f32 %v1893, 0.5
      %v1974 = vmul.f32 %v1894, 0.5
      %v1975 = vmul.f32 %v1895, 0.5
      %v1976 = vmul.f32 %v1896, 0.5
      %v1977 = vmul.f32 %v1897, 0.5
      %v1978 = vmul.f32 %v1898, 0.5
      %v1979 = vmul.f32 %v1899, 0.5
      %v1980 = vmul.f32 %v1900, 0.5
      %v1981 = vmul.f32 %v1901, 0.5
      %v1982 = vmul.f32 %v1902, 0.5
      %v1983 = vmul.f32 %v1903, 0.5
      %v1984 = vmul.f32 %v1904, 0.5
      %v1985 = vmul.f32 %v1905, 0.5
      %v1986 = vmul.f32 %v1906, 0.5
      %v1987 = vmul.f32 %v1907, 0.5
      %v1988 = vmul.f32 %v1908, 0.5
      %v1989 = vmul.f32 %v1909, 0.5
      %v1990 = vmul.f32 %v1910, 0.5
      %v1991 = vmul.f32 %v1911, 0.5
      %v1992 = vmul.f32 %v1912, 0.5
      %v1993 = vmul.f32 %v1913, 0.5
      %v1994 = vmul.f32 %v1914, 0.5
      %v1995 = vmul.f32 %v1915, 0.5
      %v1996 = vmul.f32 %v1916, 0.5
      %v1997 = vmul.f32 %v1917, 0.5
      %v1998 = vmul.f32 %v1918, 0.5
      %v1999 = vmul.f32 %v1919, 0.5
      %v2000 = vmul.f32 %v1920, 0.5
      %v2001 = vmul.f32 %v1921, 0.5
      %v2002 = vmul.f32 %v1922, 0.5
      %v2003 = vmul.f32 %v1923, 0.5
      %v2004 = vmul.f32 %v1924, 0.5
      %v2005 = vmul.f32 %v1925, 0.5
      %v2006 = vmul.f32 %v1926, 0.5
      %v2007 = vmul.f32 %v1927, 0.5
      %v2008 = vmul.f32 %v1928, 0.5
      %v2009 = vmul.f32 %v1929, 0.5
      %v2010 = vmul.f32 %v1930, 0.5
      %v2011 = vmul.f32 %v1931, 0.5
      %v2012 = vmul.f32 %v1932, 0.5
      %v2013 = vmul.f32 %v1933, 0.5
      %v2014 = vmul.f32 %v1934, 0.5
      %v2015 = vmul.f32 %v1935, 0.5
      %v2016 = vmul.f32 %v1936, 0.5
      %v2017 = vmul.f32 %v1937, 0.5
      %v2018 = vmul.f32 %v1938, 0.5
      %v2019 = vmul.f32 %v1939, 0.5
      %v2020 = vmul.f32 %v1940, 0.5
      %v2021 = vmul.f32 %v1941, 0.5
      %v2022 = vmul.f32 %v1942, 0.5
      %v2023 = vmul.f32 %v1943, 0.5
      %v2024 = vmul.f32 %v1944, 0.5
      %v2025 = vmul.f32 %v1945, 0.5
      %v2026 = vmul.f32 %v1946, 0.5
      %v2027 = vmul.f32 %v1947, 0.5
      %v2028 = vmul.f32 %v1948, 0.5
      %v2029 = vmul.f32 %v1949, 0.5
      %v2030 = vmul.f32 %v1950, 0.5
      %v2031 = vmul.f32 %v1951, 0.5
      %v2032 = vmul.f32 %v1952, 0.5
      %v2033 = vmul.f32 %v1953, 0.5
      %v2034 = vmul.f32 %v1874, 0.044715
      %v2035 = vmul.f32 %v1875, 0.044715
      %v2036 = vmul.f32 %v1876, 0.044715
      %v2037 = vmul.f32 %v1877, 0.044715
      %v2038 = vmul.f32 %v1878, 0.044715
      %v2039 = vmul.f32 %v1879, 0.044715
      %v2040 = vmul.f32 %v1880, 0.044715
      %v2041 = vmul.f32 %v1881, 0.044715
      %v2042 = vmul.f32 %v1882, 0.044715
      %v2043 = vmul.f32 %v1883, 0.044715
      %v2044 = vmul.f32 %v1884, 0.044715
      %v2045 = vmul.f32 %v1885, 0.044715
      %v2046 = vmul.f32 %v1886, 0.044715
      %v2047 = vmul.f32 %v1887, 0.044715
      %v2048 = vmul.f32 %v1888, 0.044715
      %v2049 = vmul.f32 %v1889, 0.044715
      %v2050 = vmul.f32 %v1890, 0.044715
      %v2051 = vmul.f32 %v1891, 0.044715
      %v2052 = vmul.f32 %v1892, 0.044715
      %v2053 = vmul.f32 %v1893, 0.044715
      %v2054 = vmul.f32 %v1894, 0.044715
      %v2055 = vmul.f32 %v1895, 0.044715
      %v2056 = vmul.f32 %v1896, 0.044715
      %v2057 = vmul.f32 %v1897, 0.044715
      %v2058 = vmul.f32 %v1898, 0.044715
      %v2059 = vmul.f32 %v1899, 0.044715
      %v2060 = vmul.f32 %v1900, 0.044715
      %v2061 = vmul.f32 %v1901, 0.044715
      %v2062 = vmul.f32 %v1902, 0.044715
      %v2063 = vmul.f32 %v1903, 0.044715
      %v2064 = vmul.f32 %v1904, 0.044715
      %v2065 = vmul.f32 %v1905, 0.044715
      %v2066 = vmul.f32 %v1906, 0.044715
      %v2067 = vmul.f32 %v1907, 0.044715
      %v2068 = vmul.f32 %v1908, 0.044715
      %v2069 = vmul.f32 %v1909, 0.044715
      %v2070 = vmul.f32 %v1910, 0.044715
      %v2071 = vmul.f32 %v1911, 0.044715
      %v2072 = vmul.f32 %v1912, 0.044715
      %v2073 = vmul.f32 %v1913, 0.044715
      %v2074 = vmul.f32 %v1914, 0.044715
      %v2075 = vmul.f32 %v1915, 0.044715
      %v2076 = vmul.f32 %v1916, 0.044715
      %v2077 = vmul.f32 %v1917, 0.044715
      %v2078 = vmul.f32 %v1918, 0.044715
      %v2079 = vmul.f32 %v1919, 0.044715
      %v2080 = vmul.f32 %v1920, 0.044715
      %v2081 = vmul.f32 %v1921, 0.044715
      %v2082 = vmul.f32 %v1922, 0.044715
      %v2083 = vmul.f32 %v1923, 0.044715
      %v2084 = vmul.f32 %v1924, 0.044715
      %v2085 = vmul.f32 %v1925, 0.044715
      %v2086 = vmul.f32 %v1926, 0.044715
      %v2087 = vmul.f32 %v1927, 0.044715
      %v2088 = vmul.f32 %v1928, 0.044715
      %v2089 = vmul.f32 %v1929, 0.044715
      %v2090 = vmul.f32 %v1930, 0.044715
      %v2091 = vmul.f32 %v1931, 0.044715
      %v2092 = vmul.f32 %v1932, 0.044715
      %v2093 = vmul.f32 %v1933, 0.044715
      %v2094 = vmul.f32 %v1934, 0.044715
      %v2095 = vmul.f32 %v1935, 0.044715
      %v2096 = vmul.f32 %v1936, 0.044715
      %v2097 = vmul.f32 %v1937, 0.044715
      %v2098 = vmul.f32 %v1938, 0.044715
      %v2099 = vmul.f32 %v1939, 0.044715
      %v2100 = vmul.f32 %v1940, 0.044715
      %v2101 = vmul.f32 %v1941, 0.044715
      %v2102 = vmul.f32 %v1942, 0.044715
      %v2103 = vmul.f32 %v1943, 0.044715
      %v2104 = vmul.f32 %v1944, 0.044715
      %v2105 = vmul.f32 %v1945, 0.044715
      %v2106 = vmul.f32 %v1946, 0.044715
      %v2107 = vmul.f32 %v1947, 0.044715
      %v2108 = vmul.f32 %v1948, 0.044715
      %v2109 = vmul.f32 %v1949, 0.044715
      %v2110 = vmul.f32 %v1950, 0.044715
      %v2111 = vmul.f32 %v1951, 0.044715
      %v2112 = vmul.f32 %v1952, 0.044715
      %v2113 = vmul.f32 %v1953, 0.044715
      %v2114 = vmul.f32 %v2034, %v1874
      %v2115 = vmul.f32 %v2035, %v1875
      %v2116 = vmul.f32 %v2036, %v1876
      %v2117 = vmul.f32 %v2037, %v1877
      %v2118 = vmul.f32 %v2038, %v1878
      %v2119 = vmul.f32 %v2039, %v1879
      %v2120 = vmul.f32 %v2040, %v1880
      %v2121 = vmul.f32 %v2041, %v1881
      %v2122 = vmul.f32 %v2042, %v1882
      %v2123 = vmul.f32 %v2043, %v1883
      %v2124 = vmul.f32 %v2044, %v1884
      %v2125 = vmul.f32 %v2045, %v1885
      %v2126 = vmul.f32 %v2046, %v1886
      %v2127 = vmul.f32 %v2047, %v1887
      %v2128 = vmul.f32 %v2048, %v1888
      %v2129 = vmul.f32 %v2049, %v1889
      %v2130 = vmul.f32 %v2050, %v1890
      %v2131 = vmul.f32 %v2051, %v1891
      %v2132 = vmul.f32 %v2052, %v1892
      %v2133 = vmul.f32 %v2053, %v1893
      %v2134 = vmul.f32 %v2054, %v1894
      %v2135 = vmul.f32 %v2055, %v1895
      %v2136 = vmul.f32 %v2056, %v1896
      %v2137 = vmul.f32 %v2057, %v1897
      %v2138 = vmul.f32 %v2058, %v1898
      %v2139 = vmul.f32 %v2059, %v1899
      %v2140 = vmul.f32 %v2060, %v1900
      %v2141 = vmul.f32 %v2061, %v1901
      %v2142 = vmul.f32 %v2062, %v1902
      %v2143 = vmul.f32 %v2063, %v1903
      %v2144 = vmul.f32 %v2064, %v1904
      %v2145 = vmul.f32 %v2065, %v1905
      %v2146 = vmul.f32 %v2066, %v1906
      %v2147 = vmul.f32 %v2067, %v1907
      %v2148 = vmul.f32 %v2068, %v1908
      %v2149 = vmul.f32 %v2069, %v1909
      %v2150 = vmul.f32 %v2070, %v1910
      %v2151 = vmul.f32 %v2071, %v1911
      %v2152 = vmul.f32 %v2072, %v1912
      %v2153 = vmul.f32 %v2073, %v1913
      %v2154 = vmul.f32 %v2074, %v1914
      %v2155 = vmul.f32 %v2075, %v1915
      %v2156 = vmul.f32 %v2076, %v1916
      %v2157 = vmul.f32 %v2077, %v1917
      %v2158 = vmul.f32 %v2078, %v1918
      %v2159 = vmul.f32 %v2079, %v1919
      %v2160 = vmul.f32 %v2080, %v1920
      %v2161 = vmul.f32 %v2081, %v1921
      %v2162 = vmul.f32 %v2082, %v1922
      %v2163 = vmul.f32 %v2083, %v1923
      %v2164 = vmul.f32 %v2084, %v1924
      %v2165 = vmul.f32 %v2085, %v1925
      %v2166 = vmul.f32 %v2086, %v1926
      %v2167 = vmul.f32 %v2087, %v1927
      %v2168 = vmul.f32 %v2088, %v1928
      %v2169 = vmul.f32 %v2089, %v1929
      %v2170 = vmul.f32 %v2090, %v1930
      %v2171 = vmul.f32 %v2091, %v1931
      %v2172 = vmul.f32 %v2092, %v1932
      %v2173 = vmul.f32 %v2093, %v1933
      %v2174 = vmul.f32 %v2094, %v1934
      %v2175 = vmul.f32 %v2095, %v1935
      %v2176 = vmul.f32 %v2096, %v1936
      %v2177 = vmul.f32 %v2097, %v1937
      %v2178 = vmul.f32 %v2098, %v1938
      %v2179 = vmul.f32 %v2099, %v1939
      %v2180 = vmul.f32 %v2100, %v1940
      %v2181 = vmul.f32 %v2101, %v1941
      %v2182 = vmul.f32 %v2102, %v1942
      %v2183 = vmul.f32 %v2103, %v1943
      %v2184 = vmul.f32 %v2104, %v1944
      %v2185 = vmul.f32 %v2105, %v1945
      %v2186 = vmul.f32 %v2106, %v1946
      %v2187 = vmul.f32 %v2107, %v1947
      %v2188 = vmul.f32 %v2108, %v1948
      %v2189 = vmul.f32 %v2109, %v1949
      %v2190 = vmul.f32 %v2110, %v1950
      %v2191 = vmul.f32 %v2111, %v1951
      %v2192 = vmul.f32 %v2112, %v1952
      %v2193 = vmul.f32 %v2113, %v1953
      %v2194 = vmul.f32 %v2114, %v1874
      %v2195 = vmul.f32 %v2115, %v1875
      %v2196 = vmul.f32 %v2116, %v1876
      %v2197 = vmul.f32 %v2117, %v1877
      %v2198 = vmul.f32 %v2118, %v1878
      %v2199 = vmul.f32 %v2119, %v1879
      %v2200 = vmul.f32 %v2120, %v1880
      %v2201 = vmul.f32 %v2121, %v1881
      %v2202 = vmul.f32 %v2122, %v1882
      %v2203 = vmul.f32 %v2123, %v1883
      %v2204 = vmul.f32 %v2124, %v1884
      %v2205 = vmul.f32 %v2125, %v1885
      %v2206 = vmul.f32 %v2126, %v1886
      %v2207 = vmul.f32 %v2127, %v1887
      %v2208 = vmul.f32 %v2128, %v1888
      %v2209 = vmul.f32 %v2129, %v1889
      %v2210 = vmul.f32 %v2130, %v1890
      %v2211 = vmul.f32 %v2131, %v1891
      %v2212 = vmul.f32 %v2132, %v1892
      %v2213 = vmul.f32 %v2133, %v1893
      %v2214 = vmul.f32 %v2134, %v1894
      %v2215 = vmul.f32 %v2135, %v1895
      %v2216 = vmul.f32 %v2136, %v1896
      %v2217 = vmul.f32 %v2137, %v1897
      %v2218 = vmul.f32 %v2138, %v1898
      %v2219 = vmul.f32 %v2139, %v1899
      %v2220 = vmul.f32 %v2140, %v1900
      %v2221 = vmul.f32 %v2141, %v1901
      %v2222 = vmul.f32 %v2142, %v1902
      %v2223 = vmul.f32 %v2143, %v1903
      %v2224 = vmul.f32 %v2144, %v1904
      %v2225 = vmul.f32 %v2145, %v1905
      %v2226 = vmul.f32 %v2146, %v1906
      %v2227 = vmul.f32 %v2147, %v1907
      %v2228 = vmul.f32 %v2148, %v1908
      %v2229 = vmul.f32 %v2149, %v1909
      %v2230 = vmul.f32 %v2150, %v1910
      %v2231 = vmul.f32 %v2151, %v1911
      %v2232 = vmul.f32 %v2152, %v1912
      %v2233 = vmul.f32 %v2153, %v1913
      %v2234 = vmul.f32 %v2154, %v1914
      %v2235 = vmul.f32 %v2155, %v1915
      %v2236 = vmul.f32 %v2156, %v1916
      %v2237 = vmul.f32 %v2157, %v1917
      %v2238 = vmul.f32 %v2158, %v1918
      %v2239 = vmul.f32 %v2159, %v1919
      %v2240 = vmul.f32 %v2160, %v1920
      %v2241 = vmul.f32 %v2161, %v1921
      %v2242 = vmul.f32 %v2162, %v1922
      %v2243 = vmul.f32 %v2163, %v1923
      %v2244 = vmul.f32 %v2164, %v1924
      %v2245 = vmul.f32 %v2165, %v1925
      %v2246 = vmul.f32 %v2166, %v1926
      %v2247 = vmul.f32 %v2167, %v1927
      %v2248 = vmul.f32 %v2168, %v1928
      %v2249 = vmul.f32 %v2169, %v1929
      %v2250 = vmul.f32 %v2170, %v1930
      %v2251 = vmul.f32 %v2171, %v1931
      %v2252 = vmul.f32 %v2172, %v1932
      %v2253 = vmul.f32 %v2173, %v1933
      %v2254 = vmul.f32 %v2174, %v1934
      %v2255 = vmul.f32 %v2175, %v1935
      %v2256 = vmul.f32 %v2176, %v1936
      %v2257 = vmul.f32 %v2177, %v1937
      %v2258 = vmul.f32 %v2178, %v1938
      %v2259 = vmul.f32 %v2179, %v1939
      %v2260 = vmul.f32 %v2180, %v1940
      %v2261 = vmul.f32 %v2181, %v1941
      %v2262 = vmul.f32 %v2182, %v1942
      %v2263 = vmul.f32 %v2183, %v1943
      %v2264 = vmul.f32 %v2184, %v1944
      %v2265 = vmul.f32 %v2185, %v1945
      %v2266 = vmul.f32 %v2186, %v1946
      %v2267 = vmul.f32 %v2187, %v1947
      %v2268 = vmul.f32 %v2188, %v1948
      %v2269 = vmul.f32 %v2189, %v1949
      %v2270 = vmul.f32 %v2190, %v1950
      %v2271 = vmul.f32 %v2191, %v1951
      %v2272 = vmul.f32 %v2192, %v1952
      %v2273 = vmul.f32 %v2193, %v1953
      %v2274 = vadd.f32 %v1874, %v2194
      %v2275 = vadd.f32 %v1875, %v2195
      %v2276 = vadd.f32 %v1876, %v2196
      %v2277 = vadd.f32 %v1877, %v2197
      %v2278 = vadd.f32 %v1878, %v2198
      %v2279 = vadd.f32 %v1879, %v2199
      %v2280 = vadd.f32 %v1880, %v2200
      %v2281 = vadd.f32 %v1881, %v2201
      %v2282 = vadd.f32 %v1882, %v2202
      %v2283 = vadd.f32 %v1883, %v2203
      %v2284 = vadd.f32 %v1884, %v2204
      %v2285 = vadd.f32 %v1885, %v2205
      %v2286 = vadd.f32 %v1886, %v2206
      %v2287 = vadd.f32 %v1887, %v2207
      %v2288 = vadd.f32 %v1888, %v2208
      %v2289 = vadd.f32 %v1889, %v2209
      %v2290 = vadd.f32 %v1890, %v2210
      %v2291 = vadd.f32 %v1891, %v2211
      %v2292 = vadd.f32 %v1892, %v2212
      %v2293 = vadd.f32 %v1893, %v2213
      %v2294 = vadd.f32 %v1894, %v2214
      %v2295 = vadd.f32 %v1895, %v2215
      %v2296 = vadd.f32 %v1896, %v2216
      %v2297 = vadd.f32 %v1897, %v2217
      %v2298 = vadd.f32 %v1898, %v2218
      %v2299 = vadd.f32 %v1899, %v2219
      %v2300 = vadd.f32 %v1900, %v2220
      %v2301 = vadd.f32 %v1901, %v2221
      %v2302 = vadd.f32 %v1902, %v2222
      %v2303 = vadd.f32 %v1903, %v2223
      %v2304 = vadd.f32 %v1904, %v2224
      %v2305 = vadd.f32 %v1905, %v2225
      %v2306 = vadd.f32 %v1906, %v2226
      %v2307 = vadd.f32 %v1907, %v2227
      %v2308 = vadd.f32 %v1908, %v2228
      %v2309 = vadd.f32 %v1909, %v2229
      %v2310 = vadd.f32 %v1910, %v2230
      %v2311 = vadd.f32 %v1911, %v2231
      %v2312 = vadd.f32 %v1912, %v2232
      %v2313 = vadd.f32 %v1913, %v2233
      %v2314 = vadd.f32 %v1914, %v2234
      %v2315 = vadd.f32 %v1915, %v2235
      %v2316 = vadd.f32 %v1916, %v2236
      %v2317 = vadd.f32 %v1917, %v2237
      %v2318 = vadd.f32 %v1918, %v2238
      %v2319 = vadd.f32 %v1919, %v2239
      %v2320 = vadd.f32 %v1920, %v2240
      %v2321 = vadd.f32 %v1921, %v2241
      %v2322 = vadd.f32 %v1922, %v2242
      %v2323 = vadd.f32 %v1923, %v2243
      %v2324 = vadd.f32 %v1924, %v2244
      %v2325 = vadd.f32 %v1925, %v2245
      %v2326 = vadd.f32 %v1926, %v2246
      %v2327 = vadd.f32 %v1927, %v2247
      %v2328 = vadd.f32 %v1928, %v2248
      %v2329 = vadd.f32 %v1929, %v2249
      %v2330 = vadd.f32 %v1930, %v2250
      %v2331 = vadd.f32 %v1931, %v2251
      %v2332 = vadd.f32 %v1932, %v2252
      %v2333 = vadd.f32 %v1933, %v2253
      %v2334 = vadd.f32 %v1934, %v2254
      %v2335 = vadd.f32 %v1935, %v2255
      %v2336 = vadd.f32 %v1936, %v2256
      %v2337 = vadd.f32 %v1937, %v2257
      %v2338 = vadd.f32 %v1938, %v2258
      %v2339 = vadd.f32 %v1939, %v2259
      %v2340 = vadd.f32 %v1940, %v2260
      %v2341 = vadd.f32 %v1941, %v2261
      %v2342 = vadd.f32 %v1942, %v2262
      %v2343 = vadd.f32 %v1943, %v2263
      %v2344 = vadd.f32 %v1944, %v2264
      %v2345 = vadd.f32 %v1945, %v2265
      %v2346 = vadd.f32 %v1946, %v2266
      %v2347 = vadd.f32 %v1947, %v2267
      %v2348 = vadd.f32 %v1948, %v2268
      %v2349 = vadd.f32 %v1949, %v2269
      %v2350 = vadd.f32 %v1950, %v2270
      %v2351 = vadd.f32 %v1951, %v2271
      %v2352 = vadd.f32 %v1952, %v2272
      %v2353 = vadd.f32 %v1953, %v2273
      %v2354 = vmul.f32 %v2274, 0.7978846
      %v2355 = vmul.f32 %v2275, 0.7978846
      %v2356 = vmul.f32 %v2276, 0.7978846
      %v2357 = vmul.f32 %v2277, 0.7978846
      %v2358 = vmul.f32 %v2278, 0.7978846
      %v2359 = vmul.f32 %v2279, 0.7978846
      %v2360 = vmul.f32 %v2280, 0.7978846
      %v2361 = vmul.f32 %v2281, 0.7978846
      %v2362 = vmul.f32 %v2282, 0.7978846
      %v2363 = vmul.f32 %v2283, 0.7978846
      %v2364 = vmul.f32 %v2284, 0.7978846
      %v2365 = vmul.f32 %v2285, 0.7978846
      %v2366 = vmul.f32 %v2286, 0.7978846
      %v2367 = vmul.f32 %v2287, 0.7978846
      %v2368 = vmul.f32 %v2288, 0.7978846
      %v2369 = vmul.f32 %v2289, 0.7978846
      %v2370 = vmul.f32 %v2290, 0.7978846
      %v2371 = vmul.f32 %v2291, 0.7978846
      %v2372 = vmul.f32 %v2292, 0.7978846
      %v2373 = vmul.f32 %v2293, 0.7978846
      %v2374 = vmul.f32 %v2294, 0.7978846
      %v2375 = vmul.f32 %v2295, 0.7978846
      %v2376 = vmul.f32 %v2296, 0.7978846
      %v2377 = vmul.f32 %v2297, 0.7978846
      %v2378 = vmul.f32 %v2298, 0.7978846
      %v2379 = vmul.f32 %v2299, 0.7978846
      %v2380 = vmul.f32 %v2300, 0.7978846
      %v2381 = vmul.f32 %v2301, 0.7978846
      %v2382 = vmul.f32 %v2302, 0.7978846
      %v2383 = vmul.f32 %v2303, 0.7978846
      %v2384 = vmul.f32 %v2304, 0.7978846
      %v2385 = vmul.f32 %v2305, 0.7978846
      %v2386 = vmul.f32 %v2306, 0.7978846
      %v2387 = vmul.f32 %v2307, 0.7978846
      %v2388 = vmul.f32 %v2308, 0.7978846
      %v2389 = vmul.f32 %v2309, 0.7978846
      %v2390 = vmul.f32 %v2310, 0.7978846
      %v2391 = vmul.f32 %v2311, 0.7978846
      %v2392 = vmul.f32 %v2312, 0.7978846
      %v2393 = vmul.f32 %v2313, 0.7978846
      %v2394 = vmul.f32 %v2314, 0.7978846
      %v2395 = vmul.f32 %v2315, 0.7978846
      %v2396 = vmul.f32 %v2316, 0.7978846
      %v2397 = vmul.f32 %v2317, 0.7978846
      %v2398 = vmul.f32 %v2318, 0.7978846
      %v2399 = vmul.f32 %v2319, 0.7978846
      %v2400 = vmul.f32 %v2320, 0.7978846
      %v2401 = vmul.f32 %v2321, 0.7978846
      %v2402 = vmul.f32 %v2322, 0.7978846
      %v2403 = vmul.f32 %v2323, 0.7978846
      %v2404 = vmul.f32 %v2324, 0.7978846
      %v2405 = vmul.f32 %v2325, 0.7978846
      %v2406 = vmul.f32 %v2326, 0.7978846
      %v2407 = vmul.f32 %v2327, 0.7978846
      %v2408 = vmul.f32 %v2328, 0.7978846
      %v2409 = vmul.f32 %v2329, 0.7978846
      %v2410 = vmul.f32 %v2330, 0.7978846
      %v2411 = vmul.f32 %v2331, 0.7978846
      %v2412 = vmul.f32 %v2332, 0.7978846
      %v2413 = vmul.f32 %v2333, 0.7978846
      %v2414 = vmul.f32 %v2334, 0.7978846
      %v2415 = vmul.f32 %v2335, 0.7978846
      %v2416 = vmul.f32 %v2336, 0.7978846
      %v2417 = vmul.f32 %v2337, 0.7978846
      %v2418 = vmul.f32 %v2338, 0.7978846
      %v2419 = vmul.f32 %v2339, 0.7978846
      %v2420 = vmul.f32 %v2340, 0.7978846
      %v2421 = vmul.f32 %v2341, 0.7978846
      %v2422 = vmul.f32 %v2342, 0.7978846
      %v2423 = vmul.f32 %v2343, 0.7978846
      %v2424 = vmul.f32 %v2344, 0.7978846
      %v2425 = vmul.f32 %v2345, 0.7978846
      %v2426 = vmul.f32 %v2346, 0.7978846
      %v2427 = vmul.f32 %v2347, 0.7978846
      %v2428 = vmul.f32 %v2348, 0.7978846
      %v2429 = vmul.f32 %v2349, 0.7978846
      %v2430 = vmul.f32 %v2350, 0.7978846
      %v2431 = vmul.f32 %v2351, 0.7978846
      %v2432 = vmul.f32 %v2352, 0.7978846
      %v2433 = vmul.f32 %v2353, 0.7978846
      %v2434 = vtanh.pop %v2354
      %v2435 = vtanh.pop %v2355
      %v2436 = vtanh.pop %v2356
      %v2437 = vtanh.pop %v2357
      %v2438 = vtanh.pop %v2358
      %v2439 = vtanh.pop %v2359
      %v2440 = vtanh.pop %v2360
      %v2441 = vtanh.pop %v2361
      %v2442 = vtanh.pop %v2362
      %v2443 = vtanh.pop %v2363
      %v2444 = vtanh.pop %v2364
      %v2445 = vtanh.pop %v2365
      %v2446 = vtanh.pop %v2366
      %v2447 = vtanh.pop %v2367
      %v2448 = vtanh.pop %v2368
      %v2449 = vtanh.pop %v2369
      %v2450 = vtanh.pop %v2370
      %v2451 = vtanh.pop %v2371
      %v2452 = vtanh.pop %v2372
      %v2453 = vtanh.pop %v2373
      %v2454 = vtanh.pop %v2374
      %v2455 = vtanh.pop %v2375
      %v2456 = vtanh.pop %v2376
      %v2457 = vtanh.pop %v2377
      %v2458 = vtanh.pop %v2378
      %v2459 = vtanh.pop %v2379
      %v2460 = vtanh.pop %v2380
      %v2461 = vtanh.pop %v2381
      %v2462 = vtanh.pop %v2382
      %v2463 = vtanh.pop %v2383
      %v2464 = vtanh.pop %v2384
      %v2465 = vtanh.pop %v2385
      %v2466 = vtanh.pop %v2386
      %v2467 = vtanh.pop %v2387
      %v2468 = vtanh.pop %v2388
      %v2469 = vtanh.pop %v2389
      %v2470 = vtanh.pop %v2390
      %v2471 = vtanh.pop %v2391
      %v2472 = vtanh.pop %v2392
      %v2473 = vtanh.pop %v2393
      %v2474 = vtanh.pop %v2394
      %v2475 = vtanh.pop %v2395
      %v2476 = vtanh.pop %v2396
      %v2477 = vtanh.pop %v2397
      %v2478 = vtanh.pop %v2398
      %v2479 = vtanh.pop %v2399
      %v2480 = vtanh.pop %v2400
      %v2481 = vtanh.pop %v2401
      %v2482 = vtanh.pop %v2402
      %v2483 = vtanh.pop %v2403
      %v2484 = vtanh.pop %v2404
      %v2485 = vtanh.pop %v2405
      %v2486 = vtanh.pop %v2406
      %v2487 = vtanh.pop %v2407
      %v2488 = vtanh.pop %v2408
      %v2489 = vtanh.pop %v2409
      %v2490 = vtanh.pop %v2410
      %v2491 = vtanh.pop %v2411
      %v2492 = vtanh.pop %v2412
      %v2493 = vtanh.pop %v2413
      %v2494 = vtanh.pop %v2414
      %v2495 = vtanh.pop %v2415
      %v2496 = vtanh.pop %v2416
      %v2497 = vtanh.pop %v2417
      %v2498 = vtanh.pop %v2418
      %v2499 = vtanh.pop %v2419
      %v2500 = vtanh.pop %v2420
      %v2501 = vtanh.pop %v2421
      %v2502 = vtanh.pop %v2422
      %v2503 = vtanh.pop %v2423
      %v2504 = vtanh.pop %v2424
      %v2505 = vtanh.pop %v2425
      %v2506 = vtanh.pop %v2426
      %v2507 = vtanh.pop %v2427
      %v2508 = vtanh.pop %v2428
      %v2509 = vtanh.pop %v2429
      %v2510 = vtanh.pop %v2430
      %v2511 = vtanh.pop %v2431
      %v2512 = vtanh.pop %v2432
      %v2513 = vtanh.pop %v2433
      %v2514 = vadd.f32 %v2434, 1.0
      %v2515 = vadd.f32 %v2435, 1.0
      %v2516 = vadd.f32 %v2436, 1.0
      %v2517 = vadd.f32 %v2437, 1.0
      %v2518 = vadd.f32 %v2438, 1.0
      %v2519 = vadd.f32 %v2439, 1.0
      %v2520 = vadd.f32 %v2440, 1.0
      %v2521 = vadd.f32 %v2441, 1.0
      %v2522 = vadd.f32 %v2442, 1.0
      %v2523 = vadd.f32 %v2443, 1.0
      %v2524 = vadd.f32 %v2444, 1.0
      %v2525 = vadd.f32 %v2445, 1.0
      %v2526 = vadd.f32 %v2446, 1.0
      %v2527 = vadd.f32 %v2447, 1.0
      %v2528 = vadd.f32 %v2448, 1.0
      %v2529 = vadd.f32 %v2449, 1.0
      %v2530 = vadd.f32 %v2450, 1.0
      %v2531 = vadd.f32 %v2451, 1.0
      %v2532 = vadd.f32 %v2452, 1.0
      %v2533 = vadd.f32 %v2453, 1.0
      %v2534 = vadd.f32 %v2454, 1.0
      %v2535 = vadd.f32 %v2455, 1.0
      %v2536 = vadd.f32 %v2456, 1.0
      %v2537 = vadd.f32 %v2457, 1.0
      %v2538 = vadd.f32 %v2458, 1.0
      %v2539 = vadd.f32 %v2459, 1.0
      %v2540 = vadd.f32 %v2460, 1.0
      %v2541 = vadd.f32 %v2461, 1.0
      %v2542 = vadd.f32 %v2462, 1.0
      %v2543 = vadd.f32 %v2463, 1.0
      %v2544 = vadd.f32 %v2464, 1.0
      %v2545 = vadd.f32 %v2465, 1.0
      %v2546 = vadd.f32 %v2466, 1.0
      %v2547 = vadd.f32 %v2467, 1.0
      %v2548 = vadd.f32 %v2468, 1.0
      %v2549 = vadd.f32 %v2469, 1.0
      %v2550 = vadd.f32 %v2470, 1.0
      %v2551 = vadd.f32 %v2471, 1.0
      %v2552 = vadd.f32 %v2472, 1.0
      %v2553 = vadd.f32 %v2473, 1.0
      %v2554 = vadd.f32 %v2474, 1.0
      %v2555 = vadd.f32 %v2475, 1.0
      %v2556 = vadd.f32 %v2476, 1.0
      %v2557 = vadd.f32 %v2477, 1.0
      %v2558 = vadd.f32 %v2478, 1.0
      %v2559 = vadd.f32 %v2479, 1.0
      %v2560 = vadd.f32 %v2480, 1.0
      %v2561 = vadd.f32 %v2481, 1.0
      %v2562 = vadd.f32 %v2482, 1.0
      %v2563 = vadd.f32 %v2483, 1.0
      %v2564 = vadd.f32 %v2484, 1.0
      %v2565 = vadd.f32 %v2485, 1.0
      %v2566 = vadd.f32 %v2486, 1.0
      %v2567 = vadd.f32 %v2487, 1.0
      %v2568 = vadd.f32 %v2488, 1.0
      %v2569 = vadd.f32 %v2489, 1.0
      %v2570 = vadd.f32 %v2490, 1.0
      %v2571 = vadd.f32 %v2491, 1.0
      %v2572 = vadd.f32 %v2492, 1.0
      %v2573 = vadd.f32 %v2493, 1.0
      %v2574 = vadd.f32 %v2494, 1.0
      %v2575 = vadd.f32 %v2495, 1.0
      %v2576 = vadd.f32 %v2496, 1.0
      %v2577 = vadd.f32 %v2497, 1.0
      %v2578 = vadd.f32 %v2498, 1.0
      %v2579 = vadd.f32 %v2499, 1.0
      %v2580 = vadd.f32 %v2500, 1.0
      %v2581 = vadd.f32 %v2501, 1.0
      %v2582 = vadd.f32 %v2502, 1.0
      %v2583 = vadd.f32 %v2503, 1.0
      %v2584 = vadd.f32 %v2504, 1.0
      %v2585 = vadd.f32 %v2505, 1.0
      %v2586 = vadd.f32 %v2506, 1.0
      %v2587 = vadd.f32 %v2507, 1.0
      %v2588 = vadd.f32 %v2508, 1.0
      %v2589 = vadd.f32 %v2509, 1.0
      %v2590 = vadd.f32 %v2510, 1.0
      %v2591 = vadd.f32 %v2511, 1.0
      %v2592 = vadd.f32 %v2512, 1.0
      %v2593 = vadd.f32 %v2513, 1.0
      %v2594 = vmul.f32 %v1954, %v2514
      %v2595 = vmul.f32 %v1955, %v2515
      %v2596 = vmul.f32 %v1956, %v2516
      %v2597 = vmul.f32 %v1957, %v2517
      %v2598 = vmul.f32 %v1958, %v2518
      %v2599 = vmul.f32 %v1959, %v2519
      %v2600 = vmul.f32 %v1960, %v2520
      %v2601 = vmul.f32 %v1961, %v2521
      %v2602 = vmul.f32 %v1962, %v2522
      %v2603 = vmul.f32 %v1963, %v2523
      %v2604 = vmul.f32 %v1964, %v2524
      %v2605 = vmul.f32 %v1965, %v2525
      %v2606 = vmul.f32 %v1966, %v2526
      %v2607 = vmul.f32 %v1967, %v2527
      %v2608 = vmul.f32 %v1968, %v2528
      %v2609 = vmul.f32 %v1969, %v2529
      %v2610 = vmul.f32 %v1970, %v2530
      %v2611 = vmul.f32 %v1971, %v2531
      %v2612 = vmul.f32 %v1972, %v2532
      %v2613 = vmul.f32 %v1973, %v2533
      %v2614 = vmul.f32 %v1974, %v2534
      %v2615 = vmul.f32 %v1975, %v2535
      %v2616 = vmul.f32 %v1976, %v2536
      %v2617 = vmul.f32 %v1977, %v2537
      %v2618 = vmul.f32 %v1978, %v2538
      %v2619 = vmul.f32 %v1979, %v2539
      %v2620 = vmul.f32 %v1980, %v2540
      %v2621 = vmul.f32 %v1981, %v2541
      %v2622 = vmul.f32 %v1982, %v2542
      %v2623 = vmul.f32 %v1983, %v2543
      %v2624 = vmul.f32 %v1984, %v2544
      %v2625 = vmul.f32 %v1985, %v2545
      %v2626 = vmul.f32 %v1986, %v2546
      %v2627 = vmul.f32 %v1987, %v2547
      %v2628 = vmul.f32 %v1988, %v2548
      %v2629 = vmul.f32 %v1989, %v2549
      %v2630 = vmul.f32 %v1990, %v2550
      %v2631 = vmul.f32 %v1991, %v2551
      %v2632 = vmul.f32 %v1992, %v2552
      %v2633 = vmul.f32 %v1993, %v2553
      %v2634 = vmul.f32 %v1994, %v2554
      %v2635 = vmul.f32 %v1995, %v2555
      %v2636 = vmul.f32 %v1996, %v2556
      %v2637 = vmul.f32 %v1997, %v2557
      %v2638 = vmul.f32 %v1998, %v2558
      %v2639 = vmul.f32 %v1999, %v2559
      %v2640 = vmul.f32 %v2000, %v2560
      %v2641 = vmul.f32 %v2001, %v2561
      %v2642 = vmul.f32 %v2002, %v2562
      %v2643 = vmul.f32 %v2003, %v2563
      %v2644 = vmul.f32 %v2004, %v2564
      %v2645 = vmul.f32 %v2005, %v2565
      %v2646 = vmul.f32 %v2006, %v2566
      %v2647 = vmul.f32 %v2007, %v2567
      %v2648 = vmul.f32 %v2008, %v2568
      %v2649 = vmul.f32 %v2009, %v2569
      %v2650 = vmul.f32 %v2010, %v2570
      %v2651 = vmul.f32 %v2011, %v2571
      %v2652 = vmul.f32 %v2012, %v2572
      %v2653 = vmul.f32 %v2013, %v2573
      %v2654 = vmul.f32 %v2014, %v2574
      %v2655 = vmul.f32 %v2015, %v2575
      %v2656 = vmul.f32 %v2016, %v2576
      %v2657 = vmul.f32 %v2017, %v2577
      %v2658 = vmul.f32 %v2018, %v2578
      %v2659 = vmul.f32 %v2019, %v2579
      %v2660 = vmul.f32 %v2020, %v2580
      %v2661 = vmul.f32 %v2021, %v2581
      %v2662 = vmul.f32 %v2022, %v2582
      %v2663 = vmul.f32 %v2023, %v2583
      %v2664 = vmul.f32 %v2024, %v2584
      %v2665 = vmul.f32 %v2025, %v2585
      %v2666 = vmul.f32 %v2026, %v2586
      %v2667 = vmul.f32 %v2027, %v2587
      %v2668 = vmul.f32 %v2028, %v2588
      %v2669 = vmul.f32 %v2029, %v2589
      %v2670 = vmul.f32 %v2030, %v2590
      %v2671 = vmul.f32 %v2031, %v2591
      %v2672 = vmul.f32 %v2032, %v2592
      %v2673 = vmul.f32 %v2033, %v2593
      %2674 = vst.msk [vmem:[#allocation2] sm:$0xff] %vm1207, %v2594
      %2675 = vst.msk [vmem:[#allocation2 + $0x8] sm:$0xff] %vm1207, %v2595
      %2676 = vst.msk [vmem:[#allocation2 + $0x10] sm:$0xff] %vm1207, %v2596
      %2677 = vst.msk [vmem:[#allocation2 + $0x18] sm:$0xff] %vm1207, %v2597
      %2678 = vst.msk [vmem:[#allocation2 + $0x20] sm:$0xff] %vm1207, %v2598
      %2679 = vst.msk [vmem:[#allocation2 + $0x28] sm:$0xff] %vm1207, %v2599
      %2680 = vst.msk [vmem:[#allocation2 + $0x30] sm:$0xff] %vm1207, %v2600
      %2681 = vst.msk [vmem:[#allocation2 + $0x38] sm:$0xff] %vm1207, %v2601
      %2682 = vst.msk [vmem:[#allocation2 + $0x40] sm:$0xff] %vm1207, %v2602
      %2683 = vst.msk [vmem:[#allocation2 + $0x48] sm:$0xff] %vm1207, %v2603
      %2684 = vst.msk [vmem:[#allocation2 + $0x50] sm:$0xff] %vm1207, %v2604
      %2685 = vst.msk [vmem:[#allocation2 + $0x58] sm:$0xff] %vm1207, %v2605
      %2686 = vst.msk [vmem:[#allocation2 + $0x60] sm:$0xff] %vm1207, %v2606
      %2687 = vst.msk [vmem:[#allocation2 + $0x68] sm:$0xff] %vm1207, %v2607
      %2688 = vst.msk [vmem:[#allocation2 + $0x70] sm:$0xff] %vm1207, %v2608
      %2689 = vst.msk [vmem:[#allocation2 + $0x78] sm:$0xff] %vm1207, %v2609
      %2690 = vst.msk [vmem:[#allocation2 + $0x80] sm:$0xff] %vm1207, %v2610
      %2691 = vst.msk [vmem:[#allocation2 + $0x88] sm:$0xff] %vm1207, %v2611
      %2692 = vst.msk [vmem:[#allocation2 + $0x90] sm:$0xff] %vm1207, %v2612
      %2693 = vst.msk [vmem:[#allocation2 + $0x98] sm:$0xff] %vm1207, %v2613
      %2694 = vst.msk [vmem:[#allocation2 + $0xa0] sm:$0xff] %vm1207, %v2614
      %2695 = vst.msk [vmem:[#allocation2 + $0xa8] sm:$0xff] %vm1207, %v2615
      %2696 = vst.msk [vmem:[#allocation2 + $0xb0] sm:$0xff] %vm1207, %v2616
      %2697 = vst.msk [vmem:[#allocation2 + $0xb8] sm:$0xff] %vm1207, %v2617
      %2698 = vst.msk [vmem:[#allocation2 + $0xc0] sm:$0xff] %vm1207, %v2618
      %2699 = vst.msk [vmem:[#allocation2 + $0xc8] sm:$0xff] %vm1207, %v2619
      %2700 = vst.msk [vmem:[#allocation2 + $0xd0] sm:$0xff] %vm1207, %v2620
      %2701 = vst.msk [vmem:[#allocation2 + $0xd8] sm:$0xff] %vm1207, %v2621
      %2702 = vst.msk [vmem:[#allocation2 + $0xe0] sm:$0xff] %vm1207, %v2622
      %2703 = vst.msk [vmem:[#allocation2 + $0xe8] sm:$0xff] %vm1207, %v2623
      %2704 = vst.msk [vmem:[#allocation2 + $0xf0] sm:$0xff] %vm1207, %v2624
      %2705 = vst.msk [vmem:[#allocation2 + $0xf8] sm:$0xff] %vm1207, %v2625
      %2706 = vst.msk [vmem:[#allocation2 + $0x100] sm:$0xff] %vm1207, %v2626
      %2707 = vst.msk [vmem:[#allocation2 + $0x108] sm:$0xff] %vm1207, %v2627
      %2708 = vst.msk [vmem:[#allocation2 + $0x110] sm:$0xff] %vm1207, %v2628
      %2709 = vst.msk [vmem:[#allocation2 + $0x118] sm:$0xff] %vm1207, %v2629
      %2710 = vst.msk [vmem:[#allocation2 + $0x120] sm:$0xff] %vm1207, %v2630
      %2711 = vst.msk [vmem:[#allocation2 + $0x128] sm:$0xff] %vm1207, %v2631
      %2712 = vst.msk [vmem:[#allocation2 + $0x130] sm:$0xff] %vm1207, %v2632
      %2713 = vst.msk [vmem:[#allocation2 + $0x138] sm:$0xff] %vm1207, %v2633
      %2714 = vst.msk [vmem:[#allocation2 + $0x140] sm:$0xff] %vm1207, %v2634
      %2715 = vst.msk [vmem:[#allocation2 + $0x148] sm:$0xff] %vm1207, %v2635
      %2716 = vst.msk [vmem:[#allocation2 + $0x150] sm:$0xff] %vm1207, %v2636
      %2717 = vst.msk [vmem:[#allocation2 + $0x158] sm:$0xff] %vm1207, %v2637
      %2718 = vst.msk [vmem:[#allocation2 + $0x160] sm:$0xff] %vm1207, %v2638
      %2719 = vst.msk [vmem:[#allocation2 + $0x168] sm:$0xff] %vm1207, %v2639
      %2720 = vst.msk [vmem:[#allocation2 + $0x170] sm:$0xff] %vm1207, %v2640
      %2721 = vst.msk [vmem:[#allocation2 + $0x178] sm:$0xff] %vm1207, %v2641
      %2722 = vst.msk [vmem:[#allocation2 + $0x180] sm:$0xff] %vm1207, %v2642
      %2723 = vst.msk [vmem:[#allocation2 + $0x188] sm:$0xff] %vm1207, %v2643
      %2724 = vst.msk [vmem:[#allocation2 + $0x190] sm:$0xff] %vm1207, %v2644
      %2725 = vst.msk [vmem:[#allocation2 + $0x198] sm:$0xff] %vm1207, %v2645
      %2726 = vst.msk [vmem:[#allocation2 + $0x1a0] sm:$0xff] %vm1207, %v2646
      %2727 = vst.msk [vmem:[#allocation2 + $0x1a8] sm:$0xff] %vm1207, %v2647
      %2728 = vst.msk [vmem:[#allocation2 + $0x1b0] sm:$0xff] %vm1207, %v2648
      %2729 = vst.msk [vmem:[#allocation2 + $0x1b8] sm:$0xff] %vm1207, %v2649
      %2730 = vst.msk [vmem:[#allocation2 + $0x1c0] sm:$0xff] %vm1207, %v2650
      %2731 = vst.msk [vmem:[#allocation2 + $0x1c8] sm:$0xff] %vm1207, %v2651
      %2732 = vst.msk [vmem:[#allocation2 + $0x1d0] sm:$0xff] %vm1207, %v2652
      %2733 = vst.msk [vmem:[#allocation2 + $0x1d8] sm:$0xff] %vm1207, %v2653
      %2734 = vst.msk [vmem:[#allocation2 + $0x1e0] sm:$0xff] %vm1207, %v2654
      %2735 = vst.msk [vmem:[#allocation2 + $0x1e8] sm:$0xff] %vm1207, %v2655
      %2736 = vst.msk [vmem:[#allocation2 + $0x1f0] sm:$0xff] %vm1207, %v2656
      %2737 = vst.msk [vmem:[#allocation2 + $0x1f8] sm:$0xff] %vm1207, %v2657
      %2738 = vst.msk [vmem:[#allocation2 + $0x200] sm:$0xff] %vm1207, %v2658
      %2739 = vst.msk [vmem:[#allocation2 + $0x208] sm:$0xff] %vm1207, %v2659
      %2740 = vst.msk [vmem:[#allocation2 + $0x210] sm:$0xff] %vm1207, %v2660
      %2741 = vst.msk [vmem:[#allocation2 + $0x218] sm:$0xff] %vm1207, %v2661
      %2742 = vst.msk [vmem:[#allocation2 + $0x220] sm:$0xff] %vm1207, %v2662
      %2743 = vst.msk [vmem:[#allocation2 + $0x228] sm:$0xff] %vm1207, %v2663
      %2744 = vst.msk [vmem:[#allocation2 + $0x230] sm:$0xff] %vm1207, %v2664
      %2745 = vst.msk [vmem:[#allocation2 + $0x238] sm:$0xff] %vm1207, %v2665
      %2746 = vst.msk [vmem:[#allocation2 + $0x240] sm:$0xff] %vm1207, %v2666
      %2747 = vst.msk [vmem:[#allocation2 + $0x248] sm:$0xff] %vm1207, %v2667
      %2748 = vst.msk [vmem:[#allocation2 + $0x250] sm:$0xff] %vm1207, %v2668
      %2749 = vst.msk [vmem:[#allocation2 + $0x258] sm:$0xff] %vm1207, %v2669
      %2750 = vst.msk [vmem:[#allocation2 + $0x260] sm:$0xff] %vm1207, %v2670
      %2751 = vst.msk [vmem:[#allocation2 + $0x268] sm:$0xff] %vm1207, %v2671
      %2752 = vst.msk [vmem:[#allocation2 + $0x270] sm:$0xff] %vm1207, %v2672
      %2753 = vst.msk [vmem:[#allocation2 + $0x278] sm:$0x7f] %vm1365, %v2673
      %v2754 = vld [vmem:[#allocation2] ss:$2 sm:$0xff]
      %s2755 = scalar_lea.vmem [#allocation2], 16
      %v2756 = vld [vmem:[%s2755] ss:$2 sm:$0xff]
      %s2757 = scalar_lea.vmem [#allocation2], 32
      %v2758 = vld [vmem:[%s2757] ss:$2 sm:$0xff]
      %s2759 = scalar_lea.vmem [#allocation2], 48
      %v2760 = vld [vmem:[%s2759] ss:$2 sm:$0xff]
      %s2761 = scalar_lea.vmem [#allocation2], 64
      %v2762 = vld [vmem:[%s2761] ss:$2 sm:$0xff]
      %s2763 = scalar_lea.vmem [#allocation2], 80
      %v2764 = vld [vmem:[%s2763] ss:$2 sm:$0xff]
      %s2765 = scalar_lea.vmem [#allocation2], 96
      %v2766 = vld [vmem:[%s2765] ss:$2 sm:$0xff]
      %s2767 = scalar_lea.vmem [#allocation2], 112
      %v2768 = vld [vmem:[%s2767] ss:$2 sm:$0xff]
      %s2769 = scalar_lea.vmem [#allocation2], 128
      %v2770 = vld [vmem:[%s2769] ss:$2 sm:$0xff]
      %s2771 = scalar_lea.vmem [#allocation2], 144
      %v2772 = vld [vmem:[%s2771] ss:$2 sm:$0xff]
      %s2773 = scalar_lea.vmem [#allocation2], 160
      %v2774 = vld [vmem:[%s2773] ss:$2 sm:$0xff]
      %s2775 = scalar_lea.vmem [#allocation2], 176
      %v2776 = vld [vmem:[%s2775] ss:$2 sm:$0xff]
      %s2777 = scalar_lea.vmem [#allocation2], 192
      %v2778 = vld [vmem:[%s2777] ss:$2 sm:$0xff]
      %s2779 = scalar_lea.vmem [#allocation2], 208
      %v2780 = vld [vmem:[%s2779] ss:$2 sm:$0xff]
      %s2781 = scalar_lea.vmem [#allocation2], 224
      %v2782 = vld [vmem:[%s2781] ss:$2 sm:$0xff]
      %s2783 = scalar_lea.vmem [#allocation2], 240
      %v2784 = vld [vmem:[%s2783] ss:$2 sm:$0xff]
      %s2785 = scalar_lea.vmem [#allocation2], 256
      %v2786 = vld [vmem:[%s2785] ss:$2 sm:$0xff]
      %s2787 = scalar_lea.vmem [#allocation2], 272
      %v2788 = vld [vmem:[%s2787] ss:$2 sm:$0xff]
      %s2789 = scalar_lea.vmem [#allocation2], 288
      %v2790 = vld [vmem:[%s2789] ss:$2 sm:$0xff]
      %s2791 = scalar_lea.vmem [#allocation2], 304
      %v2792 = vld [vmem:[%s2791] ss:$2 sm:$0xff]
      %s2793 = scalar_lea.vmem [#allocation2], 320
      %v2794 = vld [vmem:[%s2793] ss:$2 sm:$0xff]
      %s2795 = scalar_lea.vmem [#allocation2], 336
      %v2796 = vld [vmem:[%s2795] ss:$2 sm:$0xff]
      %s2797 = scalar_lea.vmem [#allocation2], 352
      %v2798 = vld [vmem:[%s2797] ss:$2 sm:$0xff]
      %s2799 = scalar_lea.vmem [#allocation2], 368
      %v2800 = vld [vmem:[%s2799] ss:$2 sm:$0xff]
      %s2801 = scalar_lea.vmem [#allocation2], 384
      %v2802 = vld [vmem:[%s2801] ss:$2 sm:$0xff]
      %s2803 = scalar_lea.vmem [#allocation2], 400
      %v2804 = vld [vmem:[%s2803] ss:$2 sm:$0xff]
      %s2805 = scalar_lea.vmem [#allocation2], 416
      %v2806 = vld [vmem:[%s2805] ss:$2 sm:$0xff]
      %s2807 = scalar_lea.vmem [#allocation2], 432
      %v2808 = vld [vmem:[%s2807] ss:$2 sm:$0xff]
      %s2809 = scalar_lea.vmem [#allocation2], 448
      %v2810 = vld [vmem:[%s2809] ss:$2 sm:$0xff]
      %s2811 = scalar_lea.vmem [#allocation2], 464
      %v2812 = vld [vmem:[%s2811] ss:$2 sm:$0xff]
      %s2813 = scalar_lea.vmem [#allocation2], 480
      %v2814 = vld [vmem:[%s2813] ss:$2 sm:$0xff]
      %s2815 = scalar_lea.vmem [#allocation2], 496
      %v2816 = vld [vmem:[%s2815] ss:$2 sm:$0xff]
      %s2817 = scalar_lea.vmem [#allocation2], 512
      %v2818 = vld [vmem:[%s2817] ss:$2 sm:$0xff]
      %s2819 = scalar_lea.vmem [#allocation2], 528
      %v2820 = vld [vmem:[%s2819] ss:$2 sm:$0xff]
      %s2821 = scalar_lea.vmem [#allocation2], 544
      %v2822 = vld [vmem:[%s2821] ss:$2 sm:$0xff]
      %s2823 = scalar_lea.vmem [#allocation2], 560
      %v2824 = vld [vmem:[%s2823] ss:$2 sm:$0xff]
      %s2825 = scalar_lea.vmem [#allocation2], 576
      %v2826 = vld [vmem:[%s2825] ss:$2 sm:$0xff]
      %s2827 = scalar_lea.vmem [#allocation2], 592
      %v2828 = vld [vmem:[%s2827] ss:$2 sm:$0xff]
      %s2829 = scalar_lea.vmem [#allocation2], 608
      %v2830 = vld [vmem:[%s2829] ss:$2 sm:$0xff]
      %s2831 = scalar_lea.vmem [#allocation2], 624
      %v2832 = vld [vmem:[%s2831] ss:$2 sm:$0x7f]
      %v2833 = vpack.c.bf16 %v2756, %v2754
      %v2834 = vpack.c.bf16 %v2760, %v2758
      %v2835 = vpack.c.bf16 %v2764, %v2762
      %v2836 = vpack.c.bf16 %v2768, %v2766
      %v2837 = vpack.c.bf16 %v2772, %v2770
      %v2838 = vpack.c.bf16 %v2776, %v2774
      %v2839 = vpack.c.bf16 %v2780, %v2778
      %v2840 = vpack.c.bf16 %v2784, %v2782
      %v2841 = vpack.c.bf16 %v2788, %v2786
      %v2842 = vpack.c.bf16 %v2792, %v2790
      %v2843 = vpack.c.bf16 %v2796, %v2794
      %v2844 = vpack.c.bf16 %v2800, %v2798
      %v2845 = vpack.c.bf16 %v2804, %v2802
      %v2846 = vpack.c.bf16 %v2808, %v2806
      %v2847 = vpack.c.bf16 %v2812, %v2810
      %v2848 = vpack.c.bf16 %v2816, %v2814
      %v2849 = vpack.c.bf16 %v2820, %v2818
      %v2850 = vpack.c.bf16 %v2824, %v2822
      %v2851 = vpack.c.bf16 %v2828, %v2826
      %v2852 = vpack.c.bf16 %v2832, %v2830
      %v2853 = vld [vmem:[%s2] sm:$0xf]
      %v2854 = vld [vmem:[%s2 + $0x4] sm:$0xf]
      %v2855 = vld [vmem:[%s2 + $0x8] sm:$0xf]
      %v2856 = vld [vmem:[%s2 + $0xc] sm:$0xf]
      %s2857 = scalar_lea.vmem [#allocation2], 1
      %v2858 = vld [vmem:[%s2857] ss:$2 sm:$0xff]
      %s2859 = scalar_lea.vmem [#allocation2], 17
      %v2860 = vld [vmem:[%s2859] ss:$2 sm:$0xff]
      %s2861 = scalar_lea.vmem [#allocation2], 33
      %v2862 = vld [vmem:[%s2861] ss:$2 sm:$0xff]
      %s2863 = scalar_lea.vmem [#allocation2], 49
      %v2864 = vld [vmem:[%s2863] ss:$2 sm:$0xff]
      %s2865 = scalar_lea.vmem [#allocation2], 65
      %v2866 = vld [vmem:[%s2865] ss:$2 sm:$0xff]
      %s2867 = scalar_lea.vmem [#allocation2], 81
      %v2868 = vld [vmem:[%s2867] ss:$2 sm:$0xff]
      %s2869 = scalar_lea.vmem [#allocation2], 97
      %v2870 = vld [vmem:[%s2869] ss:$2 sm:$0xff]
      %s2871 = scalar_lea.vmem [#allocation2], 113
      %v2872 = vld [vmem:[%s2871] ss:$2 sm:$0xff]
      %s2873 = scalar_lea.vmem [#allocation2], 129
      %v2874 = vld [vmem:[%s2873] ss:$2 sm:$0xff]
      %s2875 = scalar_lea.vmem [#allocation2], 145
      %v2876 = vld [vmem:[%s2875] ss:$2 sm:$0xff]
      %s2877 = scalar_lea.vmem [#allocation2], 161
      %v2878 = vld [vmem:[%s2877] ss:$2 sm:$0xff]
      %s2879 = scalar_lea.vmem [#allocation2], 177
      %v2880 = vld [vmem:[%s2879] ss:$2 sm:$0xff]
      %s2881 = scalar_lea.vmem [#allocation2], 193
      %v2882 = vld [vmem:[%s2881] ss:$2 sm:$0xff]
      %s2883 = scalar_lea.vmem [#allocation2], 209
      %v2884 = vld [vmem:[%s2883] ss:$2 sm:$0xff]
      %s2885 = scalar_lea.vmem [#allocation2], 225
      %v2886 = vld [vmem:[%s2885] ss:$2 sm:$0xff]
      %s2887 = scalar_lea.vmem [#allocation2], 241
      %v2888 = vld [vmem:[%s2887] ss:$2 sm:$0xff]
      %s2889 = scalar_lea.vmem [#allocation2], 257
      %v2890 = vld [vmem:[%s2889] ss:$2 sm:$0xff]
      %s2891 = scalar_lea.vmem [#allocation2], 273
      %v2892 = vld [vmem:[%s2891] ss:$2 sm:$0xff]
      %s2893 = scalar_lea.vmem [#allocation2], 289
      %v2894 = vld [vmem:[%s2893] ss:$2 sm:$0xff]
      %s2895 = scalar_lea.vmem [#allocation2], 305
      %v2896 = vld [vmem:[%s2895] ss:$2 sm:$0xff]
      %s2897 = scalar_lea.vmem [#allocation2], 321
      %v2898 = vld [vmem:[%s2897] ss:$2 sm:$0xff]
      %s2899 = scalar_lea.vmem [#allocation2], 337
      %v2900 = vld [vmem:[%s2899] ss:$2 sm:$0xff]
      %s2901 = scalar_lea.vmem [#allocation2], 353
      %v2902 = vld [vmem:[%s2901] ss:$2 sm:$0xff]
      %s2903 = scalar_lea.vmem [#allocation2], 369
      %v2904 = vld [vmem:[%s2903] ss:$2 sm:$0xff]
      %s2905 = scalar_lea.vmem [#allocation2], 385
      %v2906 = vld [vmem:[%s2905] ss:$2 sm:$0xff]
      %s2907 = scalar_lea.vmem [#allocation2], 401
      %v2908 = vld [vmem:[%s2907] ss:$2 sm:$0xff]
      %s2909 = scalar_lea.vmem [#allocation2], 417
      %v2910 = vld [vmem:[%s2909] ss:$2 sm:$0xff]
      %s2911 = scalar_lea.vmem [#allocation2], 433
      %v2912 = vld [vmem:[%s2911] ss:$2 sm:$0xff]
      %s2913 = scalar_lea.vmem [#allocation2], 449
      %v2914 = vld [vmem:[%s2913] ss:$2 sm:$0xff]
      %s2915 = scalar_lea.vmem [#allocation2], 465
      %v2916 = vld [vmem:[%s2915] ss:$2 sm:$0xff]
      %s2917 = scalar_lea.vmem [#allocation2], 481
      %v2918 = vld [vmem:[%s2917] ss:$2 sm:$0xff]
      %s2919 = scalar_lea.vmem [#allocation2], 497
      %v2920 = vld [vmem:[%s2919] ss:$2 sm:$0xff]
      %s2921 = scalar_lea.vmem [#allocation2], 513
      %v2922 = vld [vmem:[%s2921] ss:$2 sm:$0xff]
      %s2923 = scalar_lea.vmem [#allocation2], 529
      %v2924 = vld [vmem:[%s2923] ss:$2 sm:$0xff]
      %s2925 = scalar_lea.vmem [#allocation2], 545
      %v2926 = vld [vmem:[%s2925] ss:$2 sm:$0xff]
      %s2927 = scalar_lea.vmem [#allocation2], 561
      %v2928 = vld [vmem:[%s2927] ss:$2 sm:$0xff]
      %s2929 = scalar_lea.vmem [#allocation2], 577
      %v2930 = vld [vmem:[%s2929] ss:$2 sm:$0xff]
      %s2931 = scalar_lea.vmem [#allocation2], 593
      %v2932 = vld [vmem:[%s2931] ss:$2 sm:$0xff]
      %s2933 = scalar_lea.vmem [#allocation2], 609
      %v2934 = vld [vmem:[%s2933] ss:$2 sm:$0xff]
      %s2935 = scalar_lea.vmem [#allocation2], 625
      %v2936 = vld [vmem:[%s2935] ss:$2 sm:$0x7f]
      %v2937 = vpack.c.bf16 %v2860, %v2858
      %v2938 = vpack.c.bf16 %v2864, %v2862
      %v2939 = vpack.c.bf16 %v2868, %v2866
      %v2940 = vpack.c.bf16 %v2872, %v2870
      %v2941 = vpack.c.bf16 %v2876, %v2874
      %v2942 = vpack.c.bf16 %v2880, %v2878
      %v2943 = vpack.c.bf16 %v2884, %v2882
      %v2944 = vpack.c.bf16 %v2888, %v2886
      %v2945 = vpack.c.bf16 %v2892, %v2890
      %v2946 = vpack.c.bf16 %v2896, %v2894
      %v2947 = vpack.c.bf16 %v2900, %v2898
      %v2948 = vpack.c.bf16 %v2904, %v2902
      %v2949 = vpack.c.bf16 %v2908, %v2906
      %v2950 = vpack.c.bf16 %v2912, %v2910
      %v2951 = vpack.c.bf16 %v2916, %v2914
      %v2952 = vpack.c.bf16 %v2920, %v2918
      %v2953 = vpack.c.bf16 %v2924, %v2922
      %v2954 = vpack.c.bf16 %v2928, %v2926
      %v2955 = vpack.c.bf16 %v2932, %v2930
      %v2956 = vpack.c.bf16 %v2936, %v2934
      %s2957 = scalar_lea.vmem %s2, 16
      %v2958 = vld [vmem:[%s2957] sm:$0xf]
      %v2959 = vld [vmem:[%s2957 + $0x4] sm:$0xf]
      %v2960 = vld [vmem:[%s2957 + $0x8] sm:$0xf]
      %v2961 = vld [vmem:[%s2957 + $0xc] sm:$0xf]
      %v2966 = vunpack.c.l.b16 %v2958
      %v2967 = vunpack.c.l.b16 %v2959
      %v2968 = vunpack.c.l.b16 %v2960
      %v2969 = vunpack.c.l.b16 %v2961
      %v2970 = vpack.c.b16 %v2967, %v2966
      %v2971 = vpack.c.b16 %v2969, %v2968
      %v2975 = vsel %vm1207, %v2937, 0
      %v2978 = vsel %vm1207, %v2938, 0
      %v2981 = vsel %vm1207, %v2939, 0
      %v2984 = vsel %vm1207, %v2940, 0
      %v2987 = vsel %vm1207, %v2941, 0
      %v2990 = vsel %vm1207, %v2942, 0
      %v2993 = vsel %vm1207, %v2943, 0
      %v2996 = vsel %vm1207, %v2944, 0
      %v2999 = vsel %vm1207, %v2945, 0
      %v3002 = vsel %vm1207, %v2946, 0
      %v3005 = vsel %vm1207, %v2947, 0
      %v3008 = vsel %vm1207, %v2948, 0
      %v3011 = vsel %vm1207, %v2949, 0
      %v3014 = vsel %vm1207, %v2950, 0
      %v3017 = vsel %vm1207, %v2951, 0
      %v3020 = vsel %vm1207, %v2952, 0
      %v3023 = vsel %vm1207, %v2953, 0
      %v3026 = vsel %vm1207, %v2954, 0
      %v3029 = vsel %vm1207, %v2955, 0
      %v3032 = vsel %vm1207, %v2956, 0
      %3034 = vmatprep.subr.bf16.mxu0 0
      %3035 = vmatpush1.bf16.msra.mxu0 0
      %3036 = vmatprep.subr.bf16.mxu0 0
      %3037 = vmatpush1.bf16.msra.mxu0 0
      %3038 = vmatprep.subr.bf16.mxu0 0
      %3039 = vmatpush1.bf16.msra.mxu0 0
      %3040 = vmatprep.subr.bf16.mxu0 0
      %3041 = vmatpush1.bf16.msra.mxu0 0
      %3042 = vmatprep.subr.bf16.mxu0 0
      %3043 = vmatpush1.bf16.msra.mxu0 0
      %3044 = vmatprep.subr.bf16.mxu0 0
      %3045 = vmatpush1.bf16.msra.mxu0 0
      %3046 = vmatprep.subr.bf16.mxu0 0
      %3047 = vmatpush1.bf16.msra.mxu0 %v2971
      %3048 = vmatprep.subr.bf16.mxu0 0
      %3049 = vmatpush1.bf16.msra.mxu0 %v2970
      %3050 = vmatprep.subr.bf16.mxu0 0
      %3051 = vmatpush2.bf16.msra.mxu0 0
      %3052 = vmatprep.subr.bf16.mxu0 0
      %3053 = vmatpush2.bf16.msra.mxu0 0
      %3054 = vmatprep.subr.bf16.mxu0 0
      %3055 = vmatpush2.bf16.msra.mxu0 0
      %3056 = vmatprep.subr.bf16.mxu0 0
      %3057 = vmatpush2.bf16.msra.mxu0 0
      %3058 = vmatprep.subr.bf16.mxu0 0
      %3059 = vmatpush2.bf16.msra.mxu0 0
      %3060 = vmatprep.subr.bf16.mxu0 0
      %3061 = vmatpush2.bf16.msra.mxu0 0
      %3062 = vmatprep.subr.bf16.mxu0 0
      %3063 = vmatpush2.bf16.msra.mxu0 0
      %3064 = vmatprep.subr.bf16.mxu0 0
      %3065 = vmatpush2.bf16.msra.mxu0 0
      %3066 = vmatprep.mubr.bf16.mxu0 0
      %3067 = vmatmul.mubr.bf16.gmra.mxu0 %v2975
      %v3068 = vpop.f32.mrf.mxu0
      %v3069 = vadd.f32 0.0, %v3068
      %v3070 = vpop.f32.mrf.mxu0
      %v3071 = vpop.f32.mrf.mxu0
      %v3072 = vadd.f32 0.0, %v3071
      %v3073 = vpop.f32.mrf.mxu0
      %3074 = vmatprep.mubr.bf16.mxu0 0
      %3075 = vmatmul.mubr.bf16.gmra.mxu0 %v2978
      %v3076 = vpop.f32.mrf.mxu0
      %v3077 = vadd.f32 0.0, %v3076
      %v3078 = vpop.f32.mrf.mxu0
      %v3079 = vpop.f32.mrf.mxu0
      %v3080 = vadd.f32 0.0, %v3079
      %v3081 = vpop.f32.mrf.mxu0
      %3082 = vmatprep.mubr.bf16.mxu0 0
      %3083 = vmatmul.mubr.bf16.gmra.mxu0 %v2981
      %v3084 = vpop.f32.mrf.mxu0
      %v3085 = vadd.f32 0.0, %v3084
      %v3086 = vpop.f32.mrf.mxu0
      %v3087 = vpop.f32.mrf.mxu0
      %v3088 = vadd.f32 0.0, %v3087
      %v3089 = vpop.f32.mrf.mxu0
      %3090 = vmatprep.mubr.bf16.mxu0 0
      %3091 = vmatmul.mubr.bf16.gmra.mxu0 %v2984
      %v3092 = vpop.f32.mrf.mxu0
      %v3093 = vadd.f32 0.0, %v3092
      %v3094 = vpop.f32.mrf.mxu0
      %v3095 = vpop.f32.mrf.mxu0
      %v3096 = vadd.f32 0.0, %v3095
      %v3097 = vpop.f32.mrf.mxu0
      %3098 = vmatprep.mubr.bf16.mxu0 0
      %3099 = vmatmul.mubr.bf16.gmra.mxu0 %v2987
      %v3100 = vpop.f32.mrf.mxu0
      %v3101 = vadd.f32 0.0, %v3100
      %v3102 = vpop.f32.mrf.mxu0
      %v3103 = vpop.f32.mrf.mxu0
      %v3104 = vadd.f32 0.0, %v3103
      %v3105 = vpop.f32.mrf.mxu0
      %3106 = vmatprep.mubr.bf16.mxu0 0
      %3107 = vmatmul.mubr.bf16.gmra.mxu0 %v2990
      %v3108 = vpop.f32.mrf.mxu0
      %v3109 = vadd.f32 0.0, %v3108
      %v3110 = vpop.f32.mrf.mxu0
      %v3111 = vpop.f32.mrf.mxu0
      %v3112 = vadd.f32 0.0, %v3111
      %v3113 = vpop.f32.mrf.mxu0
      %3114 = vmatprep.mubr.bf16.mxu0 0
      %3115 = vmatmul.mubr.bf16.gmra.mxu0 %v2993
      %v3116 = vpop.f32.mrf.mxu0
      %v3117 = vadd.f32 0.0, %v3116
      %v3118 = vpop.f32.mrf.mxu0
      %v3119 = vpop.f32.mrf.mxu0
      %v3120 = vadd.f32 0.0, %v3119
      %v3121 = vpop.f32.mrf.mxu0
      %3122 = vmatprep.mubr.bf16.mxu0 0
      %3123 = vmatmul.mubr.bf16.gmra.mxu0 %v2996
      %v3124 = vpop.f32.mrf.mxu0
      %v3125 = vadd.f32 0.0, %v3124
      %v3126 = vpop.f32.mrf.mxu0
      %v3127 = vpop.f32.mrf.mxu0
      %v3128 = vadd.f32 0.0, %v3127
      %v3129 = vpop.f32.mrf.mxu0
      %3130 = vmatprep.mubr.bf16.mxu0 0
      %3131 = vmatmul.mubr.bf16.gmra.mxu0 %v2999
      %v3132 = vpop.f32.mrf.mxu0
      %v3133 = vadd.f32 0.0, %v3132
      %v3134 = vpop.f32.mrf.mxu0
      %v3135 = vpop.f32.mrf.mxu0
      %v3136 = vadd.f32 0.0, %v3135
      %v3137 = vpop.f32.mrf.mxu0
      %3138 = vmatprep.mubr.bf16.mxu0 0
      %3139 = vmatmul.mubr.bf16.gmra.mxu0 %v3002
      %v3140 = vpop.f32.mrf.mxu0
      %v3141 = vadd.f32 0.0, %v3140
      %v3142 = vpop.f32.mrf.mxu0
      %v3143 = vpop.f32.mrf.mxu0
      %v3144 = vadd.f32 0.0, %v3143
      %v3145 = vpop.f32.mrf.mxu0
      %3146 = vmatprep.mubr.bf16.mxu0 0
      %3147 = vmatmul.mubr.bf16.gmra.mxu0 %v3005
      %v3148 = vpop.f32.mrf.mxu0
      %v3149 = vadd.f32 0.0, %v3148
      %v3150 = vpop.f32.mrf.mxu0
      %v3151 = vpop.f32.mrf.mxu0
      %v3152 = vadd.f32 0.0, %v3151
      %v3153 = vpop.f32.mrf.mxu0
      %3154 = vmatprep.mubr.bf16.mxu0 0
      %3155 = vmatmul.mubr.bf16.gmra.mxu0 %v3008
      %v3156 = vpop.f32.mrf.mxu0
      %v3157 = vadd.f32 0.0, %v3156
      %v3158 = vpop.f32.mrf.mxu0
      %v3159 = vpop.f32.mrf.mxu0
      %v3160 = vadd.f32 0.0, %v3159
      %v3161 = vpop.f32.mrf.mxu0
      %3162 = vmatprep.mubr.bf16.mxu0 0
      %3163 = vmatmul.mubr.bf16.gmra.mxu0 %v3011
      %v3164 = vpop.f32.mrf.mxu0
      %v3165 = vadd.f32 0.0, %v3164
      %v3166 = vpop.f32.mrf.mxu0
      %v3167 = vpop.f32.mrf.mxu0
      %v3168 = vadd.f32 0.0, %v3167
      %v3169 = vpop.f32.mrf.mxu0
      %3170 = vmatprep.mubr.bf16.mxu0 0
      %3171 = vmatmul.mubr.bf16.gmra.mxu0 %v3014
      %v3172 = vpop.f32.mrf.mxu0
      %v3173 = vadd.f32 0.0, %v3172
      %v3174 = vpop.f32.mrf.mxu0
      %v3175 = vpop.f32.mrf.mxu0
      %v3176 = vadd.f32 0.0, %v3175
      %v3177 = vpop.f32.mrf.mxu0
      %3178 = vmatprep.mubr.bf16.mxu0 0
      %3179 = vmatmul.mubr.bf16.gmra.mxu0 %v3017
      %v3180 = vpop.f32.mrf.mxu0
      %v3181 = vadd.f32 0.0, %v3180
      %v3182 = vpop.f32.mrf.mxu0
      %v3183 = vpop.f32.mrf.mxu0
      %v3184 = vadd.f32 0.0, %v3183
      %v3185 = vpop.f32.mrf.mxu0
      %3186 = vmatprep.mubr.bf16.mxu0 0
      %3187 = vmatmul.mubr.bf16.gmra.mxu0 %v3020
      %v3188 = vpop.f32.mrf.mxu0
      %v3189 = vadd.f32 0.0, %v3188
      %v3190 = vpop.f32.mrf.mxu0
      %v3191 = vpop.f32.mrf.mxu0
      %v3192 = vadd.f32 0.0, %v3191
      %v3193 = vpop.f32.mrf.mxu0
      %3194 = vmatprep.mubr.bf16.mxu0 0
      %3195 = vmatmul.mubr.bf16.gmra.mxu0 %v3023
      %v3196 = vpop.f32.mrf.mxu0
      %v3197 = vadd.f32 0.0, %v3196
      %v3198 = vpop.f32.mrf.mxu0
      %v3199 = vpop.f32.mrf.mxu0
      %v3200 = vadd.f32 0.0, %v3199
      %v3201 = vpop.f32.mrf.mxu0
      %3202 = vmatprep.mubr.bf16.mxu0 0
      %3203 = vmatmul.mubr.bf16.gmra.mxu0 %v3026
      %v3204 = vpop.f32.mrf.mxu0
      %v3205 = vadd.f32 0.0, %v3204
      %v3206 = vpop.f32.mrf.mxu0
      %v3207 = vpop.f32.mrf.mxu0
      %v3208 = vadd.f32 0.0, %v3207
      %v3209 = vpop.f32.mrf.mxu0
      %3210 = vmatprep.mubr.bf16.mxu0 0
      %3211 = vmatmul.mubr.bf16.gmra.mxu0 %v3029
      %v3212 = vpop.f32.mrf.mxu0
      %v3213 = vadd.f32 0.0, %v3212
      %v3214 = vpop.f32.mrf.mxu0
      %v3215 = vpop.f32.mrf.mxu0
      %v3216 = vadd.f32 0.0, %v3215
      %v3217 = vpop.f32.mrf.mxu0
      %3218 = vmatprep.mubr.bf16.mxu0 0
      %3219 = vmatmul.mubr.bf16.gmra.mxu0 %v3032
      %v3220 = vpop.f32.mrf.mxu0
      %v3221 = vadd.f32 0.0, %v3220
      %v3222 = vpop.f32.mrf.mxu0
      %v3223 = vpop.f32.mrf.mxu0
      %v3224 = vadd.f32 0.0, %v3223
      %v3225 = vpop.f32.mrf.mxu0
      %3226 = vdwg.mxu0
      %v3231 = vunpack.c.l.b16 %v2853
      %v3232 = vunpack.c.l.b16 %v2854
      %v3233 = vunpack.c.l.b16 %v2855
      %v3234 = vunpack.c.l.b16 %v2856
      %v3235 = vpack.c.b16 %v3232, %v3231
      %v3236 = vpack.c.b16 %v3234, %v3233
      %v3240 = vsel %vm1207, %v2833, 0
      %v3243 = vsel %vm1207, %v2834, 0
      %v3246 = vsel %vm1207, %v2835, 0
      %v3249 = vsel %vm1207, %v2836, 0
      %v3252 = vsel %vm1207, %v2837, 0
      %v3255 = vsel %vm1207, %v2838, 0
      %v3258 = vsel %vm1207, %v2839, 0
      %v3261 = vsel %vm1207, %v2840, 0
      %v3264 = vsel %vm1207, %v2841, 0
      %v3267 = vsel %vm1207, %v2842, 0
      %v3270 = vsel %vm1207, %v2843, 0
      %v3273 = vsel %vm1207, %v2844, 0
      %v3276 = vsel %vm1207, %v2845, 0
      %v3279 = vsel %vm1207, %v2846, 0
      %v3282 = vsel %vm1207, %v2847, 0
      %v3285 = vsel %vm1207, %v2848, 0
      %v3288 = vsel %vm1207, %v2849, 0
      %v3291 = vsel %vm1207, %v2850, 0
      %v3294 = vsel %vm1207, %v2851, 0
      %v3297 = vsel %vm1207, %v2852, 0
      %3299 = vmatprep.subr.bf16.mxu0 0
      %3300 = vmatpush1.bf16.msra.mxu0 0
      %3301 = vmatprep.subr.bf16.mxu0 0
      %3302 = vmatpush1.bf16.msra.mxu0 0
      %3303 = vmatprep.subr.bf16.mxu0 0
      %3304 = vmatpush1.bf16.msra.mxu0 0
      %3305 = vmatprep.subr.bf16.mxu0 0
      %3306 = vmatpush1.bf16.msra.mxu0 0
      %3307 = vmatprep.subr.bf16.mxu0 0
      %3308 = vmatpush1.bf16.msra.mxu0 0
      %3309 = vmatprep.subr.bf16.mxu0 0
      %3310 = vmatpush1.bf16.msra.mxu0 0
      %3311 = vmatprep.subr.bf16.mxu0 0
      %3312 = vmatpush1.bf16.msra.mxu0 %v3236
      %3313 = vmatprep.subr.bf16.mxu0 0
      %3314 = vmatpush1.bf16.msra.mxu0 %v3235
      %3315 = vmatprep.subr.bf16.mxu0 0
      %3316 = vmatpush2.bf16.msra.mxu0 0
      %3317 = vmatprep.subr.bf16.mxu0 0
      %3318 = vmatpush2.bf16.msra.mxu0 0
      %3319 = vmatprep.subr.bf16.mxu0 0
      %3320 = vmatpush2.bf16.msra.mxu0 0
      %3321 = vmatprep.subr.bf16.mxu0 0
      %3322 = vmatpush2.bf16.msra.mxu0 0
      %3323 = vmatprep.subr.bf16.mxu0 0
      %3324 = vmatpush2.bf16.msra.mxu0 0
      %3325 = vmatprep.subr.bf16.mxu0 0
      %3326 = vmatpush2.bf16.msra.mxu0 0
      %3327 = vmatprep.subr.bf16.mxu0 0
      %3328 = vmatpush2.bf16.msra.mxu0 0
      %3329 = vmatprep.subr.bf16.mxu0 0
      %3330 = vmatpush2.bf16.msra.mxu0 0
      %3331 = vmatprep.mubr.bf16.mxu0 0
      %3332 = vmatmul.mubr.bf16.gmra.mxu0 %v3240
      %v3333 = vpop.f32.mrf.mxu0
      %v3334 = vadd.f32 %v3069, %v3333
      %v3335 = vpop.f32.mrf.mxu0
      %v3336 = vpop.f32.mrf.mxu0
      %v3337 = vadd.f32 %v3072, %v3336
      %v3338 = vpop.f32.mrf.mxu0
      %3339 = vmatprep.mubr.bf16.mxu0 0
      %3340 = vmatmul.mubr.bf16.gmra.mxu0 %v3243
      %v3341 = vpop.f32.mrf.mxu0
      %v3342 = vadd.f32 %v3077, %v3341
      %v3343 = vpop.f32.mrf.mxu0
      %v3344 = vpop.f32.mrf.mxu0
      %v3345 = vadd.f32 %v3080, %v3344
      %v3346 = vpop.f32.mrf.mxu0
      %3347 = vmatprep.mubr.bf16.mxu0 0
      %3348 = vmatmul.mubr.bf16.gmra.mxu0 %v3246
      %v3349 = vpop.f32.mrf.mxu0
      %v3350 = vadd.f32 %v3085, %v3349
      %v3351 = vpop.f32.mrf.mxu0
      %v3352 = vpop.f32.mrf.mxu0
      %v3353 = vadd.f32 %v3088, %v3352
      %v3354 = vpop.f32.mrf.mxu0
      %3355 = vmatprep.mubr.bf16.mxu0 0
      %3356 = vmatmul.mubr.bf16.gmra.mxu0 %v3249
      %v3357 = vpop.f32.mrf.mxu0
      %v3358 = vadd.f32 %v3093, %v3357
      %v3359 = vpop.f32.mrf.mxu0
      %v3360 = vpop.f32.mrf.mxu0
      %v3361 = vadd.f32 %v3096, %v3360
      %v3362 = vpop.f32.mrf.mxu0
      %3363 = vmatprep.mubr.bf16.mxu0 0
      %3364 = vmatmul.mubr.bf16.gmra.mxu0 %v3252
      %v3365 = vpop.f32.mrf.mxu0
      %v3366 = vadd.f32 %v3101, %v3365
      %v3367 = vpop.f32.mrf.mxu0
      %v3368 = vpop.f32.mrf.mxu0
      %v3369 = vadd.f32 %v3104, %v3368
      %v3370 = vpop.f32.mrf.mxu0
      %3371 = vmatprep.mubr.bf16.mxu0 0
      %3372 = vmatmul.mubr.bf16.gmra.mxu0 %v3255
      %v3373 = vpop.f32.mrf.mxu0
      %v3374 = vadd.f32 %v3109, %v3373
      %v3375 = vpop.f32.mrf.mxu0
      %v3376 = vpop.f32.mrf.mxu0
      %v3377 = vadd.f32 %v3112, %v3376
      %v3378 = vpop.f32.mrf.mxu0
      %3379 = vmatprep.mubr.bf16.mxu0 0
      %3380 = vmatmul.mubr.bf16.gmra.mxu0 %v3258
      %v3381 = vpop.f32.mrf.mxu0
      %v3382 = vadd.f32 %v3117, %v3381
      %v3383 = vpop.f32.mrf.mxu0
      %v3384 = vpop.f32.mrf.mxu0
      %v3385 = vadd.f32 %v3120, %v3384
      %v3386 = vpop.f32.mrf.mxu0
      %3387 = vmatprep.mubr.bf16.mxu0 0
      %3388 = vmatmul.mubr.bf16.gmra.mxu0 %v3261
      %v3389 = vpop.f32.mrf.mxu0
      %v3390 = vadd.f32 %v3125, %v3389
      %v3391 = vpop.f32.mrf.mxu0
      %v3392 = vpop.f32.mrf.mxu0
      %v3393 = vadd.f32 %v3128, %v3392
      %v3394 = vpop.f32.mrf.mxu0
      %3395 = vmatprep.mubr.bf16.mxu0 0
      %3396 = vmatmul.mubr.bf16.gmra.mxu0 %v3264
      %v3397 = vpop.f32.mrf.mxu0
      %v3398 = vadd.f32 %v3133, %v3397
      %v3399 = vpop.f32.mrf.mxu0
      %v3400 = vpop.f32.mrf.mxu0
      %v3401 = vadd.f32 %v3136, %v3400
      %v3402 = vpop.f32.mrf.mxu0
      %3403 = vmatprep.mubr.bf16.mxu0 0
      %3404 = vmatmul.mubr.bf16.gmra.mxu0 %v3267
      %v3405 = vpop.f32.mrf.mxu0
      %v3406 = vadd.f32 %v3141, %v3405
      %v3407 = vpop.f32.mrf.mxu0
      %v3408 = vpop.f32.mrf.mxu0
      %v3409 = vadd.f32 %v3144, %v3408
      %v3410 = vpop.f32.mrf.mxu0
      %3411 = vmatprep.mubr.bf16.mxu0 0
      %3412 = vmatmul.mubr.bf16.gmra.mxu0 %v3270
      %v3413 = vpop.f32.mrf.mxu0
      %v3414 = vadd.f32 %v3149, %v3413
      %v3415 = vpop.f32.mrf.mxu0
      %v3416 = vpop.f32.mrf.mxu0
      %v3417 = vadd.f32 %v3152, %v3416
      %v3418 = vpop.f32.mrf.mxu0
      %3419 = vmatprep.mubr.bf16.mxu0 0
      %3420 = vmatmul.mubr.bf16.gmra.mxu0 %v3273
      %v3421 = vpop.f32.mrf.mxu0
      %v3422 = vadd.f32 %v3157, %v3421
      %v3423 = vpop.f32.mrf.mxu0
      %v3424 = vpop.f32.mrf.mxu0
      %v3425 = vadd.f32 %v3160, %v3424
      %v3426 = vpop.f32.mrf.mxu0
      %3427 = vmatprep.mubr.bf16.mxu0 0
      %3428 = vmatmul.mubr.bf16.gmra.mxu0 %v3276
      %v3429 = vpop.f32.mrf.mxu0
      %v3430 = vadd.f32 %v3165, %v3429
      %v3431 = vpop.f32.mrf.mxu0
      %v3432 = vpop.f32.mrf.mxu0
      %v3433 = vadd.f32 %v3168, %v3432
      %v3434 = vpop.f32.mrf.mxu0
      %3435 = vmatprep.mubr.bf16.mxu0 0
      %3436 = vmatmul.mubr.bf16.gmra.mxu0 %v3279
      %v3437 = vpop.f32.mrf.mxu0
      %v3438 = vadd.f32 %v3173, %v3437
      %v3439 = vpop.f32.mrf.mxu0
      %v3440 = vpop.f32.mrf.mxu0
      %v3441 = vadd.f32 %v3176, %v3440
      %v3442 = vpop.f32.mrf.mxu0
      %3443 = vmatprep.mubr.bf16.mxu0 0
      %3444 = vmatmul.mubr.bf16.gmra.mxu0 %v3282
      %v3445 = vpop.f32.mrf.mxu0
      %v3446 = vadd.f32 %v3181, %v3445
      %v3447 = vpop.f32.mrf.mxu0
      %v3448 = vpop.f32.mrf.mxu0
      %v3449 = vadd.f32 %v3184, %v3448
      %v3450 = vpop.f32.mrf.mxu0
      %3451 = vmatprep.mubr.bf16.mxu0 0
      %3452 = vmatmul.mubr.bf16.gmra.mxu0 %v3285
      %v3453 = vpop.f32.mrf.mxu0
      %v3454 = vadd.f32 %v3189, %v3453
      %v3455 = vpop.f32.mrf.mxu0
      %v3456 = vpop.f32.mrf.mxu0
      %v3457 = vadd.f32 %v3192, %v3456
      %v3458 = vpop.f32.mrf.mxu0
      %3459 = vmatprep.mubr.bf16.mxu0 0
      %3460 = vmatmul.mubr.bf16.gmra.mxu0 %v3288
      %v3461 = vpop.f32.mrf.mxu0
      %v3462 = vadd.f32 %v3197, %v3461
      %v3463 = vpop.f32.mrf.mxu0
      %v3464 = vpop.f32.mrf.mxu0
      %v3465 = vadd.f32 %v3200, %v3464
      %v3466 = vpop.f32.mrf.mxu0
      %3467 = vmatprep.mubr.bf16.mxu0 0
      %3468 = vmatmul.mubr.bf16.gmra.mxu0 %v3291
      %v3469 = vpop.f32.mrf.mxu0
      %v3470 = vadd.f32 %v3205, %v3469
      %v3471 = vpop.f32.mrf.mxu0
      %v3472 = vpop.f32.mrf.mxu0
      %v3473 = vadd.f32 %v3208, %v3472
      %v3474 = vpop.f32.mrf.mxu0
      %3475 = vmatprep.mubr.bf16.mxu0 0
      %3476 = vmatmul.mubr.bf16.gmra.mxu0 %v3294
      %v3477 = vpop.f32.mrf.mxu0
      %v3478 = vadd.f32 %v3213, %v3477
      %v3479 = vpop.f32.mrf.mxu0
      %v3480 = vpop.f32.mrf.mxu0
      %v3481 = vadd.f32 %v3216, %v3480
      %v3482 = vpop.f32.mrf.mxu0
      %3483 = vmatprep.mubr.bf16.mxu0 0
      %3484 = vmatmul.mubr.bf16.gmra.mxu0 %v3297
      %v3485 = vpop.f32.mrf.mxu0
      %v3486 = vadd.f32 %v3221, %v3485
      %v3487 = vpop.f32.mrf.mxu0
      %v3488 = vpop.f32.mrf.mxu0
      %v3489 = vadd.f32 %v3224, %v3488
      %v3490 = vpop.f32.mrf.mxu0
      %3491 = vdwg.mxu0
      %s3492 = scalar_lea.vmem [#allocation2], 2
      %v3493 = vld [vmem:[%s3492] ss:$2 sm:$0xff]
      %s3494 = scalar_lea.vmem [#allocation2], 18
      %v3495 = vld [vmem:[%s3494] ss:$2 sm:$0xff]
      %s3496 = scalar_lea.vmem [#allocation2], 34
      %v3497 = vld [vmem:[%s3496] ss:$2 sm:$0xff]
      %s3498 = scalar_lea.vmem [#allocation2], 50
      %v3499 = vld [vmem:[%s3498] ss:$2 sm:$0xff]
      %s3500 = scalar_lea.vmem [#allocation2], 66
      %v3501 = vld [vmem:[%s3500] ss:$2 sm:$0xff]
      %s3502 = scalar_lea.vmem [#allocation2], 82
      %v3503 = vld [vmem:[%s3502] ss:$2 sm:$0xff]
      %s3504 = scalar_lea.vmem [#allocation2], 98
      %v3505 = vld [vmem:[%s3504] ss:$2 sm:$0xff]
      %s3506 = scalar_lea.vmem [#allocation2], 114
      %v3507 = vld [vmem:[%s3506] ss:$2 sm:$0xff]
      %s3508 = scalar_lea.vmem [#allocation2], 130
      %v3509 = vld [vmem:[%s3508] ss:$2 sm:$0xff]
      %s3510 = scalar_lea.vmem [#allocation2], 146
      %v3511 = vld [vmem:[%s3510] ss:$2 sm:$0xff]
      %s3512 = scalar_lea.vmem [#allocation2], 162
      %v3513 = vld [vmem:[%s3512] ss:$2 sm:$0xff]
      %s3514 = scalar_lea.vmem [#allocation2], 178
      %v3515 = vld [vmem:[%s3514] ss:$2 sm:$0xff]
      %s3516 = scalar_lea.vmem [#allocation2], 194
      %v3517 = vld [vmem:[%s3516] ss:$2 sm:$0xff]
      %s3518 = scalar_lea.vmem [#allocation2], 210
      %v3519 = vld [vmem:[%s3518] ss:$2 sm:$0xff]
      %s3520 = scalar_lea.vmem [#allocation2], 226
      %v3521 = vld [vmem:[%s3520] ss:$2 sm:$0xff]
      %s3522 = scalar_lea.vmem [#allocation2], 242
      %v3523 = vld [vmem:[%s3522] ss:$2 sm:$0xff]
      %s3524 = scalar_lea.vmem [#allocation2], 258
      %v3525 = vld [vmem:[%s3524] ss:$2 sm:$0xff]
      %s3526 = scalar_lea.vmem [#allocation2], 274
      %v3527 = vld [vmem:[%s3526] ss:$2 sm:$0xff]
      %s3528 = scalar_lea.vmem [#allocation2], 290
      %v3529 = vld [vmem:[%s3528] ss:$2 sm:$0xff]
      %s3530 = scalar_lea.vmem [#allocation2], 306
      %v3531 = vld [vmem:[%s3530] ss:$2 sm:$0xff]
      %s3532 = scalar_lea.vmem [#allocation2], 322
      %v3533 = vld [vmem:[%s3532] ss:$2 sm:$0xff]
      %s3534 = scalar_lea.vmem [#allocation2], 338
      %v3535 = vld [vmem:[%s3534] ss:$2 sm:$0xff]
      %s3536 = scalar_lea.vmem [#allocation2], 354
      %v3537 = vld [vmem:[%s3536] ss:$2 sm:$0xff]
      %s3538 = scalar_lea.vmem [#allocation2], 370
      %v3539 = vld [vmem:[%s3538] ss:$2 sm:$0xff]
      %s3540 = scalar_lea.vmem [#allocation2], 386
      %v3541 = vld [vmem:[%s3540] ss:$2 sm:$0xff]
      %s3542 = scalar_lea.vmem [#allocation2], 402
      %v3543 = vld [vmem:[%s3542] ss:$2 sm:$0xff]
      %s3544 = scalar_lea.vmem [#allocation2], 418
      %v3545 = vld [vmem:[%s3544] ss:$2 sm:$0xff]
      %s3546 = scalar_lea.vmem [#allocation2], 434
      %v3547 = vld [vmem:[%s3546] ss:$2 sm:$0xff]
      %s3548 = scalar_lea.vmem [#allocation2], 450
      %v3549 = vld [vmem:[%s3548] ss:$2 sm:$0xff]
      %s3550 = scalar_lea.vmem [#allocation2], 466
      %v3551 = vld [vmem:[%s3550] ss:$2 sm:$0xff]
      %s3552 = scalar_lea.vmem [#allocation2], 482
      %v3553 = vld [vmem:[%s3552] ss:$2 sm:$0xff]
      %s3554 = scalar_lea.vmem [#allocation2], 498
      %v3555 = vld [vmem:[%s3554] ss:$2 sm:$0xff]
      %s3556 = scalar_lea.vmem [#allocation2], 514
      %v3557 = vld [vmem:[%s3556] ss:$2 sm:$0xff]
      %s3558 = scalar_lea.vmem [#allocation2], 530
      %v3559 = vld [vmem:[%s3558] ss:$2 sm:$0xff]
      %s3560 = scalar_lea.vmem [#allocation2], 546
      %v3561 = vld [vmem:[%s3560] ss:$2 sm:$0xff]
      %s3562 = scalar_lea.vmem [#allocation2], 562
      %v3563 = vld [vmem:[%s3562] ss:$2 sm:$0xff]
      %s3564 = scalar_lea.vmem [#allocation2], 578
      %v3565 = vld [vmem:[%s3564] ss:$2 sm:$0xff]
      %s3566 = scalar_lea.vmem [#allocation2], 594
      %v3567 = vld [vmem:[%s3566] ss:$2 sm:$0xff]
      %s3568 = scalar_lea.vmem [#allocation2], 610
      %v3569 = vld [vmem:[%s3568] ss:$2 sm:$0xff]
      %s3570 = scalar_lea.vmem [#allocation2], 626
      %v3571 = vld [vmem:[%s3570] ss:$2 sm:$0x7f]
      %v3572 = vpack.c.bf16 %v3495, %v3493
      %v3573 = vpack.c.bf16 %v3499, %v3497
      %v3574 = vpack.c.bf16 %v3503, %v3501
      %v3575 = vpack.c.bf16 %v3507, %v3505
      %v3576 = vpack.c.bf16 %v3511, %v3509
      %v3577 = vpack.c.bf16 %v3515, %v3513
      %v3578 = vpack.c.bf16 %v3519, %v3517
      %v3579 = vpack.c.bf16 %v3523, %v3521
      %v3580 = vpack.c.bf16 %v3527, %v3525
      %v3581 = vpack.c.bf16 %v3531, %v3529
      %v3582 = vpack.c.bf16 %v3535, %v3533
      %v3583 = vpack.c.bf16 %v3539, %v3537
      %v3584 = vpack.c.bf16 %v3543, %v3541
      %v3585 = vpack.c.bf16 %v3547, %v3545
      %v3586 = vpack.c.bf16 %v3551, %v3549
      %v3587 = vpack.c.bf16 %v3555, %v3553
      %v3588 = vpack.c.bf16 %v3559, %v3557
      %v3589 = vpack.c.bf16 %v3563, %v3561
      %v3590 = vpack.c.bf16 %v3567, %v3565
      %v3591 = vpack.c.bf16 %v3571, %v3569
      %s3592 = scalar_lea.vmem %s2, 32
      %v3593 = vld [vmem:[%s3592] sm:$0xf]
      %v3594 = vld [vmem:[%s3592 + $0x4] sm:$0xf]
      %v3595 = vld [vmem:[%s3592 + $0x8] sm:$0xf]
      %v3596 = vld [vmem:[%s3592 + $0xc] sm:$0xf]
      %v3601 = vunpack.c.l.b16 %v3593
      %v3602 = vunpack.c.l.b16 %v3594
      %v3603 = vunpack.c.l.b16 %v3595
      %v3604 = vunpack.c.l.b16 %v3596
      %v3605 = vpack.c.b16 %v3602, %v3601
      %v3606 = vpack.c.b16 %v3604, %v3603
      %v3610 = vsel %vm1207, %v3572, 0
      %v3613 = vsel %vm1207, %v3573, 0
      %v3616 = vsel %vm1207, %v3574, 0
      %v3619 = vsel %vm1207, %v3575, 0
      %v3622 = vsel %vm1207, %v3576, 0
      %v3625 = vsel %vm1207, %v3577, 0
      %v3628 = vsel %vm1207, %v3578, 0
      %v3631 = vsel %vm1207, %v3579, 0
      %v3634 = vsel %vm1207, %v3580, 0
      %v3637 = vsel %vm1207, %v3581, 0
      %v3640 = vsel %vm1207, %v3582, 0
      %v3643 = vsel %vm1207, %v3583, 0
      %v3646 = vsel %vm1207, %v3584, 0
      %v3649 = vsel %vm1207, %v3585, 0
      %v3652 = vsel %vm1207, %v3586, 0
      %v3655 = vsel %vm1207, %v3587, 0
      %v3658 = vsel %vm1207, %v3588, 0
      %v3661 = vsel %vm1207, %v3589, 0
      %v3664 = vsel %vm1207, %v3590, 0
      %v3667 = vsel %vm1207, %v3591, 0
      %3669 = vmatprep.subr.bf16.mxu0 0
      %3670 = vmatpush1.bf16.msra.mxu0 0
      %3671 = vmatprep.subr.bf16.mxu0 0
      %3672 = vmatpush1.bf16.msra.mxu0 0
      %3673 = vmatprep.subr.bf16.mxu0 0
      %3674 = vmatpush1.bf16.msra.mxu0 0
      %3675 = vmatprep.subr.bf16.mxu0 0
      %3676 = vmatpush1.bf16.msra.mxu0 0
      %3677 = vmatprep.subr.bf16.mxu0 0
      %3678 = vmatpush1.bf16.msra.mxu0 0
      %3679 = vmatprep.subr.bf16.mxu0 0
      %3680 = vmatpush1.bf16.msra.mxu0 0
      %3681 = vmatprep.subr.bf16.mxu0 0
      %3682 = vmatpush1.bf16.msra.mxu0 %v3606
      %3683 = vmatprep.subr.bf16.mxu0 0
      %3684 = vmatpush1.bf16.msra.mxu0 %v3605
      %3685 = vmatprep.subr.bf16.mxu0 0
      %3686 = vmatpush2.bf16.msra.mxu0 0
      %3687 = vmatprep.subr.bf16.mxu0 0
      %3688 = vmatpush2.bf16.msra.mxu0 0
      %3689 = vmatprep.subr.bf16.mxu0 0
      %3690 = vmatpush2.bf16.msra.mxu0 0
      %3691 = vmatprep.subr.bf16.mxu0 0
      %3692 = vmatpush2.bf16.msra.mxu0 0
      %3693 = vmatprep.subr.bf16.mxu0 0
      %3694 = vmatpush2.bf16.msra.mxu0 0
      %3695 = vmatprep.subr.bf16.mxu0 0
      %3696 = vmatpush2.bf16.msra.mxu0 0
      %3697 = vmatprep.subr.bf16.mxu0 0
      %3698 = vmatpush2.bf16.msra.mxu0 0
      %3699 = vmatprep.subr.bf16.mxu0 0
      %3700 = vmatpush2.bf16.msra.mxu0 0
      %3701 = vmatprep.mubr.bf16.mxu0 0
      %3702 = vmatmul.mubr.bf16.gmra.mxu0 %v3610
      %v3703 = vpop.f32.mrf.mxu0
      %v3704 = vadd.f32 0.0, %v3703
      %v3705 = vpop.f32.mrf.mxu0
      %v3706 = vpop.f32.mrf.mxu0
      %v3707 = vadd.f32 0.0, %v3706
      %v3708 = vpop.f32.mrf.mxu0
      %3709 = vmatprep.mubr.bf16.mxu0 0
      %3710 = vmatmul.mubr.bf16.gmra.mxu0 %v3613
      %v3711 = vpop.f32.mrf.mxu0
      %v3712 = vadd.f32 0.0, %v3711
      %v3713 = vpop.f32.mrf.mxu0
      %v3714 = vpop.f32.mrf.mxu0
      %v3715 = vadd.f32 0.0, %v3714
      %v3716 = vpop.f32.mrf.mxu0
      %3717 = vmatprep.mubr.bf16.mxu0 0
      %3718 = vmatmul.mubr.bf16.gmra.mxu0 %v3616
      %v3719 = vpop.f32.mrf.mxu0
      %v3720 = vadd.f32 0.0, %v3719
      %v3721 = vpop.f32.mrf.mxu0
      %v3722 = vpop.f32.mrf.mxu0
      %v3723 = vadd.f32 0.0, %v3722
      %v3724 = vpop.f32.mrf.mxu0
      %3725 = vmatprep.mubr.bf16.mxu0 0
      %3726 = vmatmul.mubr.bf16.gmra.mxu0 %v3619
      %v3727 = vpop.f32.mrf.mxu0
      %v3728 = vadd.f32 0.0, %v3727
      %v3729 = vpop.f32.mrf.mxu0
      %v3730 = vpop.f32.mrf.mxu0
      %v3731 = vadd.f32 0.0, %v3730
      %v3732 = vpop.f32.mrf.mxu0
      %3733 = vmatprep.mubr.bf16.mxu0 0
      %3734 = vmatmul.mubr.bf16.gmra.mxu0 %v3622
      %v3735 = vpop.f32.mrf.mxu0
      %v3736 = vadd.f32 0.0, %v3735
      %v3737 = vpop.f32.mrf.mxu0
      %v3738 = vpop.f32.mrf.mxu0
      %v3739 = vadd.f32 0.0, %v3738
      %v3740 = vpop.f32.mrf.mxu0
      %3741 = vmatprep.mubr.bf16.mxu0 0
      %3742 = vmatmul.mubr.bf16.gmra.mxu0 %v3625
      %v3743 = vpop.f32.mrf.mxu0
      %v3744 = vadd.f32 0.0, %v3743
      %v3745 = vpop.f32.mrf.mxu0
      %v3746 = vpop.f32.mrf.mxu0
      %v3747 = vadd.f32 0.0, %v3746
      %v3748 = vpop.f32.mrf.mxu0
      %3749 = vmatprep.mubr.bf16.mxu0 0
      %3750 = vmatmul.mubr.bf16.gmra.mxu0 %v3628
      %v3751 = vpop.f32.mrf.mxu0
      %v3752 = vadd.f32 0.0, %v3751
      %v3753 = vpop.f32.mrf.mxu0
      %v3754 = vpop.f32.mrf.mxu0
      %v3755 = vadd.f32 0.0, %v3754
      %v3756 = vpop.f32.mrf.mxu0
      %3757 = vmatprep.mubr.bf16.mxu0 0
      %3758 = vmatmul.mubr.bf16.gmra.mxu0 %v3631
      %v3759 = vpop.f32.mrf.mxu0
      %v3760 = vadd.f32 0.0, %v3759
      %v3761 = vpop.f32.mrf.mxu0
      %v3762 = vpop.f32.mrf.mxu0
      %v3763 = vadd.f32 0.0, %v3762
      %v3764 = vpop.f32.mrf.mxu0
      %3765 = vmatprep.mubr.bf16.mxu0 0
      %3766 = vmatmul.mubr.bf16.gmra.mxu0 %v3634
      %v3767 = vpop.f32.mrf.mxu0
      %v3768 = vadd.f32 0.0, %v3767
      %v3769 = vpop.f32.mrf.mxu0
      %v3770 = vpop.f32.mrf.mxu0
      %v3771 = vadd.f32 0.0, %v3770
      %v3772 = vpop.f32.mrf.mxu0
      %3773 = vmatprep.mubr.bf16.mxu0 0
      %3774 = vmatmul.mubr.bf16.gmra.mxu0 %v3637
      %v3775 = vpop.f32.mrf.mxu0
      %v3776 = vadd.f32 0.0, %v3775
      %v3777 = vpop.f32.mrf.mxu0
      %v3778 = vpop.f32.mrf.mxu0
      %v3779 = vadd.f32 0.0, %v3778
      %v3780 = vpop.f32.mrf.mxu0
      %3781 = vmatprep.mubr.bf16.mxu0 0
      %3782 = vmatmul.mubr.bf16.gmra.mxu0 %v3640
      %v3783 = vpop.f32.mrf.mxu0
      %v3784 = vadd.f32 0.0, %v3783
      %v3785 = vpop.f32.mrf.mxu0
      %v3786 = vpop.f32.mrf.mxu0
      %v3787 = vadd.f32 0.0, %v3786
      %v3788 = vpop.f32.mrf.mxu0
      %3789 = vmatprep.mubr.bf16.mxu0 0
      %3790 = vmatmul.mubr.bf16.gmra.mxu0 %v3643
      %v3791 = vpop.f32.mrf.mxu0
      %v3792 = vadd.f32 0.0, %v3791
      %v3793 = vpop.f32.mrf.mxu0
      %v3794 = vpop.f32.mrf.mxu0
      %v3795 = vadd.f32 0.0, %v3794
      %v3796 = vpop.f32.mrf.mxu0
      %3797 = vmatprep.mubr.bf16.mxu0 0
      %3798 = vmatmul.mubr.bf16.gmra.mxu0 %v3646
      %v3799 = vpop.f32.mrf.mxu0
      %v3800 = vadd.f32 0.0, %v3799
      %v3801 = vpop.f32.mrf.mxu0
      %v3802 = vpop.f32.mrf.mxu0
      %v3803 = vadd.f32 0.0, %v3802
      %v3804 = vpop.f32.mrf.mxu0
      %3805 = vmatprep.mubr.bf16.mxu0 0
      %3806 = vmatmul.mubr.bf16.gmra.mxu0 %v3649
      %v3807 = vpop.f32.mrf.mxu0
      %v3808 = vadd.f32 0.0, %v3807
      %v3809 = vpop.f32.mrf.mxu0
      %v3810 = vpop.f32.mrf.mxu0
      %v3811 = vadd.f32 0.0, %v3810
      %v3812 = vpop.f32.mrf.mxu0
      %3813 = vmatprep.mubr.bf16.mxu0 0
      %3814 = vmatmul.mubr.bf16.gmra.mxu0 %v3652
      %v3815 = vpop.f32.mrf.mxu0
      %v3816 = vadd.f32 0.0, %v3815
      %v3817 = vpop.f32.mrf.mxu0
      %v3818 = vpop.f32.mrf.mxu0
      %v3819 = vadd.f32 0.0, %v3818
      %v3820 = vpop.f32.mrf.mxu0
      %3821 = vmatprep.mubr.bf16.mxu0 0
      %3822 = vmatmul.mubr.bf16.gmra.mxu0 %v3655
      %v3823 = vpop.f32.mrf.mxu0
      %v3824 = vadd.f32 0.0, %v3823
      %v3825 = vpop.f32.mrf.mxu0
      %v3826 = vpop.f32.mrf.mxu0
      %v3827 = vadd.f32 0.0, %v3826
      %v3828 = vpop.f32.mrf.mxu0
      %3829 = vmatprep.mubr.bf16.mxu0 0
      %3830 = vmatmul.mubr.bf16.gmra.mxu0 %v3658
      %v3831 = vpop.f32.mrf.mxu0
      %v3832 = vadd.f32 0.0, %v3831
      %v3833 = vpop.f32.mrf.mxu0
      %v3834 = vpop.f32.mrf.mxu0
      %v3835 = vadd.f32 0.0, %v3834
      %v3836 = vpop.f32.mrf.mxu0
      %3837 = vmatprep.mubr.bf16.mxu0 0
      %3838 = vmatmul.mubr.bf16.gmra.mxu0 %v3661
      %v3839 = vpop.f32.mrf.mxu0
      %v3840 = vadd.f32 0.0, %v3839
      %v3841 = vpop.f32.mrf.mxu0
      %v3842 = vpop.f32.mrf.mxu0
      %v3843 = vadd.f32 0.0, %v3842
      %v3844 = vpop.f32.mrf.mxu0
      %3845 = vmatprep.mubr.bf16.mxu0 0
      %3846 = vmatmul.mubr.bf16.gmra.mxu0 %v3664
      %v3847 = vpop.f32.mrf.mxu0
      %v3848 = vadd.f32 0.0, %v3847
      %v3849 = vpop.f32.mrf.mxu0
      %v3850 = vpop.f32.mrf.mxu0
      %v3851 = vadd.f32 0.0, %v3850
      %v3852 = vpop.f32.mrf.mxu0
      %3853 = vmatprep.mubr.bf16.mxu0 0
      %3854 = vmatmul.mubr.bf16.gmra.mxu0 %v3667
      %v3855 = vpop.f32.mrf.mxu0
      %v3856 = vadd.f32 0.0, %v3855
      %v3857 = vpop.f32.mrf.mxu0
      %v3858 = vpop.f32.mrf.mxu0
      %v3859 = vadd.f32 0.0, %v3858
      %v3860 = vpop.f32.mrf.mxu0
      %3861 = vdwg.mxu0
      %v3862 = vadd.f32 %v3334, %v3704
      %v3863 = vadd.f32 %v3337, %v3707
      %v3864 = vadd.f32 %v3342, %v3712
      %v3865 = vadd.f32 %v3345, %v3715
      %v3866 = vadd.f32 %v3350, %v3720
      %v3867 = vadd.f32 %v3353, %v3723
      %v3868 = vadd.f32 %v3358, %v3728
      %v3869 = vadd.f32 %v3361, %v3731
      %v3870 = vadd.f32 %v3366, %v3736
      %v3871 = vadd.f32 %v3369, %v3739
      %v3872 = vadd.f32 %v3374, %v3744
      %v3873 = vadd.f32 %v3377, %v3747
      %v3874 = vadd.f32 %v3382, %v3752
      %v3875 = vadd.f32 %v3385, %v3755
      %v3876 = vadd.f32 %v3390, %v3760
      %v3877 = vadd.f32 %v3393, %v3763
      %v3878 = vadd.f32 %v3398, %v3768
      %v3879 = vadd.f32 %v3401, %v3771
      %v3880 = vadd.f32 %v3406, %v3776
      %v3881 = vadd.f32 %v3409, %v3779
      %v3882 = vadd.f32 %v3414, %v3784
      %v3883 = vadd.f32 %v3417, %v3787
      %v3884 = vadd.f32 %v3422, %v3792
      %v3885 = vadd.f32 %v3425, %v3795
      %v3886 = vadd.f32 %v3430, %v3800
      %v3887 = vadd.f32 %v3433, %v3803
      %v3888 = vadd.f32 %v3438, %v3808
      %v3889 = vadd.f32 %v3441, %v3811
      %v3890 = vadd.f32 %v3446, %v3816
      %v3891 = vadd.f32 %v3449, %v3819
      %v3892 = vadd.f32 %v3454, %v3824
      %v3893 = vadd.f32 %v3457, %v3827
      %v3894 = vadd.f32 %v3462, %v3832
      %v3895 = vadd.f32 %v3465, %v3835
      %v3896 = vadd.f32 %v3470, %v3840
      %v3897 = vadd.f32 %v3473, %v3843
      %v3898 = vadd.f32 %v3478, %v3848
      %v3899 = vadd.f32 %v3481, %v3851
      %v3900 = vadd.f32 %v3486, %v3856
      %v3901 = vadd.f32 %v3489, %v3859
      %v3902 = vmul.f32 %v3862, 0.5
      %v3903 = vmul.f32 %v3863, 0.5
      %v3904 = vmul.f32 %v3864, 0.5
      %v3905 = vmul.f32 %v3865, 0.5
      %v3906 = vmul.f32 %v3866, 0.5
      %v3907 = vmul.f32 %v3867, 0.5
      %v3908 = vmul.f32 %v3868, 0.5
      %v3909 = vmul.f32 %v3869, 0.5
      %v3910 = vmul.f32 %v3870, 0.5
      %v3911 = vmul.f32 %v3871, 0.5
      %v3912 = vmul.f32 %v3872, 0.5
      %v3913 = vmul.f32 %v3873, 0.5
      %v3914 = vmul.f32 %v3874, 0.5
      %v3915 = vmul.f32 %v3875, 0.5
      %v3916 = vmul.f32 %v3876, 0.5
      %v3917 = vmul.f32 %v3877, 0.5
      %v3918 = vmul.f32 %v3878, 0.5
      %v3919 = vmul.f32 %v3879, 0.5
      %v3920 = vmul.f32 %v3880, 0.5
      %v3921 = vmul.f32 %v3881, 0.5
      %v3922 = vmul.f32 %v3882, 0.5
      %v3923 = vmul.f32 %v3883, 0.5
      %v3924 = vmul.f32 %v3884, 0.5
      %v3925 = vmul.f32 %v3885, 0.5
      %v3926 = vmul.f32 %v3886, 0.5
      %v3927 = vmul.f32 %v3887, 0.5
      %v3928 = vmul.f32 %v3888, 0.5
      %v3929 = vmul.f32 %v3889, 0.5
      %v3930 = vmul.f32 %v3890, 0.5
      %v3931 = vmul.f32 %v3891, 0.5
      %v3932 = vmul.f32 %v3892, 0.5
      %v3933 = vmul.f32 %v3893, 0.5
      %v3934 = vmul.f32 %v3894, 0.5
      %v3935 = vmul.f32 %v3895, 0.5
      %v3936 = vmul.f32 %v3896, 0.5
      %v3937 = vmul.f32 %v3897, 0.5
      %v3938 = vmul.f32 %v3898, 0.5
      %v3939 = vmul.f32 %v3899, 0.5
      %v3940 = vmul.f32 %v3900, 0.5
      %v3941 = vmul.f32 %v3901, 0.5
      %v3942 = vmul.f32 %v3862, 0.044715
      %v3943 = vmul.f32 %v3863, 0.044715
      %v3944 = vmul.f32 %v3864, 0.044715
      %v3945 = vmul.f32 %v3865, 0.044715
      %v3946 = vmul.f32 %v3866, 0.044715
      %v3947 = vmul.f32 %v3867, 0.044715
      %v3948 = vmul.f32 %v3868, 0.044715
      %v3949 = vmul.f32 %v3869, 0.044715
      %v3950 = vmul.f32 %v3870, 0.044715
      %v3951 = vmul.f32 %v3871, 0.044715
      %v3952 = vmul.f32 %v3872, 0.044715
      %v3953 = vmul.f32 %v3873, 0.044715
      %v3954 = vmul.f32 %v3874, 0.044715
      %v3955 = vmul.f32 %v3875, 0.044715
      %v3956 = vmul.f32 %v3876, 0.044715
      %v3957 = vmul.f32 %v3877, 0.044715
      %v3958 = vmul.f32 %v3878, 0.044715
      %v3959 = vmul.f32 %v3879, 0.044715
      %v3960 = vmul.f32 %v3880, 0.044715
      %v3961 = vmul.f32 %v3881, 0.044715
      %v3962 = vmul.f32 %v3882, 0.044715
      %v3963 = vmul.f32 %v3883, 0.044715
      %v3964 = vmul.f32 %v3884, 0.044715
      %v3965 = vmul.f32 %v3885, 0.044715
      %v3966 = vmul.f32 %v3886, 0.044715
      %v3967 = vmul.f32 %v3887, 0.044715
      %v3968 = vmul.f32 %v3888, 0.044715
      %v3969 = vmul.f32 %v3889, 0.044715
      %v3970 = vmul.f32 %v3890, 0.044715
      %v3971 = vmul.f32 %v3891, 0.044715
      %v3972 = vmul.f32 %v3892, 0.044715
      %v3973 = vmul.f32 %v3893, 0.044715
      %v3974 = vmul.f32 %v3894, 0.044715
      %v3975 = vmul.f32 %v3895, 0.044715
      %v3976 = vmul.f32 %v3896, 0.044715
      %v3977 = vmul.f32 %v3897, 0.044715
      %v3978 = vmul.f32 %v3898, 0.044715
      %v3979 = vmul.f32 %v3899, 0.044715
      %v3980 = vmul.f32 %v3900, 0.044715
      %v3981 = vmul.f32 %v3901, 0.044715
      %v3982 = vmul.f32 %v3942, %v3862
      %v3983 = vmul.f32 %v3943, %v3863
      %v3984 = vmul.f32 %v3944, %v3864
      %v3985 = vmul.f32 %v3945, %v3865
      %v3986 = vmul.f32 %v3946, %v3866
      %v3987 = vmul.f32 %v3947, %v3867
      %v3988 = vmul.f32 %v3948, %v3868
      %v3989 = vmul.f32 %v3949, %v3869
      %v3990 = vmul.f32 %v3950, %v3870
      %v3991 = vmul.f32 %v3951, %v3871
      %v3992 = vmul.f32 %v3952, %v3872
      %v3993 = vmul.f32 %v3953, %v3873
      %v3994 = vmul.f32 %v3954, %v3874
      %v3995 = vmul.f32 %v3955, %v3875
      %v3996 = vmul.f32 %v3956, %v3876
      %v3997 = vmul.f32 %v3957, %v3877
      %v3998 = vmul.f32 %v3958, %v3878
      %v3999 = vmul.f32 %v3959, %v3879
      %v4000 = vmul.f32 %v3960, %v3880
      %v4001 = vmul.f32 %v3961, %v3881
      %v4002 = vmul.f32 %v3962, %v3882
      %v4003 = vmul.f32 %v3963, %v3883
      %v4004 = vmul.f32 %v3964, %v3884
      %v4005 = vmul.f32 %v3965, %v3885
      %v4006 = vmul.f32 %v3966, %v3886
      %v4007 = vmul.f32 %v3967, %v3887
      %v4008 = vmul.f32 %v3968, %v3888
      %v4009 = vmul.f32 %v3969, %v3889
      %v4010 = vmul.f32 %v3970, %v3890
      %v4011 = vmul.f32 %v3971, %v3891
      %v4012 = vmul.f32 %v3972, %v3892
      %v4013 = vmul.f32 %v3973, %v3893
      %v4014 = vmul.f32 %v3974, %v3894
      %v4015 = vmul.f32 %v3975, %v3895
      %v4016 = vmul.f32 %v3976, %v3896
      %v4017 = vmul.f32 %v3977, %v3897
      %v4018 = vmul.f32 %v3978, %v3898
      %v4019 = vmul.f32 %v3979, %v3899
      %v4020 = vmul.f32 %v3980, %v3900
      %v4021 = vmul.f32 %v3981, %v3901
      %v4022 = vmul.f32 %v3982, %v3862
      %v4023 = vmul.f32 %v3983, %v3863
      %v4024 = vmul.f32 %v3984, %v3864
      %v4025 = vmul.f32 %v3985, %v3865
      %v4026 = vmul.f32 %v3986, %v3866
      %v4027 = vmul.f32 %v3987, %v3867
      %v4028 = vmul.f32 %v3988, %v3868
      %v4029 = vmul.f32 %v3989, %v3869
      %v4030 = vmul.f32 %v3990, %v3870
      %v4031 = vmul.f32 %v3991, %v3871
      %v4032 = vmul.f32 %v3992, %v3872
      %v4033 = vmul.f32 %v3993, %v3873
      %v4034 = vmul.f32 %v3994, %v3874
      %v4035 = vmul.f32 %v3995, %v3875
      %v4036 = vmul.f32 %v3996, %v3876
      %v4037 = vmul.f32 %v3997, %v3877
      %v4038 = vmul.f32 %v3998, %v3878
      %v4039 = vmul.f32 %v3999, %v3879
      %v4040 = vmul.f32 %v4000, %v3880
      %v4041 = vmul.f32 %v4001, %v3881
      %v4042 = vmul.f32 %v4002, %v3882
      %v4043 = vmul.f32 %v4003, %v3883
      %v4044 = vmul.f32 %v4004, %v3884
      %v4045 = vmul.f32 %v4005, %v3885
      %v4046 = vmul.f32 %v4006, %v3886
      %v4047 = vmul.f32 %v4007, %v3887
      %v4048 = vmul.f32 %v4008, %v3888
      %v4049 = vmul.f32 %v4009, %v3889
      %v4050 = vmul.f32 %v4010, %v3890
      %v4051 = vmul.f32 %v4011, %v3891
      %v4052 = vmul.f32 %v4012, %v3892
      %v4053 = vmul.f32 %v4013, %v3893
      %v4054 = vmul.f32 %v4014, %v3894
      %v4055 = vmul.f32 %v4015, %v3895
      %v4056 = vmul.f32 %v4016, %v3896
      %v4057 = vmul.f32 %v4017, %v3897
      %v4058 = vmul.f32 %v4018, %v3898
      %v4059 = vmul.f32 %v4019, %v3899
      %v4060 = vmul.f32 %v4020, %v3900
      %v4061 = vmul.f32 %v4021, %v3901
      %v4062 = vadd.f32 %v3862, %v4022
      %v4063 = vadd.f32 %v3863, %v4023
      %v4064 = vadd.f32 %v3864, %v4024
      %v4065 = vadd.f32 %v3865, %v4025
      %v4066 = vadd.f32 %v3866, %v4026
      %v4067 = vadd.f32 %v3867, %v4027
      %v4068 = vadd.f32 %v3868, %v4028
      %v4069 = vadd.f32 %v3869, %v4029
      %v4070 = vadd.f32 %v3870, %v4030
      %v4071 = vadd.f32 %v3871, %v4031
      %v4072 = vadd.f32 %v3872, %v4032
      %v4073 = vadd.f32 %v3873, %v4033
      %v4074 = vadd.f32 %v3874, %v4034
      %v4075 = vadd.f32 %v3875, %v4035
      %v4076 = vadd.f32 %v3876, %v4036
      %v4077 = vadd.f32 %v3877, %v4037
      %v4078 = vadd.f32 %v3878, %v4038
      %v4079 = vadd.f32 %v3879, %v4039
      %v4080 = vadd.f32 %v3880, %v4040
      %v4081 = vadd.f32 %v3881, %v4041
      %v4082 = vadd.f32 %v3882, %v4042
      %v4083 = vadd.f32 %v3883, %v4043
      %v4084 = vadd.f32 %v3884, %v4044
      %v4085 = vadd.f32 %v3885, %v4045
      %v4086 = vadd.f32 %v3886, %v4046
      %v4087 = vadd.f32 %v3887, %v4047
      %v4088 = vadd.f32 %v3888, %v4048
      %v4089 = vadd.f32 %v3889, %v4049
      %v4090 = vadd.f32 %v3890, %v4050
      %v4091 = vadd.f32 %v3891, %v4051
      %v4092 = vadd.f32 %v3892, %v4052
      %v4093 = vadd.f32 %v3893, %v4053
      %v4094 = vadd.f32 %v3894, %v4054
      %v4095 = vadd.f32 %v3895, %v4055
      %v4096 = vadd.f32 %v3896, %v4056
      %v4097 = vadd.f32 %v3897, %v4057
      %v4098 = vadd.f32 %v3898, %v4058
      %v4099 = vadd.f32 %v3899, %v4059
      %v4100 = vadd.f32 %v3900, %v4060
      %v4101 = vadd.f32 %v3901, %v4061
      %v4102 = vmul.f32 %v4062, 0.7978846
      %v4103 = vmul.f32 %v4063, 0.7978846
      %v4104 = vmul.f32 %v4064, 0.7978846
      %v4105 = vmul.f32 %v4065, 0.7978846
      %v4106 = vmul.f32 %v4066, 0.7978846
      %v4107 = vmul.f32 %v4067, 0.7978846
      %v4108 = vmul.f32 %v4068, 0.7978846
      %v4109 = vmul.f32 %v4069, 0.7978846
      %v4110 = vmul.f32 %v4070, 0.7978846
      %v4111 = vmul.f32 %v4071, 0.7978846
      %v4112 = vmul.f32 %v4072, 0.7978846
      %v4113 = vmul.f32 %v4073, 0.7978846
      %v4114 = vmul.f32 %v4074, 0.7978846
      %v4115 = vmul.f32 %v4075, 0.7978846
      %v4116 = vmul.f32 %v4076, 0.7978846
      %v4117 = vmul.f32 %v4077, 0.7978846
      %v4118 = vmul.f32 %v4078, 0.7978846
      %v4119 = vmul.f32 %v4079, 0.7978846
      %v4120 = vmul.f32 %v4080, 0.7978846
      %v4121 = vmul.f32 %v4081, 0.7978846
      %v4122 = vmul.f32 %v4082, 0.7978846
      %v4123 = vmul.f32 %v4083, 0.7978846
      %v4124 = vmul.f32 %v4084, 0.7978846
      %v4125 = vmul.f32 %v4085, 0.7978846
      %v4126 = vmul.f32 %v4086, 0.7978846
      %v4127 = vmul.f32 %v4087, 0.7978846
      %v4128 = vmul.f32 %v4088, 0.7978846
      %v4129 = vmul.f32 %v4089, 0.7978846
      %v4130 = vmul.f32 %v4090, 0.7978846
      %v4131 = vmul.f32 %v4091, 0.7978846
      %v4132 = vmul.f32 %v4092, 0.7978846
      %v4133 = vmul.f32 %v4093, 0.7978846
      %v4134 = vmul.f32 %v4094, 0.7978846
      %v4135 = vmul.f32 %v4095, 0.7978846
      %v4136 = vmul.f32 %v4096, 0.7978846
      %v4137 = vmul.f32 %v4097, 0.7978846
      %v4138 = vmul.f32 %v4098, 0.7978846
      %v4139 = vmul.f32 %v4099, 0.7978846
      %v4140 = vmul.f32 %v4100, 0.7978846
      %v4141 = vmul.f32 %v4101, 0.7978846
      %v4142 = vtanh.pop %v4102
      %v4143 = vtanh.pop %v4103
      %v4144 = vtanh.pop %v4104
      %v4145 = vtanh.pop %v4105
      %v4146 = vtanh.pop %v4106
      %v4147 = vtanh.pop %v4107
      %v4148 = vtanh.pop %v4108
      %v4149 = vtanh.pop %v4109
      %v4150 = vtanh.pop %v4110
      %v4151 = vtanh.pop %v4111
      %v4152 = vtanh.pop %v4112
      %v4153 = vtanh.pop %v4113
      %v4154 = vtanh.pop %v4114
      %v4155 = vtanh.pop %v4115
      %v4156 = vtanh.pop %v4116
      %v4157 = vtanh.pop %v4117
      %v4158 = vtanh.pop %v4118
      %v4159 = vtanh.pop %v4119
      %v4160 = vtanh.pop %v4120
      %v4161 = vtanh.pop %v4121
      %v4162 = vtanh.pop %v4122
      %v4163 = vtanh.pop %v4123
      %v4164 = vtanh.pop %v4124
      %v4165 = vtanh.pop %v4125
      %v4166 = vtanh.pop %v4126
      %v4167 = vtanh.pop %v4127
      %v4168 = vtanh.pop %v4128
      %v4169 = vtanh.pop %v4129
      %v4170 = vtanh.pop %v4130
      %v4171 = vtanh.pop %v4131
      %v4172 = vtanh.pop %v4132
      %v4173 = vtanh.pop %v4133
      %v4174 = vtanh.pop %v4134
      %v4175 = vtanh.pop %v4135
      %v4176 = vtanh.pop %v4136
      %v4177 = vtanh.pop %v4137
      %v4178 = vtanh.pop %v4138
      %v4179 = vtanh.pop %v4139
      %v4180 = vtanh.pop %v4140
      %v4181 = vtanh.pop %v4141
      %v4182 = vadd.f32 %v4142, 1.0
      %v4183 = vadd.f32 %v4143, 1.0
      %v4184 = vadd.f32 %v4144, 1.0
      %v4185 = vadd.f32 %v4145, 1.0
      %v4186 = vadd.f32 %v4146, 1.0
      %v4187 = vadd.f32 %v4147, 1.0
      %v4188 = vadd.f32 %v4148, 1.0
      %v4189 = vadd.f32 %v4149, 1.0
      %v4190 = vadd.f32 %v4150, 1.0
      %v4191 = vadd.f32 %v4151, 1.0
      %v4192 = vadd.f32 %v4152, 1.0
      %v4193 = vadd.f32 %v4153, 1.0
      %v4194 = vadd.f32 %v4154, 1.0
      %v4195 = vadd.f32 %v4155, 1.0
      %v4196 = vadd.f32 %v4156, 1.0
      %v4197 = vadd.f32 %v4157, 1.0
      %v4198 = vadd.f32 %v4158, 1.0
      %v4199 = vadd.f32 %v4159, 1.0
      %v4200 = vadd.f32 %v4160, 1.0
      %v4201 = vadd.f32 %v4161, 1.0
      %v4202 = vadd.f32 %v4162, 1.0
      %v4203 = vadd.f32 %v4163, 1.0
      %v4204 = vadd.f32 %v4164, 1.0
      %v4205 = vadd.f32 %v4165, 1.0
      %v4206 = vadd.f32 %v4166, 1.0
      %v4207 = vadd.f32 %v4167, 1.0
      %v4208 = vadd.f32 %v4168, 1.0
      %v4209 = vadd.f32 %v4169, 1.0
      %v4210 = vadd.f32 %v4170, 1.0
      %v4211 = vadd.f32 %v4171, 1.0
      %v4212 = vadd.f32 %v4172, 1.0
      %v4213 = vadd.f32 %v4173, 1.0
      %v4214 = vadd.f32 %v4174, 1.0
      %v4215 = vadd.f32 %v4175, 1.0
      %v4216 = vadd.f32 %v4176, 1.0
      %v4217 = vadd.f32 %v4177, 1.0
      %v4218 = vadd.f32 %v4178, 1.0
      %v4219 = vadd.f32 %v4179, 1.0
      %v4220 = vadd.f32 %v4180, 1.0
      %v4221 = vadd.f32 %v4181, 1.0
      %v4222 = vmul.f32 %v3902, %v4182
      %v4223 = vmul.f32 %v3903, %v4183
      %v4224 = vmul.f32 %v3904, %v4184
      %v4225 = vmul.f32 %v3905, %v4185
      %v4226 = vmul.f32 %v3906, %v4186
      %v4227 = vmul.f32 %v3907, %v4187
      %v4228 = vmul.f32 %v3908, %v4188
      %v4229 = vmul.f32 %v3909, %v4189
      %v4230 = vmul.f32 %v3910, %v4190
      %v4231 = vmul.f32 %v3911, %v4191
      %v4232 = vmul.f32 %v3912, %v4192
      %v4233 = vmul.f32 %v3913, %v4193
      %v4234 = vmul.f32 %v3914, %v4194
      %v4235 = vmul.f32 %v3915, %v4195
      %v4236 = vmul.f32 %v3916, %v4196
      %v4237 = vmul.f32 %v3917, %v4197
      %v4238 = vmul.f32 %v3918, %v4198
      %v4239 = vmul.f32 %v3919, %v4199
      %v4240 = vmul.f32 %v3920, %v4200
      %v4241 = vmul.f32 %v3921, %v4201
      %v4242 = vmul.f32 %v3922, %v4202
      %v4243 = vmul.f32 %v3923, %v4203
      %v4244 = vmul.f32 %v3924, %v4204
      %v4245 = vmul.f32 %v3925, %v4205
      %v4246 = vmul.f32 %v3926, %v4206
      %v4247 = vmul.f32 %v3927, %v4207
      %v4248 = vmul.f32 %v3928, %v4208
      %v4249 = vmul.f32 %v3929, %v4209
      %v4250 = vmul.f32 %v3930, %v4210
      %v4251 = vmul.f32 %v3931, %v4211
      %v4252 = vmul.f32 %v3932, %v4212
      %v4253 = vmul.f32 %v3933, %v4213
      %v4254 = vmul.f32 %v3934, %v4214
      %v4255 = vmul.f32 %v3935, %v4215
      %v4256 = vmul.f32 %v3936, %v4216
      %v4257 = vmul.f32 %v3937, %v4217
      %v4258 = vmul.f32 %v3938, %v4218
      %v4259 = vmul.f32 %v3939, %v4219
      %v4260 = vmul.f32 %v3940, %v4220
      %v4261 = vmul.f32 %v3941, %v4221
      %4262 = vst.msk [vmem:[#allocation3] sm:$0xff] %vm1207, %v4222
      %4263 = vst.msk [vmem:[#allocation3 + $0x8] sm:$0xff] %vm1207, %v4223
      %4264 = vst.msk [vmem:[#allocation3 + $0x10] sm:$0xff] %vm1207, %v4224
      %4265 = vst.msk [vmem:[#allocation3 + $0x18] sm:$0xff] %vm1207, %v4225
      %4266 = vst.msk [vmem:[#allocation3 + $0x20] sm:$0xff] %vm1207, %v4226
      %4267 = vst.msk [vmem:[#allocation3 + $0x28] sm:$0xff] %vm1207, %v4227
      %4268 = vst.msk [vmem:[#allocation3 + $0x30] sm:$0xff] %vm1207, %v4228
      %4269 = vst.msk [vmem:[#allocation3 + $0x38] sm:$0xff] %vm1207, %v4229
      %4270 = vst.msk [vmem:[#allocation3 + $0x40] sm:$0xff] %vm1207, %v4230
      %4271 = vst.msk [vmem:[#allocation3 + $0x48] sm:$0xff] %vm1207, %v4231
      %4272 = vst.msk [vmem:[#allocation3 + $0x50] sm:$0xff] %vm1207, %v4232
      %4273 = vst.msk [vmem:[#allocation3 + $0x58] sm:$0xff] %vm1207, %v4233
      %4274 = vst.msk [vmem:[#allocation3 + $0x60] sm:$0xff] %vm1207, %v4234
      %4275 = vst.msk [vmem:[#allocation3 + $0x68] sm:$0xff] %vm1207, %v4235
      %4276 = vst.msk [vmem:[#allocation3 + $0x70] sm:$0xff] %vm1207, %v4236
      %4277 = vst.msk [vmem:[#allocation3 + $0x78] sm:$0xff] %vm1207, %v4237
      %4278 = vst.msk [vmem:[#allocation3 + $0x80] sm:$0xff] %vm1207, %v4238
      %4279 = vst.msk [vmem:[#allocation3 + $0x88] sm:$0xff] %vm1207, %v4239
      %4280 = vst.msk [vmem:[#allocation3 + $0x90] sm:$0xff] %vm1207, %v4240
      %4281 = vst.msk [vmem:[#allocation3 + $0x98] sm:$0xff] %vm1207, %v4241
      %4282 = vst.msk [vmem:[#allocation3 + $0xa0] sm:$0xff] %vm1207, %v4242
      %4283 = vst.msk [vmem:[#allocation3 + $0xa8] sm:$0xff] %vm1207, %v4243
      %4284 = vst.msk [vmem:[#allocation3 + $0xb0] sm:$0xff] %vm1207, %v4244
      %4285 = vst.msk [vmem:[#allocation3 + $0xb8] sm:$0xff] %vm1207, %v4245
      %4286 = vst.msk [vmem:[#allocation3 + $0xc0] sm:$0xff] %vm1207, %v4246
      %4287 = vst.msk [vmem:[#allocation3 + $0xc8] sm:$0xff] %vm1207, %v4247
      %4288 = vst.msk [vmem:[#allocation3 + $0xd0] sm:$0xff] %vm1207, %v4248
      %4289 = vst.msk [vmem:[#allocation3 + $0xd8] sm:$0xff] %vm1207, %v4249
      %4290 = vst.msk [vmem:[#allocation3 + $0xe0] sm:$0xff] %vm1207, %v4250
      %4291 = vst.msk [vmem:[#allocation3 + $0xe8] sm:$0xff] %vm1207, %v4251
      %4292 = vst.msk [vmem:[#allocation3 + $0xf0] sm:$0xff] %vm1207, %v4252
      %4293 = vst.msk [vmem:[#allocation3 + $0xf8] sm:$0xff] %vm1207, %v4253
      %4294 = vst.msk [vmem:[#allocation3 + $0x100] sm:$0xff] %vm1207, %v4254
      %4295 = vst.msk [vmem:[#allocation3 + $0x108] sm:$0xff] %vm1207, %v4255
      %4296 = vst.msk [vmem:[#allocation3 + $0x110] sm:$0xff] %vm1207, %v4256
      %4297 = vst.msk [vmem:[#allocation3 + $0x118] sm:$0xff] %vm1207, %v4257
      %4298 = vst.msk [vmem:[#allocation3 + $0x120] sm:$0xff] %vm1207, %v4258
      %4299 = vst.msk [vmem:[#allocation3 + $0x128] sm:$0xff] %vm1207, %v4259
      %4300 = vst.msk [vmem:[#allocation3 + $0x130] sm:$0xff] %vm1207, %v4260
      %4301 = vst.msk [vmem:[#allocation3 + $0x138] sm:$0x7f] %vm1365, %v4261
      %v4302 = vld [vmem:[#allocation3] ss:$2 sm:$0xff]
      %s4303 = scalar_lea.vmem [#allocation3], 16
      %v4304 = vld [vmem:[%s4303] ss:$2 sm:$0xff]
      %s4305 = scalar_lea.vmem [#allocation3], 32
      %v4306 = vld [vmem:[%s4305] ss:$2 sm:$0xff]
      %s4307 = scalar_lea.vmem [#allocation3], 48
      %v4308 = vld [vmem:[%s4307] ss:$2 sm:$0xff]
      %s4309 = scalar_lea.vmem [#allocation3], 64
      %v4310 = vld [vmem:[%s4309] ss:$2 sm:$0xff]
      %s4311 = scalar_lea.vmem [#allocation3], 80
      %v4312 = vld [vmem:[%s4311] ss:$2 sm:$0xff]
      %s4313 = scalar_lea.vmem [#allocation3], 96
      %v4314 = vld [vmem:[%s4313] ss:$2 sm:$0xff]
      %s4315 = scalar_lea.vmem [#allocation3], 112
      %v4316 = vld [vmem:[%s4315] ss:$2 sm:$0xff]
      %s4317 = scalar_lea.vmem [#allocation3], 128
      %v4318 = vld [vmem:[%s4317] ss:$2 sm:$0xff]
      %s4319 = scalar_lea.vmem [#allocation3], 144
      %v4320 = vld [vmem:[%s4319] ss:$2 sm:$0xff]
      %s4321 = scalar_lea.vmem [#allocation3], 160
      %v4322 = vld [vmem:[%s4321] ss:$2 sm:$0xff]
      %s4323 = scalar_lea.vmem [#allocation3], 176
      %v4324 = vld [vmem:[%s4323] ss:$2 sm:$0xff]
      %s4325 = scalar_lea.vmem [#allocation3], 192
      %v4326 = vld [vmem:[%s4325] ss:$2 sm:$0xff]
      %s4327 = scalar_lea.vmem [#allocation3], 208
      %v4328 = vld [vmem:[%s4327] ss:$2 sm:$0xff]
      %s4329 = scalar_lea.vmem [#allocation3], 224
      %v4330 = vld [vmem:[%s4329] ss:$2 sm:$0xff]
      %s4331 = scalar_lea.vmem [#allocation3], 240
      %v4332 = vld [vmem:[%s4331] ss:$2 sm:$0xff]
      %s4333 = scalar_lea.vmem [#allocation3], 256
      %v4334 = vld [vmem:[%s4333] ss:$2 sm:$0xff]
      %s4335 = scalar_lea.vmem [#allocation3], 272
      %v4336 = vld [vmem:[%s4335] ss:$2 sm:$0xff]
      %s4337 = scalar_lea.vmem [#allocation3], 288
      %v4338 = vld [vmem:[%s4337] ss:$2 sm:$0xff]
      %s4339 = scalar_lea.vmem [#allocation3], 304
      %v4340 = vld [vmem:[%s4339] ss:$2 sm:$0x7f]
      %v4341 = vpack.c.bf16 %v4304, %v4302
      %v4342 = vpack.c.bf16 %v4308, %v4306
      %v4343 = vpack.c.bf16 %v4312, %v4310
      %v4344 = vpack.c.bf16 %v4316, %v4314
      %v4345 = vpack.c.bf16 %v4320, %v4318
      %v4346 = vpack.c.bf16 %v4324, %v4322
      %v4347 = vpack.c.bf16 %v4328, %v4326
      %v4348 = vpack.c.bf16 %v4332, %v4330
      %v4349 = vpack.c.bf16 %v4336, %v4334
      %v4350 = vpack.c.bf16 %v4340, %v4338
      %s4351 = scalar_lea.vmem %s2, 48
      %v4352 = vld [vmem:[%s4351] sm:$0xf]
      %v4353 = vld [vmem:[%s4351 + $0x4] sm:$0xf]
      %v4354 = vld [vmem:[%s4351 + $0x8] sm:$0xf]
      %v4355 = vld [vmem:[%s4351 + $0xc] sm:$0xf]
      %s4356 = scalar_lea.vmem [#allocation3], 1
      %v4357 = vld [vmem:[%s4356] ss:$2 sm:$0xff]
      %s4358 = scalar_lea.vmem [#allocation3], 17
      %v4359 = vld [vmem:[%s4358] ss:$2 sm:$0xff]
      %s4360 = scalar_lea.vmem [#allocation3], 33
      %v4361 = vld [vmem:[%s4360] ss:$2 sm:$0xff]
      %s4362 = scalar_lea.vmem [#allocation3], 49
      %v4363 = vld [vmem:[%s4362] ss:$2 sm:$0xff]
      %s4364 = scalar_lea.vmem [#allocation3], 65
      %v4365 = vld [vmem:[%s4364] ss:$2 sm:$0xff]
      %s4366 = scalar_lea.vmem [#allocation3], 81
      %v4367 = vld [vmem:[%s4366] ss:$2 sm:$0xff]
      %s4368 = scalar_lea.vmem [#allocation3], 97
      %v4369 = vld [vmem:[%s4368] ss:$2 sm:$0xff]
      %s4370 = scalar_lea.vmem [#allocation3], 113
      %v4371 = vld [vmem:[%s4370] ss:$2 sm:$0xff]
      %s4372 = scalar_lea.vmem [#allocation3], 129
      %v4373 = vld [vmem:[%s4372] ss:$2 sm:$0xff]
      %s4374 = scalar_lea.vmem [#allocation3], 145
      %v4375 = vld [vmem:[%s4374] ss:$2 sm:$0xff]
      %s4376 = scalar_lea.vmem [#allocation3], 161
      %v4377 = vld [vmem:[%s4376] ss:$2 sm:$0xff]
      %s4378 = scalar_lea.vmem [#allocation3], 177
      %v4379 = vld [vmem:[%s4378] ss:$2 sm:$0xff]
      %s4380 = scalar_lea.vmem [#allocation3], 193
      %v4381 = vld [vmem:[%s4380] ss:$2 sm:$0xff]
      %s4382 = scalar_lea.vmem [#allocation3], 209
      %v4383 = vld [vmem:[%s4382] ss:$2 sm:$0xff]
      %s4384 = scalar_lea.vmem [#allocation3], 225
      %v4385 = vld [vmem:[%s4384] ss:$2 sm:$0xff]
      %s4386 = scalar_lea.vmem [#allocation3], 241
      %v4387 = vld [vmem:[%s4386] ss:$2 sm:$0xff]
      %s4388 = scalar_lea.vmem [#allocation3], 257
      %v4389 = vld [vmem:[%s4388] ss:$2 sm:$0xff]
      %s4390 = scalar_lea.vmem [#allocation3], 273
      %v4391 = vld [vmem:[%s4390] ss:$2 sm:$0xff]
      %s4392 = scalar_lea.vmem [#allocation3], 289
      %v4393 = vld [vmem:[%s4392] ss:$2 sm:$0xff]
      %s4394 = scalar_lea.vmem [#allocation3], 305
      %v4395 = vld [vmem:[%s4394] ss:$2 sm:$0x7f]
      %v4396 = vpack.c.bf16 %v4359, %v4357
      %v4397 = vpack.c.bf16 %v4363, %v4361
      %v4398 = vpack.c.bf16 %v4367, %v4365
      %v4399 = vpack.c.bf16 %v4371, %v4369
      %v4400 = vpack.c.bf16 %v4375, %v4373
      %v4401 = vpack.c.bf16 %v4379, %v4377
      %v4402 = vpack.c.bf16 %v4383, %v4381
      %v4403 = vpack.c.bf16 %v4387, %v4385
      %v4404 = vpack.c.bf16 %v4391, %v4389
      %v4405 = vpack.c.bf16 %v4395, %v4393
      %s4406 = scalar_lea.vmem %s2, 64
      %v4407 = vld [vmem:[%s4406] sm:$0xf]
      %v4408 = vld [vmem:[%s4406 + $0x4] sm:$0xf]
      %v4409 = vld [vmem:[%s4406 + $0x8] sm:$0xf]
      %v4410 = vld [vmem:[%s4406 + $0xc] sm:$0xf]
      %v4415 = vunpack.c.l.b16 %v4407
      %v4416 = vunpack.c.l.b16 %v4408
      %v4417 = vunpack.c.l.b16 %v4409
      %v4418 = vunpack.c.l.b16 %v4410
      %v4419 = vpack.c.b16 %v4416, %v4415
      %v4420 = vpack.c.b16 %v4418, %v4417
      %v4424 = vsel %vm1207, %v4396, 0
      %v4427 = vsel %vm1207, %v4397, 0
      %v4430 = vsel %vm1207, %v4398, 0
      %v4433 = vsel %vm1207, %v4399, 0
      %v4436 = vsel %vm1207, %v4400, 0
      %v4439 = vsel %vm1207, %v4401, 0
      %v4442 = vsel %vm1207, %v4402, 0
      %v4445 = vsel %vm1207, %v4403, 0
      %v4448 = vsel %vm1207, %v4404, 0
      %v4451 = vsel %vm1207, %v4405, 0
      %4453 = vmatprep.subr.bf16.mxu0 0
      %4454 = vmatpush1.bf16.msra.mxu0 0
      %4455 = vmatprep.subr.bf16.mxu0 0
      %4456 = vmatpush1.bf16.msra.mxu0 0
      %4457 = vmatprep.subr.bf16.mxu0 0
      %4458 = vmatpush1.bf16.msra.mxu0 0
      %4459 = vmatprep.subr.bf16.mxu0 0
      %4460 = vmatpush1.bf16.msra.mxu0 0
      %4461 = vmatprep.subr.bf16.mxu0 0
      %4462 = vmatpush1.bf16.msra.mxu0 0
      %4463 = vmatprep.subr.bf16.mxu0 0
      %4464 = vmatpush1.bf16.msra.mxu0 0
      %4465 = vmatprep.subr.bf16.mxu0 0
      %4466 = vmatpush1.bf16.msra.mxu0 %v4420
      %4467 = vmatprep.subr.bf16.mxu0 0
      %4468 = vmatpush1.bf16.msra.mxu0 %v4419
      %4469 = vmatprep.subr.bf16.mxu0 0
      %4470 = vmatpush2.bf16.msra.mxu0 0
      %4471 = vmatprep.subr.bf16.mxu0 0
      %4472 = vmatpush2.bf16.msra.mxu0 0
      %4473 = vmatprep.subr.bf16.mxu0 0
      %4474 = vmatpush2.bf16.msra.mxu0 0
      %4475 = vmatprep.subr.bf16.mxu0 0
      %4476 = vmatpush2.bf16.msra.mxu0 0
      %4477 = vmatprep.subr.bf16.mxu0 0
      %4478 = vmatpush2.bf16.msra.mxu0 0
      %4479 = vmatprep.subr.bf16.mxu0 0
      %4480 = vmatpush2.bf16.msra.mxu0 0
      %4481 = vmatprep.subr.bf16.mxu0 0
      %4482 = vmatpush2.bf16.msra.mxu0 0
      %4483 = vmatprep.subr.bf16.mxu0 0
      %4484 = vmatpush2.bf16.msra.mxu0 0
      %4485 = vmatprep.mubr.bf16.mxu0 0
      %4486 = vmatmul.mubr.bf16.gmra.mxu0 %v4424
      %v4487 = vpop.f32.mrf.mxu0
      %v4488 = vadd.f32 0.0, %v4487
      %v4489 = vpop.f32.mrf.mxu0
      %v4490 = vpop.f32.mrf.mxu0
      %v4491 = vadd.f32 0.0, %v4490
      %v4492 = vpop.f32.mrf.mxu0
      %4493 = vmatprep.mubr.bf16.mxu0 0
      %4494 = vmatmul.mubr.bf16.gmra.mxu0 %v4427
      %v4495 = vpop.f32.mrf.mxu0
      %v4496 = vadd.f32 0.0, %v4495
      %v4497 = vpop.f32.mrf.mxu0
      %v4498 = vpop.f32.mrf.mxu0
      %v4499 = vadd.f32 0.0, %v4498
      %v4500 = vpop.f32.mrf.mxu0
      %4501 = vmatprep.mubr.bf16.mxu0 0
      %4502 = vmatmul.mubr.bf16.gmra.mxu0 %v4430
      %v4503 = vpop.f32.mrf.mxu0
      %v4504 = vadd.f32 0.0, %v4503
      %v4505 = vpop.f32.mrf.mxu0
      %v4506 = vpop.f32.mrf.mxu0
      %v4507 = vadd.f32 0.0, %v4506
      %v4508 = vpop.f32.mrf.mxu0
      %4509 = vmatprep.mubr.bf16.mxu0 0
      %4510 = vmatmul.mubr.bf16.gmra.mxu0 %v4433
      %v4511 = vpop.f32.mrf.mxu0
      %v4512 = vadd.f32 0.0, %v4511
      %v4513 = vpop.f32.mrf.mxu0
      %v4514 = vpop.f32.mrf.mxu0
      %v4515 = vadd.f32 0.0, %v4514
      %v4516 = vpop.f32.mrf.mxu0
      %4517 = vmatprep.mubr.bf16.mxu0 0
      %4518 = vmatmul.mubr.bf16.gmra.mxu0 %v4436
      %v4519 = vpop.f32.mrf.mxu0
      %v4520 = vadd.f32 0.0, %v4519
      %v4521 = vpop.f32.mrf.mxu0
      %v4522 = vpop.f32.mrf.mxu0
      %v4523 = vadd.f32 0.0, %v4522
      %v4524 = vpop.f32.mrf.mxu0
      %4525 = vmatprep.mubr.bf16.mxu0 0
      %4526 = vmatmul.mubr.bf16.gmra.mxu0 %v4439
      %v4527 = vpop.f32.mrf.mxu0
      %v4528 = vadd.f32 0.0, %v4527
      %v4529 = vpop.f32.mrf.mxu0
      %v4530 = vpop.f32.mrf.mxu0
      %v4531 = vadd.f32 0.0, %v4530
      %v4532 = vpop.f32.mrf.mxu0
      %4533 = vmatprep.mubr.bf16.mxu0 0
      %4534 = vmatmul.mubr.bf16.gmra.mxu0 %v4442
      %v4535 = vpop.f32.mrf.mxu0
      %v4536 = vadd.f32 0.0, %v4535
      %v4537 = vpop.f32.mrf.mxu0
      %v4538 = vpop.f32.mrf.mxu0
      %v4539 = vadd.f32 0.0, %v4538
      %v4540 = vpop.f32.mrf.mxu0
      %4541 = vmatprep.mubr.bf16.mxu0 0
      %4542 = vmatmul.mubr.bf16.gmra.mxu0 %v4445
      %v4543 = vpop.f32.mrf.mxu0
      %v4544 = vadd.f32 0.0, %v4543
      %v4545 = vpop.f32.mrf.mxu0
      %v4546 = vpop.f32.mrf.mxu0
      %v4547 = vadd.f32 0.0, %v4546
      %v4548 = vpop.f32.mrf.mxu0
      %4549 = vmatprep.mubr.bf16.mxu0 0
      %4550 = vmatmul.mubr.bf16.gmra.mxu0 %v4448
      %v4551 = vpop.f32.mrf.mxu0
      %v4552 = vadd.f32 0.0, %v4551
      %v4553 = vpop.f32.mrf.mxu0
      %v4554 = vpop.f32.mrf.mxu0
      %v4555 = vadd.f32 0.0, %v4554
      %v4556 = vpop.f32.mrf.mxu0
      %4557 = vmatprep.mubr.bf16.mxu0 0
      %4558 = vmatmul.mubr.bf16.gmra.mxu0 %v4451
      %v4559 = vpop.f32.mrf.mxu0
      %v4560 = vadd.f32 0.0, %v4559
      %v4561 = vpop.f32.mrf.mxu0
      %v4562 = vpop.f32.mrf.mxu0
      %v4563 = vadd.f32 0.0, %v4562
      %v4564 = vpop.f32.mrf.mxu0
      %4565 = vdwg.mxu0
      %v4570 = vunpack.c.l.b16 %v4352
      %v4571 = vunpack.c.l.b16 %v4353
      %v4572 = vunpack.c.l.b16 %v4354
      %v4573 = vunpack.c.l.b16 %v4355
      %v4574 = vpack.c.b16 %v4571, %v4570
      %v4575 = vpack.c.b16 %v4573, %v4572
      %v4579 = vsel %vm1207, %v4341, 0
      %v4582 = vsel %vm1207, %v4342, 0
      %v4585 = vsel %vm1207, %v4343, 0
      %v4588 = vsel %vm1207, %v4344, 0
      %v4591 = vsel %vm1207, %v4345, 0
      %v4594 = vsel %vm1207, %v4346, 0
      %v4597 = vsel %vm1207, %v4347, 0
      %v4600 = vsel %vm1207, %v4348, 0
      %v4603 = vsel %vm1207, %v4349, 0
      %v4606 = vsel %vm1207, %v4350, 0
      %4608 = vmatprep.subr.bf16.mxu0 0
      %4609 = vmatpush1.bf16.msra.mxu0 0
      %4610 = vmatprep.subr.bf16.mxu0 0
      %4611 = vmatpush1.bf16.msra.mxu0 0
      %4612 = vmatprep.subr.bf16.mxu0 0
      %4613 = vmatpush1.bf16.msra.mxu0 0
      %4614 = vmatprep.subr.bf16.mxu0 0
      %4615 = vmatpush1.bf16.msra.mxu0 0
      %4616 = vmatprep.subr.bf16.mxu0 0
      %4617 = vmatpush1.bf16.msra.mxu0 0
      %4618 = vmatprep.subr.bf16.mxu0 0
      %4619 = vmatpush1.bf16.msra.mxu0 0
      %4620 = vmatprep.subr.bf16.mxu0 0
      %4621 = vmatpush1.bf16.msra.mxu0 %v4575
      %4622 = vmatprep.subr.bf16.mxu0 0
      %4623 = vmatpush1.bf16.msra.mxu0 %v4574
      %4624 = vmatprep.subr.bf16.mxu0 0
      %4625 = vmatpush2.bf16.msra.mxu0 0
      %4626 = vmatprep.subr.bf16.mxu0 0
      %4627 = vmatpush2.bf16.msra.mxu0 0
      %4628 = vmatprep.subr.bf16.mxu0 0
      %4629 = vmatpush2.bf16.msra.mxu0 0
      %4630 = vmatprep.subr.bf16.mxu0 0
      %4631 = vmatpush2.bf16.msra.mxu0 0
      %4632 = vmatprep.subr.bf16.mxu0 0
      %4633 = vmatpush2.bf16.msra.mxu0 0
      %4634 = vmatprep.subr.bf16.mxu0 0
      %4635 = vmatpush2.bf16.msra.mxu0 0
      %4636 = vmatprep.subr.bf16.mxu0 0
      %4637 = vmatpush2.bf16.msra.mxu0 0
      %4638 = vmatprep.subr.bf16.mxu0 0
      %4639 = vmatpush2.bf16.msra.mxu0 0
      %4640 = vmatprep.mubr.bf16.mxu0 0
      %4641 = vmatmul.mubr.bf16.gmra.mxu0 %v4579
      %v4642 = vpop.f32.mrf.mxu0
      %v4643 = vadd.f32 %v4488, %v4642
      %v4644 = vpop.f32.mrf.mxu0
      %v4645 = vpop.f32.mrf.mxu0
      %v4646 = vadd.f32 %v4491, %v4645
      %v4647 = vpop.f32.mrf.mxu0
      %4648 = vmatprep.mubr.bf16.mxu0 0
      %4649 = vmatmul.mubr.bf16.gmra.mxu0 %v4582
      %v4650 = vpop.f32.mrf.mxu0
      %v4651 = vadd.f32 %v4496, %v4650
      %v4652 = vpop.f32.mrf.mxu0
      %v4653 = vpop.f32.mrf.mxu0
      %v4654 = vadd.f32 %v4499, %v4653
      %v4655 = vpop.f32.mrf.mxu0
      %4656 = vmatprep.mubr.bf16.mxu0 0
      %4657 = vmatmul.mubr.bf16.gmra.mxu0 %v4585
      %v4658 = vpop.f32.mrf.mxu0
      %v4659 = vadd.f32 %v4504, %v4658
      %v4660 = vpop.f32.mrf.mxu0
      %v4661 = vpop.f32.mrf.mxu0
      %v4662 = vadd.f32 %v4507, %v4661
      %v4663 = vpop.f32.mrf.mxu0
      %4664 = vmatprep.mubr.bf16.mxu0 0
      %4665 = vmatmul.mubr.bf16.gmra.mxu0 %v4588
      %v4666 = vpop.f32.mrf.mxu0
      %v4667 = vadd.f32 %v4512, %v4666
      %v4668 = vpop.f32.mrf.mxu0
      %v4669 = vpop.f32.mrf.mxu0
      %v4670 = vadd.f32 %v4515, %v4669
      %v4671 = vpop.f32.mrf.mxu0
      %4672 = vmatprep.mubr.bf16.mxu0 0
      %4673 = vmatmul.mubr.bf16.gmra.mxu0 %v4591
      %v4674 = vpop.f32.mrf.mxu0
      %v4675 = vadd.f32 %v4520, %v4674
      %v4676 = vpop.f32.mrf.mxu0
      %v4677 = vpop.f32.mrf.mxu0
      %v4678 = vadd.f32 %v4523, %v4677
      %v4679 = vpop.f32.mrf.mxu0
      %4680 = vmatprep.mubr.bf16.mxu0 0
      %4681 = vmatmul.mubr.bf16.gmra.mxu0 %v4594
      %v4682 = vpop.f32.mrf.mxu0
      %v4683 = vadd.f32 %v4528, %v4682
      %v4684 = vpop.f32.mrf.mxu0
      %v4685 = vpop.f32.mrf.mxu0
      %v4686 = vadd.f32 %v4531, %v4685
      %v4687 = vpop.f32.mrf.mxu0
      %4688 = vmatprep.mubr.bf16.mxu0 0
      %4689 = vmatmul.mubr.bf16.gmra.mxu0 %v4597
      %v4690 = vpop.f32.mrf.mxu0
      %v4691 = vadd.f32 %v4536, %v4690
      %v4692 = vpop.f32.mrf.mxu0
      %v4693 = vpop.f32.mrf.mxu0
      %v4694 = vadd.f32 %v4539, %v4693
      %v4695 = vpop.f32.mrf.mxu0
      %4696 = vmatprep.mubr.bf16.mxu0 0
      %4697 = vmatmul.mubr.bf16.gmra.mxu0 %v4600
      %v4698 = vpop.f32.mrf.mxu0
      %v4699 = vadd.f32 %v4544, %v4698
      %v4700 = vpop.f32.mrf.mxu0
      %v4701 = vpop.f32.mrf.mxu0
      %v4702 = vadd.f32 %v4547, %v4701
      %v4703 = vpop.f32.mrf.mxu0
      %4704 = vmatprep.mubr.bf16.mxu0 0
      %4705 = vmatmul.mubr.bf16.gmra.mxu0 %v4603
      %v4706 = vpop.f32.mrf.mxu0
      %v4707 = vadd.f32 %v4552, %v4706
      %v4708 = vpop.f32.mrf.mxu0
      %v4709 = vpop.f32.mrf.mxu0
      %v4710 = vadd.f32 %v4555, %v4709
      %v4711 = vpop.f32.mrf.mxu0
      %4712 = vmatprep.mubr.bf16.mxu0 0
      %4713 = vmatmul.mubr.bf16.gmra.mxu0 %v4606
      %v4714 = vpop.f32.mrf.mxu0
      %v4715 = vadd.f32 %v4560, %v4714
      %v4716 = vpop.f32.mrf.mxu0
      %v4717 = vpop.f32.mrf.mxu0
      %v4718 = vadd.f32 %v4563, %v4717
      %v4719 = vpop.f32.mrf.mxu0
      %4720 = vdwg.mxu0
      %s4721 = scalar_lea.vmem [#allocation3], 2
      %v4722 = vld [vmem:[%s4721] ss:$2 sm:$0xff]
      %s4723 = scalar_lea.vmem [#allocation3], 18
      %v4724 = vld [vmem:[%s4723] ss:$2 sm:$0xff]
      %s4725 = scalar_lea.vmem [#allocation3], 34
      %v4726 = vld [vmem:[%s4725] ss:$2 sm:$0xff]
      %s4727 = scalar_lea.vmem [#allocation3], 50
      %v4728 = vld [vmem:[%s4727] ss:$2 sm:$0xff]
      %s4729 = scalar_lea.vmem [#allocation3], 66
      %v4730 = vld [vmem:[%s4729] ss:$2 sm:$0xff]
      %s4731 = scalar_lea.vmem [#allocation3], 82
      %v4732 = vld [vmem:[%s4731] ss:$2 sm:$0xff]
      %s4733 = scalar_lea.vmem [#allocation3], 98
      %v4734 = vld [vmem:[%s4733] ss:$2 sm:$0xff]
      %s4735 = scalar_lea.vmem [#allocation3], 114
      %v4736 = vld [vmem:[%s4735] ss:$2 sm:$0xff]
      %s4737 = scalar_lea.vmem [#allocation3], 130
      %v4738 = vld [vmem:[%s4737] ss:$2 sm:$0xff]
      %s4739 = scalar_lea.vmem [#allocation3], 146
      %v4740 = vld [vmem:[%s4739] ss:$2 sm:$0xff]
      %s4741 = scalar_lea.vmem [#allocation3], 162
      %v4742 = vld [vmem:[%s4741] ss:$2 sm:$0xff]
      %s4743 = scalar_lea.vmem [#allocation3], 178
      %v4744 = vld [vmem:[%s4743] ss:$2 sm:$0xff]
      %s4745 = scalar_lea.vmem [#allocation3], 194
      %v4746 = vld [vmem:[%s4745] ss:$2 sm:$0xff]
      %s4747 = scalar_lea.vmem [#allocation3], 210
      %v4748 = vld [vmem:[%s4747] ss:$2 sm:$0xff]
      %s4749 = scalar_lea.vmem [#allocation3], 226
      %v4750 = vld [vmem:[%s4749] ss:$2 sm:$0xff]
      %s4751 = scalar_lea.vmem [#allocation3], 242
      %v4752 = vld [vmem:[%s4751] ss:$2 sm:$0xff]
      %s4753 = scalar_lea.vmem [#allocation3], 258
      %v4754 = vld [vmem:[%s4753] ss:$2 sm:$0xff]
      %s4755 = scalar_lea.vmem [#allocation3], 274
      %v4756 = vld [vmem:[%s4755] ss:$2 sm:$0xff]
      %s4757 = scalar_lea.vmem [#allocation3], 290
      %v4758 = vld [vmem:[%s4757] ss:$2 sm:$0xff]
      %s4759 = scalar_lea.vmem [#allocation3], 306
      %v4760 = vld [vmem:[%s4759] ss:$2 sm:$0x7f]
      %v4761 = vpack.c.bf16 %v4724, %v4722
      %v4762 = vpack.c.bf16 %v4728, %v4726
      %v4763 = vpack.c.bf16 %v4732, %v4730
      %v4764 = vpack.c.bf16 %v4736, %v4734
      %v4765 = vpack.c.bf16 %v4740, %v4738
      %v4766 = vpack.c.bf16 %v4744, %v4742
      %v4767 = vpack.c.bf16 %v4748, %v4746
      %v4768 = vpack.c.bf16 %v4752, %v4750
      %v4769 = vpack.c.bf16 %v4756, %v4754
      %v4770 = vpack.c.bf16 %v4760, %v4758
      %s4771 = scalar_lea.vmem %s2, 80
      %v4772 = vld [vmem:[%s4771] sm:$0xf]
      %v4773 = vld [vmem:[%s4771 + $0x4] sm:$0xf]
      %v4774 = vld [vmem:[%s4771 + $0x8] sm:$0xf]
      %v4775 = vld [vmem:[%s4771 + $0xc] sm:$0xf]
      %v4780 = vunpack.c.l.b16 %v4772
      %v4781 = vunpack.c.l.b16 %v4773
      %v4782 = vunpack.c.l.b16 %v4774
      %v4783 = vunpack.c.l.b16 %v4775
      %v4784 = vpack.c.b16 %v4781, %v4780
      %v4785 = vpack.c.b16 %v4783, %v4782
      %v4789 = vsel %vm1207, %v4761, 0
      %v4792 = vsel %vm1207, %v4762, 0
      %v4795 = vsel %vm1207, %v4763, 0
      %v4798 = vsel %vm1207, %v4764, 0
      %v4801 = vsel %vm1207, %v4765, 0
      %v4804 = vsel %vm1207, %v4766, 0
      %v4807 = vsel %vm1207, %v4767, 0
      %v4810 = vsel %vm1207, %v4768, 0
      %v4813 = vsel %vm1207, %v4769, 0
      %v4816 = vsel %vm1207, %v4770, 0
      %4818 = vmatprep.subr.bf16.mxu0 0
      %4819 = vmatpush1.bf16.msra.mxu0 0
      %4820 = vmatprep.subr.bf16.mxu0 0
      %4821 = vmatpush1.bf16.msra.mxu0 0
      %4822 = vmatprep.subr.bf16.mxu0 0
      %4823 = vmatpush1.bf16.msra.mxu0 0
      %4824 = vmatprep.subr.bf16.mxu0 0
      %4825 = vmatpush1.bf16.msra.mxu0 0
      %4826 = vmatprep.subr.bf16.mxu0 0
      %4827 = vmatpush1.bf16.msra.mxu0 0
      %4828 = vmatprep.subr.bf16.mxu0 0
      %4829 = vmatpush1.bf16.msra.mxu0 0
      %4830 = vmatprep.subr.bf16.mxu0 0
      %4831 = vmatpush1.bf16.msra.mxu0 %v4785
      %4832 = vmatprep.subr.bf16.mxu0 0
      %4833 = vmatpush1.bf16.msra.mxu0 %v4784
      %4834 = vmatprep.subr.bf16.mxu0 0
      %4835 = vmatpush2.bf16.msra.mxu0 0
      %4836 = vmatprep.subr.bf16.mxu0 0
      %4837 = vmatpush2.bf16.msra.mxu0 0
      %4838 = vmatprep.subr.bf16.mxu0 0
      %4839 = vmatpush2.bf16.msra.mxu0 0
      %4840 = vmatprep.subr.bf16.mxu0 0
      %4841 = vmatpush2.bf16.msra.mxu0 0
      %4842 = vmatprep.subr.bf16.mxu0 0
      %4843 = vmatpush2.bf16.msra.mxu0 0
      %4844 = vmatprep.subr.bf16.mxu0 0
      %4845 = vmatpush2.bf16.msra.mxu0 0
      %4846 = vmatprep.subr.bf16.mxu0 0
      %4847 = vmatpush2.bf16.msra.mxu0 0
      %4848 = vmatprep.subr.bf16.mxu0 0
      %4849 = vmatpush2.bf16.msra.mxu0 0
      %4850 = vmatprep.mubr.bf16.mxu0 0
      %4851 = vmatmul.mubr.bf16.gmra.mxu0 %v4789
      %v4852 = vpop.f32.mrf.mxu0
      %v4853 = vadd.f32 0.0, %v4852
      %v4854 = vpop.f32.mrf.mxu0
      %v4855 = vpop.f32.mrf.mxu0
      %v4856 = vadd.f32 0.0, %v4855
      %v4857 = vpop.f32.mrf.mxu0
      %4858 = vmatprep.mubr.bf16.mxu0 0
      %4859 = vmatmul.mubr.bf16.gmra.mxu0 %v4792
      %v4860 = vpop.f32.mrf.mxu0
      %v4861 = vadd.f32 0.0, %v4860
      %v4862 = vpop.f32.mrf.mxu0
      %v4863 = vpop.f32.mrf.mxu0
      %v4864 = vadd.f32 0.0, %v4863
      %v4865 = vpop.f32.mrf.mxu0
      %4866 = vmatprep.mubr.bf16.mxu0 0
      %4867 = vmatmul.mubr.bf16.gmra.mxu0 %v4795
      %v4868 = vpop.f32.mrf.mxu0
      %v4869 = vadd.f32 0.0, %v4868
      %v4870 = vpop.f32.mrf.mxu0
      %v4871 = vpop.f32.mrf.mxu0
      %v4872 = vadd.f32 0.0, %v4871
      %v4873 = vpop.f32.mrf.mxu0
      %4874 = vmatprep.mubr.bf16.mxu0 0
      %4875 = vmatmul.mubr.bf16.gmra.mxu0 %v4798
      %v4876 = vpop.f32.mrf.mxu0
      %v4877 = vadd.f32 0.0, %v4876
      %v4878 = vpop.f32.mrf.mxu0
      %v4879 = vpop.f32.mrf.mxu0
      %v4880 = vadd.f32 0.0, %v4879
      %v4881 = vpop.f32.mrf.mxu0
      %4882 = vmatprep.mubr.bf16.mxu0 0
      %4883 = vmatmul.mubr.bf16.gmra.mxu0 %v4801
      %v4884 = vpop.f32.mrf.mxu0
      %v4885 = vadd.f32 0.0, %v4884
      %v4886 = vpop.f32.mrf.mxu0
      %v4887 = vpop.f32.mrf.mxu0
      %v4888 = vadd.f32 0.0, %v4887
      %v4889 = vpop.f32.mrf.mxu0
      %4890 = vmatprep.mubr.bf16.mxu0 0
      %4891 = vmatmul.mubr.bf16.gmra.mxu0 %v4804
      %v4892 = vpop.f32.mrf.mxu0
      %v4893 = vadd.f32 0.0, %v4892
      %v4894 = vpop.f32.mrf.mxu0
      %v4895 = vpop.f32.mrf.mxu0
      %v4896 = vadd.f32 0.0, %v4895
      %v4897 = vpop.f32.mrf.mxu0
      %4898 = vmatprep.mubr.bf16.mxu0 0
      %4899 = vmatmul.mubr.bf16.gmra.mxu0 %v4807
      %v4900 = vpop.f32.mrf.mxu0
      %v4901 = vadd.f32 0.0, %v4900
      %v4902 = vpop.f32.mrf.mxu0
      %v4903 = vpop.f32.mrf.mxu0
      %v4904 = vadd.f32 0.0, %v4903
      %v4905 = vpop.f32.mrf.mxu0
      %4906 = vmatprep.mubr.bf16.mxu0 0
      %4907 = vmatmul.mubr.bf16.gmra.mxu0 %v4810
      %v4908 = vpop.f32.mrf.mxu0
      %v4909 = vadd.f32 0.0, %v4908
      %v4910 = vpop.f32.mrf.mxu0
      %v4911 = vpop.f32.mrf.mxu0
      %v4912 = vadd.f32 0.0, %v4911
      %v4913 = vpop.f32.mrf.mxu0
      %4914 = vmatprep.mubr.bf16.mxu0 0
      %4915 = vmatmul.mubr.bf16.gmra.mxu0 %v4813
      %v4916 = vpop.f32.mrf.mxu0
      %v4917 = vadd.f32 0.0, %v4916
      %v4918 = vpop.f32.mrf.mxu0
      %v4919 = vpop.f32.mrf.mxu0
      %v4920 = vadd.f32 0.0, %v4919
      %v4921 = vpop.f32.mrf.mxu0
      %4922 = vmatprep.mubr.bf16.mxu0 0
      %4923 = vmatmul.mubr.bf16.gmra.mxu0 %v4816
      %v4924 = vpop.f32.mrf.mxu0
      %v4925 = vadd.f32 0.0, %v4924
      %v4926 = vpop.f32.mrf.mxu0
      %v4927 = vpop.f32.mrf.mxu0
      %v4928 = vadd.f32 0.0, %v4927
      %v4929 = vpop.f32.mrf.mxu0
      %4930 = vdwg.mxu0
      %v4931 = vadd.f32 %v4643, %v4853
      %v4932 = vadd.f32 %v4646, %v4856
      %v4933 = vadd.f32 %v4651, %v4861
      %v4934 = vadd.f32 %v4654, %v4864
      %v4935 = vadd.f32 %v4659, %v4869
      %v4936 = vadd.f32 %v4662, %v4872
      %v4937 = vadd.f32 %v4667, %v4877
      %v4938 = vadd.f32 %v4670, %v4880
      %v4939 = vadd.f32 %v4675, %v4885
      %v4940 = vadd.f32 %v4678, %v4888
      %v4941 = vadd.f32 %v4683, %v4893
      %v4942 = vadd.f32 %v4686, %v4896
      %v4943 = vadd.f32 %v4691, %v4901
      %v4944 = vadd.f32 %v4694, %v4904
      %v4945 = vadd.f32 %v4699, %v4909
      %v4946 = vadd.f32 %v4702, %v4912
      %v4947 = vadd.f32 %v4707, %v4917
      %v4948 = vadd.f32 %v4710, %v4920
      %v4949 = vadd.f32 %v4715, %v4925
      %v4950 = vadd.f32 %v4718, %v4928
      %v4951 = vmul.f32 %v4931, 0.5
      %v4952 = vmul.f32 %v4932, 0.5
      %v4953 = vmul.f32 %v4933, 0.5
      %v4954 = vmul.f32 %v4934, 0.5
      %v4955 = vmul.f32 %v4935, 0.5
      %v4956 = vmul.f32 %v4936, 0.5
      %v4957 = vmul.f32 %v4937, 0.5
      %v4958 = vmul.f32 %v4938, 0.5
      %v4959 = vmul.f32 %v4939, 0.5
      %v4960 = vmul.f32 %v4940, 0.5
      %v4961 = vmul.f32 %v4941, 0.5
      %v4962 = vmul.f32 %v4942, 0.5
      %v4963 = vmul.f32 %v4943, 0.5
      %v4964 = vmul.f32 %v4944, 0.5
      %v4965 = vmul.f32 %v4945, 0.5
      %v4966 = vmul.f32 %v4946, 0.5
      %v4967 = vmul.f32 %v4947, 0.5
      %v4968 = vmul.f32 %v4948, 0.5
      %v4969 = vmul.f32 %v4949, 0.5
      %v4970 = vmul.f32 %v4950, 0.5
      %v4971 = vmul.f32 %v4931, 0.044715
      %v4972 = vmul.f32 %v4932, 0.044715
      %v4973 = vmul.f32 %v4933, 0.044715
      %v4974 = vmul.f32 %v4934, 0.044715
      %v4975 = vmul.f32 %v4935, 0.044715
      %v4976 = vmul.f32 %v4936, 0.044715
      %v4977 = vmul.f32 %v4937, 0.044715
      %v4978 = vmul.f32 %v4938, 0.044715
      %v4979 = vmul.f32 %v4939, 0.044715
      %v4980 = vmul.f32 %v4940, 0.044715
      %v4981 = vmul.f32 %v4941, 0.044715
      %v4982 = vmul.f32 %v4942, 0.044715
      %v4983 = vmul.f32 %v4943, 0.044715
      %v4984 = vmul.f32 %v4944, 0.044715
      %v4985 = vmul.f32 %v4945, 0.044715
      %v4986 = vmul.f32 %v4946, 0.044715
      %v4987 = vmul.f32 %v4947, 0.044715
      %v4988 = vmul.f32 %v4948, 0.044715
      %v4989 = vmul.f32 %v4949, 0.044715
      %v4990 = vmul.f32 %v4950, 0.044715
      %v4991 = vmul.f32 %v4971, %v4931
      %v4992 = vmul.f32 %v4972, %v4932
      %v4993 = vmul.f32 %v4973, %v4933
      %v4994 = vmul.f32 %v4974, %v4934
      %v4995 = vmul.f32 %v4975, %v4935
      %v4996 = vmul.f32 %v4976, %v4936
      %v4997 = vmul.f32 %v4977, %v4937
      %v4998 = vmul.f32 %v4978, %v4938
      %v4999 = vmul.f32 %v4979, %v4939
      %v5000 = vmul.f32 %v4980, %v4940
      %v5001 = vmul.f32 %v4981, %v4941
      %v5002 = vmul.f32 %v4982, %v4942
      %v5003 = vmul.f32 %v4983, %v4943
      %v5004 = vmul.f32 %v4984, %v4944
      %v5005 = vmul.f32 %v4985, %v4945
      %v5006 = vmul.f32 %v4986, %v4946
      %v5007 = vmul.f32 %v4987, %v4947
      %v5008 = vmul.f32 %v4988, %v4948
      %v5009 = vmul.f32 %v4989, %v4949
      %v5010 = vmul.f32 %v4990, %v4950
      %v5011 = vmul.f32 %v4991, %v4931
      %v5012 = vmul.f32 %v4992, %v4932
      %v5013 = vmul.f32 %v4993, %v4933
      %v5014 = vmul.f32 %v4994, %v4934
      %v5015 = vmul.f32 %v4995, %v4935
      %v5016 = vmul.f32 %v4996, %v4936
      %v5017 = vmul.f32 %v4997, %v4937
      %v5018 = vmul.f32 %v4998, %v4938
      %v5019 = vmul.f32 %v4999, %v4939
      %v5020 = vmul.f32 %v5000, %v4940
      %v5021 = vmul.f32 %v5001, %v4941
      %v5022 = vmul.f32 %v5002, %v4942
      %v5023 = vmul.f32 %v5003, %v4943
      %v5024 = vmul.f32 %v5004, %v4944
      %v5025 = vmul.f32 %v5005, %v4945
      %v5026 = vmul.f32 %v5006, %v4946
      %v5027 = vmul.f32 %v5007, %v4947
      %v5028 = vmul.f32 %v5008, %v4948
      %v5029 = vmul.f32 %v5009, %v4949
      %v5030 = vmul.f32 %v5010, %v4950
      %v5031 = vadd.f32 %v4931, %v5011
      %v5032 = vadd.f32 %v4932, %v5012
      %v5033 = vadd.f32 %v4933, %v5013
      %v5034 = vadd.f32 %v4934, %v5014
      %v5035 = vadd.f32 %v4935, %v5015
      %v5036 = vadd.f32 %v4936, %v5016
      %v5037 = vadd.f32 %v4937, %v5017
      %v5038 = vadd.f32 %v4938, %v5018
      %v5039 = vadd.f32 %v4939, %v5019
      %v5040 = vadd.f32 %v4940, %v5020
      %v5041 = vadd.f32 %v4941, %v5021
      %v5042 = vadd.f32 %v4942, %v5022
      %v5043 = vadd.f32 %v4943, %v5023
      %v5044 = vadd.f32 %v4944, %v5024
      %v5045 = vadd.f32 %v4945, %v5025
      %v5046 = vadd.f32 %v4946, %v5026
      %v5047 = vadd.f32 %v4947, %v5027
      %v5048 = vadd.f32 %v4948, %v5028
      %v5049 = vadd.f32 %v4949, %v5029
      %v5050 = vadd.f32 %v4950, %v5030
      %v5051 = vmul.f32 %v5031, 0.7978846
      %v5052 = vmul.f32 %v5032, 0.7978846
      %v5053 = vmul.f32 %v5033, 0.7978846
      %v5054 = vmul.f32 %v5034, 0.7978846
      %v5055 = vmul.f32 %v5035, 0.7978846
      %v5056 = vmul.f32 %v5036, 0.7978846
      %v5057 = vmul.f32 %v5037, 0.7978846
      %v5058 = vmul.f32 %v5038, 0.7978846
      %v5059 = vmul.f32 %v5039, 0.7978846
      %v5060 = vmul.f32 %v5040, 0.7978846
      %v5061 = vmul.f32 %v5041, 0.7978846
      %v5062 = vmul.f32 %v5042, 0.7978846
      %v5063 = vmul.f32 %v5043, 0.7978846
      %v5064 = vmul.f32 %v5044, 0.7978846
      %v5065 = vmul.f32 %v5045, 0.7978846
      %v5066 = vmul.f32 %v5046, 0.7978846
      %v5067 = vmul.f32 %v5047, 0.7978846
      %v5068 = vmul.f32 %v5048, 0.7978846
      %v5069 = vmul.f32 %v5049, 0.7978846
      %v5070 = vmul.f32 %v5050, 0.7978846
      %v5071 = vtanh.pop %v5051
      %v5072 = vtanh.pop %v5052
      %v5073 = vtanh.pop %v5053
      %v5074 = vtanh.pop %v5054
      %v5075 = vtanh.pop %v5055
      %v5076 = vtanh.pop %v5056
      %v5077 = vtanh.pop %v5057
      %v5078 = vtanh.pop %v5058
      %v5079 = vtanh.pop %v5059
      %v5080 = vtanh.pop %v5060
      %v5081 = vtanh.pop %v5061
      %v5082 = vtanh.pop %v5062
      %v5083 = vtanh.pop %v5063
      %v5084 = vtanh.pop %v5064
      %v5085 = vtanh.pop %v5065
      %v5086 = vtanh.pop %v5066
      %v5087 = vtanh.pop %v5067
      %v5088 = vtanh.pop %v5068
      %v5089 = vtanh.pop %v5069
      %v5090 = vtanh.pop %v5070
      %v5091 = vadd.f32 %v5071, 1.0
      %v5092 = vadd.f32 %v5072, 1.0
      %v5093 = vadd.f32 %v5073, 1.0
      %v5094 = vadd.f32 %v5074, 1.0
      %v5095 = vadd.f32 %v5075, 1.0
      %v5096 = vadd.f32 %v5076, 1.0
      %v5097 = vadd.f32 %v5077, 1.0
      %v5098 = vadd.f32 %v5078, 1.0
      %v5099 = vadd.f32 %v5079, 1.0
      %v5100 = vadd.f32 %v5080, 1.0
      %v5101 = vadd.f32 %v5081, 1.0
      %v5102 = vadd.f32 %v5082, 1.0
      %v5103 = vadd.f32 %v5083, 1.0
      %v5104 = vadd.f32 %v5084, 1.0
      %v5105 = vadd.f32 %v5085, 1.0
      %v5106 = vadd.f32 %v5086, 1.0
      %v5107 = vadd.f32 %v5087, 1.0
      %v5108 = vadd.f32 %v5088, 1.0
      %v5109 = vadd.f32 %v5089, 1.0
      %v5110 = vadd.f32 %v5090, 1.0
      %v5111 = vmul.f32 %v4951, %v5091
      %v5112 = vmul.f32 %v4952, %v5092
      %v5113 = vmul.f32 %v4953, %v5093
      %v5114 = vmul.f32 %v4954, %v5094
      %v5115 = vmul.f32 %v4955, %v5095
      %v5116 = vmul.f32 %v4956, %v5096
      %v5117 = vmul.f32 %v4957, %v5097
      %v5118 = vmul.f32 %v4958, %v5098
      %v5119 = vmul.f32 %v4959, %v5099
      %v5120 = vmul.f32 %v4960, %v5100
      %v5121 = vmul.f32 %v4961, %v5101
      %v5122 = vmul.f32 %v4962, %v5102
      %v5123 = vmul.f32 %v4963, %v5103
      %v5124 = vmul.f32 %v4964, %v5104
      %v5125 = vmul.f32 %v4965, %v5105
      %v5126 = vmul.f32 %v4966, %v5106
      %v5127 = vmul.f32 %v4967, %v5107
      %v5128 = vmul.f32 %v4968, %v5108
      %v5129 = vmul.f32 %v4969, %v5109
      %v5130 = vmul.f32 %v4970, %v5110
      %5131 = vst.msk [vmem:[#allocation2] sm:$0xff] %vm1207, %v5111
      %5132 = vst.msk [vmem:[#allocation2 + $0x8] sm:$0xff] %vm1207, %v5112
      %5133 = vst.msk [vmem:[#allocation2 + $0x10] sm:$0xff] %vm1207, %v5113
      %5134 = vst.msk [vmem:[#allocation2 + $0x18] sm:$0xff] %vm1207, %v5114
      %5135 = vst.msk [vmem:[#allocation2 + $0x20] sm:$0xff] %vm1207, %v5115
      %5136 = vst.msk [vmem:[#allocation2 + $0x28] sm:$0xff] %vm1207, %v5116
      %5137 = vst.msk [vmem:[#allocation2 + $0x30] sm:$0xff] %vm1207, %v5117
      %5138 = vst.msk [vmem:[#allocation2 + $0x38] sm:$0xff] %vm1207, %v5118
      %5139 = vst.msk [vmem:[#allocation2 + $0x40] sm:$0xff] %vm1207, %v5119
      %5140 = vst.msk [vmem:[#allocation2 + $0x48] sm:$0xff] %vm1207, %v5120
      %5141 = vst.msk [vmem:[#allocation2 + $0x50] sm:$0xff] %vm1207, %v5121
      %5142 = vst.msk [vmem:[#allocation2 + $0x58] sm:$0xff] %vm1207, %v5122
      %5143 = vst.msk [vmem:[#allocation2 + $0x60] sm:$0xff] %vm1207, %v5123
      %5144 = vst.msk [vmem:[#allocation2 + $0x68] sm:$0xff] %vm1207, %v5124
      %5145 = vst.msk [vmem:[#allocation2 + $0x70] sm:$0xff] %vm1207, %v5125
      %5146 = vst.msk [vmem:[#allocation2 + $0x78] sm:$0xff] %vm1207, %v5126
      %5147 = vst.msk [vmem:[#allocation2 + $0x80] sm:$0xff] %vm1207, %v5127
      %5148 = vst.msk [vmem:[#allocation2 + $0x88] sm:$0xff] %vm1207, %v5128
      %5149 = vst.msk [vmem:[#allocation2 + $0x90] sm:$0xff] %vm1207, %v5129
      %5150 = vst.msk [vmem:[#allocation2 + $0x98] sm:$0x7f] %vm1365, %v5130
      %v5151 = vld [vmem:[#allocation2] ss:$2 sm:$0xff]
      %v5152 = vld [vmem:[%s2755] ss:$2 sm:$0xff]
      %v5153 = vld [vmem:[%s2757] ss:$2 sm:$0xff]
      %v5154 = vld [vmem:[%s2759] ss:$2 sm:$0xff]
      %v5155 = vld [vmem:[%s2761] ss:$2 sm:$0xff]
      %v5156 = vld [vmem:[%s2763] ss:$2 sm:$0xff]
      %v5157 = vld [vmem:[%s2765] ss:$2 sm:$0xff]
      %v5158 = vld [vmem:[%s2767] ss:$2 sm:$0xff]
      %v5159 = vld [vmem:[%s2769] ss:$2 sm:$0xff]
      %v5160 = vld [vmem:[%s2771] ss:$2 sm:$0x7f]
      %v5161 = vpack.c.bf16 %v5152, %v5151
      %v5162 = vpack.c.bf16 %v5154, %v5153
      %v5163 = vpack.c.bf16 %v5156, %v5155
      %v5164 = vpack.c.bf16 %v5158, %v5157
      %v5165 = vpack.c.bf16 %v5160, %v5159
      %s5166 = scalar_lea.vmem %s2, 96
      %v5167 = vld [vmem:[%s5166] sm:$0xf]
      %v5168 = vld [vmem:[%s5166 + $0x4] sm:$0xf]
      %v5169 = vld [vmem:[%s5166 + $0x8] sm:$0xf]
      %v5170 = vld [vmem:[%s5166 + $0xc] sm:$0xf]
      %v5171 = vld [vmem:[%s2857] ss:$2 sm:$0xff]
      %v5172 = vld [vmem:[%s2859] ss:$2 sm:$0xff]
      %v5173 = vld [vmem:[%s2861] ss:$2 sm:$0xff]
      %v5174 = vld [vmem:[%s2863] ss:$2 sm:$0xff]
      %v5175 = vld [vmem:[%s2865] ss:$2 sm:$0xff]
      %v5176 = vld [vmem:[%s2867] ss:$2 sm:$0xff]
      %v5177 = vld [vmem:[%s2869] ss:$2 sm:$0xff]
      %v5178 = vld [vmem:[%s2871] ss:$2 sm:$0xff]
      %v5179 = vld [vmem:[%s2873] ss:$2 sm:$0xff]
      %v5180 = vld [vmem:[%s2875] ss:$2 sm:$0x7f]
      %v5181 = vpack.c.bf16 %v5172, %v5171
      %v5182 = vpack.c.bf16 %v5174, %v5173
      %v5183 = vpack.c.bf16 %v5176, %v5175
      %v5184 = vpack.c.bf16 %v5178, %v5177
      %v5185 = vpack.c.bf16 %v5180, %v5179
      %s5186 = scalar_lea.vmem %s2, 112
      %v5187 = vld [vmem:[%s5186] sm:$0xf]
      %v5188 = vld [vmem:[%s5186 + $0x4] sm:$0xf]
      %v5189 = vld [vmem:[%s5186 + $0x8] sm:$0xf]
      %v5190 = vld [vmem:[%s5186 + $0xc] sm:$0xf]
      %v5195 = vunpack.c.l.b16 %v5187
      %v5196 = vunpack.c.l.b16 %v5188
      %v5197 = vunpack.c.l.b16 %v5189
      %v5198 = vunpack.c.l.b16 %v5190
      %v5199 = vpack.c.b16 %v5196, %v5195
      %v5200 = vpack.c.b16 %v5198, %v5197
      %v5204 = vsel %vm1207, %v5181, 0
      %v5207 = vsel %vm1207, %v5182, 0
      %v5210 = vsel %vm1207, %v5183, 0
      %v5213 = vsel %vm1207, %v5184, 0
      %v5216 = vsel %vm1207, %v5185, 0
      %5218 = vmatprep.subr.bf16.mxu0 0
      %5219 = vmatpush1.bf16.msra.mxu0 0
      %5220 = vmatprep.subr.bf16.mxu0 0
      %5221 = vmatpush1.bf16.msra.mxu0 0
      %5222 = vmatprep.subr.bf16.mxu0 0
      %5223 = vmatpush1.bf16.msra.mxu0 0
      %5224 = vmatprep.subr.bf16.mxu0 0
      %5225 = vmatpush1.bf16.msra.mxu0 0
      %5226 = vmatprep.subr.bf16.mxu0 0
      %5227 = vmatpush1.bf16.msra.mxu0 0
      %5228 = vmatprep.subr.bf16.mxu0 0
      %5229 = vmatpush1.bf16.msra.mxu0 0
      %5230 = vmatprep.subr.bf16.mxu0 0
      %5231 = vmatpush1.bf16.msra.mxu0 %v5200
      %5232 = vmatprep.subr.bf16.mxu0 0
      %5233 = vmatpush1.bf16.msra.mxu0 %v5199
      %5234 = vmatprep.subr.bf16.mxu0 0
      %5235 = vmatpush2.bf16.msra.mxu0 0
      %5236 = vmatprep.subr.bf16.mxu0 0
      %5237 = vmatpush2.bf16.msra.mxu0 0
      %5238 = vmatprep.subr.bf16.mxu0 0
      %5239 = vmatpush2.bf16.msra.mxu0 0
      %5240 = vmatprep.subr.bf16.mxu0 0
      %5241 = vmatpush2.bf16.msra.mxu0 0
      %5242 = vmatprep.subr.bf16.mxu0 0
      %5243 = vmatpush2.bf16.msra.mxu0 0
      %5244 = vmatprep.subr.bf16.mxu0 0
      %5245 = vmatpush2.bf16.msra.mxu0 0
      %5246 = vmatprep.subr.bf16.mxu0 0
      %5247 = vmatpush2.bf16.msra.mxu0 0
      %5248 = vmatprep.subr.bf16.mxu0 0
      %5249 = vmatpush2.bf16.msra.mxu0 0
      %5250 = vmatprep.mubr.bf16.mxu0 0
      %5251 = vmatmul.mubr.bf16.gmra.mxu0 %v5204
      %v5252 = vpop.f32.mrf.mxu0
      %v5253 = vadd.f32 0.0, %v5252
      %v5254 = vpop.f32.mrf.mxu0
      %v5255 = vpop.f32.mrf.mxu0
      %v5256 = vadd.f32 0.0, %v5255
      %v5257 = vpop.f32.mrf.mxu0
      %5258 = vmatprep.mubr.bf16.mxu0 0
      %5259 = vmatmul.mubr.bf16.gmra.mxu0 %v5207
      %v5260 = vpop.f32.mrf.mxu0
      %v5261 = vadd.f32 0.0, %v5260
      %v5262 = vpop.f32.mrf.mxu0
      %v5263 = vpop.f32.mrf.mxu0
      %v5264 = vadd.f32 0.0, %v5263
      %v5265 = vpop.f32.mrf.mxu0
      %5266 = vmatprep.mubr.bf16.mxu0 0
      %5267 = vmatmul.mubr.bf16.gmra.mxu0 %v5210
      %v5268 = vpop.f32.mrf.mxu0
      %v5269 = vadd.f32 0.0, %v5268
      %v5270 = vpop.f32.mrf.mxu0
      %v5271 = vpop.f32.mrf.mxu0
      %v5272 = vadd.f32 0.0, %v5271
      %v5273 = vpop.f32.mrf.mxu0
      %5274 = vmatprep.mubr.bf16.mxu0 0
      %5275 = vmatmul.mubr.bf16.gmra.mxu0 %v5213
      %v5276 = vpop.f32.mrf.mxu0
      %v5277 = vadd.f32 0.0, %v5276
      %v5278 = vpop.f32.mrf.mxu0
      %v5279 = vpop.f32.mrf.mxu0
      %v5280 = vadd.f32 0.0, %v5279
      %v5281 = vpop.f32.mrf.mxu0
      %5282 = vmatprep.mubr.bf16.mxu0 0
      %5283 = vmatmul.mubr.bf16.gmra.mxu0 %v5216
      %v5284 = vpop.f32.mrf.mxu0
      %v5285 = vadd.f32 0.0, %v5284
      %v5286 = vpop.f32.mrf.mxu0
      %v5287 = vpop.f32.mrf.mxu0
      %v5288 = vadd.f32 0.0, %v5287
      %v5289 = vpop.f32.mrf.mxu0
      %5290 = vdwg.mxu0
      %v5295 = vunpack.c.l.b16 %v5167
      %v5296 = vunpack.c.l.b16 %v5168
      %v5297 = vunpack.c.l.b16 %v5169
      %v5298 = vunpack.c.l.b16 %v5170
      %v5299 = vpack.c.b16 %v5296, %v5295
      %v5300 = vpack.c.b16 %v5298, %v5297
      %v5304 = vsel %vm1207, %v5161, 0
      %v5307 = vsel %vm1207, %v5162, 0
      %v5310 = vsel %vm1207, %v5163, 0
      %v5313 = vsel %vm1207, %v5164, 0
      %v5316 = vsel %vm1207, %v5165, 0
      %5318 = vmatprep.subr.bf16.mxu0 0
      %5319 = vmatpush1.bf16.msra.mxu0 0
      %5320 = vmatprep.subr.bf16.mxu0 0
      %5321 = vmatpush1.bf16.msra.mxu0 0
      %5322 = vmatprep.subr.bf16.mxu0 0
      %5323 = vmatpush1.bf16.msra.mxu0 0
      %5324 = vmatprep.subr.bf16.mxu0 0
      %5325 = vmatpush1.bf16.msra.mxu0 0
      %5326 = vmatprep.subr.bf16.mxu0 0
      %5327 = vmatpush1.bf16.msra.mxu0 0
      %5328 = vmatprep.subr.bf16.mxu0 0
      %5329 = vmatpush1.bf16.msra.mxu0 0
      %5330 = vmatprep.subr.bf16.mxu0 0
      %5331 = vmatpush1.bf16.msra.mxu0 %v5300
      %5332 = vmatprep.subr.bf16.mxu0 0
      %5333 = vmatpush1.bf16.msra.mxu0 %v5299
      %5334 = vmatprep.subr.bf16.mxu0 0
      %5335 = vmatpush2.bf16.msra.mxu0 0
      %5336 = vmatprep.subr.bf16.mxu0 0
      %5337 = vmatpush2.bf16.msra.mxu0 0
      %5338 = vmatprep.subr.bf16.mxu0 0
      %5339 = vmatpush2.bf16.msra.mxu0 0
      %5340 = vmatprep.subr.bf16.mxu0 0
      %5341 = vmatpush2.bf16.msra.mxu0 0
      %5342 = vmatprep.subr.bf16.mxu0 0
      %5343 = vmatpush2.bf16.msra.mxu0 0
      %5344 = vmatprep.subr.bf16.mxu0 0
      %5345 = vmatpush2.bf16.msra.mxu0 0
      %5346 = vmatprep.subr.bf16.mxu0 0
      %5347 = vmatpush2.bf16.msra.mxu0 0
      %5348 = vmatprep.subr.bf16.mxu0 0
      %5349 = vmatpush2.bf16.msra.mxu0 0
      %5350 = vmatprep.mubr.bf16.mxu0 0
      %5351 = vmatmul.mubr.bf16.gmra.mxu0 %v5304
      %v5352 = vpop.f32.mrf.mxu0
      %v5353 = vadd.f32 %v5253, %v5352
      %v5354 = vpop.f32.mrf.mxu0
      %v5355 = vpop.f32.mrf.mxu0
      %v5356 = vadd.f32 %v5256, %v5355
      %v5357 = vpop.f32.mrf.mxu0
      %5358 = vmatprep.mubr.bf16.mxu0 0
      %5359 = vmatmul.mubr.bf16.gmra.mxu0 %v5307
      %v5360 = vpop.f32.mrf.mxu0
      %v5361 = vadd.f32 %v5261, %v5360
      %v5362 = vpop.f32.mrf.mxu0
      %v5363 = vpop.f32.mrf.mxu0
      %v5364 = vadd.f32 %v5264, %v5363
      %v5365 = vpop.f32.mrf.mxu0
      %5366 = vmatprep.mubr.bf16.mxu0 0
      %5367 = vmatmul.mubr.bf16.gmra.mxu0 %v5310
      %v5368 = vpop.f32.mrf.mxu0
      %v5369 = vadd.f32 %v5269, %v5368
      %v5370 = vpop.f32.mrf.mxu0
      %v5371 = vpop.f32.mrf.mxu0
      %v5372 = vadd.f32 %v5272, %v5371
      %v5373 = vpop.f32.mrf.mxu0
      %5374 = vmatprep.mubr.bf16.mxu0 0
      %5375 = vmatmul.mubr.bf16.gmra.mxu0 %v5313
      %v5376 = vpop.f32.mrf.mxu0
      %v5377 = vadd.f32 %v5277, %v5376
      %v5378 = vpop.f32.mrf.mxu0
      %v5379 = vpop.f32.mrf.mxu0
      %v5380 = vadd.f32 %v5280, %v5379
      %v5381 = vpop.f32.mrf.mxu0
      %5382 = vmatprep.mubr.bf16.mxu0 0
      %5383 = vmatmul.mubr.bf16.gmra.mxu0 %v5316
      %v5384 = vpop.f32.mrf.mxu0
      %v5385 = vadd.f32 %v5285, %v5384
      %v5386 = vpop.f32.mrf.mxu0
      %v5387 = vpop.f32.mrf.mxu0
      %v5388 = vadd.f32 %v5288, %v5387
      %v5389 = vpop.f32.mrf.mxu0
      %5390 = vdwg.mxu0
      %v5391 = vld [vmem:[%s3492] ss:$2 sm:$0xff]
      %v5392 = vld [vmem:[%s3494] ss:$2 sm:$0xff]
      %v5393 = vld [vmem:[%s3496] ss:$2 sm:$0xff]
      %v5394 = vld [vmem:[%s3498] ss:$2 sm:$0xff]
      %v5395 = vld [vmem:[%s3500] ss:$2 sm:$0xff]
      %v5396 = vld [vmem:[%s3502] ss:$2 sm:$0xff]
      %v5397 = vld [vmem:[%s3504] ss:$2 sm:$0xff]
      %v5398 = vld [vmem:[%s3506] ss:$2 sm:$0xff]
      %v5399 = vld [vmem:[%s3508] ss:$2 sm:$0xff]
      %v5400 = vld [vmem:[%s3510] ss:$2 sm:$0x7f]
      %v5401 = vpack.c.bf16 %v5392, %v5391
      %v5402 = vpack.c.bf16 %v5394, %v5393
      %v5403 = vpack.c.bf16 %v5396, %v5395
      %v5404 = vpack.c.bf16 %v5398, %v5397
      %v5405 = vpack.c.bf16 %v5400, %v5399
      %s5406 = scalar_lea.vmem %s2, 128
      %v5407 = vld [vmem:[%s5406] sm:$0xf]
      %v5408 = vld [vmem:[%s5406 + $0x4] sm:$0xf]
      %v5409 = vld [vmem:[%s5406 + $0x8] sm:$0xf]
      %v5410 = vld [vmem:[%s5406 + $0xc] sm:$0xf]
      %v5415 = vunpack.c.l.b16 %v5407
      %v5416 = vunpack.c.l.b16 %v5408
      %v5417 = vunpack.c.l.b16 %v5409
      %v5418 = vunpack.c.l.b16 %v5410
      %v5419 = vpack.c.b16 %v5416, %v5415
      %v5420 = vpack.c.b16 %v5418, %v5417
      %v5424 = vsel %vm1207, %v5401, 0
      %v5427 = vsel %vm1207, %v5402, 0
      %v5430 = vsel %vm1207, %v5403, 0
      %v5433 = vsel %vm1207, %v5404, 0
      %v5436 = vsel %vm1207, %v5405, 0
      %5438 = vmatprep.subr.bf16.mxu0 0
      %5439 = vmatpush1.bf16.msra.mxu0 0
      %5440 = vmatprep.subr.bf16.mxu0 0
      %5441 = vmatpush1.bf16.msra.mxu0 0
      %5442 = vmatprep.subr.bf16.mxu0 0
      %5443 = vmatpush1.bf16.msra.mxu0 0
      %5444 = vmatprep.subr.bf16.mxu0 0
      %5445 = vmatpush1.bf16.msra.mxu0 0
      %5446 = vmatprep.subr.bf16.mxu0 0
      %5447 = vmatpush1.bf16.msra.mxu0 0
      %5448 = vmatprep.subr.bf16.mxu0 0
      %5449 = vmatpush1.bf16.msra.mxu0 0
      %5450 = vmatprep.subr.bf16.mxu0 0
      %5451 = vmatpush1.bf16.msra.mxu0 %v5420
      %5452 = vmatprep.subr.bf16.mxu0 0
      %5453 = vmatpush1.bf16.msra.mxu0 %v5419
      %5454 = vmatprep.subr.bf16.mxu0 0
      %5455 = vmatpush2.bf16.msra.mxu0 0
      %5456 = vmatprep.subr.bf16.mxu0 0
      %5457 = vmatpush2.bf16.msra.mxu0 0
      %5458 = vmatprep.subr.bf16.mxu0 0
      %5459 = vmatpush2.bf16.msra.mxu0 0
      %5460 = vmatprep.subr.bf16.mxu0 0
      %5461 = vmatpush2.bf16.msra.mxu0 0
      %5462 = vmatprep.subr.bf16.mxu0 0
      %5463 = vmatpush2.bf16.msra.mxu0 0
      %5464 = vmatprep.subr.bf16.mxu0 0
      %5465 = vmatpush2.bf16.msra.mxu0 0
      %5466 = vmatprep.subr.bf16.mxu0 0
      %5467 = vmatpush2.bf16.msra.mxu0 0
      %5468 = vmatprep.subr.bf16.mxu0 0
      %5469 = vmatpush2.bf16.msra.mxu0 0
      %5470 = vmatprep.mubr.bf16.mxu0 0
      %5471 = vmatmul.mubr.bf16.gmra.mxu0 %v5424
      %v5472 = vpop.f32.mrf.mxu0
      %v5473 = vadd.f32 0.0, %v5472
      %v5474 = vpop.f32.mrf.mxu0
      %v5475 = vpop.f32.mrf.mxu0
      %v5476 = vadd.f32 0.0, %v5475
      %v5477 = vpop.f32.mrf.mxu0
      %5478 = vmatprep.mubr.bf16.mxu0 0
      %5479 = vmatmul.mubr.bf16.gmra.mxu0 %v5427
      %v5480 = vpop.f32.mrf.mxu0
      %v5481 = vadd.f32 0.0, %v5480
      %v5482 = vpop.f32.mrf.mxu0
      %v5483 = vpop.f32.mrf.mxu0
      %v5484 = vadd.f32 0.0, %v5483
      %v5485 = vpop.f32.mrf.mxu0
      %5486 = vmatprep.mubr.bf16.mxu0 0
      %5487 = vmatmul.mubr.bf16.gmra.mxu0 %v5430
      %v5488 = vpop.f32.mrf.mxu0
      %v5489 = vadd.f32 0.0, %v5488
      %v5490 = vpop.f32.mrf.mxu0
      %v5491 = vpop.f32.mrf.mxu0
      %v5492 = vadd.f32 0.0, %v5491
      %v5493 = vpop.f32.mrf.mxu0
      %5494 = vmatprep.mubr.bf16.mxu0 0
      %5495 = vmatmul.mubr.bf16.gmra.mxu0 %v5433
      %v5496 = vpop.f32.mrf.mxu0
      %v5497 = vadd.f32 0.0, %v5496
      %v5498 = vpop.f32.mrf.mxu0
      %v5499 = vpop.f32.mrf.mxu0
      %v5500 = vadd.f32 0.0, %v5499
      %v5501 = vpop.f32.mrf.mxu0
      %5502 = vmatprep.mubr.bf16.mxu0 0
      %5503 = vmatmul.mubr.bf16.gmra.mxu0 %v5436
      %v5504 = vpop.f32.mrf.mxu0
      %v5505 = vadd.f32 0.0, %v5504
      %v5506 = vpop.f32.mrf.mxu0
      %v5507 = vpop.f32.mrf.mxu0
      %v5508 = vadd.f32 0.0, %v5507
      %v5509 = vpop.f32.mrf.mxu0
      %5510 = vdwg.mxu0
      %v5511 = vadd.f32 %v5353, %v5473
      %v5512 = vadd.f32 %v5356, %v5476
      %v5513 = vadd.f32 %v5361, %v5481
      %v5514 = vadd.f32 %v5364, %v5484
      %v5515 = vadd.f32 %v5369, %v5489
      %v5516 = vadd.f32 %v5372, %v5492
      %v5517 = vadd.f32 %v5377, %v5497
      %v5518 = vadd.f32 %v5380, %v5500
      %v5519 = vadd.f32 %v5385, %v5505
      %v5520 = vadd.f32 %v5388, %v5508
      %v5521 = vmul.f32 %v5511, 0.5
      %v5522 = vmul.f32 %v5512, 0.5
      %v5523 = vmul.f32 %v5513, 0.5
      %v5524 = vmul.f32 %v5514, 0.5
      %v5525 = vmul.f32 %v5515, 0.5
      %v5526 = vmul.f32 %v5516, 0.5
      %v5527 = vmul.f32 %v5517, 0.5
      %v5528 = vmul.f32 %v5518, 0.5
      %v5529 = vmul.f32 %v5519, 0.5
      %v5530 = vmul.f32 %v5520, 0.5
      %v5531 = vmul.f32 %v5511, 0.044715
      %v5532 = vmul.f32 %v5512, 0.044715
      %v5533 = vmul.f32 %v5513, 0.044715
      %v5534 = vmul.f32 %v5514, 0.044715
      %v5535 = vmul.f32 %v5515, 0.044715
      %v5536 = vmul.f32 %v5516, 0.044715
      %v5537 = vmul.f32 %v5517, 0.044715
      %v5538 = vmul.f32 %v5518, 0.044715
      %v5539 = vmul.f32 %v5519, 0.044715
      %v5540 = vmul.f32 %v5520, 0.044715
      %v5541 = vmul.f32 %v5531, %v5511
      %v5542 = vmul.f32 %v5532, %v5512
      %v5543 = vmul.f32 %v5533, %v5513
      %v5544 = vmul.f32 %v5534, %v5514
      %v5545 = vmul.f32 %v5535, %v5515
      %v5546 = vmul.f32 %v5536, %v5516
      %v5547 = vmul.f32 %v5537, %v5517
      %v5548 = vmul.f32 %v5538, %v5518
      %v5549 = vmul.f32 %v5539, %v5519
      %v5550 = vmul.f32 %v5540, %v5520
      %v5551 = vmul.f32 %v5541, %v5511
      %v5552 = vmul.f32 %v5542, %v5512
      %v5553 = vmul.f32 %v5543, %v5513
      %v5554 = vmul.f32 %v5544, %v5514
      %v5555 = vmul.f32 %v5545, %v5515
      %v5556 = vmul.f32 %v5546, %v5516
      %v5557 = vmul.f32 %v5547, %v5517
      %v5558 = vmul.f32 %v5548, %v5518
      %v5559 = vmul.f32 %v5549, %v5519
      %v5560 = vmul.f32 %v5550, %v5520
      %v5561 = vadd.f32 %v5511, %v5551
      %v5562 = vadd.f32 %v5512, %v5552
      %v5563 = vadd.f32 %v5513, %v5553
      %v5564 = vadd.f32 %v5514, %v5554
      %v5565 = vadd.f32 %v5515, %v5555
      %v5566 = vadd.f32 %v5516, %v5556
      %v5567 = vadd.f32 %v5517, %v5557
      %v5568 = vadd.f32 %v5518, %v5558
      %v5569 = vadd.f32 %v5519, %v5559
      %v5570 = vadd.f32 %v5520, %v5560
      %v5571 = vmul.f32 %v5561, 0.7978846
      %v5572 = vmul.f32 %v5562, 0.7978846
      %v5573 = vmul.f32 %v5563, 0.7978846
      %v5574 = vmul.f32 %v5564, 0.7978846
      %v5575 = vmul.f32 %v5565, 0.7978846
      %v5576 = vmul.f32 %v5566, 0.7978846
      %v5577 = vmul.f32 %v5567, 0.7978846
      %v5578 = vmul.f32 %v5568, 0.7978846
      %v5579 = vmul.f32 %v5569, 0.7978846
      %v5580 = vmul.f32 %v5570, 0.7978846
      %v5581 = vtanh.pop %v5571
      %v5582 = vtanh.pop %v5572
      %v5583 = vtanh.pop %v5573
      %v5584 = vtanh.pop %v5574
      %v5585 = vtanh.pop %v5575
      %v5586 = vtanh.pop %v5576
      %v5587 = vtanh.pop %v5577
      %v5588 = vtanh.pop %v5578
      %v5589 = vtanh.pop %v5579
      %v5590 = vtanh.pop %v5580
      %v5591 = vadd.f32 %v5581, 1.0
      %v5592 = vadd.f32 %v5582, 1.0
      %v5593 = vadd.f32 %v5583, 1.0
      %v5594 = vadd.f32 %v5584, 1.0
      %v5595 = vadd.f32 %v5585, 1.0
      %v5596 = vadd.f32 %v5586, 1.0
      %v5597 = vadd.f32 %v5587, 1.0
      %v5598 = vadd.f32 %v5588, 1.0
      %v5599 = vadd.f32 %v5589, 1.0
      %v5600 = vadd.f32 %v5590, 1.0
      %v5601 = vmul.f32 %v5521, %v5591
      %v5602 = vmul.f32 %v5522, %v5592
      %v5603 = vmul.f32 %v5523, %v5593
      %v5604 = vmul.f32 %v5524, %v5594
      %v5605 = vmul.f32 %v5525, %v5595
      %v5606 = vmul.f32 %v5526, %v5596
      %v5607 = vmul.f32 %v5527, %v5597
      %v5608 = vmul.f32 %v5528, %v5598
      %v5609 = vmul.f32 %v5529, %v5599
      %v5610 = vmul.f32 %v5530, %v5600
      %5611 = vst.msk [vmem:[#allocation3] sm:$0xff] %vm1207, %v5601
      %5612 = vst.msk [vmem:[#allocation3 + $0x8] sm:$0xff] %vm1207, %v5602
      %5613 = vst.msk [vmem:[#allocation3 + $0x10] sm:$0xff] %vm1207, %v5603
      %5614 = vst.msk [vmem:[#allocation3 + $0x18] sm:$0xff] %vm1207, %v5604
      %5615 = vst.msk [vmem:[#allocation3 + $0x20] sm:$0xff] %vm1207, %v5605
      %5616 = vst.msk [vmem:[#allocation3 + $0x28] sm:$0xff] %vm1207, %v5606
      %5617 = vst.msk [vmem:[#allocation3 + $0x30] sm:$0xff] %vm1207, %v5607
      %5618 = vst.msk [vmem:[#allocation3 + $0x38] sm:$0xff] %vm1207, %v5608
      %5619 = vst.msk [vmem:[#allocation3 + $0x40] sm:$0xff] %vm1207, %v5609
      %5620 = vst.msk [vmem:[#allocation3 + $0x48] sm:$0x7f] %vm1365, %v5610
      %v5621 = vld [vmem:[#allocation3] ss:$2 sm:$0xff]
      %v5622 = vld [vmem:[%s4303] ss:$2 sm:$0xff]
      %v5623 = vld [vmem:[%s4305] ss:$2 sm:$0xff]
      %v5624 = vld [vmem:[%s4307] ss:$2 sm:$0xff]
      %v5625 = vld [vmem:[%s4309] ss:$2 sm:$0x7f]
      %v5626 = vpack.c.bf16 %v5622, %v5621
      %v5627 = vpack.c.bf16 %v5624, %v5623
      %v5628 = vpack.c.bf16 %v5625, %v5625
      %s5629 = scalar_lea.vmem %s2, 144
      %v5630 = vld [vmem:[%s5629] sm:$0xf]
      %v5631 = vld [vmem:[%s5629 + $0x4] sm:$0xf]
      %v5632 = vld [vmem:[%s5629 + $0x8] sm:$0xf]
      %v5633 = vld [vmem:[%s5629 + $0xc] sm:$0xf]
      %v5634 = vld [vmem:[%s4356] ss:$2 sm:$0xff]
      %v5635 = vld [vmem:[%s4358] ss:$2 sm:$0xff]
      %v5636 = vld [vmem:[%s4360] ss:$2 sm:$0xff]
      %v5637 = vld [vmem:[%s4362] ss:$2 sm:$0xff]
      %v5638 = vld [vmem:[%s4364] ss:$2 sm:$0x7f]
      %v5639 = vpack.c.bf16 %v5635, %v5634
      %v5640 = vpack.c.bf16 %v5637, %v5636
      %v5641 = vpack.c.bf16 %v5638, %v5638
      %s5642 = scalar_lea.vmem %s2, 160
      %v5643 = vld [vmem:[%s5642] sm:$0xf]
      %v5644 = vld [vmem:[%s5642 + $0x4] sm:$0xf]
      %v5645 = vld [vmem:[%s5642 + $0x8] sm:$0xf]
      %v5646 = vld [vmem:[%s5642 + $0xc] sm:$0xf]
      %v5651 = vunpack.c.l.b16 %v5643
      %v5652 = vunpack.c.l.b16 %v5644
      %v5653 = vunpack.c.l.b16 %v5645
      %v5654 = vunpack.c.l.b16 %v5646
      %v5655 = vpack.c.b16 %v5652, %v5651
      %v5656 = vpack.c.b16 %v5654, %v5653
      %v5660 = vsel %vm1207, %v5639, 0
      %v5663 = vsel %vm1207, %v5640, 0
      %v5666 = vsel %vm1207, %v5641, 0
      %5668 = vmatprep.subr.bf16.mxu0 0
      %5669 = vmatpush1.bf16.msra.mxu0 0
      %5670 = vmatprep.subr.bf16.mxu0 0
      %5671 = vmatpush1.bf16.msra.mxu0 0
      %5672 = vmatprep.subr.bf16.mxu0 0
      %5673 = vmatpush1.bf16.msra.mxu0 0
      %5674 = vmatprep.subr.bf16.mxu0 0
      %5675 = vmatpush1.bf16.msra.mxu0 0
      %5676 = vmatprep.subr.bf16.mxu0 0
      %5677 = vmatpush1.bf16.msra.mxu0 0
      %5678 = vmatprep.subr.bf16.mxu0 0
      %5679 = vmatpush1.bf16.msra.mxu0 0
      %5680 = vmatprep.subr.bf16.mxu0 0
      %5681 = vmatpush1.bf16.msra.mxu0 %v5656
      %5682 = vmatprep.subr.bf16.mxu0 0
      %5683 = vmatpush1.bf16.msra.mxu0 %v5655
      %5684 = vmatprep.subr.bf16.mxu0 0
      %5685 = vmatpush2.bf16.msra.mxu0 0
      %5686 = vmatprep.subr.bf16.mxu0 0
      %5687 = vmatpush2.bf16.msra.mxu0 0
      %5688 = vmatprep.subr.bf16.mxu0 0
      %5689 = vmatpush2.bf16.msra.mxu0 0
      %5690 = vmatprep.subr.bf16.mxu0 0
      %5691 = vmatpush2.bf16.msra.mxu0 0
      %5692 = vmatprep.subr.bf16.mxu0 0
      %5693 = vmatpush2.bf16.msra.mxu0 0
      %5694 = vmatprep.subr.bf16.mxu0 0
      %5695 = vmatpush2.bf16.msra.mxu0 0
      %5696 = vmatprep.subr.bf16.mxu0 0
      %5697 = vmatpush2.bf16.msra.mxu0 0
      %5698 = vmatprep.subr.bf16.mxu0 0
      %5699 = vmatpush2.bf16.msra.mxu0 0
      %5700 = vmatprep.mubr.bf16.mxu0 0
      %5701 = vmatmul.mubr.bf16.gmra.mxu0 %v5660
      %v5702 = vpop.f32.mrf.mxu0
      %v5703 = vadd.f32 0.0, %v5702
      %v5704 = vpop.f32.mrf.mxu0
      %v5705 = vpop.f32.mrf.mxu0
      %v5706 = vadd.f32 0.0, %v5705
      %v5707 = vpop.f32.mrf.mxu0
      %5708 = vmatprep.mubr.bf16.mxu0 0
      %5709 = vmatmul.mubr.bf16.gmra.mxu0 %v5663
      %v5710 = vpop.f32.mrf.mxu0
      %v5711 = vadd.f32 0.0, %v5710
      %v5712 = vpop.f32.mrf.mxu0
      %v5713 = vpop.f32.mrf.mxu0
      %v5714 = vadd.f32 0.0, %v5713
      %v5715 = vpop.f32.mrf.mxu0
      %5716 = vmatprep.mubr.bf16.mxu0 0
      %5717 = vmatmul.mubr.bf16.gmra.mxu0 %v5666
      %v5718 = vpop.f32.mrf.mxu0
      %v5719 = vadd.f32 0.0, %v5718
      %v5720 = vpop.f32.mrf.mxu0
      %v5721 = vpop.f32.mrf.mxu0
      %v5722 = vpop.f32.mrf.mxu0
      %5723 = vdwg.mxu0
      %v5728 = vunpack.c.l.b16 %v5630
      %v5729 = vunpack.c.l.b16 %v5631
      %v5730 = vunpack.c.l.b16 %v5632
      %v5731 = vunpack.c.l.b16 %v5633
      %v5732 = vpack.c.b16 %v5729, %v5728
      %v5733 = vpack.c.b16 %v5731, %v5730
      %v5737 = vsel %vm1207, %v5626, 0
      %v5740 = vsel %vm1207, %v5627, 0
      %v5743 = vsel %vm1207, %v5628, 0
      %5745 = vmatprep.subr.bf16.mxu0 0
      %5746 = vmatpush1.bf16.msra.mxu0 0
      %5747 = vmatprep.subr.bf16.mxu0 0
      %5748 = vmatpush1.bf16.msra.mxu0 0
      %5749 = vmatprep.subr.bf16.mxu0 0
      %5750 = vmatpush1.bf16.msra.mxu0 0
      %5751 = vmatprep.subr.bf16.mxu0 0
      %5752 = vmatpush1.bf16.msra.mxu0 0
      %5753 = vmatprep.subr.bf16.mxu0 0
      %5754 = vmatpush1.bf16.msra.mxu0 0
      %5755 = vmatprep.subr.bf16.mxu0 0
      %5756 = vmatpush1.bf16.msra.mxu0 0
      %5757 = vmatprep.subr.bf16.mxu0 0
      %5758 = vmatpush1.bf16.msra.mxu0 %v5733
      %5759 = vmatprep.subr.bf16.mxu0 0
      %5760 = vmatpush1.bf16.msra.mxu0 %v5732
      %5761 = vmatprep.subr.bf16.mxu0 0
      %5762 = vmatpush2.bf16.msra.mxu0 0
      %5763 = vmatprep.subr.bf16.mxu0 0
      %5764 = vmatpush2.bf16.msra.mxu0 0
      %5765 = vmatprep.subr.bf16.mxu0 0
      %5766 = vmatpush2.bf16.msra.mxu0 0
      %5767 = vmatprep.subr.bf16.mxu0 0
      %5768 = vmatpush2.bf16.msra.mxu0 0
      %5769 = vmatprep.subr.bf16.mxu0 0
      %5770 = vmatpush2.bf16.msra.mxu0 0
      %5771 = vmatprep.subr.bf16.mxu0 0
      %5772 = vmatpush2.bf16.msra.mxu0 0
      %5773 = vmatprep.subr.bf16.mxu0 0
      %5774 = vmatpush2.bf16.msra.mxu0 0
      %5775 = vmatprep.subr.bf16.mxu0 0
      %5776 = vmatpush2.bf16.msra.mxu0 0
      %5777 = vmatprep.mubr.bf16.mxu0 0
      %5778 = vmatmul.mubr.bf16.gmra.mxu0 %v5737
      %v5779 = vpop.f32.mrf.mxu0
      %v5780 = vadd.f32 %v5703, %v5779
      %v5781 = vpop.f32.mrf.mxu0
      %v5782 = vpop.f32.mrf.mxu0
      %v5783 = vadd.f32 %v5706, %v5782
      %v5784 = vpop.f32.mrf.mxu0
      %5785 = vmatprep.mubr.bf16.mxu0 0
      %5786 = vmatmul.mubr.bf16.gmra.mxu0 %v5740
      %v5787 = vpop.f32.mrf.mxu0
      %v5788 = vadd.f32 %v5711, %v5787
      %v5789 = vpop.f32.mrf.mxu0
      %v5790 = vpop.f32.mrf.mxu0
      %v5791 = vadd.f32 %v5714, %v5790
      %v5792 = vpop.f32.mrf.mxu0
      %5793 = vmatprep.mubr.bf16.mxu0 0
      %5794 = vmatmul.mubr.bf16.gmra.mxu0 %v5743
      %v5795 = vpop.f32.mrf.mxu0
      %v5796 = vadd.f32 %v5719, %v5795
      %v5797 = vpop.f32.mrf.mxu0
      %v5798 = vpop.f32.mrf.mxu0
      %v5799 = vpop.f32.mrf.mxu0
      %5800 = vdwg.mxu0
      %v5801 = vld [vmem:[%s4721] ss:$2 sm:$0xff]
      %v5802 = vld [vmem:[%s4723] ss:$2 sm:$0xff]
      %v5803 = vld [vmem:[%s4725] ss:$2 sm:$0xff]
      %v5804 = vld [vmem:[%s4727] ss:$2 sm:$0xff]
      %v5805 = vld [vmem:[%s4729] ss:$2 sm:$0x7f]
      %v5806 = vpack.c.bf16 %v5802, %v5801
      %v5807 = vpack.c.bf16 %v5804, %v5803
      %v5808 = vpack.c.bf16 %v5805, %v5805
      %s5809 = scalar_lea.vmem %s2, 176
      %v5810 = vld [vmem:[%s5809] sm:$0xf]
      %v5811 = vld [vmem:[%s5809 + $0x4] sm:$0xf]
      %v5812 = vld [vmem:[%s5809 + $0x8] sm:$0xf]
      %v5813 = vld [vmem:[%s5809 + $0xc] sm:$0xf]
      %v5818 = vunpack.c.l.b16 %v5810
      %v5819 = vunpack.c.l.b16 %v5811
      %v5820 = vunpack.c.l.b16 %v5812
      %v5821 = vunpack.c.l.b16 %v5813
      %v5822 = vpack.c.b16 %v5819, %v5818
      %v5823 = vpack.c.b16 %v5821, %v5820
      %v5827 = vsel %vm1207, %v5806, 0
      %v5830 = vsel %vm1207, %v5807, 0
      %v5833 = vsel %vm1207, %v5808, 0
      %5835 = vmatprep.subr.bf16.mxu0 0
      %5836 = vmatpush1.bf16.msra.mxu0 0
      %5837 = vmatprep.subr.bf16.mxu0 0
      %5838 = vmatpush1.bf16.msra.mxu0 0
      %5839 = vmatprep.subr.bf16.mxu0 0
      %5840 = vmatpush1.bf16.msra.mxu0 0
      %5841 = vmatprep.subr.bf16.mxu0 0
      %5842 = vmatpush1.bf16.msra.mxu0 0
      %5843 = vmatprep.subr.bf16.mxu0 0
      %5844 = vmatpush1.bf16.msra.mxu0 0
      %5845 = vmatprep.subr.bf16.mxu0 0
      %5846 = vmatpush1.bf16.msra.mxu0 0
      %5847 = vmatprep.subr.bf16.mxu0 0
      %5848 = vmatpush1.bf16.msra.mxu0 %v5823
      %5849 = vmatprep.subr.bf16.mxu0 0
      %5850 = vmatpush1.bf16.msra.mxu0 %v5822
      %5851 = vmatprep.subr.bf16.mxu0 0
      %5852 = vmatpush2.bf16.msra.mxu0 0
      %5853 = vmatprep.subr.bf16.mxu0 0
      %5854 = vmatpush2.bf16.msra.mxu0 0
      %5855 = vmatprep.subr.bf16.mxu0 0
      %5856 = vmatpush2.bf16.msra.mxu0 0
      %5857 = vmatprep.subr.bf16.mxu0 0
      %5858 = vmatpush2.bf16.msra.mxu0 0
      %5859 = vmatprep.subr.bf16.mxu0 0
      %5860 = vmatpush2.bf16.msra.mxu0 0
      %5861 = vmatprep.subr.bf16.mxu0 0
      %5862 = vmatpush2.bf16.msra.mxu0 0
      %5863 = vmatprep.subr.bf16.mxu0 0
      %5864 = vmatpush2.bf16.msra.mxu0 0
      %5865 = vmatprep.subr.bf16.mxu0 0
      %5866 = vmatpush2.bf16.msra.mxu0 0
      %5867 = vmatprep.mubr.bf16.mxu0 0
      %5868 = vmatmul.mubr.bf16.gmra.mxu0 %v5827
      %v5869 = vpop.f32.mrf.mxu0
      %v5870 = vadd.f32 0.0, %v5869
      %v5871 = vpop.f32.mrf.mxu0
      %v5872 = vpop.f32.mrf.mxu0
      %v5873 = vadd.f32 0.0, %v5872
      %v5874 = vpop.f32.mrf.mxu0
      %5875 = vmatprep.mubr.bf16.mxu0 0
      %5876 = vmatmul.mubr.bf16.gmra.mxu0 %v5830
      %v5877 = vpop.f32.mrf.mxu0
      %v5878 = vadd.f32 0.0, %v5877
      %v5879 = vpop.f32.mrf.mxu0
      %v5880 = vpop.f32.mrf.mxu0
      %v5881 = vadd.f32 0.0, %v5880
      %v5882 = vpop.f32.mrf.mxu0
      %5883 = vmatprep.mubr.bf16.mxu0 0
      %5884 = vmatmul.mubr.bf16.gmra.mxu0 %v5833
      %v5885 = vpop.f32.mrf.mxu0
      %v5886 = vadd.f32 0.0, %v5885
      %v5887 = vpop.f32.mrf.mxu0
      %v5888 = vpop.f32.mrf.mxu0
      %v5889 = vpop.f32.mrf.mxu0
      %5890 = vdwg.mxu0
      %v5891 = vadd.f32 %v5780, %v5870
      %v5892 = vadd.f32 %v5783, %v5873
      %v5893 = vadd.f32 %v5788, %v5878
      %v5894 = vadd.f32 %v5791, %v5881
      %v5895 = vadd.f32 %v5796, %v5886
      %v5896 = vmul.f32 %v5891, 0.5
      %v5897 = vmul.f32 %v5892, 0.5
      %v5898 = vmul.f32 %v5893, 0.5
      %v5899 = vmul.f32 %v5894, 0.5
      %v5900 = vmul.f32 %v5895, 0.5
      %v5901 = vmul.f32 %v5891, 0.044715
      %v5902 = vmul.f32 %v5892, 0.044715
      %v5903 = vmul.f32 %v5893, 0.044715
      %v5904 = vmul.f32 %v5894, 0.044715
      %v5905 = vmul.f32 %v5895, 0.044715
      %v5906 = vmul.f32 %v5901, %v5891
      %v5907 = vmul.f32 %v5902, %v5892
      %v5908 = vmul.f32 %v5903, %v5893
      %v5909 = vmul.f32 %v5904, %v5894
      %v5910 = vmul.f32 %v5905, %v5895
      %v5911 = vmul.f32 %v5906, %v5891
      %v5912 = vmul.f32 %v5907, %v5892
      %v5913 = vmul.f32 %v5908, %v5893
      %v5914 = vmul.f32 %v5909, %v5894
      %v5915 = vmul.f32 %v5910, %v5895
      %v5916 = vadd.f32 %v5891, %v5911
      %v5917 = vadd.f32 %v5892, %v5912
      %v5918 = vadd.f32 %v5893, %v5913
      %v5919 = vadd.f32 %v5894, %v5914
      %v5920 = vadd.f32 %v5895, %v5915
      %v5921 = vmul.f32 %v5916, 0.7978846
      %v5922 = vmul.f32 %v5917, 0.7978846
      %v5923 = vmul.f32 %v5918, 0.7978846
      %v5924 = vmul.f32 %v5919, 0.7978846
      %v5925 = vmul.f32 %v5920, 0.7978846
      %v5926 = vtanh.pop %v5921
      %v5927 = vtanh.pop %v5922
      %v5928 = vtanh.pop %v5923
      %v5929 = vtanh.pop %v5924
      %v5930 = vtanh.pop %v5925
      %v5931 = vadd.f32 %v5926, 1.0
      %v5932 = vadd.f32 %v5927, 1.0
      %v5933 = vadd.f32 %v5928, 1.0
      %v5934 = vadd.f32 %v5929, 1.0
      %v5935 = vadd.f32 %v5930, 1.0
      %v5936 = vmul.f32 %v5896, %v5931
      %v5937 = vmul.f32 %v5897, %v5932
      %v5938 = vmul.f32 %v5898, %v5933
      %v5939 = vmul.f32 %v5899, %v5934
      %v5940 = vmul.f32 %v5900, %v5935
      %5941 = vst.msk [vmem:[#allocation2] sm:$0xff] %vm1207, %v5936
      %5942 = vst.msk [vmem:[#allocation2 + $0x8] sm:$0xff] %vm1207, %v5937
      %5943 = vst.msk [vmem:[#allocation2 + $0x10] sm:$0xff] %vm1207, %v5938
      %5944 = vst.msk [vmem:[#allocation2 + $0x18] sm:$0xff] %vm1207, %v5939
      %5945 = vst.msk [vmem:[#allocation2 + $0x20] sm:$0x7f] %vm1365, %v5940
      %v5946 = vld [vmem:[#allocation2] ss:$2 sm:$0xff]
      %v5947 = vld [vmem:[%s2755] ss:$2 sm:$0xff]
      %v5948 = vld [vmem:[%s2757] ss:$2 sm:$0x7]
      %v5949 = vpack.c.bf16 %v5947, %v5946
      %v5950 = vpack.c.bf16 %v5948, %v5948
      %v5951 = vld [vmem:[%s3] sm:$0xf]
      %v5952 = vld [vmem:[%s3 + $0x4] sm:$0xf]
      %v5953 = vld [vmem:[%s3 + $0x8] sm:$0xf]
      %v5954 = vld [vmem:[%s3 + $0xc] sm:$0xf]
      %v5955 = vld [vmem:[%s2857] ss:$2 sm:$0xff]
      %v5956 = vld [vmem:[%s2859] ss:$2 sm:$0xff]
      %v5957 = vld [vmem:[%s2861] ss:$2 sm:$0x7]
      %v5958 = vpack.c.bf16 %v5956, %v5955
      %v5959 = vpack.c.bf16 %v5957, %v5957
      %s5960 = scalar_lea.vmem %s3, 16
      %v5961 = vld [vmem:[%s5960] sm:$0xf]
      %v5962 = vld [vmem:[%s5960 + $0x4] sm:$0xf]
      %v5963 = vld [vmem:[%s5960 + $0x8] sm:$0xf]
      %v5964 = vld [vmem:[%s5960 + $0xc] sm:$0xf]
      %v5969 = vunpack.c.l.b16 %v5961
      %v5970 = vunpack.c.l.b16 %v5962
      %v5971 = vunpack.c.l.b16 %v5963
      %v5972 = vunpack.c.l.b16 %v5964
      %v5973 = vpack.c.b16 %v5970, %v5969
      %v5974 = vpack.c.b16 %v5972, %v5971
      %v5978 = vsel %vm1207, %v5958, 0
      %v5981 = vsel %vm1207, %v5959, 0
      %5983 = vmatprep.subr.bf16.mxu0 0
      %5984 = vmatpush1.bf16.msra.mxu0 0
      %5985 = vmatprep.subr.bf16.mxu0 0
      %5986 = vmatpush1.bf16.msra.mxu0 0
      %5987 = vmatprep.subr.bf16.mxu0 0
      %5988 = vmatpush1.bf16.msra.mxu0 0
      %5989 = vmatprep.subr.bf16.mxu0 0
      %5990 = vmatpush1.bf16.msra.mxu0 0
      %5991 = vmatprep.subr.bf16.mxu0 0
      %5992 = vmatpush1.bf16.msra.mxu0 0
      %5993 = vmatprep.subr.bf16.mxu0 0
      %5994 = vmatpush1.bf16.msra.mxu0 0
      %5995 = vmatprep.subr.bf16.mxu0 0
      %5996 = vmatpush1.bf16.msra.mxu0 %v5974
      %5997 = vmatprep.subr.bf16.mxu0 0
      %5998 = vmatpush1.bf16.msra.mxu0 %v5973
      %5999 = vmatprep.subr.bf16.mxu0 0
      %6000 = vmatpush2.bf16.msra.mxu0 0
      %6001 = vmatprep.subr.bf16.mxu0 0
      %6002 = vmatpush2.bf16.msra.mxu0 0
      %6003 = vmatprep.subr.bf16.mxu0 0
      %6004 = vmatpush2.bf16.msra.mxu0 0
      %6005 = vmatprep.subr.bf16.mxu0 0
      %6006 = vmatpush2.bf16.msra.mxu0 0
      %6007 = vmatprep.subr.bf16.mxu0 0
      %6008 = vmatpush2.bf16.msra.mxu0 0
      %6009 = vmatprep.subr.bf16.mxu0 0
      %6010 = vmatpush2.bf16.msra.mxu0 0
      %6011 = vmatprep.subr.bf16.mxu0 0
      %6012 = vmatpush2.bf16.msra.mxu0 0
      %6013 = vmatprep.subr.bf16.mxu0 0
      %6014 = vmatpush2.bf16.msra.mxu0 0
      %6015 = vmatprep.mubr.bf16.mxu0 0
      %6016 = vmatmul.mubr.bf16.gmra.mxu0 %v5978
      %v6017 = vpop.f32.mrf.mxu0
      %v6018 = vadd.f32 0.0, %v6017
      %v6019 = vpop.f32.mrf.mxu0
      %v6020 = vpop.f32.mrf.mxu0
      %v6021 = vadd.f32 0.0, %v6020
      %v6022 = vpop.f32.mrf.mxu0
      %6023 = vmatprep.mubr.bf16.mxu0 0
      %6024 = vmatmul.mubr.bf16.gmra.mxu0 %v5981
      %v6025 = vpop.f32.mrf.mxu0
      %v6026 = vadd.f32 0.0, %v6025
      %v6027 = vpop.f32.mrf.mxu0
      %v6028 = vpop.f32.mrf.mxu0
      %v6029 = vpop.f32.mrf.mxu0
      %6030 = vdwg.mxu0
      %v6035 = vunpack.c.l.b16 %v5951
      %v6036 = vunpack.c.l.b16 %v5952
      %v6037 = vunpack.c.l.b16 %v5953
      %v6038 = vunpack.c.l.b16 %v5954
      %v6039 = vpack.c.b16 %v6036, %v6035
      %v6040 = vpack.c.b16 %v6038, %v6037
      %v6044 = vsel %vm1207, %v5949, 0
      %v6047 = vsel %vm1207, %v5950, 0
      %6049 = vmatprep.subr.bf16.mxu0 0
      %6050 = vmatpush1.bf16.msra.mxu0 0
      %6051 = vmatprep.subr.bf16.mxu0 0
      %6052 = vmatpush1.bf16.msra.mxu0 0
      %6053 = vmatprep.subr.bf16.mxu0 0
      %6054 = vmatpush1.bf16.msra.mxu0 0
      %6055 = vmatprep.subr.bf16.mxu0 0
      %6056 = vmatpush1.bf16.msra.mxu0 0
      %6057 = vmatprep.subr.bf16.mxu0 0
      %6058 = vmatpush1.bf16.msra.mxu0 0
      %6059 = vmatprep.subr.bf16.mxu0 0
      %6060 = vmatpush1.bf16.msra.mxu0 0
      %6061 = vmatprep.subr.bf16.mxu0 0
      %6062 = vmatpush1.bf16.msra.mxu0 %v6040
      %6063 = vmatprep.subr.bf16.mxu0 0
      %6064 = vmatpush1.bf16.msra.mxu0 %v6039
      %6065 = vmatprep.subr.bf16.mxu0 0
      %6066 = vmatpush2.bf16.msra.mxu0 0
      %6067 = vmatprep.subr.bf16.mxu0 0
      %6068 = vmatpush2.bf16.msra.mxu0 0
      %6069 = vmatprep.subr.bf16.mxu0 0
      %6070 = vmatpush2.bf16.msra.mxu0 0
      %6071 = vmatprep.subr.bf16.mxu0 0
      %6072 = vmatpush2.bf16.msra.mxu0 0
      %6073 = vmatprep.subr.bf16.mxu0 0
      %6074 = vmatpush2.bf16.msra.mxu0 0
      %6075 = vmatprep.subr.bf16.mxu0 0
      %6076 = vmatpush2.bf16.msra.mxu0 0
      %6077 = vmatprep.subr.bf16.mxu0 0
      %6078 = vmatpush2.bf16.msra.mxu0 0
      %6079 = vmatprep.subr.bf16.mxu0 0
      %6080 = vmatpush2.bf16.msra.mxu0 0
      %6081 = vmatprep.mubr.bf16.mxu0 0
      %6082 = vmatmul.mubr.bf16.gmra.mxu0 %v6044
      %v6083 = vpop.f32.mrf.mxu0
      %v6084 = vadd.f32 %v6018, %v6083
      %v6085 = vpop.f32.mrf.mxu0
      %v6086 = vpop.f32.mrf.mxu0
      %v6087 = vadd.f32 %v6021, %v6086
      %v6088 = vpop.f32.mrf.mxu0
      %6089 = vmatprep.mubr.bf16.mxu0 0
      %6090 = vmatmul.mubr.bf16.gmra.mxu0 %v6047
      %v6091 = vpop.f32.mrf.mxu0
      %v6092 = vadd.f32 %v6026, %v6091
      %v6093 = vpop.f32.mrf.mxu0
      %v6094 = vpop.f32.mrf.mxu0
      %v6095 = vpop.f32.mrf.mxu0
      %6096 = vdwg.mxu0
      %v6097 = vmul.f32 %v6084, 0.5
      %v6098 = vmul.f32 %v6087, 0.5
      %v6099 = vmul.f32 %v6092, 0.5
      %v6100 = vmul.f32 %v6084, 0.044715
      %v6101 = vmul.f32 %v6087, 0.044715
      %v6102 = vmul.f32 %v6092, 0.044715
      %v6103 = vmul.f32 %v6100, %v6084
      %v6104 = vmul.f32 %v6101, %v6087
      %v6105 = vmul.f32 %v6102, %v6092
      %v6106 = vmul.f32 %v6103, %v6084
      %v6107 = vmul.f32 %v6104, %v6087
      %v6108 = vmul.f32 %v6105, %v6092
      %v6109 = vadd.f32 %v6084, %v6106
      %v6110 = vadd.f32 %v6087, %v6107
      %v6111 = vadd.f32 %v6092, %v6108
      %v6112 = vmul.f32 %v6109, 0.7978846
      %v6113 = vmul.f32 %v6110, 0.7978846
      %v6114 = vmul.f32 %v6111, 0.7978846
      %v6115 = vtanh.pop %v6112
      %v6116 = vtanh.pop %v6113
      %v6117 = vtanh.pop %v6114
      %v6118 = vadd.f32 %v6115, 1.0
      %v6119 = vadd.f32 %v6116, 1.0
      %v6120 = vadd.f32 %v6117, 1.0
      %v6121 = vmul.f32 %v6097, %v6118
      %v6122 = vmul.f32 %v6098, %v6119
      %v6123 = vmul.f32 %v6099, %v6120
      %6124 = vst.msk [vmem:[#allocation3] sm:$0xff] %vm1207, %v6121
      %6125 = vst.msk [vmem:[#allocation3 + $0x8] sm:$0xff] %vm1207, %v6122
      %vm6126 = vcmask 256000
      %6127 = vst.msk [vmem:[#allocation3 + $0x10] sm:$0x7] %vm6126, %v6123
      %v6128 = vld [vmem:[#allocation3] ss:$2 sm:$0xff]
      %v6129 = vld [vmem:[%s4303] ss:$2 sm:$0x1]
      %v6130 = vpack.c.bf16 %v6129, %v6128
      %s6131 = scalar_lea.vmem %s3, 32
      %v6132 = vld [vmem:[%s6131] sm:$0xf]
      %v6133 = vld [vmem:[%s6131 + $0x4] sm:$0xf]
      %v6134 = vld [vmem:[%s6131 + $0x8] sm:$0xf]
      %v6135 = vld [vmem:[%s6131 + $0xc] sm:$0xf]
      %v6136 = vld [vmem:[%s4356] ss:$2 sm:$0xff]
      %v6137 = vld [vmem:[%s4358] ss:$2 sm:$0x1]
      %v6138 = vpack.c.bf16 %v6137, %v6136
      %s6139 = scalar_lea.vmem %s3, 48
      %v6140 = vld [vmem:[%s6139] sm:$0xf]
      %v6141 = vld [vmem:[%s6139 + $0x4] sm:$0xf]
      %v6142 = vld [vmem:[%s6139 + $0x8] sm:$0xf]
      %v6143 = vld [vmem:[%s6139 + $0xc] sm:$0xf]
      %v6148 = vunpack.c.l.b16 %v6140
      %v6149 = vunpack.c.l.b16 %v6141
      %v6150 = vunpack.c.l.b16 %v6142
      %v6151 = vunpack.c.l.b16 %v6143
      %v6152 = vpack.c.b16 %v6149, %v6148
      %v6153 = vpack.c.b16 %v6151, %v6150
      %v6157 = vsel %vm1207, %v6138, 0
      %6159 = vmatprep.subr.bf16.mxu0 0
      %6160 = vmatpush1.bf16.msra.mxu0 0
      %6161 = vmatprep.subr.bf16.mxu0 0
      %6162 = vmatpush1.bf16.msra.mxu0 0
      %6163 = vmatprep.subr.bf16.mxu0 0
      %6164 = vmatpush1.bf16.msra.mxu0 0
      %6165 = vmatprep.subr.bf16.mxu0 0
      %6166 = vmatpush1.bf16.msra.mxu0 0
      %6167 = vmatprep.subr.bf16.mxu0 0
      %6168 = vmatpush1.bf16.msra.mxu0 0
      %6169 = vmatprep.subr.bf16.mxu0 0
      %6170 = vmatpush1.bf16.msra.mxu0 0
      %6171 = vmatprep.subr.bf16.mxu0 0
      %6172 = vmatpush1.bf16.msra.mxu0 %v6153
      %6173 = vmatprep.subr.bf16.mxu0 0
      %6174 = vmatpush1.bf16.msra.mxu0 %v6152
      %6175 = vmatprep.subr.bf16.mxu0 0
      %6176 = vmatpush2.bf16.msra.mxu0 0
      %6177 = vmatprep.subr.bf16.mxu0 0
      %6178 = vmatpush2.bf16.msra.mxu0 0
      %6179 = vmatprep.subr.bf16.mxu0 0
      %6180 = vmatpush2.bf16.msra.mxu0 0
      %6181 = vmatprep.subr.bf16.mxu0 0
      %6182 = vmatpush2.bf16.msra.mxu0 0
      %6183 = vmatprep.subr.bf16.mxu0 0
      %6184 = vmatpush2.bf16.msra.mxu0 0
      %6185 = vmatprep.subr.bf16.mxu0 0
      %6186 = vmatpush2.bf16.msra.mxu0 0
      %6187 = vmatprep.subr.bf16.mxu0 0
      %6188 = vmatpush2.bf16.msra.mxu0 0
      %6189 = vmatprep.subr.bf16.mxu0 0
      %6190 = vmatpush2.bf16.msra.mxu0 0
      %6191 = vmatprep.mubr.bf16.mxu0 0
      %6192 = vmatmul.mubr.bf16.gmra.mxu0 %v6157
      %v6193 = vpop.f32.mrf.mxu0
      %v6194 = vadd.f32 0.0, %v6193
      %v6195 = vpop.f32.mrf.mxu0
      %v6196 = vpop.f32.mrf.mxu0
      %v6197 = vadd.f32 0.0, %v6196
      %v6198 = vpop.f32.mrf.mxu0
      %6199 = vdwg.mxu0
      %v6204 = vunpack.c.l.b16 %v6132
      %v6205 = vunpack.c.l.b16 %v6133
      %v6206 = vunpack.c.l.b16 %v6134
      %v6207 = vunpack.c.l.b16 %v6135
      %v6208 = vpack.c.b16 %v6205, %v6204
      %v6209 = vpack.c.b16 %v6207, %v6206
      %v6213 = vsel %vm1207, %v6130, 0
      %6215 = vmatprep.subr.bf16.mxu0 0
      %6216 = vmatpush1.bf16.msra.mxu0 0
      %6217 = vmatprep.subr.bf16.mxu0 0
      %6218 = vmatpush1.bf16.msra.mxu0 0
      %6219 = vmatprep.subr.bf16.mxu0 0
      %6220 = vmatpush1.bf16.msra.mxu0 0
      %6221 = vmatprep.subr.bf16.mxu0 0
      %6222 = vmatpush1.bf16.msra.mxu0 0
      %6223 = vmatprep.subr.bf16.mxu0 0
      %6224 = vmatpush1.bf16.msra.mxu0 0
      %6225 = vmatprep.subr.bf16.mxu0 0
      %6226 = vmatpush1.bf16.msra.mxu0 0
      %6227 = vmatprep.subr.bf16.mxu0 0
      %6228 = vmatpush1.bf16.msra.mxu0 %v6209
      %6229 = vmatprep.subr.bf16.mxu0 0
      %6230 = vmatpush1.bf16.msra.mxu0 %v6208
      %6231 = vmatprep.subr.bf16.mxu0 0
      %6232 = vmatpush2.bf16.msra.mxu0 0
      %6233 = vmatprep.subr.bf16.mxu0 0
      %6234 = vmatpush2.bf16.msra.mxu0 0
      %6235 = vmatprep.subr.bf16.mxu0 0
      %6236 = vmatpush2.bf16.msra.mxu0 0
      %6237 = vmatprep.subr.bf16.mxu0 0
      %6238 = vmatpush2.bf16.msra.mxu0 0
      %6239 = vmatprep.subr.bf16.mxu0 0
      %6240 = vmatpush2.bf16.msra.mxu0 0
      %6241 = vmatprep.subr.bf16.mxu0 0
      %6242 = vmatpush2.bf16.msra.mxu0 0
      %6243 = vmatprep.subr.bf16.mxu0 0
      %6244 = vmatpush2.bf16.msra.mxu0 0
      %6245 = vmatprep.subr.bf16.mxu0 0
      %6246 = vmatpush2.bf16.msra.mxu0 0
      %6247 = vmatprep.mubr.bf16.mxu0 0
      %6248 = vmatmul.mubr.bf16.gmra.mxu0 %v6213
      %v6249 = vpop.f32.mrf.mxu0
      %v6250 = vadd.f32 %v6194, %v6249
      %v6251 = vpop.f32.mrf.mxu0
      %v6252 = vpop.f32.mrf.mxu0
      %v6253 = vadd.f32 %v6197, %v6252
      %v6254 = vpop.f32.mrf.mxu0
      %6255 = vdwg.mxu0
      %v6256 = vmul.f32 %v6250, 0.5
      %v6257 = vmul.f32 %v6253, 0.5
      %v6258 = vmul.f32 %v6250, 0.044715
      %v6259 = vmul.f32 %v6253, 0.044715
      %v6260 = vmul.f32 %v6258, %v6250
      %v6261 = vmul.f32 %v6259, %v6253
      %v6262 = vmul.f32 %v6260, %v6250
      %v6263 = vmul.f32 %v6261, %v6253
      %v6264 = vadd.f32 %v6250, %v6262
      %v6265 = vadd.f32 %v6253, %v6263
      %v6266 = vmul.f32 %v6264, 0.7978846
      %v6267 = vmul.f32 %v6265, 0.7978846
      %v6268 = vtanh.pop %v6266
      %v6269 = vtanh.pop %v6267
      %v6270 = vadd.f32 %v6268, 1.0
      %v6271 = vadd.f32 %v6269, 1.0
      %v6272 = vmul.f32 %v6256, %v6270
      %v6273 = vmul.f32 %v6257, %v6271
      %v6274 = vld [vmem:[%s4 + $0x2] sm:$0x1]
      %v6275 = vld [vmem:[%s4 + $0x3] sm:$0x1]
      %v6276 = vsel %vm1207, %v6272, 0.0
      %6277 = vadd.xlane.f32.xlu0 %v6276
      %v6278 = vpop.xlane.xlu0 %6277
      %vm6279 = vcmask 253952
      %v6280 = vsel %vm6279, %v6273, 0.0
      %6281 = vadd.xlane.f32.xlu0 %v6280
      %v6282 = vpop.xlane.xlu0 %6281
      %v6283 = vrcp.pop 32.0
      %v6284 = vmul.f32 %v6278, %v6283
      %v6285 = vmul.f32 %v6282, %v6283
      %v6286 = vsub.f32 %v6272, %v6284
      %v6287 = vsub.f32 %v6273, %v6285
      %v6288 = vmul.f32 %v6286, %v6286
      %v6289 = vmul.f32 %v6287, %v6287
      %v6290 = vsel %vm1207, %v6288, 0.0
      %6291 = vadd.xlane.f32.xlu0 %v6290
      %v6292 = vpop.xlane.xlu0 %6291
      %v6293 = vsel %vm6279, %v6289, 0.0
      %6294 = vadd.xlane.f32.xlu0 %v6293
      %v6295 = vpop.xlane.xlu0 %6294
      %v6296 = vmul.f32 %v6292, %v6283
      %v6297 = vmul.f32 %v6295, %v6283
      %v6298 = vadd.f32 %v6296, 1e-05
      %v6299 = vadd.f32 %v6297, 1e-05
      %v6300 = vrsqrt.pop %v6298
      %v6301 = vrsqrt.pop %v6299
      %v6302 = vmul.f32 %v6286, %v6300
      %v6303 = vmul.f32 %v6287, %v6301
      %v6304 = vlaneseq
      %v6305 = vshrl.u32 %v6304, 7
      %v6306 = vsub.s32 0, %v6305
      %v6307 = vrot.slane %v6274, %v6306
      %v6308 = vmul.f32 %v6302, %v6307
      %v6309 = vmul.f32 %v6303, %v6307
      %v6310 = vlaneseq
      %v6311 = vshrl.u32 %v6310, 7
      %v6312 = vsub.s32 0, %v6311
      %v6313 = vrot.slane %v6275, %v6312
      %v6314 = vadd.f32 %v6308, %v6313
      %v6315 = vadd.f32 %v6309, %v6313
      %v6316 = vpack.c.bf16 %v6315, %v6314
      %v6317 = vld [vmem:[%s5] sm:$0xf]
      %v6318 = vld [vmem:[%s5 + $0x4] sm:$0xf]
      %v6319 = vld [vmem:[%s5 + $0x8] sm:$0xf]
      %v6320 = vld [vmem:[%s5 + $0xc] sm:$0xf]
      %v6321 = vld [vmem:[%s4 + $0x4] sm:$0x1]
      %v6322 = vlaneseq
      %v6323 = vshrl.u32 %v6322, 7
      %v6324 = vsub.s32 0, %v6323
      %v6325 = vrot.slane %v6321, %v6324
      %v6330 = vunpack.c.l.b16 %v6317
      %v6331 = vunpack.c.l.b16 %v6318
      %v6332 = vunpack.c.l.b16 %v6319
      %v6333 = vunpack.c.l.b16 %v6320
      %v6334 = vpack.c.b16 %v6331, %v6330
      %v6335 = vpack.c.b16 %v6333, %v6332
      %v6339 = vsel %vm1207, %v6316, 0
      %6341 = vmatprep.subr.bf16.mxu0 0
      %6342 = vmatpush1.bf16.msra.mxu0 0
      %6343 = vmatprep.subr.bf16.mxu0 0
      %6344 = vmatpush1.bf16.msra.mxu0 0
      %6345 = vmatprep.subr.bf16.mxu0 0
      %6346 = vmatpush1.bf16.msra.mxu0 0
      %6347 = vmatprep.subr.bf16.mxu0 0
      %6348 = vmatpush1.bf16.msra.mxu0 0
      %6349 = vmatprep.subr.bf16.mxu0 0
      %6350 = vmatpush1.bf16.msra.mxu0 0
      %6351 = vmatprep.subr.bf16.mxu0 0
      %6352 = vmatpush1.bf16.msra.mxu0 0
      %6353 = vmatprep.subr.bf16.mxu0 0
      %6354 = vmatpush1.bf16.msra.mxu0 %v6335
      %6355 = vmatprep.subr.bf16.mxu0 0
      %6356 = vmatpush1.bf16.msra.mxu0 %v6334
      %6357 = vmatprep.subr.bf16.mxu0 0
      %6358 = vmatpush2.bf16.msra.mxu0 0
      %6359 = vmatprep.subr.bf16.mxu0 0
      %6360 = vmatpush2.bf16.msra.mxu0 0
      %6361 = vmatprep.subr.bf16.mxu0 0
      %6362 = vmatpush2.bf16.msra.mxu0 0
      %6363 = vmatprep.subr.bf16.mxu0 0
      %6364 = vmatpush2.bf16.msra.mxu0 0
      %6365 = vmatprep.subr.bf16.mxu0 0
      %6366 = vmatpush2.bf16.msra.mxu0 0
      %6367 = vmatprep.subr.bf16.mxu0 0
      %6368 = vmatpush2.bf16.msra.mxu0 0
      %6369 = vmatprep.subr.bf16.mxu0 0
      %6370 = vmatpush2.bf16.msra.mxu0 0
      %6371 = vmatprep.subr.bf16.mxu0 0
      %6372 = vmatpush2.bf16.msra.mxu0 0
      %6373 = vmatprep.mubr.bf16.mxu0 0
      %6374 = vmatmul.mubr.bf16.gmra.mxu0 %v6339
      %v6375 = vpop.f32.mrf.mxu0
      %v6376 = vadd.f32 %v6325, %v6375
      %v6377 = vpop.f32.mrf.mxu0
      %v6378 = vpop.f32.mrf.mxu0
      %v6379 = vadd.f32 %v6325, %v6378
      %v6380 = vpop.f32.mrf.mxu0
      %6381 = vdwg.mxu0
      %vm6384 = vcmask 1042432
      %v6385 = vrot.slane %v6376, 5
      %v6386 = vrot.slane %v6379, 5
      %v6387 = vsel %vm6384, %v6385, %v6386
      %v6390 = vsel %vm6384, 0.0, %v6385
      %vm6391 = vcmask 1043456
      %v6392 = vsel %vm6391, %v6387, 0.0
      %v6393 = vpack.c.bf16 %v6392, %v6390
      %v6394 = vld [vmem:[%s6] sm:$0xf]
      %v6395 = vld [vmem:[%s6 + $0x4] sm:$0xf]
      %v6396 = vld [vmem:[%s6 + $0x8] sm:$0xf]
      %v6397 = vld [vmem:[%s6 + $0xc] sm:$0xf]
      %s6398 = scalar_lea.vmem %s6, 16
      %v6399 = vld [vmem:[%s6398] sm:$0xf]
      %v6400 = vld [vmem:[%s6398 + $0x4] sm:$0xf]
      %v6401 = vld [vmem:[%s6398 + $0x8] sm:$0xf]
      %v6402 = vld [vmem:[%s6398 + $0xc] sm:$0xf]
      %v6404 = vshrl.u32 %v6393, 16
      %v6406 = vshll.u32 %v6393, 16
      %v6408 = vrot.slane %v6406, 1
      %v6409 = vor.u32 %v6404, %v6408
      %v6414 = vunpack.c.l.b16 %v6399
      %v6415 = vunpack.c.l.b16 %v6400
      %v6416 = vunpack.c.l.b16 %v6401
      %v6417 = vunpack.c.l.b16 %v6402
      %v6418 = vpack.c.b16 %v6415, %v6414
      %v6419 = vpack.c.b16 %v6417, %v6416
      %v6423 = vsel %vm1207, %v6409, 0
      %6425 = vmatprep.subr.bf16.mxu0 0
      %6426 = vmatpush1.bf16.msra.mxu0 0
      %6427 = vmatprep.subr.bf16.mxu0 0
      %6428 = vmatpush1.bf16.msra.mxu0 0
      %6429 = vmatprep.subr.bf16.mxu0 0
      %6430 = vmatpush1.bf16.msra.mxu0 0
      %6431 = vmatprep.subr.bf16.mxu0 0
      %6432 = vmatpush1.bf16.msra.mxu0 0
      %6433 = vmatprep.subr.bf16.mxu0 0
      %6434 = vmatpush1.bf16.msra.mxu0 0
      %6435 = vmatprep.subr.bf16.mxu0 0
      %6436 = vmatpush1.bf16.msra.mxu0 0
      %6437 = vmatprep.subr.bf16.mxu0 0
      %6438 = vmatpush1.bf16.msra.mxu0 %v6419
      %6439 = vmatprep.subr.bf16.mxu0 0
      %6440 = vmatpush1.bf16.msra.mxu0 %v6418
      %6441 = vmatprep.subr.bf16.mxu0 0
      %6442 = vmatpush2.bf16.msra.mxu0 0
      %6443 = vmatprep.subr.bf16.mxu0 0
      %6444 = vmatpush2.bf16.msra.mxu0 0
      %6445 = vmatprep.subr.bf16.mxu0 0
      %6446 = vmatpush2.bf16.msra.mxu0 0
      %6447 = vmatprep.subr.bf16.mxu0 0
      %6448 = vmatpush2.bf16.msra.mxu0 0
      %6449 = vmatprep.subr.bf16.mxu0 0
      %6450 = vmatpush2.bf16.msra.mxu0 0
      %6451 = vmatprep.subr.bf16.mxu0 0
      %6452 = vmatpush2.bf16.msra.mxu0 0
      %6453 = vmatprep.subr.bf16.mxu0 0
      %6454 = vmatpush2.bf16.msra.mxu0 0
      %6455 = vmatprep.subr.bf16.mxu0 0
      %6456 = vmatpush2.bf16.msra.mxu0 0
      %6457 = vmatprep.mubr.bf16.mxu0 0
      %6458 = vmatmul.mubr.bf16.gmra.mxu0 %v6423
      %v6459 = vpop.f32.mrf.mxu0
      %v6460 = vadd.f32 0.0, %v6459
      %v6461 = vpop.f32.mrf.mxu0
      %v6462 = vpop.f32.mrf.mxu0
      %v6463 = vadd.f32 0.0, %v6462
      %v6464 = vpop.f32.mrf.mxu0
      %6465 = vdwg.mxu0
      %v6470 = vunpack.c.l.b16 %v6394
      %v6471 = vunpack.c.l.b16 %v6395
      %v6472 = vunpack.c.l.b16 %v6396
      %v6473 = vunpack.c.l.b16 %v6397
      %v6474 = vpack.c.b16 %v6471, %v6470
      %v6475 = vpack.c.b16 %v6473, %v6472
      %v6478 = vsel %vm1207, %v6393, 0
      %6480 = vmatprep.subr.bf16.mxu0 0
      %6481 = vmatpush1.bf16.msra.mxu0 0
      %6482 = vmatprep.subr.bf16.mxu0 0
      %6483 = vmatpush1.bf16.msra.mxu0 0
      %6484 = vmatprep.subr.bf16.mxu0 0
      %6485 = vmatpush1.bf16.msra.mxu0 0
      %6486 = vmatprep.subr.bf16.mxu0 0
      %6487 = vmatpush1.bf16.msra.mxu0 0
      %6488 = vmatprep.subr.bf16.mxu0 0
      %6489 = vmatpush1.bf16.msra.mxu0 0
      %6490 = vmatprep.subr.bf16.mxu0 0
      %6491 = vmatpush1.bf16.msra.mxu0 0
      %6492 = vmatprep.subr.bf16.mxu0 0
      %6493 = vmatpush1.bf16.msra.mxu0 %v6475
      %6494 = vmatprep.subr.bf16.mxu0 0
      %6495 = vmatpush1.bf16.msra.mxu0 %v6474
      %6496 = vmatprep.subr.bf16.mxu0 0
      %6497 = vmatpush2.bf16.msra.mxu0 0
      %6498 = vmatprep.subr.bf16.mxu0 0
      %6499 = vmatpush2.bf16.msra.mxu0 0
      %6500 = vmatprep.subr.bf16.mxu0 0
      %6501 = vmatpush2.bf16.msra.mxu0 0
      %6502 = vmatprep.subr.bf16.mxu0 0
      %6503 = vmatpush2.bf16.msra.mxu0 0
      %6504 = vmatprep.subr.bf16.mxu0 0
      %6505 = vmatpush2.bf16.msra.mxu0 0
      %6506 = vmatprep.subr.bf16.mxu0 0
      %6507 = vmatpush2.bf16.msra.mxu0 0
      %6508 = vmatprep.subr.bf16.mxu0 0
      %6509 = vmatpush2.bf16.msra.mxu0 0
      %6510 = vmatprep.subr.bf16.mxu0 0
      %6511 = vmatpush2.bf16.msra.mxu0 0
      %6512 = vmatprep.mubr.bf16.mxu0 0
      %6513 = vmatmul.mubr.bf16.gmra.mxu0 %v6478
      %v6514 = vpop.f32.mrf.mxu0
      %v6515 = vadd.f32 %v6460, %v6514
      %v6516 = vpop.f32.mrf.mxu0
      %v6517 = vpop.f32.mrf.mxu0
      %v6518 = vadd.f32 %v6463, %v6517
      %v6519 = vpop.f32.mrf.mxu0
      %6520 = vdwg.mxu0
      %s6521 = scalar_lea.vmem %s6, 32
      %v6522 = vld [vmem:[%s6521] sm:$0xf]
      %v6523 = vld [vmem:[%s6521 + $0x4] sm:$0xf]
      %v6524 = vld [vmem:[%s6521 + $0x8] sm:$0xf]
      %v6525 = vld [vmem:[%s6521 + $0xc] sm:$0xf]
      %v6527 = vrot.slane %v6393, 1
      %v6532 = vunpack.c.l.b16 %v6522
      %v6533 = vunpack.c.l.b16 %v6523
      %v6534 = vunpack.c.l.b16 %v6524
      %v6535 = vunpack.c.l.b16 %v6525
      %v6536 = vpack.c.b16 %v6533, %v6532
      %v6537 = vpack.c.b16 %v6535, %v6534
      %v6541 = vsel %vm1207, %v6527, 0
      %6543 = vmatprep.subr.bf16.mxu0 0
      %6544 = vmatpush1.bf16.msra.mxu0 0
      %6545 = vmatprep.subr.bf16.mxu0 0
      %6546 = vmatpush1.bf16.msra.mxu0 0
      %6547 = vmatprep.subr.bf16.mxu0 0
      %6548 = vmatpush1.bf16.msra.mxu0 0
      %6549 = vmatprep.subr.bf16.mxu0 0
      %6550 = vmatpush1.bf16.msra.mxu0 0
      %6551 = vmatprep.subr.bf16.mxu0 0
      %6552 = vmatpush1.bf16.msra.mxu0 0
      %6553 = vmatprep.subr.bf16.mxu0 0
      %6554 = vmatpush1.bf16.msra.mxu0 0
      %6555 = vmatprep.subr.bf16.mxu0 0
      %6556 = vmatpush1.bf16.msra.mxu0 %v6537
      %6557 = vmatprep.subr.bf16.mxu0 0
      %6558 = vmatpush1.bf16.msra.mxu0 %v6536
      %6559 = vmatprep.subr.bf16.mxu0 0
      %6560 = vmatpush2.bf16.msra.mxu0 0
      %6561 = vmatprep.subr.bf16.mxu0 0
      %6562 = vmatpush2.bf16.msra.mxu0 0
      %6563 = vmatprep.subr.bf16.mxu0 0
      %6564 = vmatpush2.bf16.msra.mxu0 0
      %6565 = vmatprep.subr.bf16.mxu0 0
      %6566 = vmatpush2.bf16.msra.mxu0 0
      %6567 = vmatprep.subr.bf16.mxu0 0
      %6568 = vmatpush2.bf16.msra.mxu0 0
      %6569 = vmatprep.subr.bf16.mxu0 0
      %6570 = vmatpush2.bf16.msra.mxu0 0
      %6571 = vmatprep.subr.bf16.mxu0 0
      %6572 = vmatpush2.bf16.msra.mxu0 0
      %6573 = vmatprep.subr.bf16.mxu0 0
      %6574 = vmatpush2.bf16.msra.mxu0 0
      %6575 = vmatprep.mubr.bf16.mxu0 0
      %6576 = vmatmul.mubr.bf16.gmra.mxu0 %v6541
      %v6577 = vpop.f32.mrf.mxu0
      %v6578 = vadd.f32 0.0, %v6577
      %v6579 = vpop.f32.mrf.mxu0
      %v6580 = vpop.f32.mrf.mxu0
      %v6581 = vadd.f32 0.0, %v6580
      %v6582 = vpop.f32.mrf.mxu0
      %6583 = vdwg.mxu0
      %v6584 = vadd.f32 %v6515, %v6578
      %v6585 = vadd.f32 %v6518, %v6581
      %s6586 = scalar_lea.vmem %s6, 48
      %v6587 = vld [vmem:[%s6586] sm:$0xf]
      %v6588 = vld [vmem:[%s6586 + $0x4] sm:$0xf]
      %v6589 = vld [vmem:[%s6586 + $0x8] sm:$0xf]
      %v6590 = vld [vmem:[%s6586 + $0xc] sm:$0xf]
      %v6591 = vrot.slane %v6404, 1
      %v6592 = vrot.slane %v6406, 2
      %v6593 = vor.u32 %v6591, %v6592
      %v6598 = vunpack.c.l.b16 %v6587
      %v6599 = vunpack.c.l.b16 %v6588
      %v6600 = vunpack.c.l.b16 %v6589
      %v6601 = vunpack.c.l.b16 %v6590
      %v6602 = vpack.c.b16 %v6599, %v6598
      %v6603 = vpack.c.b16 %v6601, %v6600
      %v6607 = vsel %vm1207, %v6593, 0
      %6609 = vmatprep.subr.bf16.mxu0 0
      %6610 = vmatpush1.bf16.msra.mxu0 0
      %6611 = vmatprep.subr.bf16.mxu0 0
      %6612 = vmatpush1.bf16.msra.mxu0 0
      %6613 = vmatprep.subr.bf16.mxu0 0
      %6614 = vmatpush1.bf16.msra.mxu0 0
      %6615 = vmatprep.subr.bf16.mxu0 0
      %6616 = vmatpush1.bf16.msra.mxu0 0
      %6617 = vmatprep.subr.bf16.mxu0 0
      %6618 = vmatpush1.bf16.msra.mxu0 0
      %6619 = vmatprep.subr.bf16.mxu0 0
      %6620 = vmatpush1.bf16.msra.mxu0 0
      %6621 = vmatprep.subr.bf16.mxu0 0
      %6622 = vmatpush1.bf16.msra.mxu0 %v6603
      %6623 = vmatprep.subr.bf16.mxu0 0
      %6624 = vmatpush1.bf16.msra.mxu0 %v6602
      %6625 = vmatprep.subr.bf16.mxu0 0
      %6626 = vmatpush2.bf16.msra.mxu0 0
      %6627 = vmatprep.subr.bf16.mxu0 0
      %6628 = vmatpush2.bf16.msra.mxu0 0
      %6629 = vmatprep.subr.bf16.mxu0 0
      %6630 = vmatpush2.bf16.msra.mxu0 0
      %6631 = vmatprep.subr.bf16.mxu0 0
      %6632 = vmatpush2.bf16.msra.mxu0 0
      %6633 = vmatprep.subr.bf16.mxu0 0
      %6634 = vmatpush2.bf16.msra.mxu0 0
      %6635 = vmatprep.subr.bf16.mxu0 0
      %6636 = vmatpush2.bf16.msra.mxu0 0
      %6637 = vmatprep.subr.bf16.mxu0 0
      %6638 = vmatpush2.bf16.msra.mxu0 0
      %6639 = vmatprep.subr.bf16.mxu0 0
      %6640 = vmatpush2.bf16.msra.mxu0 0
      %6641 = vmatprep.mubr.bf16.mxu0 0
      %6642 = vmatmul.mubr.bf16.gmra.mxu0 %v6607
      %v6643 = vpop.f32.mrf.mxu0
      %v6644 = vadd.f32 0.0, %v6643
      %v6645 = vpop.f32.mrf.mxu0
      %v6646 = vpop.f32.mrf.mxu0
      %v6647 = vadd.f32 0.0, %v6646
      %v6648 = vpop.f32.mrf.mxu0
      %6649 = vdwg.mxu0
      %v6650 = vadd.f32 %v6584, %v6644
      %v6651 = vadd.f32 %v6585, %v6647
      %s6652 = scalar_lea.vmem %s6, 64
      %v6653 = vld [vmem:[%s6652] sm:$0xf]
      %v6654 = vld [vmem:[%s6652 + $0x4] sm:$0xf]
      %v6655 = vld [vmem:[%s6652 + $0x8] sm:$0xf]
      %v6656 = vld [vmem:[%s6652 + $0xc] sm:$0xf]
      %v6657 = vrot.slane %v6393, 2
      %v6662 = vunpack.c.l.b16 %v6653
      %v6663 = vunpack.c.l.b16 %v6654
      %v6664 = vunpack.c.l.b16 %v6655
      %v6665 = vunpack.c.l.b16 %v6656
      %v6666 = vpack.c.b16 %v6663, %v6662
      %v6667 = vpack.c.b16 %v6665, %v6664
      %v6671 = vsel %vm1207, %v6657, 0
      %6673 = vmatprep.subr.bf16.mxu0 0
      %6674 = vmatpush1.bf16.msra.mxu0 0
      %6675 = vmatprep.subr.bf16.mxu0 0
      %6676 = vmatpush1.bf16.msra.mxu0 0
      %6677 = vmatprep.subr.bf16.mxu0 0
      %6678 = vmatpush1.bf16.msra.mxu0 0
      %6679 = vmatprep.subr.bf16.mxu0 0
      %6680 = vmatpush1.bf16.msra.mxu0 0
      %6681 = vmatprep.subr.bf16.mxu0 0
      %6682 = vmatpush1.bf16.msra.mxu0 0
      %6683 = vmatprep.subr.bf16.mxu0 0
      %6684 = vmatpush1.bf16.msra.mxu0 0
      %6685 = vmatprep.subr.bf16.mxu0 0
      %6686 = vmatpush1.bf16.msra.mxu0 %v6667
      %6687 = vmatprep.subr.bf16.mxu0 0
      %6688 = vmatpush1.bf16.msra.mxu0 %v6666
      %6689 = vmatprep.subr.bf16.mxu0 0
      %6690 = vmatpush2.bf16.msra.mxu0 0
      %6691 = vmatprep.subr.bf16.mxu0 0
      %6692 = vmatpush2.bf16.msra.mxu0 0
      %6693 = vmatprep.subr.bf16.mxu0 0
      %6694 = vmatpush2.bf16.msra.mxu0 0
      %6695 = vmatprep.subr.bf16.mxu0 0
      %6696 = vmatpush2.bf16.msra.mxu0 0
      %6697 = vmatprep.subr.bf16.mxu0 0
      %6698 = vmatpush2.bf16.msra.mxu0 0
      %6699 = vmatprep.subr.bf16.mxu0 0
      %6700 = vmatpush2.bf16.msra.mxu0 0
      %6701 = vmatprep.subr.bf16.mxu0 0
      %6702 = vmatpush2.bf16.msra.mxu0 0
      %6703 = vmatprep.subr.bf16.mxu0 0
      %6704 = vmatpush2.bf16.msra.mxu0 0
      %6705 = vmatprep.mubr.bf16.mxu0 0
      %6706 = vmatmul.mubr.bf16.gmra.mxu0 %v6671
      %v6707 = vpop.f32.mrf.mxu0
      %v6708 = vadd.f32 0.0, %v6707
      %v6709 = vpop.f32.mrf.mxu0
      %v6710 = vpop.f32.mrf.mxu0
      %v6711 = vadd.f32 0.0, %v6710
      %v6712 = vpop.f32.mrf.mxu0
      %6713 = vdwg.mxu0
      %v6714 = vadd.f32 %v6650, %v6708
      %v6715 = vadd.f32 %v6651, %v6711
      %s6716 = scalar_lea.vmem %s6, 80
      %v6717 = vld [vmem:[%s6716] sm:$0xf]
      %v6718 = vld [vmem:[%s6716 + $0x4] sm:$0xf]
      %v6719 = vld [vmem:[%s6716 + $0x8] sm:$0xf]
      %v6720 = vld [vmem:[%s6716 + $0xc] sm:$0xf]
      %v6721 = vrot.slane %v6404, 2
      %v6722 = vrot.slane %v6406, 3
      %v6723 = vor.u32 %v6721, %v6722
      %v6728 = vunpack.c.l.b16 %v6717
      %v6729 = vunpack.c.l.b16 %v6718
      %v6730 = vunpack.c.l.b16 %v6719
      %v6731 = vunpack.c.l.b16 %v6720
      %v6732 = vpack.c.b16 %v6729, %v6728
      %v6733 = vpack.c.b16 %v6731, %v6730
      %v6737 = vsel %vm1207, %v6723, 0
      %6739 = vmatprep.subr.bf16.mxu0 0
      %6740 = vmatpush1.bf16.msra.mxu0 0
      %6741 = vmatprep.subr.bf16.mxu0 0
      %6742 = vmatpush1.bf16.msra.mxu0 0
      %6743 = vmatprep.subr.bf16.mxu0 0
      %6744 = vmatpush1.bf16.msra.mxu0 0
      %6745 = vmatprep.subr.bf16.mxu0 0
      %6746 = vmatpush1.bf16.msra.mxu0 0
      %6747 = vmatprep.subr.bf16.mxu0 0
      %6748 = vmatpush1.bf16.msra.mxu0 0
      %6749 = vmatprep.subr.bf16.mxu0 0
      %6750 = vmatpush1.bf16.msra.mxu0 0
      %6751 = vmatprep.subr.bf16.mxu0 0
      %6752 = vmatpush1.bf16.msra.mxu0 %v6733
      %6753 = vmatprep.subr.bf16.mxu0 0
      %6754 = vmatpush1.bf16.msra.mxu0 %v6732
      %6755 = vmatprep.subr.bf16.mxu0 0
      %6756 = vmatpush2.bf16.msra.mxu0 0
      %6757 = vmatprep.subr.bf16.mxu0 0
      %6758 = vmatpush2.bf16.msra.mxu0 0
      %6759 = vmatprep.subr.bf16.mxu0 0
      %6760 = vmatpush2.bf16.msra.mxu0 0
      %6761 = vmatprep.subr.bf16.mxu0 0
      %6762 = vmatpush2.bf16.msra.mxu0 0
      %6763 = vmatprep.subr.bf16.mxu0 0
      %6764 = vmatpush2.bf16.msra.mxu0 0
      %6765 = vmatprep.subr.bf16.mxu0 0
      %6766 = vmatpush2.bf16.msra.mxu0 0
      %6767 = vmatprep.subr.bf16.mxu0 0
      %6768 = vmatpush2.bf16.msra.mxu0 0
      %6769 = vmatprep.subr.bf16.mxu0 0
      %6770 = vmatpush2.bf16.msra.mxu0 0
      %6771 = vmatprep.mubr.bf16.mxu0 0
      %6772 = vmatmul.mubr.bf16.gmra.mxu0 %v6737
      %v6773 = vpop.f32.mrf.mxu0
      %v6774 = vadd.f32 0.0, %v6773
      %v6775 = vpop.f32.mrf.mxu0
      %v6776 = vpop.f32.mrf.mxu0
      %v6777 = vadd.f32 0.0, %v6776
      %v6778 = vpop.f32.mrf.mxu0
      %6779 = vdwg.mxu0
      %v6780 = vadd.f32 %v6714, %v6774
      %v6781 = vadd.f32 %v6715, %v6777
      %s6782 = scalar_lea.vmem %s6, 96
      %v6783 = vld [vmem:[%s6782] sm:$0xf]
      %v6784 = vld [vmem:[%s6782 + $0x4] sm:$0xf]
      %v6785 = vld [vmem:[%s6782 + $0x8] sm:$0xf]
      %v6786 = vld [vmem:[%s6782 + $0xc] sm:$0xf]
      %v6787 = vrot.slane %v6393, 3
      %v6792 = vunpack.c.l.b16 %v6783
      %v6793 = vunpack.c.l.b16 %v6784
      %v6794 = vunpack.c.l.b16 %v6785
      %v6795 = vunpack.c.l.b16 %v6786
      %v6796 = vpack.c.b16 %v6793, %v6792
      %v6797 = vpack.c.b16 %v6795, %v6794
      %v6801 = vsel %vm1207, %v6787, 0
      %6803 = vmatprep.subr.bf16.mxu0 0
      %6804 = vmatpush1.bf16.msra.mxu0 0
      %6805 = vmatprep.subr.bf16.mxu0 0
      %6806 = vmatpush1.bf16.msra.mxu0 0
      %6807 = vmatprep.subr.bf16.mxu0 0
      %6808 = vmatpush1.bf16.msra.mxu0 0
      %6809 = vmatprep.subr.bf16.mxu0 0
      %6810 = vmatpush1.bf16.msra.mxu0 0
      %6811 = vmatprep.subr.bf16.mxu0 0
      %6812 = vmatpush1.bf16.msra.mxu0 0
      %6813 = vmatprep.subr.bf16.mxu0 0
      %6814 = vmatpush1.bf16.msra.mxu0 0
      %6815 = vmatprep.subr.bf16.mxu0 0
      %6816 = vmatpush1.bf16.msra.mxu0 %v6797
      %6817 = vmatprep.subr.bf16.mxu0 0
      %6818 = vmatpush1.bf16.msra.mxu0 %v6796
      %6819 = vmatprep.subr.bf16.mxu0 0
      %6820 = vmatpush2.bf16.msra.mxu0 0
      %6821 = vmatprep.subr.bf16.mxu0 0
      %6822 = vmatpush2.bf16.msra.mxu0 0
      %6823 = vmatprep.subr.bf16.mxu0 0
      %6824 = vmatpush2.bf16.msra.mxu0 0
      %6825 = vmatprep.subr.bf16.mxu0 0
      %6826 = vmatpush2.bf16.msra.mxu0 0
      %6827 = vmatprep.subr.bf16.mxu0 0
      %6828 = vmatpush2.bf16.msra.mxu0 0
      %6829 = vmatprep.subr.bf16.mxu0 0
      %6830 = vmatpush2.bf16.msra.mxu0 0
      %6831 = vmatprep.subr.bf16.mxu0 0
      %6832 = vmatpush2.bf16.msra.mxu0 0
      %6833 = vmatprep.subr.bf16.mxu0 0
      %6834 = vmatpush2.bf16.msra.mxu0 0
      %6835 = vmatprep.mubr.bf16.mxu0 0
      %6836 = vmatmul.mubr.bf16.gmra.mxu0 %v6801
      %v6837 = vpop.f32.mrf.mxu0
      %v6838 = vadd.f32 0.0, %v6837
      %v6839 = vpop.f32.mrf.mxu0
      %v6840 = vpop.f32.mrf.mxu0
      %v6841 = vadd.f32 0.0, %v6840
      %v6842 = vpop.f32.mrf.mxu0
      %6843 = vdwg.mxu0
      %v6844 = vadd.f32 %v6780, %v6838
      %v6845 = vadd.f32 %v6781, %v6841
      %v6846 = vld [vmem:[%s4 + $0x5] sm:$0x1]
      %v6847 = vlaneseq
      %v6848 = vshrl.u32 %v6847, 7
      %v6849 = vsub.s32 0, %v6848
      %v6850 = vrot.slane %v6846, %v6849
      %v6851 = vadd.f32 %v6844, %v6850
      %v6852 = vadd.f32 %v6845, %v6850
      %v6853 = vmul.f32 %v6851, 0.5
      %v6854 = vmul.f32 %v6852, 0.5
      %v6855 = vmul.f32 %v6851, 0.044715
      %v6856 = vmul.f32 %v6852, 0.044715
      %v6857 = vmul.f32 %v6855, %v6851
      %v6858 = vmul.f32 %v6856, %v6852
      %v6859 = vmul.f32 %v6857, %v6851
      %v6860 = vmul.f32 %v6858, %v6852
      %v6861 = vadd.f32 %v6851, %v6859
      %v6862 = vadd.f32 %v6852, %v6860
      %v6863 = vmul.f32 %v6861, 0.7978846
      %v6864 = vmul.f32 %v6862, 0.7978846
      %v6865 = vtanh.pop %v6863
      %v6866 = vtanh.pop %v6864
      %v6867 = vadd.f32 %v6865, 1.0
      %v6868 = vadd.f32 %v6866, 1.0
      %v6869 = vmul.f32 %v6853, %v6867
      %v6870 = vmul.f32 %v6854, %v6868
      %v6871 = vadd.f32 %v6376, %v6869
      %v6872 = vadd.f32 %v6379, %v6870
      %v6873 = vld [vmem:[%s4 + $0x6] sm:$0x1]
      %v6874 = vld [vmem:[%s4 + $0x7] sm:$0x1]
      %v6875 = vsel %vm1207, %v6871, 0.0
      %6876 = vadd.xlane.f32.xlu0 %v6875
      %v6877 = vpop.xlane.xlu0 %6876
      %v6878 = vsel %vm6279, %v6872, 0.0
      %6879 = vadd.xlane.f32.xlu0 %v6878
      %v6880 = vpop.xlane.xlu0 %6879
      %v6881 = vmul.f32 %v6877, %v6283
      %v6882 = vmul.f32 %v6880, %v6283
      %v6883 = vsub.f32 %v6871, %v6881
      %v6884 = vsub.f32 %v6872, %v6882
      %v6885 = vmul.f32 %v6883, %v6883
      %v6886 = vmul.f32 %v6884, %v6884
      %v6887 = vsel %vm1207, %v6885, 0.0
      %6888 = vadd.xlane.f32.xlu0 %v6887
      %v6889 = vpop.xlane.xlu0 %6888
      %v6890 = vsel %vm6279, %v6886, 0.0
      %6891 = vadd.xlane.f32.xlu0 %v6890
      %v6892 = vpop.xlane.xlu0 %6891
      %v6893 = vmul.f32 %v6889, %v6283
      %v6894 = vmul.f32 %v6892, %v6283
      %v6895 = vadd.f32 %v6893, 1e-05
      %v6896 = vadd.f32 %v6894, 1e-05
      %v6897 = vrsqrt.pop %v6895
      %v6898 = vrsqrt.pop %v6896
      %v6899 = vmul.f32 %v6883, %v6897
      %v6900 = vmul.f32 %v6884, %v6898
      %v6901 = vlaneseq
      %v6902 = vshrl.u32 %v6901, 7
      %v6903 = vsub.s32 0, %v6902
      %v6904 = vrot.slane %v6873, %v6903
      %v6905 = vmul.f32 %v6899, %v6904
      %v6906 = vmul.f32 %v6900, %v6904
      %v6907 = vlaneseq
      %v6908 = vshrl.u32 %v6907, 7
      %v6909 = vsub.s32 0, %v6908
      %v6910 = vrot.slane %v6874, %v6909
      %v6911 = vadd.f32 %v6905, %v6910
      %v6912 = vadd.f32 %v6906, %v6910
      %v6913 = vpack.c.bf16 %v6912, %v6911
      %v6914 = vld [vmem:[%s8] sm:$0xf]
      %v6915 = vld [vmem:[%s8 + $0x4] sm:$0xf]
      %v6916 = vld [vmem:[%s8 + $0x8] sm:$0xf]
      %v6917 = vld [vmem:[%s8 + $0xc] sm:$0xf]
      %v6918 = vld [vmem:[%s12] sm:$0x1]
      %v6919 = vlaneseq
      %v6920 = vshrl.u32 %v6919, 7
      %v6921 = vsub.s32 0, %v6920
      %v6922 = vrot.slane %v6918, %v6921
      %v6927 = vunpack.c.l.b16 %v6914
      %v6928 = vunpack.c.l.b16 %v6915
      %v6929 = vunpack.c.l.b16 %v6916
      %v6930 = vunpack.c.l.b16 %v6917
      %v6931 = vpack.c.b16 %v6928, %v6927
      %v6932 = vpack.c.b16 %v6930, %v6929
      %v6936 = vsel %vm1207, %v6913, 0
      %6938 = vmatprep.subr.bf16.mxu0 0
      %6939 = vmatpush1.bf16.msra.mxu0 0
      %6940 = vmatprep.subr.bf16.mxu0 0
      %6941 = vmatpush1.bf16.msra.mxu0 0
      %6942 = vmatprep.subr.bf16.mxu0 0
      %6943 = vmatpush1.bf16.msra.mxu0 0
      %6944 = vmatprep.subr.bf16.mxu0 0
      %6945 = vmatpush1.bf16.msra.mxu0 0
      %6946 = vmatprep.subr.bf16.mxu0 0
      %6947 = vmatpush1.bf16.msra.mxu0 0
      %6948 = vmatprep.subr.bf16.mxu0 0
      %6949 = vmatpush1.bf16.msra.mxu0 0
      %6950 = vmatprep.subr.bf16.mxu0 0
      %6951 = vmatpush1.bf16.msra.mxu0 %v6932
      %6952 = vmatprep.subr.bf16.mxu0 0
      %6953 = vmatpush1.bf16.msra.mxu0 %v6931
      %6954 = vmatprep.subr.bf16.mxu0 0
      %6955 = vmatpush2.bf16.msra.mxu0 0
      %6956 = vmatprep.subr.bf16.mxu0 0
      %6957 = vmatpush2.bf16.msra.mxu0 0
      %6958 = vmatprep.subr.bf16.mxu0 0
      %6959 = vmatpush2.bf16.msra.mxu0 0
      %6960 = vmatprep.subr.bf16.mxu0 0
      %6961 = vmatpush2.bf16.msra.mxu0 0
      %6962 = vmatprep.subr.bf16.mxu0 0
      %6963 = vmatpush2.bf16.msra.mxu0 0
      %6964 = vmatprep.subr.bf16.mxu0 0
      %6965 = vmatpush2.bf16.msra.mxu0 0
      %6966 = vmatprep.subr.bf16.mxu0 0
      %6967 = vmatpush2.bf16.msra.mxu0 0
      %6968 = vmatprep.subr.bf16.mxu0 0
      %6969 = vmatpush2.bf16.msra.mxu0 0
      %6970 = vmatprep.mubr.bf16.mxu0 0
      %6971 = vmatmul.mubr.bf16.gmra.mxu0 %v6936
      %v6972 = vpop.f32.mrf.mxu0
      %v6973 = vadd.f32 %v6922, %v6972
      %v6974 = vpop.f32.mrf.mxu0
      %v6975 = vpop.f32.mrf.mxu0
      %v6976 = vadd.f32 %v6922, %v6975
      %v6977 = vpop.f32.mrf.mxu0
      %6978 = vdwg.mxu0
      %v6979 = vmul.f32 %v6973, 0.35355338
      %v6980 = vmul.f32 %v6976, 0.35355338
      %v6981 = vpack.c.bf16 %v6980, %v6979
      %v6982 = vpack.c.bf16 %v6976, %v6973
      %v6983 = vld [vmem:[%s7] sm:$0xff]
      %v6984 = vld [vmem:[%s7 + $0x8] sm:$0x1]
      %6986 = vrot.lane.b32.xlu0 %v6982, 96
      %v6987 = vpop.permute.xlu0 %6986
      %vm6988 = vcmask 64512
      %v6990 = vsel %vm6988, %v6981, 0
      %v6993 = vsel %vm6988, %v6987, 0
      %6995 = vmatprep.subr.bf16.mxu0 0
      %6996 = vmatpush1.bf16.xpose.msra.mxu0 0
      %6997 = vmatprep.subr.bf16.mxu0 0
      %6998 = vmatpush1.bf16.xpose.msra.mxu0 0
      %6999 = vmatprep.subr.bf16.mxu0 0
      %7000 = vmatpush1.bf16.xpose.msra.mxu0 0
      %7001 = vmatprep.subr.bf16.mxu0 0
      %7002 = vmatpush1.bf16.xpose.msra.mxu0 0
      %7003 = vmatprep.subr.bf16.mxu0 0
      %7004 = vmatpush1.bf16.xpose.msra.mxu0 0
      %7005 = vmatprep.subr.bf16.mxu0 0
      %7006 = vmatpush1.bf16.xpose.msra.mxu0 0
      %7007 = vmatprep.subr.bf16.mxu0 0
      %7008 = vmatpush1.bf16.xpose.msra.mxu0 0
      %7009 = vmatprep.subr.bf16.mxu0 0
      %7010 = vmatpush1.bf16.xpose.msra.mxu0 %v6993
      %7011 = vmatprep.subr.bf16.mxu0 0
      %7012 = vmatpush2.bf16.xpose.msra.mxu0 0
      %7013 = vmatprep.subr.bf16.mxu0 0
      %7014 = vmatpush2.bf16.xpose.msra.mxu0 0
      %7015 = vmatprep.subr.bf16.mxu0 0
      %7016 = vmatpush2.bf16.xpose.msra.mxu0 0
      %7017 = vmatprep.subr.bf16.mxu0 0
      %7018 = vmatpush2.bf16.xpose.msra.mxu0 0
      %7019 = vmatprep.subr.bf16.mxu0 0
      %7020 = vmatpush2.bf16.xpose.msra.mxu0 0
      %7021 = vmatprep.subr.bf16.mxu0 0
      %7022 = vmatpush2.bf16.xpose.msra.mxu0 0
      %7023 = vmatprep.subr.bf16.mxu0 0
      %7024 = vmatpush2.bf16.xpose.msra.mxu0 0
      %7025 = vmatprep.subr.bf16.mxu0 0
      %7026 = vmatpush2.bf16.xpose.msra.mxu0 0
      %7027 = vmatprep.mubr.bf16.mxu0 0
      %7028 = vmatmul.mubr.bf16.gmra.mxu0 %v6990
      %v7029 = vpop.f32.mrf.mxu0
      %v7030 = vadd.f32 %v6983, %v7029
      %v7031 = vpop.f32.mrf.mxu0
      %v7032 = vpop.f32.mrf.mxu0
      %v7033 = vadd.f32 %v6984, %v7032
      %v7034 = vpop.f32.mrf.mxu0
      %7035 = vdwg.mxu0
      %vm7036 = vcmask 72704
      %v7037 = vsel %vm7036, %v7030, -inf
      %7038 = vmax.xlane.f32.xlu0 %v7037
      %v7039 = vpop.xlane.xlu0 %7038
      %vm7040 = vcmask 65536
      %v7041 = vsel %vm7040, %v7033, -inf
      %7042 = vmax.xlane.f32.xlu0 %v7041
      %v7043 = vpop.xlane.xlu0 %7042
      %v7044 = vsub.f32 %v7030, %v7039
      %v7045 = vsub.f32 %v7033, %v7043
      %v7046 = vmul.f32 %v7044, 1.442695
      %v7047 = vpow.pop %v7046
      %v7048 = vmul.f32 %v7045, 1.442695
      %v7049 = vpow.pop %v7048
      %v7050 = vsel %vm7036, %v7047, 0.0
      %7051 = vadd.xlane.f32.xlu0 %v7050
      %v7052 = vpop.xlane.xlu0 %7051
      %v7053 = vsel %vm7040, %v7049, 0.0
      %7054 = vadd.xlane.f32.xlu0 %v7053
      %v7055 = vpop.xlane.xlu0 %7054
      %v7056 = vrcp.pop %v7052
      %v7057 = vmul.f32 %v7047, %v7056
      %v7058 = vrcp.pop %v7055
      %v7059 = vmul.f32 %v7049, %v7058
      %v7060 = vpack.c.bf16 %v7059, %v7057
      %7061 = vrot.lane.b32.xlu0 %v6982, 64
      %v7062 = vpop.permute.xlu0 %7061
      %v7064 = vsel %vm7036, %v7060, 0
      %v7066 = vsel %vm6391, 4294967295, 65535
      %v7067 = vsel %vm850, %v7066, 0
      %v7069 = vand.u32 %v7062, %v7067
      %7071 = vmatprep.subr.bf16.mxu0 0
      %7072 = vmatpush1.bf16.msra.mxu0 0
      %7073 = vmatprep.subr.bf16.mxu0 0
      %7074 = vmatpush1.bf16.msra.mxu0 0
      %7075 = vmatprep.subr.bf16.mxu0 0
      %7076 = vmatpush1.bf16.msra.mxu0 0
      %7077 = vmatprep.subr.bf16.mxu0 0
      %7078 = vmatpush1.bf16.msra.mxu0 0
      %7079 = vmatprep.subr.bf16.mxu0 0
      %7080 = vmatpush1.bf16.msra.mxu0 0
      %7081 = vmatprep.subr.bf16.mxu0 0
      %7082 = vmatpush1.bf16.msra.mxu0 0
      %7083 = vmatprep.subr.bf16.mxu0 0
      %7084 = vmatpush1.bf16.msra.mxu0 0
      %7085 = vmatprep.subr.bf16.mxu0 0
      %7086 = vmatpush1.bf16.msra.mxu0 %v7069
      %7087 = vmatprep.subr.bf16.mxu0 0
      %7088 = vmatpush2.bf16.msra.mxu0 0
      %7089 = vmatprep.subr.bf16.mxu0 0
      %7090 = vmatpush2.bf16.msra.mxu0 0
      %7091 = vmatprep.subr.bf16.mxu0 0
      %7092 = vmatpush2.bf16.msra.mxu0 0
      %7093 = vmatprep.subr.bf16.mxu0 0
      %7094 = vmatpush2.bf16.msra.mxu0 0
      %7095 = vmatprep.subr.bf16.mxu0 0
      %7096 = vmatpush2.bf16.msra.mxu0 0
      %7097 = vmatprep.subr.bf16.mxu0 0
      %7098 = vmatpush2.bf16.msra.mxu0 0
      %7099 = vmatprep.subr.bf16.mxu0 0
      %7100 = vmatpush2.bf16.msra.mxu0 0
      %7101 = vmatprep.subr.bf16.mxu0 0
      %7102 = vmatpush2.bf16.msra.mxu0 0
      %7103 = vmatprep.mubr.bf16.mxu0 0
      %7104 = vmatmul.mubr.bf16.gmra.mxu0 %v7064
      %v7105 = vpop.f32.mrf.mxu0
      %v7106 = vadd.f32 0.0, %v7105
      %v7107 = vpop.f32.mrf.mxu0
      %v7108 = vpop.f32.mrf.mxu0
      %v7109 = vadd.f32 0.0, %v7108
      %v7110 = vpop.f32.mrf.mxu0
      %7111 = vdwg.mxu0
      %s7112 = scalar_lea.vmem %s7, 16
      %v7113 = vld [vmem:[%s7112] sm:$0xff]
      %v7114 = vld [vmem:[%s7112 + $0x8] sm:$0x1]
      %7116 = vrot.lane.b32.xlu0 %v6981, 120
      %v7117 = vpop.permute.xlu0 %7116
      %7118 = vrot.lane.b32.xlu0 %v6982, 88
      %v7119 = vpop.permute.xlu0 %7118
      %v7121 = vsel %vm6988, %v7117, 0
      %v7124 = vsel %vm6988, %v7119, 0
      %7126 = vmatprep.subr.bf16.mxu0 0
      %7127 = vmatpush1.bf16.xpose.msra.mxu0 0
      %7128 = vmatprep.subr.bf16.mxu0 0
      %7129 = vmatpush1.bf16.xpose.msra.mxu0 0
      %7130 = vmatprep.subr.bf16.mxu0 0
      %7131 = vmatpush1.bf16.xpose.msra.mxu0 0
      %7132 = vmatprep.subr.bf16.mxu0 0
      %7133 = vmatpush1.bf16.xpose.msra.mxu0 0
      %7134 = vmatprep.subr.bf16.mxu0 0
      %7135 = vmatpush1.bf16.xpose.msra.mxu0 0
      %7136 = vmatprep.subr.bf16.mxu0 0
      %7137 = vmatpush1.bf16.xpose.msra.mxu0 0
      %7138 = vmatprep.subr.bf16.mxu0 0
      %7139 = vmatpush1.bf16.xpose.msra.mxu0 0
      %7140 = vmatprep.subr.bf16.mxu0 0
      %7141 = vmatpush1.bf16.xpose.msra.mxu0 %v7124
      %7142 = vmatprep.subr.bf16.mxu0 0
      %7143 = vmatpush2.bf16.xpose.msra.mxu0 0
      %7144 = vmatprep.subr.bf16.mxu0 0
      %7145 = vmatpush2.bf16.xpose.msra.mxu0 0
      %7146 = vmatprep.subr.bf16.mxu0 0
      %7147 = vmatpush2.bf16.xpose.msra.mxu0 0
      %7148 = vmatprep.subr.bf16.mxu0 0
      %7149 = vmatpush2.bf16.xpose.msra.mxu0 0
      %7150 = vmatprep.subr.bf16.mxu0 0
      %7151 = vmatpush2.bf16.xpose.msra.mxu0 0
      %7152 = vmatprep.subr.bf16.mxu0 0
      %7153 = vmatpush2.bf16.xpose.msra.mxu0 0
      %7154 = vmatprep.subr.bf16.mxu0 0
      %7155 = vmatpush2.bf16.xpose.msra.mxu0 0
      %7156 = vmatprep.subr.bf16.mxu0 0
      %7157 = vmatpush2.bf16.xpose.msra.mxu0 0
      %7158 = vmatprep.mubr.bf16.mxu0 0
      %7159 = vmatmul.mubr.bf16.gmra.mxu0 %v7121
      %v7160 = vpop.f32.mrf.mxu0
      %v7161 = vadd.f32 %v7113, %v7160
      %v7162 = vpop.f32.mrf.mxu0
      %v7163 = vpop.f32.mrf.mxu0
      %v7164 = vadd.f32 %v7114, %v7163
      %v7165 = vpop.f32.mrf.mxu0
      %7166 = vdwg.mxu0
      %v7167 = vsel %vm7036, %v7161, -inf
      %7168 = vmax.xlane.f32.xlu0 %v7167
      %v7169 = vpop.xlane.xlu0 %7168
      %v7170 = vsel %vm7040, %v7164, -inf
      %7171 = vmax.xlane.f32.xlu0 %v7170
      %v7172 = vpop.xlane.xlu0 %7171
      %v7173 = vsub.f32 %v7161, %v7169
      %v7174 = vsub.f32 %v7164, %v7172
      %v7175 = vmul.f32 %v7173, 1.442695
      %v7176 = vpow.pop %v7175
      %v7177 = vmul.f32 %v7174, 1.442695
      %v7178 = vpow.pop %v7177
      %v7179 = vsel %vm7036, %v7176, 0.0
      %7180 = vadd.xlane.f32.xlu0 %v7179
      %v7181 = vpop.xlane.xlu0 %7180
      %v7182 = vsel %vm7040, %v7178, 0.0
      %7183 = vadd.xlane.f32.xlu0 %v7182
      %v7184 = vpop.xlane.xlu0 %7183
      %v7185 = vrcp.pop %v7181
      %v7186 = vmul.f32 %v7176, %v7185
      %v7187 = vrcp.pop %v7184
      %v7188 = vmul.f32 %v7178, %v7187
      %v7189 = vpack.c.bf16 %v7188, %v7186
      %7190 = vrot.lane.b32.xlu0 %v6982, 56
      %v7191 = vpop.permute.xlu0 %7190
      %v7193 = vsel %vm7036, %v7189, 0
      %v7196 = vand.u32 %v7191, %v7067
      %7198 = vmatprep.subr.bf16.mxu0 0
      %7199 = vmatpush1.bf16.msra.mxu0 0
      %7200 = vmatprep.subr.bf16.mxu0 0
      %7201 = vmatpush1.bf16.msra.mxu0 0
      %7202 = vmatprep.subr.bf16.mxu0 0
      %7203 = vmatpush1.bf16.msra.mxu0 0
      %7204 = vmatprep.subr.bf16.mxu0 0
      %7205 = vmatpush1.bf16.msra.mxu0 0
      %7206 = vmatprep.subr.bf16.mxu0 0
      %7207 = vmatpush1.bf16.msra.mxu0 0
      %7208 = vmatprep.subr.bf16.mxu0 0
      %7209 = vmatpush1.bf16.msra.mxu0 0
      %7210 = vmatprep.subr.bf16.mxu0 0
      %7211 = vmatpush1.bf16.msra.mxu0 0
      %7212 = vmatprep.subr.bf16.mxu0 0
      %7213 = vmatpush1.bf16.msra.mxu0 %v7196
      %7214 = vmatprep.subr.bf16.mxu0 0
      %7215 = vmatpush2.bf16.msra.mxu0 0
      %7216 = vmatprep.subr.bf16.mxu0 0
      %7217 = vmatpush2.bf16.msra.mxu0 0
      %7218 = vmatprep.subr.bf16.mxu0 0
      %7219 = vmatpush2.bf16.msra.mxu0 0
      %7220 = vmatprep.subr.bf16.mxu0 0
      %7221 = vmatpush2.bf16.msra.mxu0 0
      %7222 = vmatprep.subr.bf16.mxu0 0
      %7223 = vmatpush2.bf16.msra.mxu0 0
      %7224 = vmatprep.subr.bf16.mxu0 0
      %7225 = vmatpush2.bf16.msra.mxu0 0
      %7226 = vmatprep.subr.bf16.mxu0 0
      %7227 = vmatpush2.bf16.msra.mxu0 0
      %7228 = vmatprep.subr.bf16.mxu0 0
      %7229 = vmatpush2.bf16.msra.mxu0 0
      %7230 = vmatprep.mubr.bf16.mxu0 0
      %7231 = vmatmul.mubr.bf16.gmra.mxu0 %v7193
      %v7232 = vpop.f32.mrf.mxu0
      %v7233 = vadd.f32 0.0, %v7232
      %v7234 = vpop.f32.mrf.mxu0
      %v7235 = vpop.f32.mrf.mxu0
      %v7236 = vadd.f32 0.0, %v7235
      %v7237 = vpop.f32.mrf.mxu0
      %7238 = vdwg.mxu0
      %s7239 = scalar_lea.vmem %s7, 32
      %v7240 = vld [vmem:[%s7239] sm:$0xff]
      %v7241 = vld [vmem:[%s7239 + $0x8] sm:$0x1]
      %7242 = vrot.lane.b32.xlu0 %v6981, 112
      %v7243 = vpop.permute.xlu0 %7242
      %7244 = vrot.lane.b32.xlu0 %v6982, 80
      %v7245 = vpop.permute.xlu0 %7244
      %v7247 = vsel %vm6988, %v7243, 0
      %v7250 = vsel %vm6988, %v7245, 0
      %7252 = vmatprep.subr.bf16.mxu0 0
      %7253 = vmatpush1.bf16.xpose.msra.mxu0 0
      %7254 = vmatprep.subr.bf16.mxu0 0
      %7255 = vmatpush1.bf16.xpose.msra.mxu0 0
      %7256 = vmatprep.subr.bf16.mxu0 0
      %7257 = vmatpush1.bf16.xpose.msra.mxu0 0
      %7258 = vmatprep.subr.bf16.mxu0 0
      %7259 = vmatpush1.bf16.xpose.msra.mxu0 0
      %7260 = vmatprep.subr.bf16.mxu0 0
      %7261 = vmatpush1.bf16.xpose.msra.mxu0 0
      %7262 = vmatprep.subr.bf16.mxu0 0
      %7263 = vmatpush1.bf16.xpose.msra.mxu0 0
      %7264 = vmatprep.subr.bf16.mxu0 0
      %7265 = vmatpush1.bf16.xpose.msra.mxu0 0
      %7266 = vmatprep.subr.bf16.mxu0 0
      %7267 = vmatpush1.bf16.xpose.msra.mxu0 %v7250
      %7268 = vmatprep.subr.bf16.mxu0 0
      %7269 = vmatpush2.bf16.xpose.msra.mxu0 0
      %7270 = vmatprep.subr.bf16.mxu0 0
      %7271 = vmatpush2.bf16.xpose.msra.mxu0 0
      %7272 = vmatprep.subr.bf16.mxu0 0
      %7273 = vmatpush2.bf16.xpose.msra.mxu0 0
      %7274 = vmatprep.subr.bf16.mxu0 0
      %7275 = vmatpush2.bf16.xpose.msra.mxu0 0
      %7276 = vmatprep.subr.bf16.mxu0 0
      %7277 = vmatpush2.bf16.xpose.msra.mxu0 0
      %7278 = vmatprep.subr.bf16.mxu0 0
      %7279 = vmatpush2.bf16.xpose.msra.mxu0 0
      %7280 = vmatprep.subr.bf16.mxu0 0
      %7281 = vmatpush2.bf16.xpose.msra.mxu0 0
      %7282 = vmatprep.subr.bf16.mxu0 0
      %7283 = vmatpush2.bf16.xpose.msra.mxu0 0
      %7284 = vmatprep.mubr.bf16.mxu0 0
      %7285 = vmatmul.mubr.bf16.gmra.mxu0 %v7247
      %v7286 = vpop.f32.mrf.mxu0
      %v7287 = vadd.f32 %v7240, %v7286
      %v7288 = vpop.f32.mrf.mxu0
      %v7289 = vpop.f32.mrf.mxu0
      %v7290 = vadd.f32 %v7241, %v7289
      %v7291 = vpop.f32.mrf.mxu0
      %7292 = vdwg.mxu0
      %v7293 = vsel %vm7036, %v7287, -inf
      %7294 = vmax.xlane.f32.xlu0 %v7293
      %v7295 = vpop.xlane.xlu0 %7294
      %v7296 = vsel %vm7040, %v7290, -inf
      %7297 = vmax.xlane.f32.xlu0 %v7296
      %v7298 = vpop.xlane.xlu0 %7297
      %v7299 = vsub.f32 %v7287, %v7295
      %v7300 = vsub.f32 %v7290, %v7298
      %v7301 = vmul.f32 %v7299, 1.442695
      %v7302 = vpow.pop %v7301
      %v7303 = vmul.f32 %v7300, 1.442695
      %v7304 = vpow.pop %v7303
      %v7305 = vsel %vm7036, %v7302, 0.0
      %7306 = vadd.xlane.f32.xlu0 %v7305
      %v7307 = vpop.xlane.xlu0 %7306
      %v7308 = vsel %vm7040, %v7304, 0.0
      %7309 = vadd.xlane.f32.xlu0 %v7308
      %v7310 = vpop.xlane.xlu0 %7309
      %v7311 = vrcp.pop %v7307
      %v7312 = vmul.f32 %v7302, %v7311
      %v7313 = vrcp.pop %v7310
      %v7314 = vmul.f32 %v7304, %v7313
      %v7315 = vpack.c.bf16 %v7314, %v7312
      %7316 = vrot.lane.b32.xlu0 %v6982, 48
      %v7317 = vpop.permute.xlu0 %7316
      %v7319 = vsel %vm7036, %v7315, 0
      %v7322 = vand.u32 %v7317, %v7067
      %7324 = vmatprep.subr.bf16.mxu0 0
      %7325 = vmatpush1.bf16.msra.mxu0 0
      %7326 = vmatprep.subr.bf16.mxu0 0
      %7327 = vmatpush1.bf16.msra.mxu0 0
      %7328 = vmatprep.subr.bf16.mxu0 0
      %7329 = vmatpush1.bf16.msra.mxu0 0
      %7330 = vmatprep.subr.bf16.mxu0 0
      %7331 = vmatpush1.bf16.msra.mxu0 0
      %7332 = vmatprep.subr.bf16.mxu0 0
      %7333 = vmatpush1.bf16.msra.mxu0 0
      %7334 = vmatprep.subr.bf16.mxu0 0
      %7335 = vmatpush1.bf16.msra.mxu0 0
      %7336 = vmatprep.subr.bf16.mxu0 0
      %7337 = vmatpush1.bf16.msra.mxu0 0
      %7338 = vmatprep.subr.bf16.mxu0 0
      %7339 = vmatpush1.bf16.msra.mxu0 %v7322
      %7340 = vmatprep.subr.bf16.mxu0 0
      %7341 = vmatpush2.bf16.msra.mxu0 0
      %7342 = vmatprep.subr.bf16.mxu0 0
      %7343 = vmatpush2.bf16.msra.mxu0 0
      %7344 = vmatprep.subr.bf16.mxu0 0
      %7345 = vmatpush2.bf16.msra.mxu0 0
      %7346 = vmatprep.subr.bf16.mxu0 0
      %7347 = vmatpush2.bf16.msra.mxu0 0
      %7348 = vmatprep.subr.bf16.mxu0 0
      %7349 = vmatpush2.bf16.msra.mxu0 0
      %7350 = vmatprep.subr.bf16.mxu0 0
      %7351 = vmatpush2.bf16.msra.mxu0 0
      %7352 = vmatprep.subr.bf16.mxu0 0
      %7353 = vmatpush2.bf16.msra.mxu0 0
      %7354 = vmatprep.subr.bf16.mxu0 0
      %7355 = vmatpush2.bf16.msra.mxu0 0
      %7356 = vmatprep.mubr.bf16.mxu0 0
      %7357 = vmatmul.mubr.bf16.gmra.mxu0 %v7319
      %v7358 = vpop.f32.mrf.mxu0
      %v7359 = vadd.f32 0.0, %v7358
      %v7360 = vpop.f32.mrf.mxu0
      %v7361 = vpop.f32.mrf.mxu0
      %v7362 = vadd.f32 0.0, %v7361
      %v7363 = vpop.f32.mrf.mxu0
      %7364 = vdwg.mxu0
      %s7365 = scalar_lea.vmem %s7, 48
      %v7366 = vld [vmem:[%s7365] sm:$0xff]
      %v7367 = vld [vmem:[%s7365 + $0x8] sm:$0x1]
      %7368 = vrot.lane.b32.xlu0 %v6981, 104
      %v7369 = vpop.permute.xlu0 %7368
      %7370 = vrot.lane.b32.xlu0 %v6982, 72
      %v7371 = vpop.permute.xlu0 %7370
      %v7373 = vsel %vm6988, %v7369, 0
      %v7376 = vsel %vm6988, %v7371, 0
      %7378 = vmatprep.subr.bf16.mxu0 0
      %7379 = vmatpush1.bf16.xpose.msra.mxu0 0
      %7380 = vmatprep.subr.bf16.mxu0 0
      %7381 = vmatpush1.bf16.xpose.msra.mxu0 0
      %7382 = vmatprep.subr.bf16.mxu0 0
      %7383 = vmatpush1.bf16.xpose.msra.mxu0 0
      %7384 = vmatprep.subr.bf16.mxu0 0
      %7385 = vmatpush1.bf16.xpose.msra.mxu0 0
      %7386 = vmatprep.subr.bf16.mxu0 0
      %7387 = vmatpush1.bf16.xpose.msra.mxu0 0
      %7388 = vmatprep.subr.bf16.mxu0 0
      %7389 = vmatpush1.bf16.xpose.msra.mxu0 0
      %7390 = vmatprep.subr.bf16.mxu0 0
      %7391 = vmatpush1.bf16.xpose.msra.mxu0 0
      %7392 = vmatprep.subr.bf16.mxu0 0
      %7393 = vmatpush1.bf16.xpose.msra.mxu0 %v7376
      %7394 = vmatprep.subr.bf16.mxu0 0
      %7395 = vmatpush2.bf16.xpose.msra.mxu0 0
      %7396 = vmatprep.subr.bf16.mxu0 0
      %7397 = vmatpush2.bf16.xpose.msra.mxu0 0
      %7398 = vmatprep.subr.bf16.mxu0 0
      %7399 = vmatpush2.bf16.xpose.msra.mxu0 0
      %7400 = vmatprep.subr.bf16.mxu0 0
      %7401 = vmatpush2.bf16.xpose.msra.mxu0 0
      %7402 = vmatprep.subr.bf16.mxu0 0
      %7403 = vmatpush2.bf16.xpose.msra.mxu0 0
      %7404 = vmatprep.subr.bf16.mxu0 0
      %7405 = vmatpush2.bf16.xpose.msra.mxu0 0
      %7406 = vmatprep.subr.bf16.mxu0 0
      %7407 = vmatpush2.bf16.xpose.msra.mxu0 0
      %7408 = vmatprep.subr.bf16.mxu0 0
      %7409 = vmatpush2.bf16.xpose.msra.mxu0 0
      %7410 = vmatprep.mubr.bf16.mxu0 0
      %7411 = vmatmul.mubr.bf16.gmra.mxu0 %v7373
      %v7412 = vpop.f32.mrf.mxu0
      %v7413 = vadd.f32 %v7366, %v7412
      %v7414 = vpop.f32.mrf.mxu0
      %v7415 = vpop.f32.mrf.mxu0
      %v7416 = vadd.f32 %v7367, %v7415
      %v7417 = vpop.f32.mrf.mxu0
      %7418 = vdwg.mxu0
      %v7419 = vsel %vm7036, %v7413, -inf
      %7420 = vmax.xlane.f32.xlu0 %v7419
      %v7421 = vpop.xlane.xlu0 %7420
      %v7422 = vsel %vm7040, %v7416, -inf
      %7423 = vmax.xlane.f32.xlu0 %v7422
      %v7424 = vpop.xlane.xlu0 %7423
      %v7425 = vsub.f32 %v7413, %v7421
      %v7426 = vsub.f32 %v7416, %v7424
      %v7427 = vmul.f32 %v7425, 1.442695
      %v7428 = vpow.pop %v7427
      %v7429 = vmul.f32 %v7426, 1.442695
      %v7430 = vpow.pop %v7429
      %v7431 = vsel %vm7036, %v7428, 0.0
      %7432 = vadd.xlane.f32.xlu0 %v7431
      %v7433 = vpop.xlane.xlu0 %7432
      %v7434 = vsel %vm7040, %v7430, 0.0
      %7435 = vadd.xlane.f32.xlu0 %v7434
      %v7436 = vpop.xlane.xlu0 %7435
      %v7437 = vrcp.pop %v7433
      %v7438 = vmul.f32 %v7428, %v7437
      %v7439 = vrcp.pop %v7436
      %v7440 = vmul.f32 %v7430, %v7439
      %v7441 = vpack.c.bf16 %v7440, %v7438
      %7442 = vrot.lane.b32.xlu0 %v6982, 40
      %v7443 = vpop.permute.xlu0 %7442
      %v7445 = vsel %vm7036, %v7441, 0
      %v7448 = vand.u32 %v7443, %v7067
      %7450 = vmatprep.subr.bf16.mxu0 0
      %7451 = vmatpush1.bf16.msra.mxu0 0
      %7452 = vmatprep.subr.bf16.mxu0 0
      %7453 = vmatpush1.bf16.msra.mxu0 0
      %7454 = vmatprep.subr.bf16.mxu0 0
      %7455 = vmatpush1.bf16.msra.mxu0 0
      %7456 = vmatprep.subr.bf16.mxu0 0
      %7457 = vmatpush1.bf16.msra.mxu0 0
      %7458 = vmatprep.subr.bf16.mxu0 0
      %7459 = vmatpush1.bf16.msra.mxu0 0
      %7460 = vmatprep.subr.bf16.mxu0 0
      %7461 = vmatpush1.bf16.msra.mxu0 0
      %7462 = vmatprep.subr.bf16.mxu0 0
      %7463 = vmatpush1.bf16.msra.mxu0 0
      %7464 = vmatprep.subr.bf16.mxu0 0
      %7465 = vmatpush1.bf16.msra.mxu0 %v7448
      %7466 = vmatprep.subr.bf16.mxu0 0
      %7467 = vmatpush2.bf16.msra.mxu0 0
      %7468 = vmatprep.subr.bf16.mxu0 0
      %7469 = vmatpush2.bf16.msra.mxu0 0
      %7470 = vmatprep.subr.bf16.mxu0 0
      %7471 = vmatpush2.bf16.msra.mxu0 0
      %7472 = vmatprep.subr.bf16.mxu0 0
      %7473 = vmatpush2.bf16.msra.mxu0 0
      %7474 = vmatprep.subr.bf16.mxu0 0
      %7475 = vmatpush2.bf16.msra.mxu0 0
      %7476 = vmatprep.subr.bf16.mxu0 0
      %7477 = vmatpush2.bf16.msra.mxu0 0
      %7478 = vmatprep.subr.bf16.mxu0 0
      %7479 = vmatpush2.bf16.msra.mxu0 0
      %7480 = vmatprep.subr.bf16.mxu0 0
      %7481 = vmatpush2.bf16.msra.mxu0 0
      %7482 = vmatprep.mubr.bf16.mxu0 0
      %7483 = vmatmul.mubr.bf16.gmra.mxu0 %v7445
      %v7484 = vpop.f32.mrf.mxu0
      %v7485 = vadd.f32 0.0, %v7484
      %v7486 = vpop.f32.mrf.mxu0
      %v7487 = vpop.f32.mrf.mxu0
      %v7488 = vadd.f32 0.0, %v7487
      %v7489 = vpop.f32.mrf.mxu0
      %7490 = vdwg.mxu0
      %7493 = vrot.lane.b32.xlu0 %v7233, 8
      %v7494 = vpop.permute.xlu0 %7493
      %7495 = vrot.lane.b32.xlu0 %v7236, 8
      %v7496 = vpop.permute.xlu0 %7495
      %7501 = vrot.lane.b32.xlu0 %v7359, 16
      %v7502 = vpop.permute.xlu0 %7501
      %7503 = vrot.lane.b32.xlu0 %v7362, 16
      %v7504 = vpop.permute.xlu0 %7503
      %7509 = vrot.lane.b32.xlu0 %v7485, 24
      %v7510 = vpop.permute.xlu0 %7509
      %7511 = vrot.lane.b32.xlu0 %v7488, 24
      %v7512 = vpop.permute.xlu0 %7511
      %v7515 = vsel %vm6988, %v7106, %v7494
      %v7516 = vsel %vm6988, %v7109, %v7496
      %vm7517 = vcmask 130048
      %v7518 = vsel %vm7517, %v7515, %v7502
      %v7519 = vsel %vm7517, %v7516, %v7504
      %vm7520 = vcmask 195584
      %v7521 = vsel %vm7520, %v7518, %v7510
      %v7522 = vsel %vm7520, %v7519, %v7512
      %v7523 = vpack.c.bf16 %v7522, %v7521
      %v7524 = vld [vmem:[%s9] sm:$0xf]
      %v7525 = vld [vmem:[%s9 + $0x4] sm:$0xf]
      %v7526 = vld [vmem:[%s9 + $0x8] sm:$0xf]
      %v7527 = vld [vmem:[%s9 + $0xc] sm:$0xf]
      %v7532 = vunpack.c.l.b16 %v7524
      %v7533 = vunpack.c.l.b16 %v7525
      %v7534 = vunpack.c.l.b16 %v7526
      %v7535 = vunpack.c.l.b16 %v7527
      %v7536 = vpack.c.b16 %v7533, %v7532
      %v7537 = vpack.c.b16 %v7535, %v7534
      %7541 = vrot.lane.b32.xlu0 %v6922, 32
      %v7542 = vpop.permute.xlu0 %7541
      %v7545 = vsel %vm1207, %v7523, 0
      %7547 = vmatprep.subr.bf16.mxu0 0
      %7548 = vmatpush1.bf16.msra.mxu0 0
      %7549 = vmatprep.subr.bf16.mxu0 0
      %7550 = vmatpush1.bf16.msra.mxu0 0
      %7551 = vmatprep.subr.bf16.mxu0 0
      %7552 = vmatpush1.bf16.msra.mxu0 0
      %7553 = vmatprep.subr.bf16.mxu0 0
      %7554 = vmatpush1.bf16.msra.mxu0 0
      %7555 = vmatprep.subr.bf16.mxu0 0
      %7556 = vmatpush1.bf16.msra.mxu0 0
      %7557 = vmatprep.subr.bf16.mxu0 0
      %7558 = vmatpush1.bf16.msra.mxu0 0
      %7559 = vmatprep.subr.bf16.mxu0 0
      %7560 = vmatpush1.bf16.msra.mxu0 %v7537
      %7561 = vmatprep.subr.bf16.mxu0 0
      %7562 = vmatpush1.bf16.msra.mxu0 %v7536
      %7563 = vmatprep.subr.bf16.mxu0 0
      %7564 = vmatpush2.bf16.msra.mxu0 0
      %7565 = vmatprep.subr.bf16.mxu0 0
      %7566 = vmatpush2.bf16.msra.mxu0 0
      %7567 = vmatprep.subr.bf16.mxu0 0
      %7568 = vmatpush2.bf16.msra.mxu0 0
      %7569 = vmatprep.subr.bf16.mxu0 0
      %7570 = vmatpush2.bf16.msra.mxu0 0
      %7571 = vmatprep.subr.bf16.mxu0 0
      %7572 = vmatpush2.bf16.msra.mxu0 0
      %7573 = vmatprep.subr.bf16.mxu0 0
      %7574 = vmatpush2.bf16.msra.mxu0 0
      %7575 = vmatprep.subr.bf16.mxu0 0
      %7576 = vmatpush2.bf16.msra.mxu0 0
      %7577 = vmatprep.subr.bf16.mxu0 0
      %7578 = vmatpush2.bf16.msra.mxu0 0
      %7579 = vmatprep.mubr.bf16.mxu0 0
      %7580 = vmatmul.mubr.bf16.gmra.mxu0 %v7545
      %v7581 = vpop.f32.mrf.mxu0
      %v7582 = vadd.f32 %v7542, %v7581
      %v7583 = vpop.f32.mrf.mxu0
      %v7584 = vpop.f32.mrf.mxu0
      %v7585 = vadd.f32 %v7542, %v7584
      %v7586 = vpop.f32.mrf.mxu0
      %7587 = vdwg.mxu0
      %v7588 = vadd.f32 %v6911, %v7582
      %v7589 = vadd.f32 %v6912, %v7585
      %v7590 = vld [vmem:[%s12 + $0x2] sm:$0x1]
      %v7591 = vsel %vm1207, %v7588, 0.0
      %7592 = vadd.xlane.f32.xlu0 %v7591
      %v7593 = vpop.xlane.xlu0 %7592
      %v7594 = vsel %vm6279, %v7589, 0.0
      %7595 = vadd.xlane.f32.xlu0 %v7594
      %v7596 = vpop.xlane.xlu0 %7595
      %v7597 = vmul.f32 %v7593, %v6283
      %v7598 = vmul.f32 %v7596, %v6283
      %v7599 = vsub.f32 %v7588, %v7597
      %v7600 = vsub.f32 %v7589, %v7598
      %v7601 = vmul.f32 %v7599, %v7599
      %v7602 = vmul.f32 %v7600, %v7600
      %v7603 = vsel %vm1207, %v7601, 0.0
      %7604 = vadd.xlane.f32.xlu0 %v7603
      %v7605 = vpop.xlane.xlu0 %7604
      %v7606 = vsel %vm6279, %v7602, 0.0
      %7607 = vadd.xlane.f32.xlu0 %v7606
      %v7608 = vpop.xlane.xlu0 %7607
      %v7609 = vmul.f32 %v7605, %v6283
      %v7610 = vmul.f32 %v7608, %v6283
      %v7611 = vadd.f32 %v7609, 1e-05
      %v7612 = vadd.f32 %v7610, 1e-05
      %v7613 = vrsqrt.pop %v7611
      %v7614 = vrsqrt.pop %v7612
      %v7615 = vmul.f32 %v7599, %v7613
      %v7616 = vmul.f32 %v7600, %v7614
      %v7617 = vlaneseq
      %v7618 = vshrl.u32 %v7617, 7
      %v7619 = vsub.s32 0, %v7618
      %v7620 = vrot.slane %v7590, %v7619
      %v7621 = vmul.f32 %v7615, %v7620
      %v7622 = vmul.f32 %v7616, %v7620
      %7624 = vrot.lane.b32.xlu0 %v7620, 96
      %v7625 = vpop.permute.xlu0 %7624
      %v7627 = vadd.f32 %v7621, %v7625
      %v7628 = vadd.f32 %v7622, %v7625
      %v7629 = vpack.c.bf16 %v7628, %v7627
      %v7630 = vld [vmem:[%s10] sm:$0xf]
      %v7631 = vld [vmem:[%s10 + $0x4] sm:$0xf]
      %v7632 = vld [vmem:[%s10 + $0x8] sm:$0xf]
      %v7633 = vld [vmem:[%s10 + $0xc] sm:$0xf]
      %v7638 = vunpack.c.l.b16 %v7630
      %v7639 = vunpack.c.l.b16 %v7631
      %v7640 = vunpack.c.l.b16 %v7632
      %v7641 = vunpack.c.l.b16 %v7633
      %v7642 = vpack.c.b16 %v7639, %v7638
      %v7643 = vpack.c.b16 %v7641, %v7640
      %7646 = vrot.lane.b32.xlu0 %v7620, 64
      %v7647 = vpop.permute.xlu0 %7646
      %v7650 = vsel %vm1207, %v7629, 0
      %7652 = vmatprep.subr.bf16.mxu0 0
      %7653 = vmatpush1.bf16.msra.mxu0 0
      %7654 = vmatprep.subr.bf16.mxu0 0
      %7655 = vmatpush1.bf16.msra.mxu0 0
      %7656 = vmatprep.subr.bf16.mxu0 0
      %7657 = vmatpush1.bf16.msra.mxu0 0
      %7658 = vmatprep.subr.bf16.mxu0 0
      %7659 = vmatpush1.bf16.msra.mxu0 0
      %7660 = vmatprep.subr.bf16.mxu0 0
      %7661 = vmatpush1.bf16.msra.mxu0 0
      %7662 = vmatprep.subr.bf16.mxu0 0
      %7663 = vmatpush1.bf16.msra.mxu0 0
      %7664 = vmatprep.subr.bf16.mxu0 0
      %7665 = vmatpush1.bf16.msra.mxu0 %v7643
      %7666 = vmatprep.subr.bf16.mxu0 0
      %7667 = vmatpush1.bf16.msra.mxu0 %v7642
      %7668 = vmatprep.subr.bf16.mxu0 0
      %7669 = vmatpush2.bf16.msra.mxu0 0
      %7670 = vmatprep.subr.bf16.mxu0 0
      %7671 = vmatpush2.bf16.msra.mxu0 0
      %7672 = vmatprep.subr.bf16.mxu0 0
      %7673 = vmatpush2.bf16.msra.mxu0 0
      %7674 = vmatprep.subr.bf16.mxu0 0
      %7675 = vmatpush2.bf16.msra.mxu0 0
      %7676 = vmatprep.subr.bf16.mxu0 0
      %7677 = vmatpush2.bf16.msra.mxu0 0
      %7678 = vmatprep.subr.bf16.mxu0 0
      %7679 = vmatpush2.bf16.msra.mxu0 0
      %7680 = vmatprep.subr.bf16.mxu0 0
      %7681 = vmatpush2.bf16.msra.mxu0 0
      %7682 = vmatprep.subr.bf16.mxu0 0
      %7683 = vmatpush2.bf16.msra.mxu0 0
      %7684 = vmatprep.mubr.bf16.mxu0 0
      %7685 = vmatmul.mubr.bf16.gmra.mxu0 %v7650
      %v7686 = vpop.f32.mrf.mxu0
      %v7687 = vadd.f32 %v7647, %v7686
      %v7688 = vpop.f32.mrf.mxu0
      %v7689 = vpop.f32.mrf.mxu0
      %v7690 = vadd.f32 %v7647, %v7689
      %v7691 = vpop.f32.mrf.mxu0
      %7692 = vdwg.mxu0
      %v7693 = vmul.f32 %v7687, 0.5
      %v7694 = vmul.f32 %v7690, 0.5
      %v7695 = vmul.f32 %v7687, 0.044715
      %v7696 = vmul.f32 %v7690, 0.044715
      %v7697 = vmul.f32 %v7695, %v7687
      %v7698 = vmul.f32 %v7696, %v7690
      %v7699 = vmul.f32 %v7697, %v7687
      %v7700 = vmul.f32 %v7698, %v7690
      %v7701 = vadd.f32 %v7687, %v7699
      %v7702 = vadd.f32 %v7690, %v7700
      %v7703 = vmul.f32 %v7701, 0.7978846
      %v7704 = vmul.f32 %v7702, 0.7978846
      %v7705 = vtanh.pop %v7703
      %v7706 = vtanh.pop %v7704
      %v7707 = vadd.f32 %v7705, 1.0
      %v7708 = vadd.f32 %v7706, 1.0
      %v7709 = vmul.f32 %v7693, %v7707
      %v7710 = vmul.f32 %v7694, %v7708
      %v7711 = vpack.c.bf16 %v7710, %v7709
      %v7712 = vld [vmem:[%s11] sm:$0xf]
      %v7713 = vld [vmem:[%s11 + $0x4] sm:$0xf]
      %v7714 = vld [vmem:[%s11 + $0x8] sm:$0xf]
      %v7715 = vld [vmem:[%s11 + $0xc] sm:$0xf]
      %v7716 = vld [vmem:[%s11 + $0x10] sm:$0xf]
      %v7717 = vld [vmem:[%s11 + $0x14] sm:$0xf]
      %v7718 = vld [vmem:[%s11 + $0x18] sm:$0xf]
      %v7719 = vld [vmem:[%s11 + $0x1c] sm:$0xf]
      %v7720 = vld [vmem:[%s12 + $0x4] sm:$0x1]
      %v7721 = vlaneseq
      %v7722 = vshrl.u32 %v7721, 7
      %v7723 = vsub.s32 0, %v7722
      %v7724 = vrot.slane %v7720, %v7723
      %v7733 = vunpack.c.l.b16 %v7712
      %v7734 = vunpack.c.l.b16 %v7713
      %v7735 = vunpack.c.l.b16 %v7714
      %v7736 = vunpack.c.l.b16 %v7715
      %v7737 = vunpack.c.l.b16 %v7716
      %v7738 = vunpack.c.l.b16 %v7717
      %v7739 = vunpack.c.l.b16 %v7718
      %v7740 = vunpack.c.l.b16 %v7719
      %v7741 = vpack.c.b16 %v7734, %v7733
      %v7742 = vpack.c.b16 %v7736, %v7735
      %v7743 = vpack.c.b16 %v7738, %v7737
      %v7744 = vpack.c.b16 %v7740, %v7739
      %vm7749 = vcmask 523264
      %v7751 = vsel %vm7749, %v7711, 0
      %7753 = vmatprep.subr.bf16.mxu0 0
      %7754 = vmatpush1.bf16.msra.mxu0 0
      %7755 = vmatprep.subr.bf16.mxu0 0
      %7756 = vmatpush1.bf16.msra.mxu0 0
      %7757 = vmatprep.subr.bf16.mxu0 0
      %7758 = vmatpush1.bf16.msra.mxu0 0
      %7759 = vmatprep.subr.bf16.mxu0 0
      %7760 = vmatpush1.bf16.msra.mxu0 0
      %7761 = vmatprep.subr.bf16.mxu0 0
      %7762 = vmatpush1.bf16.msra.mxu0 %v7744
      %7763 = vmatprep.subr.bf16.mxu0 0
      %7764 = vmatpush1.bf16.msra.mxu0 %v7743
      %7765 = vmatprep.subr.bf16.mxu0 0
      %7766 = vmatpush1.bf16.msra.mxu0 %v7742
      %7767 = vmatprep.subr.bf16.mxu0 0
      %7768 = vmatpush1.bf16.msra.mxu0 %v7741
      %7769 = vmatprep.subr.bf16.mxu0 0
      %7770 = vmatpush2.bf16.msra.mxu0 0
      %7771 = vmatprep.subr.bf16.mxu0 0
      %7772 = vmatpush2.bf16.msra.mxu0 0
      %7773 = vmatprep.subr.bf16.mxu0 0
      %7774 = vmatpush2.bf16.msra.mxu0 0
      %7775 = vmatprep.subr.bf16.mxu0 0
      %7776 = vmatpush2.bf16.msra.mxu0 0
      %7777 = vmatprep.subr.bf16.mxu0 0
      %7778 = vmatpush2.bf16.msra.mxu0 0
      %7779 = vmatprep.subr.bf16.mxu0 0
      %7780 = vmatpush2.bf16.msra.mxu0 0
      %7781 = vmatprep.subr.bf16.mxu0 0
      %7782 = vmatpush2.bf16.msra.mxu0 0
      %7783 = vmatprep.subr.bf16.mxu0 0
      %7784 = vmatpush2.bf16.msra.mxu0 0
      %7785 = vmatprep.mubr.bf16.mxu0 0
      %7786 = vmatmul.mubr.bf16.gmra.mxu0 %v7751
      %v7787 = vpop.f32.mrf.mxu0
      %v7788 = vadd.f32 %v7724, %v7787
      %v7789 = vpop.f32.mrf.mxu0
      %v7790 = vpop.f32.mrf.mxu0
      %v7791 = vadd.f32 %v7724, %v7790
      %v7792 = vpop.f32.mrf.mxu0
      %7793 = vdwg.mxu0
      %v7794 = vadd.f32 %v7627, %v7788
      %v7795 = vadd.f32 %v7628, %v7791
      %v7796 = vsel %vm1207, %v7794, 0.0
      %7797 = vadd.xlane.f32.xlu0 %v7796
      %v7798 = vpop.xlane.xlu0 %7797
      %v7799 = vsel %vm6279, %v7795, 0.0
      %7800 = vadd.xlane.f32.xlu0 %v7799
      %v7801 = vpop.xlane.xlu0 %7800
      %v7802 = vmul.f32 %v7798, %v6283
      %v7803 = vmul.f32 %v7801, %v6283
      %v7804 = vsub.f32 %v7794, %v7802
      %v7805 = vsub.f32 %v7795, %v7803
      %v7806 = vmul.f32 %v7804, %v7804
      %v7807 = vmul.f32 %v7805, %v7805
      %v7808 = vsel %vm1207, %v7806, 0.0
      %7809 = vadd.xlane.f32.xlu0 %v7808
      %v7810 = vpop.xlane.xlu0 %7809
      %v7811 = vsel %vm6279, %v7807, 0.0
      %7812 = vadd.xlane.f32.xlu0 %v7811
      %v7813 = vpop.xlane.xlu0 %7812
      %v7814 = vmul.f32 %v7810, %v6283
      %v7815 = vmul.f32 %v7813, %v6283
      %v7816 = vadd.f32 %v7814, 1e-05
      %v7817 = vadd.f32 %v7815, 1e-05
      %v7818 = vrsqrt.pop %v7816
      %v7819 = vrsqrt.pop %v7817
      %v7820 = vmul.f32 %v7804, %v7818
      %v7821 = vmul.f32 %v7805, %v7819
      %7823 = vrot.lane.b32.xlu0 %v7724, 96
      %v7824 = vpop.permute.xlu0 %7823
      %v7826 = vmul.f32 %v7820, %v7824
      %v7827 = vmul.f32 %v7821, %v7824
      %7828 = vrot.lane.b32.xlu0 %v7724, 64
      %v7829 = vpop.permute.xlu0 %7828
      %v7831 = vadd.f32 %v7826, %v7829
      %v7832 = vadd.f32 %v7827, %v7829
      %v7833 = vpack.c.bf16 %v7832, %v7831
      %s7834 = scalar_lea.vmem %s8, 16
      %v7835 = vld [vmem:[%s7834] sm:$0xf]
      %v7836 = vld [vmem:[%s7834 + $0x4] sm:$0xf]
      %v7837 = vld [vmem:[%s7834 + $0x8] sm:$0xf]
      %v7838 = vld [vmem:[%s7834 + $0xc] sm:$0xf]
      %v7839 = vld [vmem:[%s12 + $0x1] sm:$0x1]
      %v7840 = vlaneseq
      %v7841 = vshrl.u32 %v7840, 7
      %v7842 = vsub.s32 0, %v7841
      %v7843 = vrot.slane %v7839, %v7842
      %v7848 = vunpack.c.l.b16 %v7835
      %v7849 = vunpack.c.l.b16 %v7836
      %v7850 = vunpack.c.l.b16 %v7837
      %v7851 = vunpack.c.l.b16 %v7838
      %v7852 = vpack.c.b16 %v7849, %v7848
      %v7853 = vpack.c.b16 %v7851, %v7850
      %v7857 = vsel %vm1207, %v7833, 0
      %7859 = vmatprep.subr.bf16.mxu0 0
      %7860 = vmatpush1.bf16.msra.mxu0 0
      %7861 = vmatprep.subr.bf16.mxu0 0
      %7862 = vmatpush1.bf16.msra.mxu0 0
      %7863 = vmatprep.subr.bf16.mxu0 0
      %7864 = vmatpush1.bf16.msra.mxu0 0
      %7865 = vmatprep.subr.bf16.mxu0 0
      %7866 = vmatpush1.bf16.msra.mxu0 0
      %7867 = vmatprep.subr.bf16.mxu0 0
      %7868 = vmatpush1.bf16.msra.mxu0 0
      %7869 = vmatprep.subr.bf16.mxu0 0
      %7870 = vmatpush1.bf16.msra.mxu0 0
      %7871 = vmatprep.subr.bf16.mxu0 0
      %7872 = vmatpush1.bf16.msra.mxu0 %v7853
      %7873 = vmatprep.subr.bf16.mxu0 0
      %7874 = vmatpush1.bf16.msra.mxu0 %v7852
      %7875 = vmatprep.subr.bf16.mxu0 0
      %7876 = vmatpush2.bf16.msra.mxu0 0
      %7877 = vmatprep.subr.bf16.mxu0 0
      %7878 = vmatpush2.bf16.msra.mxu0 0
      %7879 = vmatprep.subr.bf16.mxu0 0
      %7880 = vmatpush2.bf16.msra.mxu0 0
      %7881 = vmatprep.subr.bf16.mxu0 0
      %7882 = vmatpush2.bf16.msra.mxu0 0
      %7883 = vmatprep.subr.bf16.mxu0 0
      %7884 = vmatpush2.bf16.msra.mxu0 0
      %7885 = vmatprep.subr.bf16.mxu0 0
      %7886 = vmatpush2.bf16.msra.mxu0 0
      %7887 = vmatprep.subr.bf16.mxu0 0
      %7888 = vmatpush2.bf16.msra.mxu0 0
      %7889 = vmatprep.subr.bf16.mxu0 0
      %7890 = vmatpush2.bf16.msra.mxu0 0
      %7891 = vmatprep.mubr.bf16.mxu0 0
      %7892 = vmatmul.mubr.bf16.gmra.mxu0 %v7857
      %v7893 = vpop.f32.mrf.mxu0
      %v7894 = vadd.f32 %v7843, %v7893
      %v7895 = vpop.f32.mrf.mxu0
      %v7896 = vpop.f32.mrf.mxu0
      %v7897 = vadd.f32 %v7843, %v7896
      %v7898 = vpop.f32.mrf.mxu0
      %7899 = vdwg.mxu0
      %v7900 = vmul.f32 %v7894, 0.35355338
      %v7901 = vmul.f32 %v7897, 0.35355338
      %v7902 = vpack.c.bf16 %v7901, %v7900
      %v7903 = vpack.c.bf16 %v7897, %v7894
      %7905 = vrot.lane.b32.xlu0 %v7903, 96
      %v7906 = vpop.permute.xlu0 %7905
      %v7908 = vsel %vm6988, %v7902, 0
      %v7911 = vsel %vm6988, %v7906, 0
      %7913 = vmatprep.subr.bf16.mxu0 0
      %7914 = vmatpush1.bf16.xpose.msra.mxu0 0
      %7915 = vmatprep.subr.bf16.mxu0 0
      %7916 = vmatpush1.bf16.xpose.msra.mxu0 0
      %7917 = vmatprep.subr.bf16.mxu0 0
      %7918 = vmatpush1.bf16.xpose.msra.mxu0 0
      %7919 = vmatprep.subr.bf16.mxu0 0
      %7920 = vmatpush1.bf16.xpose.msra.mxu0 0
      %7921 = vmatprep.subr.bf16.mxu0 0
      %7922 = vmatpush1.bf16.xpose.msra.mxu0 0
      %7923 = vmatprep.subr.bf16.mxu0 0
      %7924 = vmatpush1.bf16.xpose.msra.mxu0 0
      %7925 = vmatprep.subr.bf16.mxu0 0
      %7926 = vmatpush1.bf16.xpose.msra.mxu0 0
      %7927 = vmatprep.subr.bf16.mxu0 0
      %7928 = vmatpush1.bf16.xpose.msra.mxu0 %v7911
      %7929 = vmatprep.subr.bf16.mxu0 0
      %7930 = vmatpush2.bf16.xpose.msra.mxu0 0
      %7931 = vmatprep.subr.bf16.mxu0 0
      %7932 = vmatpush2.bf16.xpose.msra.mxu0 0
      %7933 = vmatprep.subr.bf16.mxu0 0
      %7934 = vmatpush2.bf16.xpose.msra.mxu0 0
      %7935 = vmatprep.subr.bf16.mxu0 0
      %7936 = vmatpush2.bf16.xpose.msra.mxu0 0
      %7937 = vmatprep.subr.bf16.mxu0 0
      %7938 = vmatpush2.bf16.xpose.msra.mxu0 0
      %7939 = vmatprep.subr.bf16.mxu0 0
      %7940 = vmatpush2.bf16.xpose.msra.mxu0 0
      %7941 = vmatprep.subr.bf16.mxu0 0
      %7942 = vmatpush2.bf16.xpose.msra.mxu0 0
      %7943 = vmatprep.subr.bf16.mxu0 0
      %7944 = vmatpush2.bf16.xpose.msra.mxu0 0
      %7945 = vmatprep.mubr.bf16.mxu0 0
      %7946 = vmatmul.mubr.bf16.gmra.mxu0 %v7908
      %v7947 = vpop.f32.mrf.mxu0
      %v7948 = vadd.f32 %v6983, %v7947
      %v7949 = vpop.f32.mrf.mxu0
      %v7950 = vpop.f32.mrf.mxu0
      %v7951 = vadd.f32 %v6984, %v7950
      %v7952 = vpop.f32.mrf.mxu0
      %7953 = vdwg.mxu0
      %v7954 = vsel %vm7036, %v7948, -inf
      %7955 = vmax.xlane.f32.xlu0 %v7954
      %v7956 = vpop.xlane.xlu0 %7955
      %v7957 = vsel %vm7040, %v7951, -inf
      %7958 = vmax.xlane.f32.xlu0 %v7957
      %v7959 = vpop.xlane.xlu0 %7958
      %v7960 = vsub.f32 %v7948, %v7956
      %v7961 = vsub.f32 %v7951, %v7959
      %v7962 = vmul.f32 %v7960, 1.442695
      %v7963 = vpow.pop %v7962
      %v7964 = vmul.f32 %v7961, 1.442695
      %v7965 = vpow.pop %v7964
      %v7966 = vsel %vm7036, %v7963, 0.0
      %7967 = vadd.xlane.f32.xlu0 %v7966
      %v7968 = vpop.xlane.xlu0 %7967
      %v7969 = vsel %vm7040, %v7965, 0.0
      %7970 = vadd.xlane.f32.xlu0 %v7969
      %v7971 = vpop.xlane.xlu0 %7970
      %v7972 = vrcp.pop %v7968
      %v7973 = vmul.f32 %v7963, %v7972
      %v7974 = vrcp.pop %v7971
      %v7975 = vmul.f32 %v7965, %v7974
      %v7976 = vpack.c.bf16 %v7975, %v7973
      %7977 = vrot.lane.b32.xlu0 %v7903, 64
      %v7978 = vpop.permute.xlu0 %7977
      %v7980 = vsel %vm7036, %v7976, 0
      %v7983 = vand.u32 %v7978, %v7067
      %7985 = vmatprep.subr.bf16.mxu0 0
      %7986 = vmatpush1.bf16.msra.mxu0 0
      %7987 = vmatprep.subr.bf16.mxu0 0
      %7988 = vmatpush1.bf16.msra.mxu0 0
      %7989 = vmatprep.subr.bf16.mxu0 0
      %7990 = vmatpush1.bf16.msra.mxu0 0
      %7991 = vmatprep.subr.bf16.mxu0 0
      %7992 = vmatpush1.bf16.msra.mxu0 0
      %7993 = vmatprep.subr.bf16.mxu0 0
      %7994 = vmatpush1.bf16.msra.mxu0 0
      %7995 = vmatprep.subr.bf16.mxu0 0
      %7996 = vmatpush1.bf16.msra.mxu0 0
      %7997 = vmatprep.subr.bf16.mxu0 0
      %7998 = vmatpush1.bf16.msra.mxu0 0
      %7999 = vmatprep.subr.bf16.mxu0 0
      %8000 = vmatpush1.bf16.msra.mxu0 %v7983
      %8001 = vmatprep.subr.bf16.mxu0 0
      %8002 = vmatpush2.bf16.msra.mxu0 0
      %8003 = vmatprep.subr.bf16.mxu0 0
      %8004 = vmatpush2.bf16.msra.mxu0 0
      %8005 = vmatprep.subr.bf16.mxu0 0
      %8006 = vmatpush2.bf16.msra.mxu0 0
      %8007 = vmatprep.subr.bf16.mxu0 0
      %8008 = vmatpush2.bf16.msra.mxu0 0
      %8009 = vmatprep.subr.bf16.mxu0 0
      %8010 = vmatpush2.bf16.msra.mxu0 0
      %8011 = vmatprep.subr.bf16.mxu0 0
      %8012 = vmatpush2.bf16.msra.mxu0 0
      %8013 = vmatprep.subr.bf16.mxu0 0
      %8014 = vmatpush2.bf16.msra.mxu0 0
      %8015 = vmatprep.subr.bf16.mxu0 0
      %8016 = vmatpush2.bf16.msra.mxu0 0
      %8017 = vmatprep.mubr.bf16.mxu0 0
      %8018 = vmatmul.mubr.bf16.gmra.mxu0 %v7980
      %v8019 = vpop.f32.mrf.mxu0
      %v8020 = vadd.f32 0.0, %v8019
      %v8021 = vpop.f32.mrf.mxu0
      %v8022 = vpop.f32.mrf.mxu0
      %v8023 = vadd.f32 0.0, %v8022
      %v8024 = vpop.f32.mrf.mxu0
      %8025 = vdwg.mxu0
      %8027 = vrot.lane.b32.xlu0 %v7902, 120
      %v8028 = vpop.permute.xlu0 %8027
      %8029 = vrot.lane.b32.xlu0 %v7903, 88
      %v8030 = vpop.permute.xlu0 %8029
      %v8032 = vsel %vm6988, %v8028, 0
      %v8035 = vsel %vm6988, %v8030, 0
      %8037 = vmatprep.subr.bf16.mxu0 0
      %8038 = vmatpush1.bf16.xpose.msra.mxu0 0
      %8039 = vmatprep.subr.bf16.mxu0 0
      %8040 = vmatpush1.bf16.xpose.msra.mxu0 0
      %8041 = vmatprep.subr.bf16.mxu0 0
      %8042 = vmatpush1.bf16.xpose.msra.mxu0 0
      %8043 = vmatprep.subr.bf16.mxu0 0
      %8044 = vmatpush1.bf16.xpose.msra.mxu0 0
      %8045 = vmatprep.subr.bf16.mxu0 0
      %8046 = vmatpush1.bf16.xpose.msra.mxu0 0
      %8047 = vmatprep.subr.bf16.mxu0 0
      %8048 = vmatpush1.bf16.xpose.msra.mxu0 0
      %8049 = vmatprep.subr.bf16.mxu0 0
      %8050 = vmatpush1.bf16.xpose.msra.mxu0 0
      %8051 = vmatprep.subr.bf16.mxu0 0
      %8052 = vmatpush1.bf16.xpose.msra.mxu0 %v8035
      %8053 = vmatprep.subr.bf16.mxu0 0
      %8054 = vmatpush2.bf16.xpose.msra.mxu0 0
      %8055 = vmatprep.subr.bf16.mxu0 0
      %8056 = vmatpush2.bf16.xpose.msra.mxu0 0
      %8057 = vmatprep.subr.bf16.mxu0 0
      %8058 = vmatpush2.bf16.xpose.msra.mxu0 0
      %8059 = vmatprep.subr.bf16.mxu0 0
      %8060 = vmatpush2.bf16.xpose.msra.mxu0 0
      %8061 = vmatprep.subr.bf16.mxu0 0
      %8062 = vmatpush2.bf16.xpose.msra.mxu0 0
      %8063 = vmatprep.subr.bf16.mxu0 0
      %8064 = vmatpush2.bf16.xpose.msra.mxu0 0
      %8065 = vmatprep.subr.bf16.mxu0 0
      %8066 = vmatpush2.bf16.xpose.msra.mxu0 0
      %8067 = vmatprep.subr.bf16.mxu0 0
      %8068 = vmatpush2.bf16.xpose.msra.mxu0 0
      %8069 = vmatprep.mubr.bf16.mxu0 0
      %8070 = vmatmul.mubr.bf16.gmra.mxu0 %v8032
      %v8071 = vpop.f32.mrf.mxu0
      %v8072 = vadd.f32 %v7113, %v8071
      %v8073 = vpop.f32.mrf.mxu0
      %v8074 = vpop.f32.mrf.mxu0
      %v8075 = vadd.f32 %v7114, %v8074
      %v8076 = vpop.f32.mrf.mxu0
      %8077 = vdwg.mxu0
      %v8078 = vsel %vm7036, %v8072, -inf
      %8079 = vmax.xlane.f32.xlu0 %v8078
      %v8080 = vpop.xlane.xlu0 %8079
      %v8081 = vsel %vm7040, %v8075, -inf
      %8082 = vmax.xlane.f32.xlu0 %v8081
      %v8083 = vpop.xlane.xlu0 %8082
      %v8084 = vsub.f32 %v8072, %v8080
      %v8085 = vsub.f32 %v8075, %v8083
      %v8086 = vmul.f32 %v8084, 1.442695
      %v8087 = vpow.pop %v8086
      %v8088 = vmul.f32 %v8085, 1.442695
      %v8089 = vpow.pop %v8088
      %v8090 = vsel %vm7036, %v8087, 0.0
      %8091 = vadd.xlane.f32.xlu0 %v8090
      %v8092 = vpop.xlane.xlu0 %8091
      %v8093 = vsel %vm7040, %v8089, 0.0
      %8094 = vadd.xlane.f32.xlu0 %v8093
      %v8095 = vpop.xlane.xlu0 %8094
      %v8096 = vrcp.pop %v8092
      %v8097 = vmul.f32 %v8087, %v8096
      %v8098 = vrcp.pop %v8095
      %v8099 = vmul.f32 %v8089, %v8098
      %v8100 = vpack.c.bf16 %v8099, %v8097
      %8101 = vrot.lane.b32.xlu0 %v7903, 56
      %v8102 = vpop.permute.xlu0 %8101
      %v8104 = vsel %vm7036, %v8100, 0
      %v8107 = vand.u32 %v8102, %v7067
      %8109 = vmatprep.subr.bf16.mxu0 0
      %8110 = vmatpush1.bf16.msra.mxu0 0
      %8111 = vmatprep.subr.bf16.mxu0 0
      %8112 = vmatpush1.bf16.msra.mxu0 0
      %8113 = vmatprep.subr.bf16.mxu0 0
      %8114 = vmatpush1.bf16.msra.mxu0 0
      %8115 = vmatprep.subr.bf16.mxu0 0
      %8116 = vmatpush1.bf16.msra.mxu0 0
      %8117 = vmatprep.subr.bf16.mxu0 0
      %8118 = vmatpush1.bf16.msra.mxu0 0
      %8119 = vmatprep.subr.bf16.mxu0 0
      %8120 = vmatpush1.bf16.msra.mxu0 0
      %8121 = vmatprep.subr.bf16.mxu0 0
      %8122 = vmatpush1.bf16.msra.mxu0 0
      %8123 = vmatprep.subr.bf16.mxu0 0
      %8124 = vmatpush1.bf16.msra.mxu0 %v8107
      %8125 = vmatprep.subr.bf16.mxu0 0
      %8126 = vmatpush2.bf16.msra.mxu0 0
      %8127 = vmatprep.subr.bf16.mxu0 0
      %8128 = vmatpush2.bf16.msra.mxu0 0
      %8129 = vmatprep.subr.bf16.mxu0 0
      %8130 = vmatpush2.bf16.msra.mxu0 0
      %8131 = vmatprep.subr.bf16.mxu0 0
      %8132 = vmatpush2.bf16.msra.mxu0 0
      %8133 = vmatprep.subr.bf16.mxu0 0
      %8134 = vmatpush2.bf16.msra.mxu0 0
      %8135 = vmatprep.subr.bf16.mxu0 0
      %8136 = vmatpush2.bf16.msra.mxu0 0
      %8137 = vmatprep.subr.bf16.mxu0 0
      %8138 = vmatpush2.bf16.msra.mxu0 0
      %8139 = vmatprep.subr.bf16.mxu0 0
      %8140 = vmatpush2.bf16.msra.mxu0 0
      %8141 = vmatprep.mubr.bf16.mxu0 0
      %8142 = vmatmul.mubr.bf16.gmra.mxu0 %v8104
      %v8143 = vpop.f32.mrf.mxu0
      %v8144 = vadd.f32 0.0, %v8143
      %v8145 = vpop.f32.mrf.mxu0
      %v8146 = vpop.f32.mrf.mxu0
      %v8147 = vadd.f32 0.0, %v8146
      %v8148 = vpop.f32.mrf.mxu0
      %8149 = vdwg.mxu0
      %8150 = vrot.lane.b32.xlu0 %v7902, 112
      %v8151 = vpop.permute.xlu0 %8150
      %8152 = vrot.lane.b32.xlu0 %v7903, 80
      %v8153 = vpop.permute.xlu0 %8152
      %v8155 = vsel %vm6988, %v8151, 0
      %v8158 = vsel %vm6988, %v8153, 0
      %8160 = vmatprep.subr.bf16.mxu0 0
      %8161 = vmatpush1.bf16.xpose.msra.mxu0 0
      %8162 = vmatprep.subr.bf16.mxu0 0
      %8163 = vmatpush1.bf16.xpose.msra.mxu0 0
      %8164 = vmatprep.subr.bf16.mxu0 0
      %8165 = vmatpush1.bf16.xpose.msra.mxu0 0
      %8166 = vmatprep.subr.bf16.mxu0 0
      %8167 = vmatpush1.bf16.xpose.msra.mxu0 0
      %8168 = vmatprep.subr.bf16.mxu0 0
      %8169 = vmatpush1.bf16.xpose.msra.mxu0 0
      %8170 = vmatprep.subr.bf16.mxu0 0
      %8171 = vmatpush1.bf16.xpose.msra.mxu0 0
      %8172 = vmatprep.subr.bf16.mxu0 0
      %8173 = vmatpush1.bf16.xpose.msra.mxu0 0
      %8174 = vmatprep.subr.bf16.mxu0 0
      %8175 = vmatpush1.bf16.xpose.msra.mxu0 %v8158
      %8176 = vmatprep.subr.bf16.mxu0 0
      %8177 = vmatpush2.bf16.xpose.msra.mxu0 0
      %8178 = vmatprep.subr.bf16.mxu0 0
      %8179 = vmatpush2.bf16.xpose.msra.mxu0 0
      %8180 = vmatprep.subr.bf16.mxu0 0
      %8181 = vmatpush2.bf16.xpose.msra.mxu0 0
      %8182 = vmatprep.subr.bf16.mxu0 0
      %8183 = vmatpush2.bf16.xpose.msra.mxu0 0
      %8184 = vmatprep.subr.bf16.mxu0 0
      %8185 = vmatpush2.bf16.xpose.msra.mxu0 0
      %8186 = vmatprep.subr.bf16.mxu0 0
      %8187 = vmatpush2.bf16.xpose.msra.mxu0 0
      %8188 = vmatprep.subr.bf16.mxu0 0
      %8189 = vmatpush2.bf16.xpose.msra.mxu0 0
      %8190 = vmatprep.subr.bf16.mxu0 0
      %8191 = vmatpush2.bf16.xpose.msra.mxu0 0
      %8192 = vmatprep.mubr.bf16.mxu0 0
      %8193 = vmatmul.mubr.bf16.gmra.mxu0 %v8155
      %v8194 = vpop.f32.mrf.mxu0
      %v8195 = vadd.f32 %v7240, %v8194
      %v8196 = vpop.f32.mrf.mxu0
      %v8197 = vpop.f32.mrf.mxu0
      %v8198 = vadd.f32 %v7241, %v8197
      %v8199 = vpop.f32.mrf.mxu0
      %8200 = vdwg.mxu0
      %v8201 = vsel %vm7036, %v8195, -inf
      %8202 = vmax.xlane.f32.xlu0 %v8201
      %v8203 = vpop.xlane.xlu0 %8202
      %v8204 = vsel %vm7040, %v8198, -inf
      %8205 = vmax.xlane.f32.xlu0 %v8204
      %v8206 = vpop.xlane.xlu0 %8205
      %v8207 = vsub.f32 %v8195, %v8203
      %v8208 = vsub.f32 %v8198, %v8206
      %v8209 = vmul.f32 %v8207, 1.442695
      %v8210 = vpow.pop %v8209
      %v8211 = vmul.f32 %v8208, 1.442695
      %v8212 = vpow.pop %v8211
      %v8213 = vsel %vm7036, %v8210, 0.0
      %8214 = vadd.xlane.f32.xlu0 %v8213
      %v8215 = vpop.xlane.xlu0 %8214
      %v8216 = vsel %vm7040, %v8212, 0.0
      %8217 = vadd.xlane.f32.xlu0 %v8216
      %v8218 = vpop.xlane.xlu0 %8217
      %v8219 = vrcp.pop %v8215
      %v8220 = vmul.f32 %v8210, %v8219
      %v8221 = vrcp.pop %v8218
      %v8222 = vmul.f32 %v8212, %v8221
      %v8223 = vpack.c.bf16 %v8222, %v8220
      %8224 = vrot.lane.b32.xlu0 %v7903, 48
      %v8225 = vpop.permute.xlu0 %8224
      %v8227 = vsel %vm7036, %v8223, 0
      %v8230 = vand.u32 %v8225, %v7067
      %8232 = vmatprep.subr.bf16.mxu0 0
      %8233 = vmatpush1.bf16.msra.mxu0 0
      %8234 = vmatprep.subr.bf16.mxu0 0
      %8235 = vmatpush1.bf16.msra.mxu0 0
      %8236 = vmatprep.subr.bf16.mxu0 0
      %8237 = vmatpush1.bf16.msra.mxu0 0
      %8238 = vmatprep.subr.bf16.mxu0 0
      %8239 = vmatpush1.bf16.msra.mxu0 0
      %8240 = vmatprep.subr.bf16.mxu0 0
      %8241 = vmatpush1.bf16.msra.mxu0 0
      %8242 = vmatprep.subr.bf16.mxu0 0
      %8243 = vmatpush1.bf16.msra.mxu0 0
      %8244 = vmatprep.subr.bf16.mxu0 0
      %8245 = vmatpush1.bf16.msra.mxu0 0
      %8246 = vmatprep.subr.bf16.mxu0 0
      %8247 = vmatpush1.bf16.msra.mxu0 %v8230
      %8248 = vmatprep.subr.bf16.mxu0 0
      %8249 = vmatpush2.bf16.msra.mxu0 0
      %8250 = vmatprep.subr.bf16.mxu0 0
      %8251 = vmatpush2.bf16.msra.mxu0 0
      %8252 = vmatprep.subr.bf16.mxu0 0
      %8253 = vmatpush2.bf16.msra.mxu0 0
      %8254 = vmatprep.subr.bf16.mxu0 0
      %8255 = vmatpush2.bf16.msra.mxu0 0
      %8256 = vmatprep.subr.bf16.mxu0 0
      %8257 = vmatpush2.bf16.msra.mxu0 0
      %8258 = vmatprep.subr.bf16.mxu0 0
      %8259 = vmatpush2.bf16.msra.mxu0 0
      %8260 = vmatprep.subr.bf16.mxu0 0
      %8261 = vmatpush2.bf16.msra.mxu0 0
      %8262 = vmatprep.subr.bf16.mxu0 0
      %8263 = vmatpush2.bf16.msra.mxu0 0
      %8264 = vmatprep.mubr.bf16.mxu0 0
      %8265 = vmatmul.mubr.bf16.gmra.mxu0 %v8227
      %v8266 = vpop.f32.mrf.mxu0
      %v8267 = vadd.f32 0.0, %v8266
      %v8268 = vpop.f32.mrf.mxu0
      %v8269 = vpop.f32.mrf.mxu0
      %v8270 = vadd.f32 0.0, %v8269
      %v8271 = vpop.f32.mrf.mxu0
      %8272 = vdwg.mxu0
      %8273 = vrot.lane.b32.xlu0 %v7902, 104
      %v8274 = vpop.permute.xlu0 %8273
      %8275 = vrot.lane.b32.xlu0 %v7903, 72
      %v8276 = vpop.permute.xlu0 %8275
      %v8278 = vsel %vm6988, %v8274, 0
      %v8281 = vsel %vm6988, %v8276, 0
      %8283 = vmatprep.subr.bf16.mxu0 0
      %8284 = vmatpush1.bf16.xpose.msra.mxu0 0
      %8285 = vmatprep.subr.bf16.mxu0 0
      %8286 = vmatpush1.bf16.xpose.msra.mxu0 0
      %8287 = vmatprep.subr.bf16.mxu0 0
      %8288 = vmatpush1.bf16.xpose.msra.mxu0 0
      %8289 = vmatprep.subr.bf16.mxu0 0
      %8290 = vmatpush1.bf16.xpose.msra.mxu0 0
      %8291 = vmatprep.subr.bf16.mxu0 0
      %8292 = vmatpush1.bf16.xpose.msra.mxu0 0
      %8293 = vmatprep.subr.bf16.mxu0 0
      %8294 = vmatpush1.bf16.xpose.msra.mxu0 0
      %8295 = vmatprep.subr.bf16.mxu0 0
      %8296 = vmatpush1.bf16.xpose.msra.mxu0 0
      %8297 = vmatprep.subr.bf16.mxu0 0
      %8298 = vmatpush1.bf16.xpose.msra.mxu0 %v8281
      %8299 = vmatprep.subr.bf16.mxu0 0
      %8300 = vmatpush2.bf16.xpose.msra.mxu0 0
      %8301 = vmatprep.subr.bf16.mxu0 0
      %8302 = vmatpush2.bf16.xpose.msra.mxu0 0
      %8303 = vmatprep.subr.bf16.mxu0 0
      %8304 = vmatpush2.bf16.xpose.msra.mxu0 0
      %8305 = vmatprep.subr.bf16.mxu0 0
      %8306 = vmatpush2.bf16.xpose.msra.mxu0 0
      %8307 = vmatprep.subr.bf16.mxu0 0
      %8308 = vmatpush2.bf16.xpose.msra.mxu0 0
      %8309 = vmatprep.subr.bf16.mxu0 0
      %8310 = vmatpush2.bf16.xpose.msra.mxu0 0
      %8311 = vmatprep.subr.bf16.mxu0 0
      %8312 = vmatpush2.bf16.xpose.msra.mxu0 0
      %8313 = vmatprep.subr.bf16.mxu0 0
      %8314 = vmatpush2.bf16.xpose.msra.mxu0 0
      %8315 = vmatprep.mubr.bf16.mxu0 0
      %8316 = vmatmul.mubr.bf16.gmra.mxu0 %v8278
      %v8317 = vpop.f32.mrf.mxu0
      %v8318 = vadd.f32 %v7366, %v8317
      %v8319 = vpop.f32.mrf.mxu0
      %v8320 = vpop.f32.mrf.mxu0
      %v8321 = vadd.f32 %v7367, %v8320
      %v8322 = vpop.f32.mrf.mxu0
      %8323 = vdwg.mxu0
      %v8324 = vsel %vm7036, %v8318, -inf
      %8325 = vmax.xlane.f32.xlu0 %v8324
      %v8326 = vpop.xlane.xlu0 %8325
      %v8327 = vsel %vm7040, %v8321, -inf
      %8328 = vmax.xlane.f32.xlu0 %v8327
      %v8329 = vpop.xlane.xlu0 %8328
      %v8330 = vsub.f32 %v8318, %v8326
      %v8331 = vsub.f32 %v8321, %v8329
      %v8332 = vmul.f32 %v8330, 1.442695
      %v8333 = vpow.pop %v8332
      %v8334 = vmul.f32 %v8331, 1.442695
      %v8335 = vpow.pop %v8334
      %v8336 = vsel %vm7036, %v8333, 0.0
      %8337 = vadd.xlane.f32.xlu0 %v8336
      %v8338 = vpop.xlane.xlu0 %8337
      %v8339 = vsel %vm7040, %v8335, 0.0
      %8340 = vadd.xlane.f32.xlu0 %v8339
      %v8341 = vpop.xlane.xlu0 %8340
      %v8342 = vrcp.pop %v8338
      %v8343 = vmul.f32 %v8333, %v8342
      %v8344 = vrcp.pop %v8341
      %v8345 = vmul.f32 %v8335, %v8344
      %v8346 = vpack.c.bf16 %v8345, %v8343
      %8347 = vrot.lane.b32.xlu0 %v7903, 40
      %v8348 = vpop.permute.xlu0 %8347
      %v8350 = vsel %vm7036, %v8346, 0
      %v8353 = vand.u32 %v8348, %v7067
      %8355 = vmatprep.subr.bf16.mxu0 0
      %8356 = vmatpush1.bf16.msra.mxu0 0
      %8357 = vmatprep.subr.bf16.mxu0 0
      %8358 = vmatpush1.bf16.msra.mxu0 0
      %8359 = vmatprep.subr.bf16.mxu0 0
      %8360 = vmatpush1.bf16.msra.mxu0 0
      %8361 = vmatprep.subr.bf16.mxu0 0
      %8362 = vmatpush1.bf16.msra.mxu0 0
      %8363 = vmatprep.subr.bf16.mxu0 0
      %8364 = vmatpush1.bf16.msra.mxu0 0
      %8365 = vmatprep.subr.bf16.mxu0 0
      %8366 = vmatpush1.bf16.msra.mxu0 0
      %8367 = vmatprep.subr.bf16.mxu0 0
      %8368 = vmatpush1.bf16.msra.mxu0 0
      %8369 = vmatprep.subr.bf16.mxu0 0
      %8370 = vmatpush1.bf16.msra.mxu0 %v8353
      %8371 = vmatprep.subr.bf16.mxu0 0
      %8372 = vmatpush2.bf16.msra.mxu0 0
      %8373 = vmatprep.subr.bf16.mxu0 0
      %8374 = vmatpush2.bf16.msra.mxu0 0
      %8375 = vmatprep.subr.bf16.mxu0 0
      %8376 = vmatpush2.bf16.msra.mxu0 0
      %8377 = vmatprep.subr.bf16.mxu0 0
      %8378 = vmatpush2.bf16.msra.mxu0 0
      %8379 = vmatprep.subr.bf16.mxu0 0
      %8380 = vmatpush2.bf16.msra.mxu0 0
      %8381 = vmatprep.subr.bf16.mxu0 0
      %8382 = vmatpush2.bf16.msra.mxu0 0
      %8383 = vmatprep.subr.bf16.mxu0 0
      %8384 = vmatpush2.bf16.msra.mxu0 0
      %8385 = vmatprep.subr.bf16.mxu0 0
      %8386 = vmatpush2.bf16.msra.mxu0 0
      %8387 = vmatprep.mubr.bf16.mxu0 0
      %8388 = vmatmul.mubr.bf16.gmra.mxu0 %v8350
      %v8389 = vpop.f32.mrf.mxu0
      %v8390 = vadd.f32 0.0, %v8389
      %v8391 = vpop.f32.mrf.mxu0
      %v8392 = vpop.f32.mrf.mxu0
      %v8393 = vadd.f32 0.0, %v8392
      %v8394 = vpop.f32.mrf.mxu0
      %8395 = vdwg.mxu0
      %8398 = vrot.lane.b32.xlu0 %v8144, 8
      %v8399 = vpop.permute.xlu0 %8398
      %8400 = vrot.lane.b32.xlu0 %v8147, 8
      %v8401 = vpop.permute.xlu0 %8400
      %8406 = vrot.lane.b32.xlu0 %v8267, 16
      %v8407 = vpop.permute.xlu0 %8406
      %8408 = vrot.lane.b32.xlu0 %v8270, 16
      %v8409 = vpop.permute.xlu0 %8408
      %8414 = vrot.lane.b32.xlu0 %v8390, 24
      %v8415 = vpop.permute.xlu0 %8414
      %8416 = vrot.lane.b32.xlu0 %v8393, 24
      %v8417 = vpop.permute.xlu0 %8416
      %v8420 = vsel %vm6988, %v8020, %v8399
      %v8421 = vsel %vm6988, %v8023, %v8401
      %v8422 = vsel %vm7517, %v8420, %v8407
      %v8423 = vsel %vm7517, %v8421, %v8409
      %v8424 = vsel %vm7520, %v8422, %v8415
      %v8425 = vsel %vm7520, %v8423, %v8417
      %v8426 = vpack.c.bf16 %v8425, %v8424
      %s8427 = scalar_lea.vmem %s9, 16
      %v8428 = vld [vmem:[%s8427] sm:$0xf]
      %v8429 = vld [vmem:[%s8427 + $0x4] sm:$0xf]
      %v8430 = vld [vmem:[%s8427 + $0x8] sm:$0xf]
      %v8431 = vld [vmem:[%s8427 + $0xc] sm:$0xf]
      %v8436 = vunpack.c.l.b16 %v8428
      %v8437 = vunpack.c.l.b16 %v8429
      %v8438 = vunpack.c.l.b16 %v8430
      %v8439 = vunpack.c.l.b16 %v8431
      %v8440 = vpack.c.b16 %v8437, %v8436
      %v8441 = vpack.c.b16 %v8439, %v8438
      %8445 = vrot.lane.b32.xlu0 %v7843, 32
      %v8446 = vpop.permute.xlu0 %8445
      %v8449 = vsel %vm1207, %v8426, 0
      %8451 = vmatprep.subr.bf16.mxu0 0
      %8452 = vmatpush1.bf16.msra.mxu0 0
      %8453 = vmatprep.subr.bf16.mxu0 0
      %8454 = vmatpush1.bf16.msra.mxu0 0
      %8455 = vmatprep.subr.bf16.mxu0 0
      %8456 = vmatpush1.bf16.msra.mxu0 0
      %8457 = vmatprep.subr.bf16.mxu0 0
      %8458 = vmatpush1.bf16.msra.mxu0 0
      %8459 = vmatprep.subr.bf16.mxu0 0
      %8460 = vmatpush1.bf16.msra.mxu0 0
      %8461 = vmatprep.subr.bf16.mxu0 0
      %8462 = vmatpush1.bf16.msra.mxu0 0
      %8463 = vmatprep.subr.bf16.mxu0 0
      %8464 = vmatpush1.bf16.msra.mxu0 %v8441
      %8465 = vmatprep.subr.bf16.mxu0 0
      %8466 = vmatpush1.bf16.msra.mxu0 %v8440
      %8467 = vmatprep.subr.bf16.mxu0 0
      %8468 = vmatpush2.bf16.msra.mxu0 0
      %8469 = vmatprep.subr.bf16.mxu0 0
      %8470 = vmatpush2.bf16.msra.mxu0 0
      %8471 = vmatprep.subr.bf16.mxu0 0
      %8472 = vmatpush2.bf16.msra.mxu0 0
      %8473 = vmatprep.subr.bf16.mxu0 0
      %8474 = vmatpush2.bf16.msra.mxu0 0
      %8475 = vmatprep.subr.bf16.mxu0 0
      %8476 = vmatpush2.bf16.msra.mxu0 0
      %8477 = vmatprep.subr.bf16.mxu0 0
      %8478 = vmatpush2.bf16.msra.mxu0 0
      %8479 = vmatprep.subr.bf16.mxu0 0
      %8480 = vmatpush2.bf16.msra.mxu0 0
      %8481 = vmatprep.subr.bf16.mxu0 0
      %8482 = vmatpush2.bf16.msra.mxu0 0
      %8483 = vmatprep.mubr.bf16.mxu0 0
      %8484 = vmatmul.mubr.bf16.gmra.mxu0 %v8449
      %v8485 = vpop.f32.mrf.mxu0
      %v8486 = vadd.f32 %v8446, %v8485
      %v8487 = vpop.f32.mrf.mxu0
      %v8488 = vpop.f32.mrf.mxu0
      %v8489 = vadd.f32 %v8446, %v8488
      %v8490 = vpop.f32.mrf.mxu0
      %8491 = vdwg.mxu0
      %v8492 = vadd.f32 %v7831, %v8486
      %v8493 = vadd.f32 %v7832, %v8489
      %v8494 = vld [vmem:[%s12 + $0x3] sm:$0x1]
      %v8495 = vsel %vm1207, %v8492, 0.0
      %8496 = vadd.xlane.f32.xlu0 %v8495
      %v8497 = vpop.xlane.xlu0 %8496
      %v8498 = vsel %vm6279, %v8493, 0.0
      %8499 = vadd.xlane.f32.xlu0 %v8498
      %v8500 = vpop.xlane.xlu0 %8499
      %v8501 = vmul.f32 %v8497, %v6283
      %v8502 = vmul.f32 %v8500, %v6283
      %v8503 = vsub.f32 %v8492, %v8501
      %v8504 = vsub.f32 %v8493, %v8502
      %v8505 = vmul.f32 %v8503, %v8503
      %v8506 = vmul.f32 %v8504, %v8504
      %v8507 = vsel %vm1207, %v8505, 0.0
      %8508 = vadd.xlane.f32.xlu0 %v8507
      %v8509 = vpop.xlane.xlu0 %8508
      %v8510 = vsel %vm6279, %v8506, 0.0
      %8511 = vadd.xlane.f32.xlu0 %v8510
      %v8512 = vpop.xlane.xlu0 %8511
      %v8513 = vmul.f32 %v8509, %v6283
      %v8514 = vmul.f32 %v8512, %v6283
      %v8515 = vadd.f32 %v8513, 1e-05
      %v8516 = vadd.f32 %v8514, 1e-05
      %v8517 = vrsqrt.pop %v8515
      %v8518 = vrsqrt.pop %v8516
      %v8519 = vmul.f32 %v8503, %v8517
      %v8520 = vmul.f32 %v8504, %v8518
      %v8521 = vlaneseq
      %v8522 = vshrl.u32 %v8521, 7
      %v8523 = vsub.s32 0, %v8522
      %v8524 = vrot.slane %v8494, %v8523
      %v8525 = vmul.f32 %v8519, %v8524
      %v8526 = vmul.f32 %v8520, %v8524
      %8528 = vrot.lane.b32.xlu0 %v8524, 96
      %v8529 = vpop.permute.xlu0 %8528
      %v8531 = vadd.f32 %v8525, %v8529
      %v8532 = vadd.f32 %v8526, %v8529
      %v8533 = vpack.c.bf16 %v8532, %v8531
      %s8534 = scalar_lea.vmem %s10, 16
      %v8535 = vld [vmem:[%s8534] sm:$0xf]
      %v8536 = vld [vmem:[%s8534 + $0x4] sm:$0xf]
      %v8537 = vld [vmem:[%s8534 + $0x8] sm:$0xf]
      %v8538 = vld [vmem:[%s8534 + $0xc] sm:$0xf]
      %v8543 = vunpack.c.l.b16 %v8535
      %v8544 = vunpack.c.l.b16 %v8536
      %v8545 = vunpack.c.l.b16 %v8537
      %v8546 = vunpack.c.l.b16 %v8538
      %v8547 = vpack.c.b16 %v8544, %v8543
      %v8548 = vpack.c.b16 %v8546, %v8545
      %8551 = vrot.lane.b32.xlu0 %v8524, 64
      %v8552 = vpop.permute.xlu0 %8551
      %v8555 = vsel %vm1207, %v8533, 0
      %8557 = vmatprep.subr.bf16.mxu0 0
      %8558 = vmatpush1.bf16.msra.mxu0 0
      %8559 = vmatprep.subr.bf16.mxu0 0
      %8560 = vmatpush1.bf16.msra.mxu0 0
      %8561 = vmatprep.subr.bf16.mxu0 0
      %8562 = vmatpush1.bf16.msra.mxu0 0
      %8563 = vmatprep.subr.bf16.mxu0 0
      %8564 = vmatpush1.bf16.msra.mxu0 0
      %8565 = vmatprep.subr.bf16.mxu0 0
      %8566 = vmatpush1.bf16.msra.mxu0 0
      %8567 = vmatprep.subr.bf16.mxu0 0
      %8568 = vmatpush1.bf16.msra.mxu0 0
      %8569 = vmatprep.subr.bf16.mxu0 0
      %8570 = vmatpush1.bf16.msra.mxu0 %v8548
      %8571 = vmatprep.subr.bf16.mxu0 0
      %8572 = vmatpush1.bf16.msra.mxu0 %v8547
      %8573 = vmatprep.subr.bf16.mxu0 0
      %8574 = vmatpush2.bf16.msra.mxu0 0
      %8575 = vmatprep.subr.bf16.mxu0 0
      %8576 = vmatpush2.bf16.msra.mxu0 0
      %8577 = vmatprep.subr.bf16.mxu0 0
      %8578 = vmatpush2.bf16.msra.mxu0 0
      %8579 = vmatprep.subr.bf16.mxu0 0
      %8580 = vmatpush2.bf16.msra.mxu0 0
      %8581 = vmatprep.subr.bf16.mxu0 0
      %8582 = vmatpush2.bf16.msra.mxu0 0
      %8583 = vmatprep.subr.bf16.mxu0 0
      %8584 = vmatpush2.bf16.msra.mxu0 0
      %8585 = vmatprep.subr.bf16.mxu0 0
      %8586 = vmatpush2.bf16.msra.mxu0 0
      %8587 = vmatprep.subr.bf16.mxu0 0
      %8588 = vmatpush2.bf16.msra.mxu0 0
      %8589 = vmatprep.mubr.bf16.mxu0 0
      %8590 = vmatmul.mubr.bf16.gmra.mxu0 %v8555
      %v8591 = vpop.f32.mrf.mxu0
      %v8592 = vadd.f32 %v8552, %v8591
      %v8593 = vpop.f32.mrf.mxu0
      %v8594 = vpop.f32.mrf.mxu0
      %v8595 = vadd.f32 %v8552, %v8594
      %v8596 = vpop.f32.mrf.mxu0
      %8597 = vdwg.mxu0
      %v8598 = vmul.f32 %v8592, 0.5
      %v8599 = vmul.f32 %v8595, 0.5
      %v8600 = vmul.f32 %v8592, 0.044715
      %v8601 = vmul.f32 %v8595, 0.044715
      %v8602 = vmul.f32 %v8600, %v8592
      %v8603 = vmul.f32 %v8601, %v8595
      %v8604 = vmul.f32 %v8602, %v8592
      %v8605 = vmul.f32 %v8603, %v8595
      %v8606 = vadd.f32 %v8592, %v8604
      %v8607 = vadd.f32 %v8595, %v8605
      %v8608 = vmul.f32 %v8606, 0.7978846
      %v8609 = vmul.f32 %v8607, 0.7978846
      %v8610 = vtanh.pop %v8608
      %v8611 = vtanh.pop %v8609
      %v8612 = vadd.f32 %v8610, 1.0
      %v8613 = vadd.f32 %v8611, 1.0
      %v8614 = vmul.f32 %v8598, %v8612
      %v8615 = vmul.f32 %v8599, %v8613
      %v8616 = vpack.c.bf16 %v8615, %v8614
      %s8617 = scalar_lea.vmem %s11, 32
      %v8618 = vld [vmem:[%s8617] sm:$0xf]
      %v8619 = vld [vmem:[%s8617 + $0x4] sm:$0xf]
      %v8620 = vld [vmem:[%s8617 + $0x8] sm:$0xf]
      %v8621 = vld [vmem:[%s8617 + $0xc] sm:$0xf]
      %v8622 = vld [vmem:[%s8617 + $0x10] sm:$0xf]
      %v8623 = vld [vmem:[%s8617 + $0x14] sm:$0xf]
      %v8624 = vld [vmem:[%s8617 + $0x18] sm:$0xf]
      %v8625 = vld [vmem:[%s8617 + $0x1c] sm:$0xf]
      %v8626 = vld [vmem:[%s12 + $0x5] sm:$0x1]
      %v8627 = vlaneseq
      %v8628 = vshrl.u32 %v8627, 7
      %v8629 = vsub.s32 0, %v8628
      %v8630 = vrot.slane %v8626, %v8629
      %v8639 = vunpack.c.l.b16 %v8618
      %v8640 = vunpack.c.l.b16 %v8619
      %v8641 = vunpack.c.l.b16 %v8620
      %v8642 = vunpack.c.l.b16 %v8621
      %v8643 = vunpack.c.l.b16 %v8622
      %v8644 = vunpack.c.l.b16 %v8623
      %v8645 = vunpack.c.l.b16 %v8624
      %v8646 = vunpack.c.l.b16 %v8625
      %v8647 = vpack.c.b16 %v8640, %v8639
      %v8648 = vpack.c.b16 %v8642, %v8641
      %v8649 = vpack.c.b16 %v8644, %v8643
      %v8650 = vpack.c.b16 %v8646, %v8645
      %v8656 = vsel %vm7749, %v8616, 0
      %8658 = vmatprep.subr.bf16.mxu0 0
      %8659 = vmatpush1.bf16.msra.mxu0 0
      %8660 = vmatprep.subr.bf16.mxu0 0
      %8661 = vmatpush1.bf16.msra.mxu0 0
      %8662 = vmatprep.subr.bf16.mxu0 0
      %8663 = vmatpush1.bf16.msra.mxu0 0
      %8664 = vmatprep.subr.bf16.mxu0 0
      %8665 = vmatpush1.bf16.msra.mxu0 0
      %8666 = vmatprep.subr.bf16.mxu0 0
      %8667 = vmatpush1.bf16.msra.mxu0 %v8650
      %8668 = vmatprep.subr.bf16.mxu0 0
      %8669 = vmatpush1.bf16.msra.mxu0 %v8649
      %8670 = vmatprep.subr.bf16.mxu0 0
      %8671 = vmatpush1.bf16.msra.mxu0 %v8648
      %8672 = vmatprep.subr.bf16.mxu0 0
      %8673 = vmatpush1.bf16.msra.mxu0 %v8647
      %8674 = vmatprep.subr.bf16.mxu0 0
      %8675 = vmatpush2.bf16.msra.mxu0 0
      %8676 = vmatprep.subr.bf16.mxu0 0
      %8677 = vmatpush2.bf16.msra.mxu0 0
      %8678 = vmatprep.subr.bf16.mxu0 0
      %8679 = vmatpush2.bf16.msra.mxu0 0
      %8680 = vmatprep.subr.bf16.mxu0 0
      %8681 = vmatpush2.bf16.msra.mxu0 0
      %8682 = vmatprep.subr.bf16.mxu0 0
      %8683 = vmatpush2.bf16.msra.mxu0 0
      %8684 = vmatprep.subr.bf16.mxu0 0
      %8685 = vmatpush2.bf16.msra.mxu0 0
      %8686 = vmatprep.subr.bf16.mxu0 0
      %8687 = vmatpush2.bf16.msra.mxu0 0
      %8688 = vmatprep.subr.bf16.mxu0 0
      %8689 = vmatpush2.bf16.msra.mxu0 0
      %8690 = vmatprep.mubr.bf16.mxu0 0
      %8691 = vmatmul.mubr.bf16.gmra.mxu0 %v8656
      %v8692 = vpop.f32.mrf.mxu0
      %v8693 = vadd.f32 %v8630, %v8692
      %v8694 = vpop.f32.mrf.mxu0
      %v8695 = vpop.f32.mrf.mxu0
      %v8696 = vadd.f32 %v8630, %v8695
      %v8697 = vpop.f32.mrf.mxu0
      %8698 = vdwg.mxu0
      %v8699 = vadd.f32 %v8531, %v8693
      %v8700 = vadd.f32 %v8532, %v8696
      %v8701 = vsel %vm1207, %v8699, 0.0
      %8702 = vadd.xlane.f32.xlu0 %v8701
      %v8703 = vpop.xlane.xlu0 %8702
      %v8704 = vsel %vm6279, %v8700, 0.0
      %8705 = vadd.xlane.f32.xlu0 %v8704
      %v8706 = vpop.xlane.xlu0 %8705
      %v8707 = vmul.f32 %v8703, %v6283
      %v8708 = vmul.f32 %v8706, %v6283
      %v8709 = vsub.f32 %v8699, %v8707
      %v8710 = vsub.f32 %v8700, %v8708
      %v8711 = vmul.f32 %v8709, %v8709
      %v8712 = vmul.f32 %v8710, %v8710
      %v8713 = vsel %vm1207, %v8711, 0.0
      %8714 = vadd.xlane.f32.xlu0 %v8713
      %v8715 = vpop.xlane.xlu0 %8714
      %v8716 = vsel %vm6279, %v8712, 0.0
      %8717 = vadd.xlane.f32.xlu0 %v8716
      %v8718 = vpop.xlane.xlu0 %8717
      %v8719 = vmul.f32 %v8715, %v6283
      %v8720 = vmul.f32 %v8718, %v6283
      %v8721 = vadd.f32 %v8719, 1e-05
      %v8722 = vadd.f32 %v8720, 1e-05
      %v8723 = vrsqrt.pop %v8721
      %v8724 = vrsqrt.pop %v8722
      %v8725 = vmul.f32 %v8709, %v8723
      %v8726 = vmul.f32 %v8710, %v8724
      %8728 = vrot.lane.b32.xlu0 %v8630, 96
      %v8729 = vpop.permute.xlu0 %8728
      %v8731 = vmul.f32 %v8725, %v8729
      %v8732 = vmul.f32 %v8726, %v8729
      %8733 = vrot.lane.b32.xlu0 %v8630, 64
      %v8734 = vpop.permute.xlu0 %8733
      %v8736 = vadd.f32 %v8731, %v8734
      %v8737 = vadd.f32 %v8732, %v8734
      %8738 = vst.msk [vmem:[%s440] sm:$0xff] %vm1207, %v8736
      %8739 = vst.msk [vmem:[%s440 + $0x8] sm:$0x1] %vm6279, %v8737
      %p8740 = scmp.lt.s32.totalorder %s24, 1
      %s8741 = scalar_select %p8740, %s24, 1
      %s8742 = smul.addr %s8741, 2
      %s8743 = smul.addr %s8742, 8
      %s8744 = scalar_lea.vmem %s13, %s8743
      // Predicated region
      $region73: #{wavlm_forward.1} parent=71 // pred_check
        %p8745 = pneg %p320
      $region74: #{wavlm_forward.1} parent=71 // pred_check_branch
        %8747 = sbr.rel (%p8745) target = $region76
      $region75: #{wavlm_forward.1} parent=71 // pred_region
        _
      $region76: #{wavlm_forward.1} parent=71 // pred_fallthru
        _
    $region72: #{wavlm_forward.1} parent=5 // pred_fallthru
      _
    %p8748 = scmp.le.s32.totalorder 2, %s19
    // Predicated region
    $region77: #{wavlm_forward.1} parent=5 // pred_check
      %p8749 = pneg %p8748
    $region78: #{wavlm_forward.1} parent=5 // pred_check_branch
      %8751 = sbr.rel (%p8749) target = $region80
    $region79: #{wavlm_forward.1} parent=5 // pred_region
      %s8752 = ssub.s32 %s19, 2
      // Predicated region
      $region81: #{wavlm_forward.1} parent=79 // pred_check
        %p8753 = pneg %p326
      $region82: #{wavlm_forward.1} parent=79 // pred_check_branch
        %8755 = sbr.rel (%p8753) target = $region84
      $region83: #{wavlm_forward.1} parent=79 // pred_region
        %p8756 = scmp.lt.s32.totalorder %s25, 1
        %s8757 = scalar_select %p8756, %s25, 1
        %s8758 = smul.addr %s8757, 2
        %s8759 = smul.addr %s8758, 8
        %s8760 = scalar_lea.vmem %s13, %s8759
      $region84: #{wavlm_forward.1} parent=79 // pred_fallthru
        _
    $region80: #{wavlm_forward.1} parent=5 // pred_fallthru
      _
  $region6: #{wavlm_forward.1} parent=0 // loop_footer
    %s23 = sadd.s32 1, %s19
  $region7: #{wavlm_forward.1} parent=0 // loop_footer_branch
    %18 = sbr.rel target = $region3
  $region8: #{wavlm_forward.1} parent=0 // loop_exit
    _

</llo_original>
